<compile_context>
chip_gen: v5e
topology: v5e:2x2
jax: 0.10.0
libtpu: 0.0.40
codegen_flags: <defaults>
</compile_context>

<pallas_src>
import functools
import math

import jax
import jax.numpy as jnp
from jax.experimental import pallas as pl
from jax.experimental.pallas import tpu as pltpu

EPS = 1e-5
C = 32              # channel width inside the residual stacks
K = 5               # residual-unit conv kernel size
N_STACKS = 5
L_FINAL = 4         # 128 / 2**5
FEAT = C * L_FINAL  # 128, matches .view(-1, 128)
N_CLASSES = 5
OUT_PAD = 8         # class rows padded to one sublane group


def _vmem_spec():
    # whole-array operand resident in VMEM (everything here is tiny)
    return pl.BlockSpec(memory_space=pltpu.MemorySpace.VMEM)


def _shift_lanes(a, d):
    """t[:, n] = a[:, n + d], zero-filled outside [0, a.shape[1])."""
    if d == 0:
        return a
    n = a.shape[1]
    pad = jnp.zeros((a.shape[0], abs(d)), a.dtype)
    if d > 0:
        return jnp.concatenate([a[:, d:], pad], axis=1)
    return jnp.concatenate([pad, a[:, :n + d]], axis=1)


# ----------------------------------------------------------------------------
# Single fused kernel: 5 residual stacks + view(-1,128) + linear head
# ----------------------------------------------------------------------------
def _resnet_kernel(x_ref, w1_ref, b1_ref, wc_ref, bc_ref, g_ref, bt_ref,
                   l1w_ref, l2w_ref, l3w_ref, hb_ref, o_ref, *, B, L0):
    f32 = jnp.float32

    def batchnorm(y, s, i):
        # training-mode BN: batch statistics per channel over (batch, length)
        g = g_ref[:, 5 * s + i:5 * s + i + 1]                    # (32, 1)
        b = bt_ref[:, 5 * s + i:5 * s + i + 1]                   # (32, 1)
        n = y.shape[1]
        mean = jnp.sum(y, axis=1, keepdims=True) * (1.0 / n)
        cen = y - mean
        var = jnp.sum(cen * cen, axis=1, keepdims=True) * (1.0 / n)  # biased
        return g * (cen * jax.lax.rsqrt(var + EPS)) + b

    def conv5(a, s, u, masks):
        # Conv1d(k=5, padding=2) as ONE im2col matmul:
        #   (32, 160) @ (160, B*L); contraction index = k*32 + cin.
        # Taps are full-width lane shifts; masks zero the positions where a
        # tap would read across a batch-segment (i.e. zero-padding) boundary.
        base = (4 * s + u) * (K * C)
        w = wc_ref[:, base:base + K * C]                         # (32, 160)
        bias = bc_ref[:, 4 * s + u:4 * s + u + 1]                # (32, 1)
        taps = []
        for k in range(K):
            d = k - 2
            t = _shift_lanes(a, d)
            if d != 0:
                t = t * masks[d]
            taps.append(t)
        col = jnp.concatenate(taps, axis=0)                      # (160, B*L)
        return jnp.dot(w, col, preferred_element_type=f32) + bias

    # Input already packed by the wrapper: (32, B*L0), lane index = b*L0 + l.
    a = x_ref[...]

    L = L0
    for s in range(N_STACKS):
        N = B * L
        # per-stack tap-validity masks (lane n valid iff 0 <= n%L + d < L)
        l_idx = jax.lax.broadcasted_iota(jnp.int32, (1, N), 1) % L
        masks = {d: ((l_idx + d >= 0) & (l_idx + d < L)).astype(f32)
                 for d in (-2, -1, 1, 2)}

        # 1x1 conv + stack BatchNorm (no ReLU here, matching the reference)
        w1 = w1_ref[:, C * s:C * (s + 1)]                        # (32, 32)
        y = jnp.dot(w1, a, preferred_element_type=f32) + b1_ref[:, s:s + 1]
        y = batchnorm(y, s, 0)

        # two residual units: conv->relu->bn->conv->relu->bn, then + input
        for u in range(2):
            res = y
            z = conv5(y, s, 2 * u, masks)
            z = jnp.maximum(z, 0.0)
            z = batchnorm(z, s, 1 + 2 * u)
            z = conv5(z, s, 2 * u + 1, masks)
            z = jnp.maximum(z, 0.0)
            z = batchnorm(z, s, 2 + 2 * u)
            y = z + res

        # MaxPool1d(2): pairwise max via a lane shift, then compact the even
        # positions with one exact 0/1 selection matmul (rides on the MXU).
        Nh = N // 2
        m = jnp.maximum(y, _shift_lanes(y, 1))
        rows = jax.lax.broadcasted_iota(jnp.int32, (N, Nh), 0)
        cols = jax.lax.broadcasted_iota(jnp.int32, (N, Nh), 1)
        sel = (rows == 2 * cols).astype(f32)
        a = jnp.dot(m, sel, preferred_element_type=f32)          # (32, N/2)
        L = L // 2

    # ---- view(-1, 128) + Linear head, transposed (features, batch) ----
    # a: (32, B*L_FINAL) with lane index b*L_FINAL + l.  Build G (128, B)
    # whose row index is l*32 + c (== xlin^T up to a column permutation of
    # W1 that was folded into l1w offline).
    NL = B * L_FINAL
    n_idx = jax.lax.broadcasted_iota(jnp.int32, (NL, B), 0)
    b_idx = jax.lax.broadcasted_iota(jnp.int32, (NL, B), 1)
    parts = []
    for l in range(L_FINAL):
        sel_l = (n_idx == L_FINAL * b_idx + l).astype(f32)       # (B*4, B)
        parts.append(jnp.dot(a, sel_l, preferred_element_type=f32))
    g_mat = jnp.concatenate(parts, axis=0)                       # (128, B)

    h = jnp.dot(l1w_ref[...], g_mat, preferred_element_type=f32) + hb_ref[:, 0:1]
    h = jnp.maximum(h, 0.0)
    # TODO(synk): nn.AlphaDropout(0.1) treated as identity (eval semantics).
    h = jnp.dot(l2w_ref[...], h, preferred_element_type=f32) + hb_ref[:, 1:2]
    h = jnp.maximum(h, 0.0)
    h = jnp.dot(l3w_ref[...], h, preferred_element_type=f32) + hb_ref[0:OUT_PAD, 2:3]
    o_ref[...] = h.astype(o_ref.dtype)                           # (8, B)


# ----------------------------------------------------------------------------
# Forward pass (ONE pallas_call; layout plumbing stays in the XLA wrapper)
# ----------------------------------------------------------------------------
def resnet_forward(x, kp):
    B, cin, L0 = x.shape
    assert L0 % (2 ** N_STACKS) == 0 and C * (L0 // (2 ** N_STACKS)) == FEAT, (
        "input length must reduce to 128 features for view(-1, 128)")
    if cin < C:  # one tiny pad of the network input (not per-layer)
        x = jnp.pad(x, ((0, 0), (0, C - cin), (0, 0)))
    # (B, 32, L0) -> (32, B*L0): channels on sublanes, batch folded into lanes
    xf = jnp.transpose(x, (1, 0, 2)).reshape(C, B * L0)

    out = pl.pallas_call(
        functools.partial(_resnet_kernel, B=B, L0=L0),
        out_shape=jax.ShapeDtypeStruct((OUT_PAD, B), jnp.float32),
        in_specs=[_vmem_spec()] * 11,
        out_specs=_vmem_spec(),
    )(xf, kp["w1x1"], kp["b1x1"], kp["wconv"], kp["bconv"], kp["bng"],
      kp["bnb"], kp["l1w"], kp["l2w"], kp["l3w"], kp["hb"])

    # (8, B) padded logits -> (B, 5)
    return out[:N_CLASSES, :].T


# ----------------------------------------------------------------------------
# One-time parameter packing (hoists all transposes out of the forward path)
# ----------------------------------------------------------------------------
def prepare_params(p):
    w1_cols, b1_cols, wc_cols, bc_cols, g_cols, bt_cols = [], [], [], [], [], []
    for sp in p["stacks"]:
        w = sp["c_w"][:, :, 0]                                   # (32, Cin)
        if w.shape[1] < C:
            w = jnp.pad(w, ((0, 0), (0, C - w.shape[1])))        # zero in-chans
        w1_cols.append(w)
        b1_cols.append(sp["c_b"].reshape(C, 1))
        g_cols.append(sp["bn_g"].reshape(C, 1))
        bt_cols.append(sp["bn_b"].reshape(C, 1))
        for ru in (sp["ru1"], sp["ru2"]):
            for cw, cb in ((ru["c1_w"], ru["c1_b"]), (ru["c2_w"], ru["c2_b"])):
                # (Cout, Cin, K) -> (Cout, K, Cin) -> (Cout, K*Cin)  (im2col)
                wc_cols.append(jnp.transpose(cw, (0, 2, 1)).reshape(C, K * C))
                bc_cols.append(cb.reshape(C, 1))
            g_cols += [ru["bn1_g"].reshape(C, 1), ru["bn2_g"].reshape(C, 1)]
            bt_cols += [ru["bn1_b"].reshape(C, 1), ru["bn2_b"].reshape(C, 1)]

    # Linear head (used in transposed (features, batch) orientation):
    #  * l1w: column-permuted W1 so that column index l*32+c reads the
    #    original column c*4+l (absorbs the channel-major view(-1,128) order).
    #  * l2w: PyTorch (out,in) weight used directly.
    #  * l3w/b3: padded from 5 to 8 output rows (sliced back in the wrapper).
    l1w = (p["l1_w"].reshape(FEAT, C, L_FINAL)
           .transpose(0, 2, 1).reshape(FEAT, FEAT))
    l3w = jnp.pad(p["l3_w"], ((0, OUT_PAD - N_CLASSES), (0, 0)))
    hb = jnp.concatenate(
        [p["l1_b"].reshape(FEAT, 1),
         p["l2_b"].reshape(FEAT, 1),
         jnp.pad(p["l3_b"], (0, FEAT - N_CLASSES)).reshape(FEAT, 1)], axis=1)

    return dict(
        w1x1=jnp.concatenate(w1_cols, axis=1),    # (32, 5*32)
        b1x1=jnp.concatenate(b1_cols, axis=1),    # (32, 5)
        wconv=jnp.concatenate(wc_cols, axis=1),   # (32, 20*160)
        bconv=jnp.concatenate(bc_cols, axis=1),   # (32, 20)
        bng=jnp.concatenate(g_cols, axis=1),      # (32, 25)
        bnb=jnp.concatenate(bt_cols, axis=1),     # (32, 25)
        l1w=l1w,                                  # (128, 128) permuted
        l2w=p["l2_w"],                            # (128, 128)
        l3w=l3w,                                  # (8, 128)
        hb=hb,                                    # (128, 3) packed biases
    )


# ----------------------------------------------------------------------------
# Deterministic parameter initialization (PyTorch-like uniform fan-in bounds)
# ----------------------------------------------------------------------------
def _init_conv(key, cout, cin, k):
    kw, kb = jax.random.split(key)
    bound = 1.0 / math.sqrt(cin * k)
    w = jax.random.uniform(kw, (cout, cin, k), jnp.float32, -bound, bound)
    b = jax.random.uniform(kb, (cout,), jnp.float32, -bound, bound)
    return w, b


def _init_bn(key, c):
    kg, kb = jax.random.split(key)
    gamma = 1.0 + 0.1 * jax.random.normal(kg, (c,), jnp.float32)
    beta = 0.1 * jax.random.normal(kb, (c,), jnp.float32)
    return gamma, beta


def _init_linear(key, out_f, in_f):
    kw, kb = jax.random.split(key)
    bound = 1.0 / math.sqrt(in_f)
    w = jax.random.uniform(kw, (out_f, in_f), jnp.float32, -bound, bound)
    b = jax.random.uniform(kb, (out_f,), jnp.float32, -bound, bound)
    return w, b


def init_residual_unit(key):
    k = jax.random.split(key, 4)
    c1_w, c1_b = _init_conv(k[0], 32, 32, 5)
    c2_w, c2_b = _init_conv(k[1], 32, 32, 5)
    bn1_g, bn1_b = _init_bn(k[2], 32)
    bn2_g, bn2_b = _init_bn(k[3], 32)
    return dict(c1_w=c1_w, c1_b=c1_b, c2_w=c2_w, c2_b=c2_b,
                bn1_g=bn1_g, bn1_b=bn1_b, bn2_g=bn2_g, bn2_b=bn2_b)


def init_residual_stack(key, in_channels):
    k = jax.random.split(key, 4)
    c_w, c_b = _init_conv(k[0], 32, in_channels, 1)
    bn_g, bn_b = _init_bn(k[1], 32)
    return dict(c_w=c_w, c_b=c_b, bn_g=bn_g, bn_b=bn_b,
                ru1=init_residual_unit(k[2]), ru2=init_residual_unit(k[3]))


def init_resnet(key):
    k = jax.random.split(key, 8)
    stacks = [init_residual_stack(k[0], 2)] + [
        init_residual_stack(k[i], 32) for i in range(1, 5)
    ]
    l1_w, l1_b = _init_linear(k[5], 128, 128)
    l2_w, l2_b = _init_linear(k[6], 128, 128)
    l3_w, l3_b = _init_linear(k[7], 5, 128)
    return dict(stacks=stacks, l1_w=l1_w, l1_b=l1_b,
                l2_w=l2_w, l2_b=l2_b, l3_w=l3_w, l3_b=l3_b)


if __name__ == "__main__":
    key = jax.random.PRNGKey(0)
    kx, kparam = jax.random.split(key)
    # (batch, channels=2, length=128) NCL — length 128 so that after 5 pools
    # the per-sample feature count is 32 * 4 = 128, matching view(-1, 128).
    x = jax.random.normal(kx, (2, 2, 128), jnp.float32)
    params = init_resnet(kparam)
    kparams = prepare_params(params)        # one-time packing, out of fwd path

    fwd = jax.jit(resnet_forward)
    out = fwd(x, kparams)
    jax.block_until_ready(out)
    assert out.shape == (2, N_CLASSES) and out.dtype == jnp.float32
    print("KERNEL_OK")
</pallas_src>

<mosaic_0001>
module attributes {stable_mosaic.version = 11 : i64} {
  func.func @_resnet_kernel(%arg0: memref<32x256xf32, #tpu.memory_space<vmem>>, %arg1: memref<32x160xf32, #tpu.memory_space<vmem>>, %arg2: memref<32x5xf32, #tpu.memory_space<vmem>>, %arg3: memref<32x3200xf32, #tpu.memory_space<vmem>>, %arg4: memref<32x20xf32, #tpu.memory_space<vmem>>, %arg5: memref<32x25xf32, #tpu.memory_space<vmem>>, %arg6: memref<32x25xf32, #tpu.memory_space<vmem>>, %arg7: memref<128x128xf32, #tpu.memory_space<vmem>>, %arg8: memref<128x128xf32, #tpu.memory_space<vmem>>, %arg9: memref<8x128xf32, #tpu.memory_space<vmem>>, %arg10: memref<128x3xf32, #tpu.memory_space<vmem>>, %arg11: memref<8x2xf32, #tpu.memory_space<vmem>>) attributes {dimension_semantics = [], scalar_prefetch = 0 : i64, scratch_operands = 0 : i64, tpu.core_type = #tpu.core_type<tc>} {
    %c0 = arith.constant 0 : index
    %c0_0 = arith.constant 0 : index
    %0 = vector.load %arg0[%c0, %c0_0] : memref<32x256xf32, #tpu.memory_space<vmem>>, vector<32x256xf32>
    %1 = tpu.iota {dimensions = array<i32: 1>} : vector<1x256xi32>
    %c128_i32 = arith.constant 128 : i32
    %c0_i32 = arith.constant 0 : i32
    %2 = arith.cmpi eq, %c128_i32, %c0_i32 : i32
    %c1_i32 = arith.constant 1 : i32
    %3 = arith.select %2, %c1_i32, %c128_i32 : i32
    %4 = vector.broadcast %3 : i32 to vector<1x256xi32>
    %5 = arith.remsi %1, %4 : vector<1x256xi32>
    %c0_i32_1 = arith.constant 0 : i32
    %6 = vector.broadcast %c0_i32_1 : i32 to vector<1x256xi32>
    %7 = arith.cmpi ne, %5, %6 : vector<1x256xi32>
    %c0_i32_2 = arith.constant 0 : i32
    %8 = vector.broadcast %c0_i32_2 : i32 to vector<1x256xi32>
    %9 = arith.cmpi slt, %5, %8 : vector<1x256xi32>
    %c0_i32_3 = arith.constant 0 : i32
    %10 = arith.cmpi slt, %3, %c0_i32_3 : i32
    %11 = vector.broadcast %10 : i1 to vector<1x256xi1>
    %12 = vector.broadcast %11 : vector<1x256xi1> to vector<1x256xi1>
    %13 = arith.xori %9, %12 : vector<1x256xi1>
    %14 = arith.andi %13, %7 : vector<1x256xi1>
    %15 = vector.broadcast %3 : i32 to vector<1x256xi32>
    %16 = arith.addi %5, %15 : vector<1x256xi32>
    %17 = arith.select %14, %16, %5 : vector<1x256xi1>, vector<1x256xi32>
    %c-2_i32 = arith.constant -2 : i32
    %18 = vector.broadcast %c-2_i32 : i32 to vector<1x256xi32>
    %19 = arith.addi %17, %18 : vector<1x256xi32>
    %c0_i32_4 = arith.constant 0 : i32
    %20 = vector.broadcast %c0_i32_4 : i32 to vector<1x256xi32>
    %21 = arith.cmpi sge, %19, %20 : vector<1x256xi32>
    %c-2_i32_5 = arith.constant -2 : i32
    %22 = vector.broadcast %c-2_i32_5 : i32 to vector<1x256xi32>
    %23 = arith.addi %17, %22 : vector<1x256xi32>
    %c128_i32_6 = arith.constant 128 : i32
    %24 = vector.broadcast %c128_i32_6 : i32 to vector<1x256xi32>
    %25 = arith.cmpi slt, %23, %24 : vector<1x256xi32>
    %26 = arith.andi %21, %25 : vector<1x256xi1>
    %27 = arith.extui %26 : vector<1x256xi1> to vector<1x256xi32>
    %28 = arith.sitofp %27 : vector<1x256xi32> to vector<1x256xf32>
    %c-1_i32 = arith.constant -1 : i32
    %29 = vector.broadcast %c-1_i32 : i32 to vector<1x256xi32>
    %30 = arith.addi %17, %29 : vector<1x256xi32>
    %c0_i32_7 = arith.constant 0 : i32
    %31 = vector.broadcast %c0_i32_7 : i32 to vector<1x256xi32>
    %32 = arith.cmpi sge, %30, %31 : vector<1x256xi32>
    %c-1_i32_8 = arith.constant -1 : i32
    %33 = vector.broadcast %c-1_i32_8 : i32 to vector<1x256xi32>
    %34 = arith.addi %17, %33 : vector<1x256xi32>
    %c128_i32_9 = arith.constant 128 : i32
    %35 = vector.broadcast %c128_i32_9 : i32 to vector<1x256xi32>
    %36 = arith.cmpi slt, %34, %35 : vector<1x256xi32>
    %37 = arith.andi %32, %36 : vector<1x256xi1>
    %38 = arith.extui %37 : vector<1x256xi1> to vector<1x256xi32>
    %39 = arith.sitofp %38 : vector<1x256xi32> to vector<1x256xf32>
    %c1_i32_10 = arith.constant 1 : i32
    %40 = vector.broadcast %c1_i32_10 : i32 to vector<1x256xi32>
    %41 = arith.addi %17, %40 : vector<1x256xi32>
    %c0_i32_11 = arith.constant 0 : i32
    %42 = vector.broadcast %c0_i32_11 : i32 to vector<1x256xi32>
    %43 = arith.cmpi sge, %41, %42 : vector<1x256xi32>
    %c1_i32_12 = arith.constant 1 : i32
    %44 = vector.broadcast %c1_i32_12 : i32 to vector<1x256xi32>
    %45 = arith.addi %17, %44 : vector<1x256xi32>
    %c128_i32_13 = arith.constant 128 : i32
    %46 = vector.broadcast %c128_i32_13 : i32 to vector<1x256xi32>
    %47 = arith.cmpi slt, %45, %46 : vector<1x256xi32>
    %48 = arith.andi %43, %47 : vector<1x256xi1>
    %49 = arith.extui %48 : vector<1x256xi1> to vector<1x256xi32>
    %50 = arith.sitofp %49 : vector<1x256xi32> to vector<1x256xf32>
    %c2_i32 = arith.constant 2 : i32
    %51 = vector.broadcast %c2_i32 : i32 to vector<1x256xi32>
    %52 = arith.addi %17, %51 : vector<1x256xi32>
    %c0_i32_14 = arith.constant 0 : i32
    %53 = vector.broadcast %c0_i32_14 : i32 to vector<1x256xi32>
    %54 = arith.cmpi sge, %52, %53 : vector<1x256xi32>
    %c2_i32_15 = arith.constant 2 : i32
    %55 = vector.broadcast %c2_i32_15 : i32 to vector<1x256xi32>
    %56 = arith.addi %17, %55 : vector<1x256xi32>
    %c128_i32_16 = arith.constant 128 : i32
    %57 = vector.broadcast %c128_i32_16 : i32 to vector<1x256xi32>
    %58 = arith.cmpi slt, %56, %57 : vector<1x256xi32>
    %59 = arith.andi %54, %58 : vector<1x256xi1>
    %60 = arith.extui %59 : vector<1x256xi1> to vector<1x256xi32>
    %61 = arith.sitofp %60 : vector<1x256xi32> to vector<1x256xf32>
    %c0_17 = arith.constant 0 : index
    %c0_18 = arith.constant 0 : index
    %62 = vector.load %arg1[%c0_17, %c0_18] : memref<32x160xf32, #tpu.memory_space<vmem>>, vector<32x32xf32>
    %cst = arith.constant dense<0.000000e+00> : vector<32x256xf32>
    %63 = tpu.matmul %62, %0, %cst {dimension_numbers = #tpu.dot_dimension_numbers<[1], [0], [0], [1], [0, 0, 1, 1], [], []>} : vector<32x32xf32>, vector<32x256xf32>, vector<32x256xf32> -> vector<32x256xf32>
    %c0_19 = arith.constant 0 : index
    %c0_20 = arith.constant 0 : index
    %64 = vector.load %arg2[%c0_19, %c0_20] : memref<32x5xf32, #tpu.memory_space<vmem>>, vector<32x1xf32>
    %65 = vector.broadcast %64 : vector<32x1xf32> to vector<32x256xf32>
    %66 = arith.addf %63, %65 : vector<32x256xf32>
    %c0_21 = arith.constant 0 : index
    %c0_22 = arith.constant 0 : index
    %67 = vector.load %arg5[%c0_21, %c0_22] : memref<32x25xf32, #tpu.memory_space<vmem>>, vector<32x1xf32>
    %c0_23 = arith.constant 0 : index
    %c0_24 = arith.constant 0 : index
    %68 = vector.load %arg6[%c0_23, %c0_24] : memref<32x25xf32, #tpu.memory_space<vmem>>, vector<32x1xf32>
    %cst_25 = arith.constant dense<0.000000e+00> : vector<32xf32>
    %69 = vector.multi_reduction <add>, %66, %cst_25 [1] : vector<32x256xf32> to vector<32xf32>
    %70 = vector.shape_cast %69 : vector<32xf32> to vector<32x1xf32>
    %cst_26 = arith.constant 3.906250e-03 : f32
    %71 = vector.broadcast %cst_26 : f32 to vector<32x1xf32>
    %72 = arith.mulf %70, %71 : vector<32x1xf32>
    %73 = vector.broadcast %72 : vector<32x1xf32> to vector<32x256xf32>
    %74 = arith.subf %66, %73 : vector<32x256xf32>
    %75 = arith.mulf %74, %74 : vector<32x256xf32>
    %cst_27 = arith.constant dense<0.000000e+00> : vector<32xf32>
    %76 = vector.multi_reduction <add>, %75, %cst_27 [1] : vector<32x256xf32> to vector<32xf32>
    %77 = vector.shape_cast %76 : vector<32xf32> to vector<32x1xf32>
    %cst_28 = arith.constant 3.906250e-03 : f32
    %78 = vector.broadcast %cst_28 : f32 to vector<32x1xf32>
    %79 = arith.mulf %77, %78 : vector<32x1xf32>
    %cst_29 = arith.constant 9.99999974E-6 : f32
    %80 = vector.broadcast %cst_29 : f32 to vector<32x1xf32>
    %81 = arith.addf %79, %80 : vector<32x1xf32>
    %82 = math.rsqrt %81 : vector<32x1xf32>
    %83 = vector.broadcast %82 : vector<32x1xf32> to vector<32x256xf32>
    %84 = arith.mulf %74, %83 : vector<32x256xf32>
    %85 = vector.broadcast %67 : vector<32x1xf32> to vector<32x256xf32>
    %86 = arith.mulf %85, %84 : vector<32x256xf32>
    %87 = vector.broadcast %68 : vector<32x1xf32> to vector<32x256xf32>
    %88 = arith.addf %86, %87 : vector<32x256xf32>
    %c0_30 = arith.constant 0 : index
    %c0_31 = arith.constant 0 : index
    %89 = vector.load %arg3[%c0_30, %c0_31] : memref<32x3200xf32, #tpu.memory_space<vmem>>, vector<32x160xf32>
    %c0_32 = arith.constant 0 : index
    %c0_33 = arith.constant 0 : index
    %90 = vector.load %arg4[%c0_32, %c0_33] : memref<32x20xf32, #tpu.memory_space<vmem>>, vector<32x1xf32>
    %cst_34 = arith.constant 0.000000e+00 : f32
    %91 = vector.broadcast %cst_34 : f32 to vector<32x2xf32>
    %92 = vector.extract_strided_slice %88 {offsets = [0, 0], sizes = [32, 254], strides = [1, 1]} : vector<32x256xf32> to vector<32x254xf32>
    %93 = tpu.concatenate %91, %92 in 1 : vector<32x2xf32>, vector<32x254xf32> -> vector<32x256xf32>
    %94 = vector.broadcast %28 : vector<1x256xf32> to vector<32x256xf32>
    %95 = arith.mulf %93, %94 : vector<32x256xf32>
    %cst_35 = arith.constant 0.000000e+00 : f32
    %96 = vector.broadcast %cst_35 : f32 to vector<32x1xf32>
    %97 = vector.extract_strided_slice %88 {offsets = [0, 0], sizes = [32, 255], strides = [1, 1]} : vector<32x256xf32> to vector<32x255xf32>
    %98 = tpu.concatenate %96, %97 in 1 : vector<32x1xf32>, vector<32x255xf32> -> vector<32x256xf32>
    %99 = vector.broadcast %39 : vector<1x256xf32> to vector<32x256xf32>
    %100 = arith.mulf %98, %99 : vector<32x256xf32>
    %cst_36 = arith.constant 0.000000e+00 : f32
    %101 = vector.broadcast %cst_36 : f32 to vector<32x1xf32>
    %102 = vector.extract_strided_slice %88 {offsets = [0, 1], sizes = [32, 255], strides = [1, 1]} : vector<32x256xf32> to vector<32x255xf32>
    %103 = tpu.concatenate %102, %101 in 1 : vector<32x255xf32>, vector<32x1xf32> -> vector<32x256xf32>
    %104 = vector.broadcast %50 : vector<1x256xf32> to vector<32x256xf32>
    %105 = arith.mulf %103, %104 : vector<32x256xf32>
    %cst_37 = arith.constant 0.000000e+00 : f32
    %106 = vector.broadcast %cst_37 : f32 to vector<32x2xf32>
    %107 = vector.extract_strided_slice %88 {offsets = [0, 2], sizes = [32, 254], strides = [1, 1]} : vector<32x256xf32> to vector<32x254xf32>
    %108 = tpu.concatenate %107, %106 in 1 : vector<32x254xf32>, vector<32x2xf32> -> vector<32x256xf32>
    %109 = vector.broadcast %61 : vector<1x256xf32> to vector<32x256xf32>
    %110 = arith.mulf %108, %109 : vector<32x256xf32>
    %111 = tpu.concatenate %95, %100, %88, %105, %110 in 0 : vector<32x256xf32>, vector<32x256xf32>, vector<32x256xf32>, vector<32x256xf32>, vector<32x256xf32> -> vector<160x256xf32>
    %cst_38 = arith.constant dense<0.000000e+00> : vector<32x256xf32>
    %112 = tpu.matmul %89, %111, %cst_38 {dimension_numbers = #tpu.dot_dimension_numbers<[1], [0], [0], [1], [0, 0, 1, 1], [], []>} : vector<32x160xf32>, vector<160x256xf32>, vector<32x256xf32> -> vector<32x256xf32>
    %113 = vector.broadcast %90 : vector<32x1xf32> to vector<32x256xf32>
    %114 = arith.addf %112, %113 : vector<32x256xf32>
    %cst_39 = arith.constant 0.000000e+00 : f32
    %115 = vector.broadcast %cst_39 : f32 to vector<32x256xf32>
    %116 = arith.maximumf %114, %115 : vector<32x256xf32>
    %c0_40 = arith.constant 0 : index
    %c1 = arith.constant 1 : index
    %117 = vector.load %arg5[%c0_40, %c1] : memref<32x25xf32, #tpu.memory_space<vmem>>, vector<32x1xf32>
    %c0_41 = arith.constant 0 : index
    %c1_42 = arith.constant 1 : index
    %118 = vector.load %arg6[%c0_41, %c1_42] : memref<32x25xf32, #tpu.memory_space<vmem>>, vector<32x1xf32>
    %cst_43 = arith.constant dense<0.000000e+00> : vector<32xf32>
    %119 = vector.multi_reduction <add>, %116, %cst_43 [1] : vector<32x256xf32> to vector<32xf32>
    %120 = vector.shape_cast %119 : vector<32xf32> to vector<32x1xf32>
    %cst_44 = arith.constant 3.906250e-03 : f32
    %121 = vector.broadcast %cst_44 : f32 to vector<32x1xf32>
    %122 = arith.mulf %120, %121 : vector<32x1xf32>
    %123 = vector.broadcast %122 : vector<32x1xf32> to vector<32x256xf32>
    %124 = arith.subf %116, %123 : vector<32x256xf32>
    %125 = arith.mulf %124, %124 : vector<32x256xf32>
    %cst_45 = arith.constant dense<0.000000e+00> : vector<32xf32>
    %126 = vector.multi_reduction <add>, %125, %cst_45 [1] : vector<32x256xf32> to vector<32xf32>
    %127 = vector.shape_cast %126 : vector<32xf32> to vector<32x1xf32>
    %cst_46 = arith.constant 3.906250e-03 : f32
    %128 = vector.broadcast %cst_46 : f32 to vector<32x1xf32>
    %129 = arith.mulf %127, %128 : vector<32x1xf32>
    %cst_47 = arith.constant 9.99999974E-6 : f32
    %130 = vector.broadcast %cst_47 : f32 to vector<32x1xf32>
    %131 = arith.addf %129, %130 : vector<32x1xf32>
    %132 = math.rsqrt %131 : vector<32x1xf32>
    %133 = vector.broadcast %132 : vector<32x1xf32> to vector<32x256xf32>
    %134 = arith.mulf %124, %133 : vector<32x256xf32>
    %135 = vector.broadcast %117 : vector<32x1xf32> to vector<32x256xf32>
    %136 = arith.mulf %135, %134 : vector<32x256xf32>
    %137 = vector.broadcast %118 : vector<32x1xf32> to vector<32x256xf32>
    %138 = arith.addf %136, %137 : vector<32x256xf32>
    %c0_48 = arith.constant 0 : index
    %c160 = arith.constant 160 : index
    %139 = vector.load %arg3[%c0_48, %c160] : memref<32x3200xf32, #tpu.memory_space<vmem>>, vector<32x160xf32>
    %c0_49 = arith.constant 0 : index
    %c1_50 = arith.constant 1 : index
    %140 = vector.load %arg4[%c0_49, %c1_50] : memref<32x20xf32, #tpu.memory_space<vmem>>, vector<32x1xf32>
    %cst_51 = arith.constant 0.000000e+00 : f32
    %141 = vector.broadcast %cst_51 : f32 to vector<32x2xf32>
    %142 = vector.extract_strided_slice %138 {offsets = [0, 0], sizes = [32, 254], strides = [1, 1]} : vector<32x256xf32> to vector<32x254xf32>
    %143 = tpu.concatenate %141, %142 in 1 : vector<32x2xf32>, vector<32x254xf32> -> vector<32x256xf32>
    %144 = vector.broadcast %28 : vector<1x256xf32> to vector<32x256xf32>
    %145 = arith.mulf %143, %144 : vector<32x256xf32>
    %cst_52 = arith.constant 0.000000e+00 : f32
    %146 = vector.broadcast %cst_52 : f32 to vector<32x1xf32>
    %147 = vector.extract_strided_slice %138 {offsets = [0, 0], sizes = [32, 255], strides = [1, 1]} : vector<32x256xf32> to vector<32x255xf32>
    %148 = tpu.concatenate %146, %147 in 1 : vector<32x1xf32>, vector<32x255xf32> -> vector<32x256xf32>
    %149 = vector.broadcast %39 : vector<1x256xf32> to vector<32x256xf32>
    %150 = arith.mulf %148, %149 : vector<32x256xf32>
    %cst_53 = arith.constant 0.000000e+00 : f32
    %151 = vector.broadcast %cst_53 : f32 to vector<32x1xf32>
    %152 = vector.extract_strided_slice %138 {offsets = [0, 1], sizes = [32, 255], strides = [1, 1]} : vector<32x256xf32> to vector<32x255xf32>
    %153 = tpu.concatenate %152, %151 in 1 : vector<32x255xf32>, vector<32x1xf32> -> vector<32x256xf32>
    %154 = vector.broadcast %50 : vector<1x256xf32> to vector<32x256xf32>
    %155 = arith.mulf %153, %154 : vector<32x256xf32>
    %cst_54 = arith.constant 0.000000e+00 : f32
    %156 = vector.broadcast %cst_54 : f32 to vector<32x2xf32>
    %157 = vector.extract_strided_slice %138 {offsets = [0, 2], sizes = [32, 254], strides = [1, 1]} : vector<32x256xf32> to vector<32x254xf32>
    %158 = tpu.concatenate %157, %156 in 1 : vector<32x254xf32>, vector<32x2xf32> -> vector<32x256xf32>
    %159 = vector.broadcast %61 : vector<1x256xf32> to vector<32x256xf32>
    %160 = arith.mulf %158, %159 : vector<32x256xf32>
    %161 = tpu.concatenate %145, %150, %138, %155, %160 in 0 : vector<32x256xf32>, vector<32x256xf32>, vector<32x256xf32>, vector<32x256xf32>, vector<32x256xf32> -> vector<160x256xf32>
    %cst_55 = arith.constant dense<0.000000e+00> : vector<32x256xf32>
    %162 = tpu.matmul %139, %161, %cst_55 {dimension_numbers = #tpu.dot_dimension_numbers<[1], [0], [0], [1], [0, 0, 1, 1], [], []>} : vector<32x160xf32>, vector<160x256xf32>, vector<32x256xf32> -> vector<32x256xf32>
    %163 = vector.broadcast %140 : vector<32x1xf32> to vector<32x256xf32>
    %164 = arith.addf %162, %163 : vector<32x256xf32>
    %cst_56 = arith.constant 0.000000e+00 : f32
    %165 = vector.broadcast %cst_56 : f32 to vector<32x256xf32>
    %166 = arith.maximumf %164, %165 : vector<32x256xf32>
    %c0_57 = arith.constant 0 : index
    %c2 = arith.constant 2 : index
    %167 = vector.load %arg5[%c0_57, %c2] : memref<32x25xf32, #tpu.memory_space<vmem>>, vector<32x1xf32>
    %c0_58 = arith.constant 0 : index
    %c2_59 = arith.constant 2 : index
    %168 = vector.load %arg6[%c0_58, %c2_59] : memref<32x25xf32, #tpu.memory_space<vmem>>, vector<32x1xf32>
    %cst_60 = arith.constant dense<0.000000e+00> : vector<32xf32>
    %169 = vector.multi_reduction <add>, %166, %cst_60 [1] : vector<32x256xf32> to vector<32xf32>
    %170 = vector.shape_cast %169 : vector<32xf32> to vector<32x1xf32>
    %cst_61 = arith.constant 3.906250e-03 : f32
    %171 = vector.broadcast %cst_61 : f32 to vector<32x1xf32>
    %172 = arith.mulf %170, %171 : vector<32x1xf32>
    %173 = vector.broadcast %172 : vector<32x1xf32> to vector<32x256xf32>
    %174 = arith.subf %166, %173 : vector<32x256xf32>
    %175 = arith.mulf %174, %174 : vector<32x256xf32>
    %cst_62 = arith.constant dense<0.000000e+00> : vector<32xf32>
    %176 = vector.multi_reduction <add>, %175, %cst_62 [1] : vector<32x256xf32> to vector<32xf32>
    %177 = vector.shape_cast %176 : vector<32xf32> to vector<32x1xf32>
    %cst_63 = arith.constant 3.906250e-03 : f32
    %178 = vector.broadcast %cst_63 : f32 to vector<32x1xf32>
    %179 = arith.mulf %177, %178 : vector<32x1xf32>
    %cst_64 = arith.constant 9.99999974E-6 : f32
    %180 = vector.broadcast %cst_64 : f32 to vector<32x1xf32>
    %181 = arith.addf %179, %180 : vector<32x1xf32>
    %182 = math.rsqrt %181 : vector<32x1xf32>
    %183 = vector.broadcast %182 : vector<32x1xf32> to vector<32x256xf32>
    %184 = arith.mulf %174, %183 : vector<32x256xf32>
    %185 = vector.broadcast %167 : vector<32x1xf32> to vector<32x256xf32>
    %186 = arith.mulf %185, %184 : vector<32x256xf32>
    %187 = vector.broadcast %168 : vector<32x1xf32> to vector<32x256xf32>
    %188 = arith.addf %186, %187 : vector<32x256xf32>
    %189 = arith.addf %188, %88 : vector<32x256xf32>
    %c0_65 = arith.constant 0 : index
    %c320 = arith.constant 320 : index
    %190 = vector.load %arg3[%c0_65, %c320] : memref<32x3200xf32, #tpu.memory_space<vmem>>, vector<32x160xf32>
    %c0_66 = arith.constant 0 : index
    %c2_67 = arith.constant 2 : index
    %191 = vector.load %arg4[%c0_66, %c2_67] : memref<32x20xf32, #tpu.memory_space<vmem>>, vector<32x1xf32>
    %cst_68 = arith.constant 0.000000e+00 : f32
    %192 = vector.broadcast %cst_68 : f32 to vector<32x2xf32>
    %193 = vector.extract_strided_slice %189 {offsets = [0, 0], sizes = [32, 254], strides = [1, 1]} : vector<32x256xf32> to vector<32x254xf32>
    %194 = tpu.concatenate %192, %193 in 1 : vector<32x2xf32>, vector<32x254xf32> -> vector<32x256xf32>
    %195 = vector.broadcast %28 : vector<1x256xf32> to vector<32x256xf32>
    %196 = arith.mulf %194, %195 : vector<32x256xf32>
    %cst_69 = arith.constant 0.000000e+00 : f32
    %197 = vector.broadcast %cst_69 : f32 to vector<32x1xf32>
    %198 = vector.extract_strided_slice %189 {offsets = [0, 0], sizes = [32, 255], strides = [1, 1]} : vector<32x256xf32> to vector<32x255xf32>
    %199 = tpu.concatenate %197, %198 in 1 : vector<32x1xf32>, vector<32x255xf32> -> vector<32x256xf32>
    %200 = vector.broadcast %39 : vector<1x256xf32> to vector<32x256xf32>
    %201 = arith.mulf %199, %200 : vector<32x256xf32>
    %cst_70 = arith.constant 0.000000e+00 : f32
    %202 = vector.broadcast %cst_70 : f32 to vector<32x1xf32>
    %203 = vector.extract_strided_slice %189 {offsets = [0, 1], sizes = [32, 255], strides = [1, 1]} : vector<32x256xf32> to vector<32x255xf32>
    %204 = tpu.concatenate %203, %202 in 1 : vector<32x255xf32>, vector<32x1xf32> -> vector<32x256xf32>
    %205 = vector.broadcast %50 : vector<1x256xf32> to vector<32x256xf32>
    %206 = arith.mulf %204, %205 : vector<32x256xf32>
    %cst_71 = arith.constant 0.000000e+00 : f32
    %207 = vector.broadcast %cst_71 : f32 to vector<32x2xf32>
    %208 = vector.extract_strided_slice %189 {offsets = [0, 2], sizes = [32, 254], strides = [1, 1]} : vector<32x256xf32> to vector<32x254xf32>
    %209 = tpu.concatenate %208, %207 in 1 : vector<32x254xf32>, vector<32x2xf32> -> vector<32x256xf32>
    %210 = vector.broadcast %61 : vector<1x256xf32> to vector<32x256xf32>
    %211 = arith.mulf %209, %210 : vector<32x256xf32>
    %212 = tpu.concatenate %196, %201, %189, %206, %211 in 0 : vector<32x256xf32>, vector<32x256xf32>, vector<32x256xf32>, vector<32x256xf32>, vector<32x256xf32> -> vector<160x256xf32>
    %cst_72 = arith.constant dense<0.000000e+00> : vector<32x256xf32>
    %213 = tpu.matmul %190, %212, %cst_72 {dimension_numbers = #tpu.dot_dimension_numbers<[1], [0], [0], [1], [0, 0, 1, 1], [], []>} : vector<32x160xf32>, vector<160x256xf32>, vector<32x256xf32> -> vector<32x256xf32>
    %214 = vector.broadcast %191 : vector<32x1xf32> to vector<32x256xf32>
    %215 = arith.addf %213, %214 : vector<32x256xf32>
    %cst_73 = arith.constant 0.000000e+00 : f32
    %216 = vector.broadcast %cst_73 : f32 to vector<32x256xf32>
    %217 = arith.maximumf %215, %216 : vector<32x256xf32>
    %c0_74 = arith.constant 0 : index
    %c3 = arith.constant 3 : index
    %218 = vector.load %arg5[%c0_74, %c3] : memref<32x25xf32, #tpu.memory_space<vmem>>, vector<32x1xf32>
    %c0_75 = arith.constant 0 : index
    %c3_76 = arith.constant 3 : index
    %219 = vector.load %arg6[%c0_75, %c3_76] : memref<32x25xf32, #tpu.memory_space<vmem>>, vector<32x1xf32>
    %cst_77 = arith.constant dense<0.000000e+00> : vector<32xf32>
    %220 = vector.multi_reduction <add>, %217, %cst_77 [1] : vector<32x256xf32> to vector<32xf32>
    %221 = vector.shape_cast %220 : vector<32xf32> to vector<32x1xf32>
    %cst_78 = arith.constant 3.906250e-03 : f32
    %222 = vector.broadcast %cst_78 : f32 to vector<32x1xf32>
    %223 = arith.mulf %221, %222 : vector<32x1xf32>
    %224 = vector.broadcast %223 : vector<32x1xf32> to vector<32x256xf32>
    %225 = arith.subf %217, %224 : vector<32x256xf32>
    %226 = arith.mulf %225, %225 : vector<32x256xf32>
    %cst_79 = arith.constant dense<0.000000e+00> : vector<32xf32>
    %227 = vector.multi_reduction <add>, %226, %cst_79 [1] : vector<32x256xf32> to vector<32xf32>
    %228 = vector.shape_cast %227 : vector<32xf32> to vector<32x1xf32>
    %cst_80 = arith.constant 3.906250e-03 : f32
    %229 = vector.broadcast %cst_80 : f32 to vector<32x1xf32>
    %230 = arith.mulf %228, %229 : vector<32x1xf32>
    %cst_81 = arith.constant 9.99999974E-6 : f32
    %231 = vector.broadcast %cst_81 : f32 to vector<32x1xf32>
    %232 = arith.addf %230, %231 : vector<32x1xf32>
    %233 = math.rsqrt %232 : vector<32x1xf32>
    %234 = vector.broadcast %233 : vector<32x1xf32> to vector<32x256xf32>
    %235 = arith.mulf %225, %234 : vector<32x256xf32>
    %236 = vector.broadcast %218 : vector<32x1xf32> to vector<32x256xf32>
    %237 = arith.mulf %236, %235 : vector<32x256xf32>
    %238 = vector.broadcast %219 : vector<32x1xf32> to vector<32x256xf32>
    %239 = arith.addf %237, %238 : vector<32x256xf32>
    %c0_82 = arith.constant 0 : index
    %c480 = arith.constant 480 : index
    %240 = vector.load %arg3[%c0_82, %c480] : memref<32x3200xf32, #tpu.memory_space<vmem>>, vector<32x160xf32>
    %c0_83 = arith.constant 0 : index
    %c3_84 = arith.constant 3 : index
    %241 = vector.load %arg4[%c0_83, %c3_84] : memref<32x20xf32, #tpu.memory_space<vmem>>, vector<32x1xf32>
    %cst_85 = arith.constant 0.000000e+00 : f32
    %242 = vector.broadcast %cst_85 : f32 to vector<32x2xf32>
    %243 = vector.extract_strided_slice %239 {offsets = [0, 0], sizes = [32, 254], strides = [1, 1]} : vector<32x256xf32> to vector<32x254xf32>
    %244 = tpu.concatenate %242, %243 in 1 : vector<32x2xf32>, vector<32x254xf32> -> vector<32x256xf32>
    %245 = vector.broadcast %28 : vector<1x256xf32> to vector<32x256xf32>
    %246 = arith.mulf %244, %245 : vector<32x256xf32>
    %cst_86 = arith.constant 0.000000e+00 : f32
    %247 = vector.broadcast %cst_86 : f32 to vector<32x1xf32>
    %248 = vector.extract_strided_slice %239 {offsets = [0, 0], sizes = [32, 255], strides = [1, 1]} : vector<32x256xf32> to vector<32x255xf32>
    %249 = tpu.concatenate %247, %248 in 1 : vector<32x1xf32>, vector<32x255xf32> -> vector<32x256xf32>
    %250 = vector.broadcast %39 : vector<1x256xf32> to vector<32x256xf32>
    %251 = arith.mulf %249, %250 : vector<32x256xf32>
    %cst_87 = arith.constant 0.000000e+00 : f32
    %252 = vector.broadcast %cst_87 : f32 to vector<32x1xf32>
    %253 = vector.extract_strided_slice %239 {offsets = [0, 1], sizes = [32, 255], strides = [1, 1]} : vector<32x256xf32> to vector<32x255xf32>
    %254 = tpu.concatenate %253, %252 in 1 : vector<32x255xf32>, vector<32x1xf32> -> vector<32x256xf32>
    %255 = vector.broadcast %50 : vector<1x256xf32> to vector<32x256xf32>
    %256 = arith.mulf %254, %255 : vector<32x256xf32>
    %cst_88 = arith.constant 0.000000e+00 : f32
    %257 = vector.broadcast %cst_88 : f32 to vector<32x2xf32>
    %258 = vector.extract_strided_slice %239 {offsets = [0, 2], sizes = [32, 254], strides = [1, 1]} : vector<32x256xf32> to vector<32x254xf32>
    %259 = tpu.concatenate %258, %257 in 1 : vector<32x254xf32>, vector<32x2xf32> -> vector<32x256xf32>
    %260 = vector.broadcast %61 : vector<1x256xf32> to vector<32x256xf32>
    %261 = arith.mulf %259, %260 : vector<32x256xf32>
    %262 = tpu.concatenate %246, %251, %239, %256, %261 in 0 : vector<32x256xf32>, vector<32x256xf32>, vector<32x256xf32>, vector<32x256xf32>, vector<32x256xf32> -> vector<160x256xf32>
    %cst_89 = arith.constant dense<0.000000e+00> : vector<32x256xf32>
    %263 = tpu.matmul %240, %262, %cst_89 {dimension_numbers = #tpu.dot_dimension_numbers<[1], [0], [0], [1], [0, 0, 1, 1], [], []>} : vector<32x160xf32>, vector<160x256xf32>, vector<32x256xf32> -> vector<32x256xf32>
    %264 = vector.broadcast %241 : vector<32x1xf32> to vector<32x256xf32>
    %265 = arith.addf %263, %264 : vector<32x256xf32>
    %cst_90 = arith.constant 0.000000e+00 : f32
    %266 = vector.broadcast %cst_90 : f32 to vector<32x256xf32>
    %267 = arith.maximumf %265, %266 : vector<32x256xf32>
    %c0_91 = arith.constant 0 : index
    %c4 = arith.constant 4 : index
    %268 = vector.load %arg5[%c0_91, %c4] : memref<32x25xf32, #tpu.memory_space<vmem>>, vector<32x1xf32>
    %c0_92 = arith.constant 0 : index
    %c4_93 = arith.constant 4 : index
    %269 = vector.load %arg6[%c0_92, %c4_93] : memref<32x25xf32, #tpu.memory_space<vmem>>, vector<32x1xf32>
    %cst_94 = arith.constant dense<0.000000e+00> : vector<32xf32>
    %270 = vector.multi_reduction <add>, %267, %cst_94 [1] : vector<32x256xf32> to vector<32xf32>
    %271 = vector.shape_cast %270 : vector<32xf32> to vector<32x1xf32>
    %cst_95 = arith.constant 3.906250e-03 : f32
    %272 = vector.broadcast %cst_95 : f32 to vector<32x1xf32>
    %273 = arith.mulf %271, %272 : vector<32x1xf32>
    %274 = vector.broadcast %273 : vector<32x1xf32> to vector<32x256xf32>
    %275 = arith.subf %267, %274 : vector<32x256xf32>
    %276 = arith.mulf %275, %275 : vector<32x256xf32>
    %cst_96 = arith.constant dense<0.000000e+00> : vector<32xf32>
    %277 = vector.multi_reduction <add>, %276, %cst_96 [1] : vector<32x256xf32> to vector<32xf32>
    %278 = vector.shape_cast %277 : vector<32xf32> to vector<32x1xf32>
    %cst_97 = arith.constant 3.906250e-03 : f32
    %279 = vector.broadcast %cst_97 : f32 to vector<32x1xf32>
    %280 = arith.mulf %278, %279 : vector<32x1xf32>
    %cst_98 = arith.constant 9.99999974E-6 : f32
    %281 = vector.broadcast %cst_98 : f32 to vector<32x1xf32>
    %282 = arith.addf %280, %281 : vector<32x1xf32>
    %283 = math.rsqrt %282 : vector<32x1xf32>
    %284 = vector.broadcast %283 : vector<32x1xf32> to vector<32x256xf32>
    %285 = arith.mulf %275, %284 : vector<32x256xf32>
    %286 = vector.broadcast %268 : vector<32x1xf32> to vector<32x256xf32>
    %287 = arith.mulf %286, %285 : vector<32x256xf32>
    %288 = vector.broadcast %269 : vector<32x1xf32> to vector<32x256xf32>
    %289 = arith.addf %287, %288 : vector<32x256xf32>
    %290 = arith.addf %289, %189 : vector<32x256xf32>
    %cst_99 = arith.constant 0.000000e+00 : f32
    %291 = vector.broadcast %cst_99 : f32 to vector<32x1xf32>
    %292 = vector.extract_strided_slice %290 {offsets = [0, 1], sizes = [32, 255], strides = [1, 1]} : vector<32x256xf32> to vector<32x255xf32>
    %293 = tpu.concatenate %292, %291 in 1 : vector<32x255xf32>, vector<32x1xf32> -> vector<32x256xf32>
    %294 = arith.maximumf %290, %293 : vector<32x256xf32>
    %295 = tpu.iota {dimensions = array<i32: 0>} : vector<256x128xi32>
    %296 = tpu.iota {dimensions = array<i32: 1>} : vector<256x128xi32>
    %c2_i32_100 = arith.constant 2 : i32
    %297 = vector.broadcast %c2_i32_100 : i32 to vector<256x128xi32>
    %298 = arith.muli %297, %296 : vector<256x128xi32>
    %299 = arith.cmpi eq, %295, %298 : vector<256x128xi32>
    %300 = arith.extui %299 : vector<256x128xi1> to vector<256x128xi32>
    %301 = arith.sitofp %300 : vector<256x128xi32> to vector<256x128xf32>
    %cst_101 = arith.constant dense<0.000000e+00> : vector<32x128xf32>
    %302 = tpu.matmul %294, %301, %cst_101 {dimension_numbers = #tpu.dot_dimension_numbers<[1], [0], [0], [1], [0, 0, 1, 1], [], []>} : vector<32x256xf32>, vector<256x128xf32>, vector<32x128xf32> -> vector<32x128xf32>
    %303 = tpu.iota {dimensions = array<i32: 1>} : vector<1x128xi32>
    %c64_i32 = arith.constant 64 : i32
    %c0_i32_102 = arith.constant 0 : i32
    %304 = arith.cmpi eq, %c64_i32, %c0_i32_102 : i32
    %c1_i32_103 = arith.constant 1 : i32
    %305 = arith.select %304, %c1_i32_103, %c64_i32 : i32
    %306 = vector.broadcast %305 : i32 to vector<1x128xi32>
    %307 = arith.remsi %303, %306 : vector<1x128xi32>
    %c0_i32_104 = arith.constant 0 : i32
    %308 = vector.broadcast %c0_i32_104 : i32 to vector<1x128xi32>
    %309 = arith.cmpi ne, %307, %308 : vector<1x128xi32>
    %c0_i32_105 = arith.constant 0 : i32
    %310 = vector.broadcast %c0_i32_105 : i32 to vector<1x128xi32>
    %311 = arith.cmpi slt, %307, %310 : vector<1x128xi32>
    %c0_i32_106 = arith.constant 0 : i32
    %312 = arith.cmpi slt, %305, %c0_i32_106 : i32
    %313 = vector.broadcast %312 : i1 to vector<1x128xi1>
    %314 = vector.broadcast %313 : vector<1x128xi1> to vector<1x128xi1>
    %315 = arith.xori %311, %314 : vector<1x128xi1>
    %316 = arith.andi %315, %309 : vector<1x128xi1>
    %317 = vector.broadcast %305 : i32 to vector<1x128xi32>
    %318 = arith.addi %307, %317 : vector<1x128xi32>
    %319 = arith.select %316, %318, %307 : vector<1x128xi1>, vector<1x128xi32>
    %c-2_i32_107 = arith.constant -2 : i32
    %320 = vector.broadcast %c-2_i32_107 : i32 to vector<1x128xi32>
    %321 = arith.addi %319, %320 : vector<1x128xi32>
    %c0_i32_108 = arith.constant 0 : i32
    %322 = vector.broadcast %c0_i32_108 : i32 to vector<1x128xi32>
    %323 = arith.cmpi sge, %321, %322 : vector<1x128xi32>
    %c-2_i32_109 = arith.constant -2 : i32
    %324 = vector.broadcast %c-2_i32_109 : i32 to vector<1x128xi32>
    %325 = arith.addi %319, %324 : vector<1x128xi32>
    %c64_i32_110 = arith.constant 64 : i32
    %326 = vector.broadcast %c64_i32_110 : i32 to vector<1x128xi32>
    %327 = arith.cmpi slt, %325, %326 : vector<1x128xi32>
    %328 = arith.andi %323, %327 : vector<1x128xi1>
    %329 = arith.extui %328 : vector<1x128xi1> to vector<1x128xi32>
    %330 = arith.sitofp %329 : vector<1x128xi32> to vector<1x128xf32>
    %c-1_i32_111 = arith.constant -1 : i32
    %331 = vector.broadcast %c-1_i32_111 : i32 to vector<1x128xi32>
    %332 = arith.addi %319, %331 : vector<1x128xi32>
    %c0_i32_112 = arith.constant 0 : i32
    %333 = vector.broadcast %c0_i32_112 : i32 to vector<1x128xi32>
    %334 = arith.cmpi sge, %332, %333 : vector<1x128xi32>
    %c-1_i32_113 = arith.constant -1 : i32
    %335 = vector.broadcast %c-1_i32_113 : i32 to vector<1x128xi32>
    %336 = arith.addi %319, %335 : vector<1x128xi32>
    %c64_i32_114 = arith.constant 64 : i32
    %337 = vector.broadcast %c64_i32_114 : i32 to vector<1x128xi32>
    %338 = arith.cmpi slt, %336, %337 : vector<1x128xi32>
    %339 = arith.andi %334, %338 : vector<1x128xi1>
    %340 = arith.extui %339 : vector<1x128xi1> to vector<1x128xi32>
    %341 = arith.sitofp %340 : vector<1x128xi32> to vector<1x128xf32>
    %c1_i32_115 = arith.constant 1 : i32
    %342 = vector.broadcast %c1_i32_115 : i32 to vector<1x128xi32>
    %343 = arith.addi %319, %342 : vector<1x128xi32>
    %c0_i32_116 = arith.constant 0 : i32
    %344 = vector.broadcast %c0_i32_116 : i32 to vector<1x128xi32>
    %345 = arith.cmpi sge, %343, %344 : vector<1x128xi32>
    %c1_i32_117 = arith.constant 1 : i32
    %346 = vector.broadcast %c1_i32_117 : i32 to vector<1x128xi32>
    %347 = arith.addi %319, %346 : vector<1x128xi32>
    %c64_i32_118 = arith.constant 64 : i32
    %348 = vector.broadcast %c64_i32_118 : i32 to vector<1x128xi32>
    %349 = arith.cmpi slt, %347, %348 : vector<1x128xi32>
    %350 = arith.andi %345, %349 : vector<1x128xi1>
    %351 = arith.extui %350 : vector<1x128xi1> to vector<1x128xi32>
    %352 = arith.sitofp %351 : vector<1x128xi32> to vector<1x128xf32>
    %c2_i32_119 = arith.constant 2 : i32
    %353 = vector.broadcast %c2_i32_119 : i32 to vector<1x128xi32>
    %354 = arith.addi %319, %353 : vector<1x128xi32>
    %c0_i32_120 = arith.constant 0 : i32
    %355 = vector.broadcast %c0_i32_120 : i32 to vector<1x128xi32>
    %356 = arith.cmpi sge, %354, %355 : vector<1x128xi32>
    %c2_i32_121 = arith.constant 2 : i32
    %357 = vector.broadcast %c2_i32_121 : i32 to vector<1x128xi32>
    %358 = arith.addi %319, %357 : vector<1x128xi32>
    %c64_i32_122 = arith.constant 64 : i32
    %359 = vector.broadcast %c64_i32_122 : i32 to vector<1x128xi32>
    %360 = arith.cmpi slt, %358, %359 : vector<1x128xi32>
    %361 = arith.andi %356, %360 : vector<1x128xi1>
    %362 = arith.extui %361 : vector<1x128xi1> to vector<1x128xi32>
    %363 = arith.sitofp %362 : vector<1x128xi32> to vector<1x128xf32>
    %c0_123 = arith.constant 0 : index
    %c32 = arith.constant 32 : index
    %364 = vector.load %arg1[%c0_123, %c32] : memref<32x160xf32, #tpu.memory_space<vmem>>, vector<32x32xf32>
    %cst_124 = arith.constant dense<0.000000e+00> : vector<32x128xf32>
    %365 = tpu.matmul %364, %302, %cst_124 {dimension_numbers = #tpu.dot_dimension_numbers<[1], [0], [0], [1], [0, 0, 1, 1], [], []>} : vector<32x32xf32>, vector<32x128xf32>, vector<32x128xf32> -> vector<32x128xf32>
    %c0_125 = arith.constant 0 : index
    %c1_126 = arith.constant 1 : index
    %366 = vector.load %arg2[%c0_125, %c1_126] : memref<32x5xf32, #tpu.memory_space<vmem>>, vector<32x1xf32>
    %367 = vector.broadcast %366 : vector<32x1xf32> to vector<32x128xf32>
    %368 = arith.addf %365, %367 : vector<32x128xf32>
    %c0_127 = arith.constant 0 : index
    %c5 = arith.constant 5 : index
    %369 = vector.load %arg5[%c0_127, %c5] : memref<32x25xf32, #tpu.memory_space<vmem>>, vector<32x1xf32>
    %c0_128 = arith.constant 0 : index
    %c5_129 = arith.constant 5 : index
    %370 = vector.load %arg6[%c0_128, %c5_129] : memref<32x25xf32, #tpu.memory_space<vmem>>, vector<32x1xf32>
    %cst_130 = arith.constant dense<0.000000e+00> : vector<32xf32>
    %371 = vector.multi_reduction <add>, %368, %cst_130 [1] : vector<32x128xf32> to vector<32xf32>
    %372 = vector.shape_cast %371 : vector<32xf32> to vector<32x1xf32>
    %cst_131 = arith.constant 7.812500e-03 : f32
    %373 = vector.broadcast %cst_131 : f32 to vector<32x1xf32>
    %374 = arith.mulf %372, %373 : vector<32x1xf32>
    %375 = vector.broadcast %374 : vector<32x1xf32> to vector<32x128xf32>
    %376 = arith.subf %368, %375 : vector<32x128xf32>
    %377 = arith.mulf %376, %376 : vector<32x128xf32>
    %cst_132 = arith.constant dense<0.000000e+00> : vector<32xf32>
    %378 = vector.multi_reduction <add>, %377, %cst_132 [1] : vector<32x128xf32> to vector<32xf32>
    %379 = vector.shape_cast %378 : vector<32xf32> to vector<32x1xf32>
    %cst_133 = arith.constant 7.812500e-03 : f32
    %380 = vector.broadcast %cst_133 : f32 to vector<32x1xf32>
    %381 = arith.mulf %379, %380 : vector<32x1xf32>
    %cst_134 = arith.constant 9.99999974E-6 : f32
    %382 = vector.broadcast %cst_134 : f32 to vector<32x1xf32>
    %383 = arith.addf %381, %382 : vector<32x1xf32>
    %384 = math.rsqrt %383 : vector<32x1xf32>
    %385 = vector.broadcast %384 : vector<32x1xf32> to vector<32x128xf32>
    %386 = arith.mulf %376, %385 : vector<32x128xf32>
    %387 = vector.broadcast %369 : vector<32x1xf32> to vector<32x128xf32>
    %388 = arith.mulf %387, %386 : vector<32x128xf32>
    %389 = vector.broadcast %370 : vector<32x1xf32> to vector<32x128xf32>
    %390 = arith.addf %388, %389 : vector<32x128xf32>
    %c0_135 = arith.constant 0 : index
    %c640 = arith.constant 640 : index
    %391 = vector.load %arg3[%c0_135, %c640] : memref<32x3200xf32, #tpu.memory_space<vmem>>, vector<32x160xf32>
    %c0_136 = arith.constant 0 : index
    %c4_137 = arith.constant 4 : index
    %392 = vector.load %arg4[%c0_136, %c4_137] : memref<32x20xf32, #tpu.memory_space<vmem>>, vector<32x1xf32>
    %cst_138 = arith.constant 0.000000e+00 : f32
    %393 = vector.broadcast %cst_138 : f32 to vector<32x2xf32>
    %394 = vector.extract_strided_slice %390 {offsets = [0, 0], sizes = [32, 126], strides = [1, 1]} : vector<32x128xf32> to vector<32x126xf32>
    %395 = tpu.concatenate %393, %394 in 1 : vector<32x2xf32>, vector<32x126xf32> -> vector<32x128xf32>
    %396 = vector.broadcast %330 : vector<1x128xf32> to vector<32x128xf32>
    %397 = arith.mulf %395, %396 : vector<32x128xf32>
    %cst_139 = arith.constant 0.000000e+00 : f32
    %398 = vector.broadcast %cst_139 : f32 to vector<32x1xf32>
    %399 = vector.extract_strided_slice %390 {offsets = [0, 0], sizes = [32, 127], strides = [1, 1]} : vector<32x128xf32> to vector<32x127xf32>
    %400 = tpu.concatenate %398, %399 in 1 : vector<32x1xf32>, vector<32x127xf32> -> vector<32x128xf32>
    %401 = vector.broadcast %341 : vector<1x128xf32> to vector<32x128xf32>
    %402 = arith.mulf %400, %401 : vector<32x128xf32>
    %cst_140 = arith.constant 0.000000e+00 : f32
    %403 = vector.broadcast %cst_140 : f32 to vector<32x1xf32>
    %404 = vector.extract_strided_slice %390 {offsets = [0, 1], sizes = [32, 127], strides = [1, 1]} : vector<32x128xf32> to vector<32x127xf32>
    %405 = tpu.concatenate %404, %403 in 1 : vector<32x127xf32>, vector<32x1xf32> -> vector<32x128xf32>
    %406 = vector.broadcast %352 : vector<1x128xf32> to vector<32x128xf32>
    %407 = arith.mulf %405, %406 : vector<32x128xf32>
    %cst_141 = arith.constant 0.000000e+00 : f32
    %408 = vector.broadcast %cst_141 : f32 to vector<32x2xf32>
    %409 = vector.extract_strided_slice %390 {offsets = [0, 2], sizes = [32, 126], strides = [1, 1]} : vector<32x128xf32> to vector<32x126xf32>
    %410 = tpu.concatenate %409, %408 in 1 : vector<32x126xf32>, vector<32x2xf32> -> vector<32x128xf32>
    %411 = vector.broadcast %363 : vector<1x128xf32> to vector<32x128xf32>
    %412 = arith.mulf %410, %411 : vector<32x128xf32>
    %413 = tpu.concatenate %397, %402, %390, %407, %412 in 0 : vector<32x128xf32>, vector<32x128xf32>, vector<32x128xf32>, vector<32x128xf32>, vector<32x128xf32> -> vector<160x128xf32>
    %cst_142 = arith.constant dense<0.000000e+00> : vector<32x128xf32>
    %414 = tpu.matmul %391, %413, %cst_142 {dimension_numbers = #tpu.dot_dimension_numbers<[1], [0], [0], [1], [0, 0, 1, 1], [], []>} : vector<32x160xf32>, vector<160x128xf32>, vector<32x128xf32> -> vector<32x128xf32>
    %415 = vector.broadcast %392 : vector<32x1xf32> to vector<32x128xf32>
    %416 = arith.addf %414, %415 : vector<32x128xf32>
    %cst_143 = arith.constant 0.000000e+00 : f32
    %417 = vector.broadcast %cst_143 : f32 to vector<32x128xf32>
    %418 = arith.maximumf %416, %417 : vector<32x128xf32>
    %c0_144 = arith.constant 0 : index
    %c6 = arith.constant 6 : index
    %419 = vector.load %arg5[%c0_144, %c6] : memref<32x25xf32, #tpu.memory_space<vmem>>, vector<32x1xf32>
    %c0_145 = arith.constant 0 : index
    %c6_146 = arith.constant 6 : index
    %420 = vector.load %arg6[%c0_145, %c6_146] : memref<32x25xf32, #tpu.memory_space<vmem>>, vector<32x1xf32>
    %cst_147 = arith.constant dense<0.000000e+00> : vector<32xf32>
    %421 = vector.multi_reduction <add>, %418, %cst_147 [1] : vector<32x128xf32> to vector<32xf32>
    %422 = vector.shape_cast %421 : vector<32xf32> to vector<32x1xf32>
    %cst_148 = arith.constant 7.812500e-03 : f32
    %423 = vector.broadcast %cst_148 : f32 to vector<32x1xf32>
    %424 = arith.mulf %422, %423 : vector<32x1xf32>
    %425 = vector.broadcast %424 : vector<32x1xf32> to vector<32x128xf32>
    %426 = arith.subf %418, %425 : vector<32x128xf32>
    %427 = arith.mulf %426, %426 : vector<32x128xf32>
    %cst_149 = arith.constant dense<0.000000e+00> : vector<32xf32>
    %428 = vector.multi_reduction <add>, %427, %cst_149 [1] : vector<32x128xf32> to vector<32xf32>
    %429 = vector.shape_cast %428 : vector<32xf32> to vector<32x1xf32>
    %cst_150 = arith.constant 7.812500e-03 : f32
    %430 = vector.broadcast %cst_150 : f32 to vector<32x1xf32>
    %431 = arith.mulf %429, %430 : vector<32x1xf32>
    %cst_151 = arith.constant 9.99999974E-6 : f32
    %432 = vector.broadcast %cst_151 : f32 to vector<32x1xf32>
    %433 = arith.addf %431, %432 : vector<32x1xf32>
    %434 = math.rsqrt %433 : vector<32x1xf32>
    %435 = vector.broadcast %434 : vector<32x1xf32> to vector<32x128xf32>
    %436 = arith.mulf %426, %435 : vector<32x128xf32>
    %437 = vector.broadcast %419 : vector<32x1xf32> to vector<32x128xf32>
    %438 = arith.mulf %437, %436 : vector<32x128xf32>
    %439 = vector.broadcast %420 : vector<32x1xf32> to vector<32x128xf32>
    %440 = arith.addf %438, %439 : vector<32x128xf32>
    %c0_152 = arith.constant 0 : index
    %c800 = arith.constant 800 : index
    %441 = vector.load %arg3[%c0_152, %c800] : memref<32x3200xf32, #tpu.memory_space<vmem>>, vector<32x160xf32>
    %c0_153 = arith.constant 0 : index
    %c5_154 = arith.constant 5 : index
    %442 = vector.load %arg4[%c0_153, %c5_154] : memref<32x20xf32, #tpu.memory_space<vmem>>, vector<32x1xf32>
    %cst_155 = arith.constant 0.000000e+00 : f32
    %443 = vector.broadcast %cst_155 : f32 to vector<32x2xf32>
    %444 = vector.extract_strided_slice %440 {offsets = [0, 0], sizes = [32, 126], strides = [1, 1]} : vector<32x128xf32> to vector<32x126xf32>
    %445 = tpu.concatenate %443, %444 in 1 : vector<32x2xf32>, vector<32x126xf32> -> vector<32x128xf32>
    %446 = vector.broadcast %330 : vector<1x128xf32> to vector<32x128xf32>
    %447 = arith.mulf %445, %446 : vector<32x128xf32>
    %cst_156 = arith.constant 0.000000e+00 : f32
    %448 = vector.broadcast %cst_156 : f32 to vector<32x1xf32>
    %449 = vector.extract_strided_slice %440 {offsets = [0, 0], sizes = [32, 127], strides = [1, 1]} : vector<32x128xf32> to vector<32x127xf32>
    %450 = tpu.concatenate %448, %449 in 1 : vector<32x1xf32>, vector<32x127xf32> -> vector<32x128xf32>
    %451 = vector.broadcast %341 : vector<1x128xf32> to vector<32x128xf32>
    %452 = arith.mulf %450, %451 : vector<32x128xf32>
    %cst_157 = arith.constant 0.000000e+00 : f32
    %453 = vector.broadcast %cst_157 : f32 to vector<32x1xf32>
    %454 = vector.extract_strided_slice %440 {offsets = [0, 1], sizes = [32, 127], strides = [1, 1]} : vector<32x128xf32> to vector<32x127xf32>
    %455 = tpu.concatenate %454, %453 in 1 : vector<32x127xf32>, vector<32x1xf32> -> vector<32x128xf32>
    %456 = vector.broadcast %352 : vector<1x128xf32> to vector<32x128xf32>
    %457 = arith.mulf %455, %456 : vector<32x128xf32>
    %cst_158 = arith.constant 0.000000e+00 : f32
    %458 = vector.broadcast %cst_158 : f32 to vector<32x2xf32>
    %459 = vector.extract_strided_slice %440 {offsets = [0, 2], sizes = [32, 126], strides = [1, 1]} : vector<32x128xf32> to vector<32x126xf32>
    %460 = tpu.concatenate %459, %458 in 1 : vector<32x126xf32>, vector<32x2xf32> -> vector<32x128xf32>
    %461 = vector.broadcast %363 : vector<1x128xf32> to vector<32x128xf32>
    %462 = arith.mulf %460, %461 : vector<32x128xf32>
    %463 = tpu.concatenate %447, %452, %440, %457, %462 in 0 : vector<32x128xf32>, vector<32x128xf32>, vector<32x128xf32>, vector<32x128xf32>, vector<32x128xf32> -> vector<160x128xf32>
    %cst_159 = arith.constant dense<0.000000e+00> : vector<32x128xf32>
    %464 = tpu.matmul %441, %463, %cst_159 {dimension_numbers = #tpu.dot_dimension_numbers<[1], [0], [0], [1], [0, 0, 1, 1], [], []>} : vector<32x160xf32>, vector<160x128xf32>, vector<32x128xf32> -> vector<32x128xf32>
    %465 = vector.broadcast %442 : vector<32x1xf32> to vector<32x128xf32>
    %466 = arith.addf %464, %465 : vector<32x128xf32>
    %cst_160 = arith.constant 0.000000e+00 : f32
    %467 = vector.broadcast %cst_160 : f32 to vector<32x128xf32>
    %468 = arith.maximumf %466, %467 : vector<32x128xf32>
    %c0_161 = arith.constant 0 : index
    %c7 = arith.constant 7 : index
    %469 = vector.load %arg5[%c0_161, %c7] : memref<32x25xf32, #tpu.memory_space<vmem>>, vector<32x1xf32>
    %c0_162 = arith.constant 0 : index
    %c7_163 = arith.constant 7 : index
    %470 = vector.load %arg6[%c0_162, %c7_163] : memref<32x25xf32, #tpu.memory_space<vmem>>, vector<32x1xf32>
    %cst_164 = arith.constant dense<0.000000e+00> : vector<32xf32>
    %471 = vector.multi_reduction <add>, %468, %cst_164 [1] : vector<32x128xf32> to vector<32xf32>
    %472 = vector.shape_cast %471 : vector<32xf32> to vector<32x1xf32>
    %cst_165 = arith.constant 7.812500e-03 : f32
    %473 = vector.broadcast %cst_165 : f32 to vector<32x1xf32>
    %474 = arith.mulf %472, %473 : vector<32x1xf32>
    %475 = vector.broadcast %474 : vector<32x1xf32> to vector<32x128xf32>
    %476 = arith.subf %468, %475 : vector<32x128xf32>
    %477 = arith.mulf %476, %476 : vector<32x128xf32>
    %cst_166 = arith.constant dense<0.000000e+00> : vector<32xf32>
    %478 = vector.multi_reduction <add>, %477, %cst_166 [1] : vector<32x128xf32> to vector<32xf32>
    %479 = vector.shape_cast %478 : vector<32xf32> to vector<32x1xf32>
    %cst_167 = arith.constant 7.812500e-03 : f32
    %480 = vector.broadcast %cst_167 : f32 to vector<32x1xf32>
    %481 = arith.mulf %479, %480 : vector<32x1xf32>
    %cst_168 = arith.constant 9.99999974E-6 : f32
    %482 = vector.broadcast %cst_168 : f32 to vector<32x1xf32>
    %483 = arith.addf %481, %482 : vector<32x1xf32>
    %484 = math.rsqrt %483 : vector<32x1xf32>
    %485 = vector.broadcast %484 : vector<32x1xf32> to vector<32x128xf32>
    %486 = arith.mulf %476, %485 : vector<32x128xf32>
    %487 = vector.broadcast %469 : vector<32x1xf32> to vector<32x128xf32>
    %488 = arith.mulf %487, %486 : vector<32x128xf32>
    %489 = vector.broadcast %470 : vector<32x1xf32> to vector<32x128xf32>
    %490 = arith.addf %488, %489 : vector<32x128xf32>
    %491 = arith.addf %490, %390 : vector<32x128xf32>
    %c0_169 = arith.constant 0 : index
    %c960 = arith.constant 960 : index
    %492 = vector.load %arg3[%c0_169, %c960] : memref<32x3200xf32, #tpu.memory_space<vmem>>, vector<32x160xf32>
    %c0_170 = arith.constant 0 : index
    %c6_171 = arith.constant 6 : index
    %493 = vector.load %arg4[%c0_170, %c6_171] : memref<32x20xf32, #tpu.memory_space<vmem>>, vector<32x1xf32>
    %cst_172 = arith.constant 0.000000e+00 : f32
    %494 = vector.broadcast %cst_172 : f32 to vector<32x2xf32>
    %495 = vector.extract_strided_slice %491 {offsets = [0, 0], sizes = [32, 126], strides = [1, 1]} : vector<32x128xf32> to vector<32x126xf32>
    %496 = tpu.concatenate %494, %495 in 1 : vector<32x2xf32>, vector<32x126xf32> -> vector<32x128xf32>
    %497 = vector.broadcast %330 : vector<1x128xf32> to vector<32x128xf32>
    %498 = arith.mulf %496, %497 : vector<32x128xf32>
    %cst_173 = arith.constant 0.000000e+00 : f32
    %499 = vector.broadcast %cst_173 : f32 to vector<32x1xf32>
    %500 = vector.extract_strided_slice %491 {offsets = [0, 0], sizes = [32, 127], strides = [1, 1]} : vector<32x128xf32> to vector<32x127xf32>
    %501 = tpu.concatenate %499, %500 in 1 : vector<32x1xf32>, vector<32x127xf32> -> vector<32x128xf32>
    %502 = vector.broadcast %341 : vector<1x128xf32> to vector<32x128xf32>
    %503 = arith.mulf %501, %502 : vector<32x128xf32>
    %cst_174 = arith.constant 0.000000e+00 : f32
    %504 = vector.broadcast %cst_174 : f32 to vector<32x1xf32>
    %505 = vector.extract_strided_slice %491 {offsets = [0, 1], sizes = [32, 127], strides = [1, 1]} : vector<32x128xf32> to vector<32x127xf32>
    %506 = tpu.concatenate %505, %504 in 1 : vector<32x127xf32>, vector<32x1xf32> -> vector<32x128xf32>
    %507 = vector.broadcast %352 : vector<1x128xf32> to vector<32x128xf32>
    %508 = arith.mulf %506, %507 : vector<32x128xf32>
    %cst_175 = arith.constant 0.000000e+00 : f32
    %509 = vector.broadcast %cst_175 : f32 to vector<32x2xf32>
    %510 = vector.extract_strided_slice %491 {offsets = [0, 2], sizes = [32, 126], strides = [1, 1]} : vector<32x128xf32> to vector<32x126xf32>
    %511 = tpu.concatenate %510, %509 in 1 : vector<32x126xf32>, vector<32x2xf32> -> vector<32x128xf32>
    %512 = vector.broadcast %363 : vector<1x128xf32> to vector<32x128xf32>
    %513 = arith.mulf %511, %512 : vector<32x128xf32>
    %514 = tpu.concatenate %498, %503, %491, %508, %513 in 0 : vector<32x128xf32>, vector<32x128xf32>, vector<32x128xf32>, vector<32x128xf32>, vector<32x128xf32> -> vector<160x128xf32>
    %cst_176 = arith.constant dense<0.000000e+00> : vector<32x128xf32>
    %515 = tpu.matmul %492, %514, %cst_176 {dimension_numbers = #tpu.dot_dimension_numbers<[1], [0], [0], [1], [0, 0, 1, 1], [], []>} : vector<32x160xf32>, vector<160x128xf32>, vector<32x128xf32> -> vector<32x128xf32>
    %516 = vector.broadcast %493 : vector<32x1xf32> to vector<32x128xf32>
    %517 = arith.addf %515, %516 : vector<32x128xf32>
    %cst_177 = arith.constant 0.000000e+00 : f32
    %518 = vector.broadcast %cst_177 : f32 to vector<32x128xf32>
    %519 = arith.maximumf %517, %518 : vector<32x128xf32>
    %c0_178 = arith.constant 0 : index
    %c8 = arith.constant 8 : index
    %520 = vector.load %arg5[%c0_178, %c8] : memref<32x25xf32, #tpu.memory_space<vmem>>, vector<32x1xf32>
    %c0_179 = arith.constant 0 : index
    %c8_180 = arith.constant 8 : index
    %521 = vector.load %arg6[%c0_179, %c8_180] : memref<32x25xf32, #tpu.memory_space<vmem>>, vector<32x1xf32>
    %cst_181 = arith.constant dense<0.000000e+00> : vector<32xf32>
    %522 = vector.multi_reduction <add>, %519, %cst_181 [1] : vector<32x128xf32> to vector<32xf32>
    %523 = vector.shape_cast %522 : vector<32xf32> to vector<32x1xf32>
    %cst_182 = arith.constant 7.812500e-03 : f32
    %524 = vector.broadcast %cst_182 : f32 to vector<32x1xf32>
    %525 = arith.mulf %523, %524 : vector<32x1xf32>
    %526 = vector.broadcast %525 : vector<32x1xf32> to vector<32x128xf32>
    %527 = arith.subf %519, %526 : vector<32x128xf32>
    %528 = arith.mulf %527, %527 : vector<32x128xf32>
    %cst_183 = arith.constant dense<0.000000e+00> : vector<32xf32>
    %529 = vector.multi_reduction <add>, %528, %cst_183 [1] : vector<32x128xf32> to vector<32xf32>
    %530 = vector.shape_cast %529 : vector<32xf32> to vector<32x1xf32>
    %cst_184 = arith.constant 7.812500e-03 : f32
    %531 = vector.broadcast %cst_184 : f32 to vector<32x1xf32>
    %532 = arith.mulf %530, %531 : vector<32x1xf32>
    %cst_185 = arith.constant 9.99999974E-6 : f32
    %533 = vector.broadcast %cst_185 : f32 to vector<32x1xf32>
    %534 = arith.addf %532, %533 : vector<32x1xf32>
    %535 = math.rsqrt %534 : vector<32x1xf32>
    %536 = vector.broadcast %535 : vector<32x1xf32> to vector<32x128xf32>
    %537 = arith.mulf %527, %536 : vector<32x128xf32>
    %538 = vector.broadcast %520 : vector<32x1xf32> to vector<32x128xf32>
    %539 = arith.mulf %538, %537 : vector<32x128xf32>
    %540 = vector.broadcast %521 : vector<32x1xf32> to vector<32x128xf32>
    %541 = arith.addf %539, %540 : vector<32x128xf32>
    %c0_186 = arith.constant 0 : index
    %c1120 = arith.constant 1120 : index
    %542 = vector.load %arg3[%c0_186, %c1120] : memref<32x3200xf32, #tpu.memory_space<vmem>>, vector<32x160xf32>
    %c0_187 = arith.constant 0 : index
    %c7_188 = arith.constant 7 : index
    %543 = vector.load %arg4[%c0_187, %c7_188] : memref<32x20xf32, #tpu.memory_space<vmem>>, vector<32x1xf32>
    %cst_189 = arith.constant 0.000000e+00 : f32
    %544 = vector.broadcast %cst_189 : f32 to vector<32x2xf32>
    %545 = vector.extract_strided_slice %541 {offsets = [0, 0], sizes = [32, 126], strides = [1, 1]} : vector<32x128xf32> to vector<32x126xf32>
    %546 = tpu.concatenate %544, %545 in 1 : vector<32x2xf32>, vector<32x126xf32> -> vector<32x128xf32>
    %547 = vector.broadcast %330 : vector<1x128xf32> to vector<32x128xf32>
    %548 = arith.mulf %546, %547 : vector<32x128xf32>
    %cst_190 = arith.constant 0.000000e+00 : f32
    %549 = vector.broadcast %cst_190 : f32 to vector<32x1xf32>
    %550 = vector.extract_strided_slice %541 {offsets = [0, 0], sizes = [32, 127], strides = [1, 1]} : vector<32x128xf32> to vector<32x127xf32>
    %551 = tpu.concatenate %549, %550 in 1 : vector<32x1xf32>, vector<32x127xf32> -> vector<32x128xf32>
    %552 = vector.broadcast %341 : vector<1x128xf32> to vector<32x128xf32>
    %553 = arith.mulf %551, %552 : vector<32x128xf32>
    %cst_191 = arith.constant 0.000000e+00 : f32
    %554 = vector.broadcast %cst_191 : f32 to vector<32x1xf32>
    %555 = vector.extract_strided_slice %541 {offsets = [0, 1], sizes = [32, 127], strides = [1, 1]} : vector<32x128xf32> to vector<32x127xf32>
    %556 = tpu.concatenate %555, %554 in 1 : vector<32x127xf32>, vector<32x1xf32> -> vector<32x128xf32>
    %557 = vector.broadcast %352 : vector<1x128xf32> to vector<32x128xf32>
    %558 = arith.mulf %556, %557 : vector<32x128xf32>
    %cst_192 = arith.constant 0.000000e+00 : f32
    %559 = vector.broadcast %cst_192 : f32 to vector<32x2xf32>
    %560 = vector.extract_strided_slice %541 {offsets = [0, 2], sizes = [32, 126], strides = [1, 1]} : vector<32x128xf32> to vector<32x126xf32>
    %561 = tpu.concatenate %560, %559 in 1 : vector<32x126xf32>, vector<32x2xf32> -> vector<32x128xf32>
    %562 = vector.broadcast %363 : vector<1x128xf32> to vector<32x128xf32>
    %563 = arith.mulf %561, %562 : vector<32x128xf32>
    %564 = tpu.concatenate %548, %553, %541, %558, %563 in 0 : vector<32x128xf32>, vector<32x128xf32>, vector<32x128xf32>, vector<32x128xf32>, vector<32x128xf32> -> vector<160x128xf32>
    %cst_193 = arith.constant dense<0.000000e+00> : vector<32x128xf32>
    %565 = tpu.matmul %542, %564, %cst_193 {dimension_numbers = #tpu.dot_dimension_numbers<[1], [0], [0], [1], [0, 0, 1, 1], [], []>} : vector<32x160xf32>, vector<160x128xf32>, vector<32x128xf32> -> vector<32x128xf32>
    %566 = vector.broadcast %543 : vector<32x1xf32> to vector<32x128xf32>
    %567 = arith.addf %565, %566 : vector<32x128xf32>
    %cst_194 = arith.constant 0.000000e+00 : f32
    %568 = vector.broadcast %cst_194 : f32 to vector<32x128xf32>
    %569 = arith.maximumf %567, %568 : vector<32x128xf32>
    %c0_195 = arith.constant 0 : index
    %c9 = arith.constant 9 : index
    %570 = vector.load %arg5[%c0_195, %c9] : memref<32x25xf32, #tpu.memory_space<vmem>>, vector<32x1xf32>
    %c0_196 = arith.constant 0 : index
    %c9_197 = arith.constant 9 : index
    %571 = vector.load %arg6[%c0_196, %c9_197] : memref<32x25xf32, #tpu.memory_space<vmem>>, vector<32x1xf32>
    %cst_198 = arith.constant dense<0.000000e+00> : vector<32xf32>
    %572 = vector.multi_reduction <add>, %569, %cst_198 [1] : vector<32x128xf32> to vector<32xf32>
    %573 = vector.shape_cast %572 : vector<32xf32> to vector<32x1xf32>
    %cst_199 = arith.constant 7.812500e-03 : f32
    %574 = vector.broadcast %cst_199 : f32 to vector<32x1xf32>
    %575 = arith.mulf %573, %574 : vector<32x1xf32>
    %576 = vector.broadcast %575 : vector<32x1xf32> to vector<32x128xf32>
    %577 = arith.subf %569, %576 : vector<32x128xf32>
    %578 = arith.mulf %577, %577 : vector<32x128xf32>
    %cst_200 = arith.constant dense<0.000000e+00> : vector<32xf32>
    %579 = vector.multi_reduction <add>, %578, %cst_200 [1] : vector<32x128xf32> to vector<32xf32>
    %580 = vector.shape_cast %579 : vector<32xf32> to vector<32x1xf32>
    %cst_201 = arith.constant 7.812500e-03 : f32
    %581 = vector.broadcast %cst_201 : f32 to vector<32x1xf32>
    %582 = arith.mulf %580, %581 : vector<32x1xf32>
    %cst_202 = arith.constant 9.99999974E-6 : f32
    %583 = vector.broadcast %cst_202 : f32 to vector<32x1xf32>
    %584 = arith.addf %582, %583 : vector<32x1xf32>
    %585 = math.rsqrt %584 : vector<32x1xf32>
    %586 = vector.broadcast %585 : vector<32x1xf32> to vector<32x128xf32>
    %587 = arith.mulf %577, %586 : vector<32x128xf32>
    %588 = vector.broadcast %570 : vector<32x1xf32> to vector<32x128xf32>
    %589 = arith.mulf %588, %587 : vector<32x128xf32>
    %590 = vector.broadcast %571 : vector<32x1xf32> to vector<32x128xf32>
    %591 = arith.addf %589, %590 : vector<32x128xf32>
    %592 = arith.addf %591, %491 : vector<32x128xf32>
    %cst_203 = arith.constant 0.000000e+00 : f32
    %593 = vector.broadcast %cst_203 : f32 to vector<32x1xf32>
    %594 = vector.extract_strided_slice %592 {offsets = [0, 1], sizes = [32, 127], strides = [1, 1]} : vector<32x128xf32> to vector<32x127xf32>
    %595 = tpu.concatenate %594, %593 in 1 : vector<32x127xf32>, vector<32x1xf32> -> vector<32x128xf32>
    %596 = arith.maximumf %592, %595 : vector<32x128xf32>
    %597 = tpu.iota {dimensions = array<i32: 0>} : vector<128x64xi32>
    %598 = tpu.iota {dimensions = array<i32: 1>} : vector<128x64xi32>
    %c2_i32_204 = arith.constant 2 : i32
    %599 = vector.broadcast %c2_i32_204 : i32 to vector<128x64xi32>
    %600 = arith.muli %599, %598 : vector<128x64xi32>
    %601 = arith.cmpi eq, %597, %600 : vector<128x64xi32>
    %602 = arith.extui %601 : vector<128x64xi1> to vector<128x64xi32>
    %603 = arith.sitofp %602 : vector<128x64xi32> to vector<128x64xf32>
    %cst_205 = arith.constant dense<0.000000e+00> : vector<32x64xf32>
    %604 = tpu.matmul %596, %603, %cst_205 {dimension_numbers = #tpu.dot_dimension_numbers<[1], [0], [0], [1], [0, 0, 1, 1], [], []>} : vector<32x128xf32>, vector<128x64xf32>, vector<32x64xf32> -> vector<32x64xf32>
    %605 = tpu.iota {dimensions = array<i32: 1>} : vector<1x64xi32>
    %c32_i32 = arith.constant 32 : i32
    %c0_i32_206 = arith.constant 0 : i32
    %606 = arith.cmpi eq, %c32_i32, %c0_i32_206 : i32
    %c1_i32_207 = arith.constant 1 : i32
    %607 = arith.select %606, %c1_i32_207, %c32_i32 : i32
    %608 = vector.broadcast %607 : i32 to vector<1x64xi32>
    %609 = arith.remsi %605, %608 : vector<1x64xi32>
    %c0_i32_208 = arith.constant 0 : i32
    %610 = vector.broadcast %c0_i32_208 : i32 to vector<1x64xi32>
    %611 = arith.cmpi ne, %609, %610 : vector<1x64xi32>
    %c0_i32_209 = arith.constant 0 : i32
    %612 = vector.broadcast %c0_i32_209 : i32 to vector<1x64xi32>
    %613 = arith.cmpi slt, %609, %612 : vector<1x64xi32>
    %c0_i32_210 = arith.constant 0 : i32
    %614 = arith.cmpi slt, %607, %c0_i32_210 : i32
    %615 = vector.broadcast %614 : i1 to vector<1x64xi1>
    %616 = vector.broadcast %615 : vector<1x64xi1> to vector<1x64xi1>
    %617 = arith.xori %613, %616 : vector<1x64xi1>
    %618 = arith.andi %617, %611 : vector<1x64xi1>
    %619 = vector.broadcast %607 : i32 to vector<1x64xi32>
    %620 = arith.addi %609, %619 : vector<1x64xi32>
    %621 = arith.select %618, %620, %609 : vector<1x64xi1>, vector<1x64xi32>
    %c-2_i32_211 = arith.constant -2 : i32
    %622 = vector.broadcast %c-2_i32_211 : i32 to vector<1x64xi32>
    %623 = arith.addi %621, %622 : vector<1x64xi32>
    %c0_i32_212 = arith.constant 0 : i32
    %624 = vector.broadcast %c0_i32_212 : i32 to vector<1x64xi32>
    %625 = arith.cmpi sge, %623, %624 : vector<1x64xi32>
    %c-2_i32_213 = arith.constant -2 : i32
    %626 = vector.broadcast %c-2_i32_213 : i32 to vector<1x64xi32>
    %627 = arith.addi %621, %626 : vector<1x64xi32>
    %c32_i32_214 = arith.constant 32 : i32
    %628 = vector.broadcast %c32_i32_214 : i32 to vector<1x64xi32>
    %629 = arith.cmpi slt, %627, %628 : vector<1x64xi32>
    %630 = arith.andi %625, %629 : vector<1x64xi1>
    %631 = arith.extui %630 : vector<1x64xi1> to vector<1x64xi32>
    %632 = arith.sitofp %631 : vector<1x64xi32> to vector<1x64xf32>
    %c-1_i32_215 = arith.constant -1 : i32
    %633 = vector.broadcast %c-1_i32_215 : i32 to vector<1x64xi32>
    %634 = arith.addi %621, %633 : vector<1x64xi32>
    %c0_i32_216 = arith.constant 0 : i32
    %635 = vector.broadcast %c0_i32_216 : i32 to vector<1x64xi32>
    %636 = arith.cmpi sge, %634, %635 : vector<1x64xi32>
    %c-1_i32_217 = arith.constant -1 : i32
    %637 = vector.broadcast %c-1_i32_217 : i32 to vector<1x64xi32>
    %638 = arith.addi %621, %637 : vector<1x64xi32>
    %c32_i32_218 = arith.constant 32 : i32
    %639 = vector.broadcast %c32_i32_218 : i32 to vector<1x64xi32>
    %640 = arith.cmpi slt, %638, %639 : vector<1x64xi32>
    %641 = arith.andi %636, %640 : vector<1x64xi1>
    %642 = arith.extui %641 : vector<1x64xi1> to vector<1x64xi32>
    %643 = arith.sitofp %642 : vector<1x64xi32> to vector<1x64xf32>
    %c1_i32_219 = arith.constant 1 : i32
    %644 = vector.broadcast %c1_i32_219 : i32 to vector<1x64xi32>
    %645 = arith.addi %621, %644 : vector<1x64xi32>
    %c0_i32_220 = arith.constant 0 : i32
    %646 = vector.broadcast %c0_i32_220 : i32 to vector<1x64xi32>
    %647 = arith.cmpi sge, %645, %646 : vector<1x64xi32>
    %c1_i32_221 = arith.constant 1 : i32
    %648 = vector.broadcast %c1_i32_221 : i32 to vector<1x64xi32>
    %649 = arith.addi %621, %648 : vector<1x64xi32>
    %c32_i32_222 = arith.constant 32 : i32
    %650 = vector.broadcast %c32_i32_222 : i32 to vector<1x64xi32>
    %651 = arith.cmpi slt, %649, %650 : vector<1x64xi32>
    %652 = arith.andi %647, %651 : vector<1x64xi1>
    %653 = arith.extui %652 : vector<1x64xi1> to vector<1x64xi32>
    %654 = arith.sitofp %653 : vector<1x64xi32> to vector<1x64xf32>
    %c2_i32_223 = arith.constant 2 : i32
    %655 = vector.broadcast %c2_i32_223 : i32 to vector<1x64xi32>
    %656 = arith.addi %621, %655 : vector<1x64xi32>
    %c0_i32_224 = arith.constant 0 : i32
    %657 = vector.broadcast %c0_i32_224 : i32 to vector<1x64xi32>
    %658 = arith.cmpi sge, %656, %657 : vector<1x64xi32>
    %c2_i32_225 = arith.constant 2 : i32
    %659 = vector.broadcast %c2_i32_225 : i32 to vector<1x64xi32>
    %660 = arith.addi %621, %659 : vector<1x64xi32>
    %c32_i32_226 = arith.constant 32 : i32
    %661 = vector.broadcast %c32_i32_226 : i32 to vector<1x64xi32>
    %662 = arith.cmpi slt, %660, %661 : vector<1x64xi32>
    %663 = arith.andi %658, %662 : vector<1x64xi1>
    %664 = arith.extui %663 : vector<1x64xi1> to vector<1x64xi32>
    %665 = arith.sitofp %664 : vector<1x64xi32> to vector<1x64xf32>
    %c0_227 = arith.constant 0 : index
    %c64 = arith.constant 64 : index
    %666 = vector.load %arg1[%c0_227, %c64] : memref<32x160xf32, #tpu.memory_space<vmem>>, vector<32x32xf32>
    %cst_228 = arith.constant dense<0.000000e+00> : vector<32x64xf32>
    %667 = tpu.matmul %666, %604, %cst_228 {dimension_numbers = #tpu.dot_dimension_numbers<[1], [0], [0], [1], [0, 0, 1, 1], [], []>} : vector<32x32xf32>, vector<32x64xf32>, vector<32x64xf32> -> vector<32x64xf32>
    %c0_229 = arith.constant 0 : index
    %c2_230 = arith.constant 2 : index
    %668 = vector.load %arg2[%c0_229, %c2_230] : memref<32x5xf32, #tpu.memory_space<vmem>>, vector<32x1xf32>
    %669 = vector.broadcast %668 : vector<32x1xf32> to vector<32x64xf32>
    %670 = arith.addf %667, %669 : vector<32x64xf32>
    %c0_231 = arith.constant 0 : index
    %c10 = arith.constant 10 : index
    %671 = vector.load %arg5[%c0_231, %c10] : memref<32x25xf32, #tpu.memory_space<vmem>>, vector<32x1xf32>
    %c0_232 = arith.constant 0 : index
    %c10_233 = arith.constant 10 : index
    %672 = vector.load %arg6[%c0_232, %c10_233] : memref<32x25xf32, #tpu.memory_space<vmem>>, vector<32x1xf32>
    %cst_234 = arith.constant dense<0.000000e+00> : vector<32xf32>
    %673 = vector.multi_reduction <add>, %670, %cst_234 [1] : vector<32x64xf32> to vector<32xf32>
    %674 = vector.shape_cast %673 : vector<32xf32> to vector<32x1xf32>
    %cst_235 = arith.constant 1.562500e-02 : f32
    %675 = vector.broadcast %cst_235 : f32 to vector<32x1xf32>
    %676 = arith.mulf %674, %675 : vector<32x1xf32>
    %677 = vector.broadcast %676 : vector<32x1xf32> to vector<32x64xf32>
    %678 = arith.subf %670, %677 : vector<32x64xf32>
    %679 = arith.mulf %678, %678 : vector<32x64xf32>
    %cst_236 = arith.constant dense<0.000000e+00> : vector<32xf32>
    %680 = vector.multi_reduction <add>, %679, %cst_236 [1] : vector<32x64xf32> to vector<32xf32>
    %681 = vector.shape_cast %680 : vector<32xf32> to vector<32x1xf32>
    %cst_237 = arith.constant 1.562500e-02 : f32
    %682 = vector.broadcast %cst_237 : f32 to vector<32x1xf32>
    %683 = arith.mulf %681, %682 : vector<32x1xf32>
    %cst_238 = arith.constant 9.99999974E-6 : f32
    %684 = vector.broadcast %cst_238 : f32 to vector<32x1xf32>
    %685 = arith.addf %683, %684 : vector<32x1xf32>
    %686 = math.rsqrt %685 : vector<32x1xf32>
    %687 = vector.broadcast %686 : vector<32x1xf32> to vector<32x64xf32>
    %688 = arith.mulf %678, %687 : vector<32x64xf32>
    %689 = vector.broadcast %671 : vector<32x1xf32> to vector<32x64xf32>
    %690 = arith.mulf %689, %688 : vector<32x64xf32>
    %691 = vector.broadcast %672 : vector<32x1xf32> to vector<32x64xf32>
    %692 = arith.addf %690, %691 : vector<32x64xf32>
    %c0_239 = arith.constant 0 : index
    %c1280 = arith.constant 1280 : index
    %693 = vector.load %arg3[%c0_239, %c1280] : memref<32x3200xf32, #tpu.memory_space<vmem>>, vector<32x160xf32>
    %c0_240 = arith.constant 0 : index
    %c8_241 = arith.constant 8 : index
    %694 = vector.load %arg4[%c0_240, %c8_241] : memref<32x20xf32, #tpu.memory_space<vmem>>, vector<32x1xf32>
    %cst_242 = arith.constant 0.000000e+00 : f32
    %695 = vector.broadcast %cst_242 : f32 to vector<32x2xf32>
    %696 = vector.extract_strided_slice %692 {offsets = [0, 0], sizes = [32, 62], strides = [1, 1]} : vector<32x64xf32> to vector<32x62xf32>
    %697 = tpu.concatenate %695, %696 in 1 : vector<32x2xf32>, vector<32x62xf32> -> vector<32x64xf32>
    %698 = vector.broadcast %632 : vector<1x64xf32> to vector<32x64xf32>
    %699 = arith.mulf %697, %698 : vector<32x64xf32>
    %cst_243 = arith.constant 0.000000e+00 : f32
    %700 = vector.broadcast %cst_243 : f32 to vector<32x1xf32>
    %701 = vector.extract_strided_slice %692 {offsets = [0, 0], sizes = [32, 63], strides = [1, 1]} : vector<32x64xf32> to vector<32x63xf32>
    %702 = tpu.concatenate %700, %701 in 1 : vector<32x1xf32>, vector<32x63xf32> -> vector<32x64xf32>
    %703 = vector.broadcast %643 : vector<1x64xf32> to vector<32x64xf32>
    %704 = arith.mulf %702, %703 : vector<32x64xf32>
    %cst_244 = arith.constant 0.000000e+00 : f32
    %705 = vector.broadcast %cst_244 : f32 to vector<32x1xf32>
    %706 = vector.extract_strided_slice %692 {offsets = [0, 1], sizes = [32, 63], strides = [1, 1]} : vector<32x64xf32> to vector<32x63xf32>
    %707 = tpu.concatenate %706, %705 in 1 : vector<32x63xf32>, vector<32x1xf32> -> vector<32x64xf32>
    %708 = vector.broadcast %654 : vector<1x64xf32> to vector<32x64xf32>
    %709 = arith.mulf %707, %708 : vector<32x64xf32>
    %cst_245 = arith.constant 0.000000e+00 : f32
    %710 = vector.broadcast %cst_245 : f32 to vector<32x2xf32>
    %711 = vector.extract_strided_slice %692 {offsets = [0, 2], sizes = [32, 62], strides = [1, 1]} : vector<32x64xf32> to vector<32x62xf32>
    %712 = tpu.concatenate %711, %710 in 1 : vector<32x62xf32>, vector<32x2xf32> -> vector<32x64xf32>
    %713 = vector.broadcast %665 : vector<1x64xf32> to vector<32x64xf32>
    %714 = arith.mulf %712, %713 : vector<32x64xf32>
    %715 = tpu.concatenate %699, %704, %692, %709, %714 in 0 : vector<32x64xf32>, vector<32x64xf32>, vector<32x64xf32>, vector<32x64xf32>, vector<32x64xf32> -> vector<160x64xf32>
    %cst_246 = arith.constant dense<0.000000e+00> : vector<32x64xf32>
    %716 = tpu.matmul %693, %715, %cst_246 {dimension_numbers = #tpu.dot_dimension_numbers<[1], [0], [0], [1], [0, 0, 1, 1], [], []>} : vector<32x160xf32>, vector<160x64xf32>, vector<32x64xf32> -> vector<32x64xf32>
    %717 = vector.broadcast %694 : vector<32x1xf32> to vector<32x64xf32>
    %718 = arith.addf %716, %717 : vector<32x64xf32>
    %cst_247 = arith.constant 0.000000e+00 : f32
    %719 = vector.broadcast %cst_247 : f32 to vector<32x64xf32>
    %720 = arith.maximumf %718, %719 : vector<32x64xf32>
    %c0_248 = arith.constant 0 : index
    %c11 = arith.constant 11 : index
    %721 = vector.load %arg5[%c0_248, %c11] : memref<32x25xf32, #tpu.memory_space<vmem>>, vector<32x1xf32>
    %c0_249 = arith.constant 0 : index
    %c11_250 = arith.constant 11 : index
    %722 = vector.load %arg6[%c0_249, %c11_250] : memref<32x25xf32, #tpu.memory_space<vmem>>, vector<32x1xf32>
    %cst_251 = arith.constant dense<0.000000e+00> : vector<32xf32>
    %723 = vector.multi_reduction <add>, %720, %cst_251 [1] : vector<32x64xf32> to vector<32xf32>
    %724 = vector.shape_cast %723 : vector<32xf32> to vector<32x1xf32>
    %cst_252 = arith.constant 1.562500e-02 : f32
    %725 = vector.broadcast %cst_252 : f32 to vector<32x1xf32>
    %726 = arith.mulf %724, %725 : vector<32x1xf32>
    %727 = vector.broadcast %726 : vector<32x1xf32> to vector<32x64xf32>
    %728 = arith.subf %720, %727 : vector<32x64xf32>
    %729 = arith.mulf %728, %728 : vector<32x64xf32>
    %cst_253 = arith.constant dense<0.000000e+00> : vector<32xf32>
    %730 = vector.multi_reduction <add>, %729, %cst_253 [1] : vector<32x64xf32> to vector<32xf32>
    %731 = vector.shape_cast %730 : vector<32xf32> to vector<32x1xf32>
    %cst_254 = arith.constant 1.562500e-02 : f32
    %732 = vector.broadcast %cst_254 : f32 to vector<32x1xf32>
    %733 = arith.mulf %731, %732 : vector<32x1xf32>
    %cst_255 = arith.constant 9.99999974E-6 : f32
    %734 = vector.broadcast %cst_255 : f32 to vector<32x1xf32>
    %735 = arith.addf %733, %734 : vector<32x1xf32>
    %736 = math.rsqrt %735 : vector<32x1xf32>
    %737 = vector.broadcast %736 : vector<32x1xf32> to vector<32x64xf32>
    %738 = arith.mulf %728, %737 : vector<32x64xf32>
    %739 = vector.broadcast %721 : vector<32x1xf32> to vector<32x64xf32>
    %740 = arith.mulf %739, %738 : vector<32x64xf32>
    %741 = vector.broadcast %722 : vector<32x1xf32> to vector<32x64xf32>
    %742 = arith.addf %740, %741 : vector<32x64xf32>
    %c0_256 = arith.constant 0 : index
    %c1440 = arith.constant 1440 : index
    %743 = vector.load %arg3[%c0_256, %c1440] : memref<32x3200xf32, #tpu.memory_space<vmem>>, vector<32x160xf32>
    %c0_257 = arith.constant 0 : index
    %c9_258 = arith.constant 9 : index
    %744 = vector.load %arg4[%c0_257, %c9_258] : memref<32x20xf32, #tpu.memory_space<vmem>>, vector<32x1xf32>
    %cst_259 = arith.constant 0.000000e+00 : f32
    %745 = vector.broadcast %cst_259 : f32 to vector<32x2xf32>
    %746 = vector.extract_strided_slice %742 {offsets = [0, 0], sizes = [32, 62], strides = [1, 1]} : vector<32x64xf32> to vector<32x62xf32>
    %747 = tpu.concatenate %745, %746 in 1 : vector<32x2xf32>, vector<32x62xf32> -> vector<32x64xf32>
    %748 = vector.broadcast %632 : vector<1x64xf32> to vector<32x64xf32>
    %749 = arith.mulf %747, %748 : vector<32x64xf32>
    %cst_260 = arith.constant 0.000000e+00 : f32
    %750 = vector.broadcast %cst_260 : f32 to vector<32x1xf32>
    %751 = vector.extract_strided_slice %742 {offsets = [0, 0], sizes = [32, 63], strides = [1, 1]} : vector<32x64xf32> to vector<32x63xf32>
    %752 = tpu.concatenate %750, %751 in 1 : vector<32x1xf32>, vector<32x63xf32> -> vector<32x64xf32>
    %753 = vector.broadcast %643 : vector<1x64xf32> to vector<32x64xf32>
    %754 = arith.mulf %752, %753 : vector<32x64xf32>
    %cst_261 = arith.constant 0.000000e+00 : f32
    %755 = vector.broadcast %cst_261 : f32 to vector<32x1xf32>
    %756 = vector.extract_strided_slice %742 {offsets = [0, 1], sizes = [32, 63], strides = [1, 1]} : vector<32x64xf32> to vector<32x63xf32>
    %757 = tpu.concatenate %756, %755 in 1 : vector<32x63xf32>, vector<32x1xf32> -> vector<32x64xf32>
    %758 = vector.broadcast %654 : vector<1x64xf32> to vector<32x64xf32>
    %759 = arith.mulf %757, %758 : vector<32x64xf32>
    %cst_262 = arith.constant 0.000000e+00 : f32
    %760 = vector.broadcast %cst_262 : f32 to vector<32x2xf32>
    %761 = vector.extract_strided_slice %742 {offsets = [0, 2], sizes = [32, 62], strides = [1, 1]} : vector<32x64xf32> to vector<32x62xf32>
    %762 = tpu.concatenate %761, %760 in 1 : vector<32x62xf32>, vector<32x2xf32> -> vector<32x64xf32>
    %763 = vector.broadcast %665 : vector<1x64xf32> to vector<32x64xf32>
    %764 = arith.mulf %762, %763 : vector<32x64xf32>
    %765 = tpu.concatenate %749, %754, %742, %759, %764 in 0 : vector<32x64xf32>, vector<32x64xf32>, vector<32x64xf32>, vector<32x64xf32>, vector<32x64xf32> -> vector<160x64xf32>
    %cst_263 = arith.constant dense<0.000000e+00> : vector<32x64xf32>
    %766 = tpu.matmul %743, %765, %cst_263 {dimension_numbers = #tpu.dot_dimension_numbers<[1], [0], [0], [1], [0, 0, 1, 1], [], []>} : vector<32x160xf32>, vector<160x64xf32>, vector<32x64xf32> -> vector<32x64xf32>
    %767 = vector.broadcast %744 : vector<32x1xf32> to vector<32x64xf32>
    %768 = arith.addf %766, %767 : vector<32x64xf32>
    %cst_264 = arith.constant 0.000000e+00 : f32
    %769 = vector.broadcast %cst_264 : f32 to vector<32x64xf32>
    %770 = arith.maximumf %768, %769 : vector<32x64xf32>
    %c0_265 = arith.constant 0 : index
    %c12 = arith.constant 12 : index
    %771 = vector.load %arg5[%c0_265, %c12] : memref<32x25xf32, #tpu.memory_space<vmem>>, vector<32x1xf32>
    %c0_266 = arith.constant 0 : index
    %c12_267 = arith.constant 12 : index
    %772 = vector.load %arg6[%c0_266, %c12_267] : memref<32x25xf32, #tpu.memory_space<vmem>>, vector<32x1xf32>
    %cst_268 = arith.constant dense<0.000000e+00> : vector<32xf32>
    %773 = vector.multi_reduction <add>, %770, %cst_268 [1] : vector<32x64xf32> to vector<32xf32>
    %774 = vector.shape_cast %773 : vector<32xf32> to vector<32x1xf32>
    %cst_269 = arith.constant 1.562500e-02 : f32
    %775 = vector.broadcast %cst_269 : f32 to vector<32x1xf32>
    %776 = arith.mulf %774, %775 : vector<32x1xf32>
    %777 = vector.broadcast %776 : vector<32x1xf32> to vector<32x64xf32>
    %778 = arith.subf %770, %777 : vector<32x64xf32>
    %779 = arith.mulf %778, %778 : vector<32x64xf32>
    %cst_270 = arith.constant dense<0.000000e+00> : vector<32xf32>
    %780 = vector.multi_reduction <add>, %779, %cst_270 [1] : vector<32x64xf32> to vector<32xf32>
    %781 = vector.shape_cast %780 : vector<32xf32> to vector<32x1xf32>
    %cst_271 = arith.constant 1.562500e-02 : f32
    %782 = vector.broadcast %cst_271 : f32 to vector<32x1xf32>
    %783 = arith.mulf %781, %782 : vector<32x1xf32>
    %cst_272 = arith.constant 9.99999974E-6 : f32
    %784 = vector.broadcast %cst_272 : f32 to vector<32x1xf32>
    %785 = arith.addf %783, %784 : vector<32x1xf32>
    %786 = math.rsqrt %785 : vector<32x1xf32>
    %787 = vector.broadcast %786 : vector<32x1xf32> to vector<32x64xf32>
    %788 = arith.mulf %778, %787 : vector<32x64xf32>
    %789 = vector.broadcast %771 : vector<32x1xf32> to vector<32x64xf32>
    %790 = arith.mulf %789, %788 : vector<32x64xf32>
    %791 = vector.broadcast %772 : vector<32x1xf32> to vector<32x64xf32>
    %792 = arith.addf %790, %791 : vector<32x64xf32>
    %793 = arith.addf %792, %692 : vector<32x64xf32>
    %c0_273 = arith.constant 0 : index
    %c1600 = arith.constant 1600 : index
    %794 = vector.load %arg3[%c0_273, %c1600] : memref<32x3200xf32, #tpu.memory_space<vmem>>, vector<32x160xf32>
    %c0_274 = arith.constant 0 : index
    %c10_275 = arith.constant 10 : index
    %795 = vector.load %arg4[%c0_274, %c10_275] : memref<32x20xf32, #tpu.memory_space<vmem>>, vector<32x1xf32>
    %cst_276 = arith.constant 0.000000e+00 : f32
    %796 = vector.broadcast %cst_276 : f32 to vector<32x2xf32>
    %797 = vector.extract_strided_slice %793 {offsets = [0, 0], sizes = [32, 62], strides = [1, 1]} : vector<32x64xf32> to vector<32x62xf32>
    %798 = tpu.concatenate %796, %797 in 1 : vector<32x2xf32>, vector<32x62xf32> -> vector<32x64xf32>
    %799 = vector.broadcast %632 : vector<1x64xf32> to vector<32x64xf32>
    %800 = arith.mulf %798, %799 : vector<32x64xf32>
    %cst_277 = arith.constant 0.000000e+00 : f32
    %801 = vector.broadcast %cst_277 : f32 to vector<32x1xf32>
    %802 = vector.extract_strided_slice %793 {offsets = [0, 0], sizes = [32, 63], strides = [1, 1]} : vector<32x64xf32> to vector<32x63xf32>
    %803 = tpu.concatenate %801, %802 in 1 : vector<32x1xf32>, vector<32x63xf32> -> vector<32x64xf32>
    %804 = vector.broadcast %643 : vector<1x64xf32> to vector<32x64xf32>
    %805 = arith.mulf %803, %804 : vector<32x64xf32>
    %cst_278 = arith.constant 0.000000e+00 : f32
    %806 = vector.broadcast %cst_278 : f32 to vector<32x1xf32>
    %807 = vector.extract_strided_slice %793 {offsets = [0, 1], sizes = [32, 63], strides = [1, 1]} : vector<32x64xf32> to vector<32x63xf32>
    %808 = tpu.concatenate %807, %806 in 1 : vector<32x63xf32>, vector<32x1xf32> -> vector<32x64xf32>
    %809 = vector.broadcast %654 : vector<1x64xf32> to vector<32x64xf32>
    %810 = arith.mulf %808, %809 : vector<32x64xf32>
    %cst_279 = arith.constant 0.000000e+00 : f32
    %811 = vector.broadcast %cst_279 : f32 to vector<32x2xf32>
    %812 = vector.extract_strided_slice %793 {offsets = [0, 2], sizes = [32, 62], strides = [1, 1]} : vector<32x64xf32> to vector<32x62xf32>
    %813 = tpu.concatenate %812, %811 in 1 : vector<32x62xf32>, vector<32x2xf32> -> vector<32x64xf32>
    %814 = vector.broadcast %665 : vector<1x64xf32> to vector<32x64xf32>
    %815 = arith.mulf %813, %814 : vector<32x64xf32>
    %816 = tpu.concatenate %800, %805, %793, %810, %815 in 0 : vector<32x64xf32>, vector<32x64xf32>, vector<32x64xf32>, vector<32x64xf32>, vector<32x64xf32> -> vector<160x64xf32>
    %cst_280 = arith.constant dense<0.000000e+00> : vector<32x64xf32>
    %817 = tpu.matmul %794, %816, %cst_280 {dimension_numbers = #tpu.dot_dimension_numbers<[1], [0], [0], [1], [0, 0, 1, 1], [], []>} : vector<32x160xf32>, vector<160x64xf32>, vector<32x64xf32> -> vector<32x64xf32>
    %818 = vector.broadcast %795 : vector<32x1xf32> to vector<32x64xf32>
    %819 = arith.addf %817, %818 : vector<32x64xf32>
    %cst_281 = arith.constant 0.000000e+00 : f32
    %820 = vector.broadcast %cst_281 : f32 to vector<32x64xf32>
    %821 = arith.maximumf %819, %820 : vector<32x64xf32>
    %c0_282 = arith.constant 0 : index
    %c13 = arith.constant 13 : index
    %822 = vector.load %arg5[%c0_282, %c13] : memref<32x25xf32, #tpu.memory_space<vmem>>, vector<32x1xf32>
    %c0_283 = arith.constant 0 : index
    %c13_284 = arith.constant 13 : index
    %823 = vector.load %arg6[%c0_283, %c13_284] : memref<32x25xf32, #tpu.memory_space<vmem>>, vector<32x1xf32>
    %cst_285 = arith.constant dense<0.000000e+00> : vector<32xf32>
    %824 = vector.multi_reduction <add>, %821, %cst_285 [1] : vector<32x64xf32> to vector<32xf32>
    %825 = vector.shape_cast %824 : vector<32xf32> to vector<32x1xf32>
    %cst_286 = arith.constant 1.562500e-02 : f32
    %826 = vector.broadcast %cst_286 : f32 to vector<32x1xf32>
    %827 = arith.mulf %825, %826 : vector<32x1xf32>
    %828 = vector.broadcast %827 : vector<32x1xf32> to vector<32x64xf32>
    %829 = arith.subf %821, %828 : vector<32x64xf32>
    %830 = arith.mulf %829, %829 : vector<32x64xf32>
    %cst_287 = arith.constant dense<0.000000e+00> : vector<32xf32>
    %831 = vector.multi_reduction <add>, %830, %cst_287 [1] : vector<32x64xf32> to vector<32xf32>
    %832 = vector.shape_cast %831 : vector<32xf32> to vector<32x1xf32>
    %cst_288 = arith.constant 1.562500e-02 : f32
    %833 = vector.broadcast %cst_288 : f32 to vector<32x1xf32>
    %834 = arith.mulf %832, %833 : vector<32x1xf32>
    %cst_289 = arith.constant 9.99999974E-6 : f32
    %835 = vector.broadcast %cst_289 : f32 to vector<32x1xf32>
    %836 = arith.addf %834, %835 : vector<32x1xf32>
    %837 = math.rsqrt %836 : vector<32x1xf32>
    %838 = vector.broadcast %837 : vector<32x1xf32> to vector<32x64xf32>
    %839 = arith.mulf %829, %838 : vector<32x64xf32>
    %840 = vector.broadcast %822 : vector<32x1xf32> to vector<32x64xf32>
    %841 = arith.mulf %840, %839 : vector<32x64xf32>
    %842 = vector.broadcast %823 : vector<32x1xf32> to vector<32x64xf32>
    %843 = arith.addf %841, %842 : vector<32x64xf32>
    %c0_290 = arith.constant 0 : index
    %c1760 = arith.constant 1760 : index
    %844 = vector.load %arg3[%c0_290, %c1760] : memref<32x3200xf32, #tpu.memory_space<vmem>>, vector<32x160xf32>
    %c0_291 = arith.constant 0 : index
    %c11_292 = arith.constant 11 : index
    %845 = vector.load %arg4[%c0_291, %c11_292] : memref<32x20xf32, #tpu.memory_space<vmem>>, vector<32x1xf32>
    %cst_293 = arith.constant 0.000000e+00 : f32
    %846 = vector.broadcast %cst_293 : f32 to vector<32x2xf32>
    %847 = vector.extract_strided_slice %843 {offsets = [0, 0], sizes = [32, 62], strides = [1, 1]} : vector<32x64xf32> to vector<32x62xf32>
    %848 = tpu.concatenate %846, %847 in 1 : vector<32x2xf32>, vector<32x62xf32> -> vector<32x64xf32>
    %849 = vector.broadcast %632 : vector<1x64xf32> to vector<32x64xf32>
    %850 = arith.mulf %848, %849 : vector<32x64xf32>
    %cst_294 = arith.constant 0.000000e+00 : f32
    %851 = vector.broadcast %cst_294 : f32 to vector<32x1xf32>
    %852 = vector.extract_strided_slice %843 {offsets = [0, 0], sizes = [32, 63], strides = [1, 1]} : vector<32x64xf32> to vector<32x63xf32>
    %853 = tpu.concatenate %851, %852 in 1 : vector<32x1xf32>, vector<32x63xf32> -> vector<32x64xf32>
    %854 = vector.broadcast %643 : vector<1x64xf32> to vector<32x64xf32>
    %855 = arith.mulf %853, %854 : vector<32x64xf32>
    %cst_295 = arith.constant 0.000000e+00 : f32
    %856 = vector.broadcast %cst_295 : f32 to vector<32x1xf32>
    %857 = vector.extract_strided_slice %843 {offsets = [0, 1], sizes = [32, 63], strides = [1, 1]} : vector<32x64xf32> to vector<32x63xf32>
    %858 = tpu.concatenate %857, %856 in 1 : vector<32x63xf32>, vector<32x1xf32> -> vector<32x64xf32>
    %859 = vector.broadcast %654 : vector<1x64xf32> to vector<32x64xf32>
    %860 = arith.mulf %858, %859 : vector<32x64xf32>
    %cst_296 = arith.constant 0.000000e+00 : f32
    %861 = vector.broadcast %cst_296 : f32 to vector<32x2xf32>
    %862 = vector.extract_strided_slice %843 {offsets = [0, 2], sizes = [32, 62], strides = [1, 1]} : vector<32x64xf32> to vector<32x62xf32>
    %863 = tpu.concatenate %862, %861 in 1 : vector<32x62xf32>, vector<32x2xf32> -> vector<32x64xf32>
    %864 = vector.broadcast %665 : vector<1x64xf32> to vector<32x64xf32>
    %865 = arith.mulf %863, %864 : vector<32x64xf32>
    %866 = tpu.concatenate %850, %855, %843, %860, %865 in 0 : vector<32x64xf32>, vector<32x64xf32>, vector<32x64xf32>, vector<32x64xf32>, vector<32x64xf32> -> vector<160x64xf32>
    %cst_297 = arith.constant dense<0.000000e+00> : vector<32x64xf32>
    %867 = tpu.matmul %844, %866, %cst_297 {dimension_numbers = #tpu.dot_dimension_numbers<[1], [0], [0], [1], [0, 0, 1, 1], [], []>} : vector<32x160xf32>, vector<160x64xf32>, vector<32x64xf32> -> vector<32x64xf32>
    %868 = vector.broadcast %845 : vector<32x1xf32> to vector<32x64xf32>
    %869 = arith.addf %867, %868 : vector<32x64xf32>
    %cst_298 = arith.constant 0.000000e+00 : f32
    %870 = vector.broadcast %cst_298 : f32 to vector<32x64xf32>
    %871 = arith.maximumf %869, %870 : vector<32x64xf32>
    %c0_299 = arith.constant 0 : index
    %c14 = arith.constant 14 : index
    %872 = vector.load %arg5[%c0_299, %c14] : memref<32x25xf32, #tpu.memory_space<vmem>>, vector<32x1xf32>
    %c0_300 = arith.constant 0 : index
    %c14_301 = arith.constant 14 : index
    %873 = vector.load %arg6[%c0_300, %c14_301] : memref<32x25xf32, #tpu.memory_space<vmem>>, vector<32x1xf32>
    %cst_302 = arith.constant dense<0.000000e+00> : vector<32xf32>
    %874 = vector.multi_reduction <add>, %871, %cst_302 [1] : vector<32x64xf32> to vector<32xf32>
    %875 = vector.shape_cast %874 : vector<32xf32> to vector<32x1xf32>
    %cst_303 = arith.constant 1.562500e-02 : f32
    %876 = vector.broadcast %cst_303 : f32 to vector<32x1xf32>
    %877 = arith.mulf %875, %876 : vector<32x1xf32>
    %878 = vector.broadcast %877 : vector<32x1xf32> to vector<32x64xf32>
    %879 = arith.subf %871, %878 : vector<32x64xf32>
    %880 = arith.mulf %879, %879 : vector<32x64xf32>
    %cst_304 = arith.constant dense<0.000000e+00> : vector<32xf32>
    %881 = vector.multi_reduction <add>, %880, %cst_304 [1] : vector<32x64xf32> to vector<32xf32>
    %882 = vector.shape_cast %881 : vector<32xf32> to vector<32x1xf32>
    %cst_305 = arith.constant 1.562500e-02 : f32
    %883 = vector.broadcast %cst_305 : f32 to vector<32x1xf32>
    %884 = arith.mulf %882, %883 : vector<32x1xf32>
    %cst_306 = arith.constant 9.99999974E-6 : f32
    %885 = vector.broadcast %cst_306 : f32 to vector<32x1xf32>
    %886 = arith.addf %884, %885 : vector<32x1xf32>
    %887 = math.rsqrt %886 : vector<32x1xf32>
    %888 = vector.broadcast %887 : vector<32x1xf32> to vector<32x64xf32>
    %889 = arith.mulf %879, %888 : vector<32x64xf32>
    %890 = vector.broadcast %872 : vector<32x1xf32> to vector<32x64xf32>
    %891 = arith.mulf %890, %889 : vector<32x64xf32>
    %892 = vector.broadcast %873 : vector<32x1xf32> to vector<32x64xf32>
    %893 = arith.addf %891, %892 : vector<32x64xf32>
    %894 = arith.addf %893, %793 : vector<32x64xf32>
    %cst_307 = arith.constant 0.000000e+00 : f32
    %895 = vector.broadcast %cst_307 : f32 to vector<32x1xf32>
    %896 = vector.extract_strided_slice %894 {offsets = [0, 1], sizes = [32, 63], strides = [1, 1]} : vector<32x64xf32> to vector<32x63xf32>
    %897 = tpu.concatenate %896, %895 in 1 : vector<32x63xf32>, vector<32x1xf32> -> vector<32x64xf32>
    %898 = arith.maximumf %894, %897 : vector<32x64xf32>
    %899 = tpu.iota {dimensions = array<i32: 0>} : vector<64x32xi32>
    %900 = tpu.iota {dimensions = array<i32: 1>} : vector<64x32xi32>
    %c2_i32_308 = arith.constant 2 : i32
    %901 = vector.broadcast %c2_i32_308 : i32 to vector<64x32xi32>
    %902 = arith.muli %901, %900 : vector<64x32xi32>
    %903 = arith.cmpi eq, %899, %902 : vector<64x32xi32>
    %904 = arith.extui %903 : vector<64x32xi1> to vector<64x32xi32>
    %905 = arith.sitofp %904 : vector<64x32xi32> to vector<64x32xf32>
    %cst_309 = arith.constant dense<0.000000e+00> : vector<32x32xf32>
    %906 = tpu.matmul %898, %905, %cst_309 {dimension_numbers = #tpu.dot_dimension_numbers<[1], [0], [0], [1], [0, 0, 1, 1], [], []>} : vector<32x64xf32>, vector<64x32xf32>, vector<32x32xf32> -> vector<32x32xf32>
    %907 = tpu.iota {dimensions = array<i32: 1>} : vector<1x32xi32>
    %c16_i32 = arith.constant 16 : i32
    %c0_i32_310 = arith.constant 0 : i32
    %908 = arith.cmpi eq, %c16_i32, %c0_i32_310 : i32
    %c1_i32_311 = arith.constant 1 : i32
    %909 = arith.select %908, %c1_i32_311, %c16_i32 : i32
    %910 = vector.broadcast %909 : i32 to vector<1x32xi32>
    %911 = arith.remsi %907, %910 : vector<1x32xi32>
    %c0_i32_312 = arith.constant 0 : i32
    %912 = vector.broadcast %c0_i32_312 : i32 to vector<1x32xi32>
    %913 = arith.cmpi ne, %911, %912 : vector<1x32xi32>
    %c0_i32_313 = arith.constant 0 : i32
    %914 = vector.broadcast %c0_i32_313 : i32 to vector<1x32xi32>
    %915 = arith.cmpi slt, %911, %914 : vector<1x32xi32>
    %c0_i32_314 = arith.constant 0 : i32
    %916 = arith.cmpi slt, %909, %c0_i32_314 : i32
    %917 = vector.broadcast %916 : i1 to vector<1x32xi1>
    %918 = vector.broadcast %917 : vector<1x32xi1> to vector<1x32xi1>
    %919 = arith.xori %915, %918 : vector<1x32xi1>
    %920 = arith.andi %919, %913 : vector<1x32xi1>
    %921 = vector.broadcast %909 : i32 to vector<1x32xi32>
    %922 = arith.addi %911, %921 : vector<1x32xi32>
    %923 = arith.select %920, %922, %911 : vector<1x32xi1>, vector<1x32xi32>
    %c-2_i32_315 = arith.constant -2 : i32
    %924 = vector.broadcast %c-2_i32_315 : i32 to vector<1x32xi32>
    %925 = arith.addi %923, %924 : vector<1x32xi32>
    %c0_i32_316 = arith.constant 0 : i32
    %926 = vector.broadcast %c0_i32_316 : i32 to vector<1x32xi32>
    %927 = arith.cmpi sge, %925, %926 : vector<1x32xi32>
    %c-2_i32_317 = arith.constant -2 : i32
    %928 = vector.broadcast %c-2_i32_317 : i32 to vector<1x32xi32>
    %929 = arith.addi %923, %928 : vector<1x32xi32>
    %c16_i32_318 = arith.constant 16 : i32
    %930 = vector.broadcast %c16_i32_318 : i32 to vector<1x32xi32>
    %931 = arith.cmpi slt, %929, %930 : vector<1x32xi32>
    %932 = arith.andi %927, %931 : vector<1x32xi1>
    %933 = arith.extui %932 : vector<1x32xi1> to vector<1x32xi32>
    %934 = arith.sitofp %933 : vector<1x32xi32> to vector<1x32xf32>
    %c-1_i32_319 = arith.constant -1 : i32
    %935 = vector.broadcast %c-1_i32_319 : i32 to vector<1x32xi32>
    %936 = arith.addi %923, %935 : vector<1x32xi32>
    %c0_i32_320 = arith.constant 0 : i32
    %937 = vector.broadcast %c0_i32_320 : i32 to vector<1x32xi32>
    %938 = arith.cmpi sge, %936, %937 : vector<1x32xi32>
    %c-1_i32_321 = arith.constant -1 : i32
    %939 = vector.broadcast %c-1_i32_321 : i32 to vector<1x32xi32>
    %940 = arith.addi %923, %939 : vector<1x32xi32>
    %c16_i32_322 = arith.constant 16 : i32
    %941 = vector.broadcast %c16_i32_322 : i32 to vector<1x32xi32>
    %942 = arith.cmpi slt, %940, %941 : vector<1x32xi32>
    %943 = arith.andi %938, %942 : vector<1x32xi1>
    %944 = arith.extui %943 : vector<1x32xi1> to vector<1x32xi32>
    %945 = arith.sitofp %944 : vector<1x32xi32> to vector<1x32xf32>
    %c1_i32_323 = arith.constant 1 : i32
    %946 = vector.broadcast %c1_i32_323 : i32 to vector<1x32xi32>
    %947 = arith.addi %923, %946 : vector<1x32xi32>
    %c0_i32_324 = arith.constant 0 : i32
    %948 = vector.broadcast %c0_i32_324 : i32 to vector<1x32xi32>
    %949 = arith.cmpi sge, %947, %948 : vector<1x32xi32>
    %c1_i32_325 = arith.constant 1 : i32
    %950 = vector.broadcast %c1_i32_325 : i32 to vector<1x32xi32>
    %951 = arith.addi %923, %950 : vector<1x32xi32>
    %c16_i32_326 = arith.constant 16 : i32
    %952 = vector.broadcast %c16_i32_326 : i32 to vector<1x32xi32>
    %953 = arith.cmpi slt, %951, %952 : vector<1x32xi32>
    %954 = arith.andi %949, %953 : vector<1x32xi1>
    %955 = arith.extui %954 : vector<1x32xi1> to vector<1x32xi32>
    %956 = arith.sitofp %955 : vector<1x32xi32> to vector<1x32xf32>
    %c2_i32_327 = arith.constant 2 : i32
    %957 = vector.broadcast %c2_i32_327 : i32 to vector<1x32xi32>
    %958 = arith.addi %923, %957 : vector<1x32xi32>
    %c0_i32_328 = arith.constant 0 : i32
    %959 = vector.broadcast %c0_i32_328 : i32 to vector<1x32xi32>
    %960 = arith.cmpi sge, %958, %959 : vector<1x32xi32>
    %c2_i32_329 = arith.constant 2 : i32
    %961 = vector.broadcast %c2_i32_329 : i32 to vector<1x32xi32>
    %962 = arith.addi %923, %961 : vector<1x32xi32>
    %c16_i32_330 = arith.constant 16 : i32
    %963 = vector.broadcast %c16_i32_330 : i32 to vector<1x32xi32>
    %964 = arith.cmpi slt, %962, %963 : vector<1x32xi32>
    %965 = arith.andi %960, %964 : vector<1x32xi1>
    %966 = arith.extui %965 : vector<1x32xi1> to vector<1x32xi32>
    %967 = arith.sitofp %966 : vector<1x32xi32> to vector<1x32xf32>
    %c0_331 = arith.constant 0 : index
    %c96 = arith.constant 96 : index
    %968 = vector.load %arg1[%c0_331, %c96] : memref<32x160xf32, #tpu.memory_space<vmem>>, vector<32x32xf32>
    %cst_332 = arith.constant dense<0.000000e+00> : vector<32x32xf32>
    %969 = tpu.matmul %968, %906, %cst_332 {dimension_numbers = #tpu.dot_dimension_numbers<[1], [0], [0], [1], [0, 0, 1, 1], [], []>} : vector<32x32xf32>, vector<32x32xf32>, vector<32x32xf32> -> vector<32x32xf32>
    %c0_333 = arith.constant 0 : index
    %c3_334 = arith.constant 3 : index
    %970 = vector.load %arg2[%c0_333, %c3_334] : memref<32x5xf32, #tpu.memory_space<vmem>>, vector<32x1xf32>
    %971 = vector.broadcast %970 : vector<32x1xf32> to vector<32x32xf32>
    %972 = arith.addf %969, %971 : vector<32x32xf32>
    %c0_335 = arith.constant 0 : index
    %c15 = arith.constant 15 : index
    %973 = vector.load %arg5[%c0_335, %c15] : memref<32x25xf32, #tpu.memory_space<vmem>>, vector<32x1xf32>
    %c0_336 = arith.constant 0 : index
    %c15_337 = arith.constant 15 : index
    %974 = vector.load %arg6[%c0_336, %c15_337] : memref<32x25xf32, #tpu.memory_space<vmem>>, vector<32x1xf32>
    %cst_338 = arith.constant dense<0.000000e+00> : vector<32xf32>
    %975 = vector.multi_reduction <add>, %972, %cst_338 [1] : vector<32x32xf32> to vector<32xf32>
    %976 = vector.shape_cast %975 : vector<32xf32> to vector<32x1xf32>
    %cst_339 = arith.constant 3.125000e-02 : f32
    %977 = vector.broadcast %cst_339 : f32 to vector<32x1xf32>
    %978 = arith.mulf %976, %977 : vector<32x1xf32>
    %979 = vector.broadcast %978 : vector<32x1xf32> to vector<32x32xf32>
    %980 = arith.subf %972, %979 : vector<32x32xf32>
    %981 = arith.mulf %980, %980 : vector<32x32xf32>
    %cst_340 = arith.constant dense<0.000000e+00> : vector<32xf32>
    %982 = vector.multi_reduction <add>, %981, %cst_340 [1] : vector<32x32xf32> to vector<32xf32>
    %983 = vector.shape_cast %982 : vector<32xf32> to vector<32x1xf32>
    %cst_341 = arith.constant 3.125000e-02 : f32
    %984 = vector.broadcast %cst_341 : f32 to vector<32x1xf32>
    %985 = arith.mulf %983, %984 : vector<32x1xf32>
    %cst_342 = arith.constant 9.99999974E-6 : f32
    %986 = vector.broadcast %cst_342 : f32 to vector<32x1xf32>
    %987 = arith.addf %985, %986 : vector<32x1xf32>
    %988 = math.rsqrt %987 : vector<32x1xf32>
    %989 = vector.broadcast %988 : vector<32x1xf32> to vector<32x32xf32>
    %990 = arith.mulf %980, %989 : vector<32x32xf32>
    %991 = vector.broadcast %973 : vector<32x1xf32> to vector<32x32xf32>
    %992 = arith.mulf %991, %990 : vector<32x32xf32>
    %993 = vector.broadcast %974 : vector<32x1xf32> to vector<32x32xf32>
    %994 = arith.addf %992, %993 : vector<32x32xf32>
    %c0_343 = arith.constant 0 : index
    %c1920 = arith.constant 1920 : index
    %995 = vector.load %arg3[%c0_343, %c1920] : memref<32x3200xf32, #tpu.memory_space<vmem>>, vector<32x160xf32>
    %c0_344 = arith.constant 0 : index
    %c12_345 = arith.constant 12 : index
    %996 = vector.load %arg4[%c0_344, %c12_345] : memref<32x20xf32, #tpu.memory_space<vmem>>, vector<32x1xf32>
    %cst_346 = arith.constant 0.000000e+00 : f32
    %997 = vector.broadcast %cst_346 : f32 to vector<32x2xf32>
    %998 = vector.extract_strided_slice %994 {offsets = [0, 0], sizes = [32, 30], strides = [1, 1]} : vector<32x32xf32> to vector<32x30xf32>
    %999 = tpu.concatenate %997, %998 in 1 : vector<32x2xf32>, vector<32x30xf32> -> vector<32x32xf32>
    %1000 = vector.broadcast %934 : vector<1x32xf32> to vector<32x32xf32>
    %1001 = arith.mulf %999, %1000 : vector<32x32xf32>
    %cst_347 = arith.constant 0.000000e+00 : f32
    %1002 = vector.broadcast %cst_347 : f32 to vector<32x1xf32>
    %1003 = vector.extract_strided_slice %994 {offsets = [0, 0], sizes = [32, 31], strides = [1, 1]} : vector<32x32xf32> to vector<32x31xf32>
    %1004 = tpu.concatenate %1002, %1003 in 1 : vector<32x1xf32>, vector<32x31xf32> -> vector<32x32xf32>
    %1005 = vector.broadcast %945 : vector<1x32xf32> to vector<32x32xf32>
    %1006 = arith.mulf %1004, %1005 : vector<32x32xf32>
    %cst_348 = arith.constant 0.000000e+00 : f32
    %1007 = vector.broadcast %cst_348 : f32 to vector<32x1xf32>
    %1008 = vector.extract_strided_slice %994 {offsets = [0, 1], sizes = [32, 31], strides = [1, 1]} : vector<32x32xf32> to vector<32x31xf32>
    %1009 = tpu.concatenate %1008, %1007 in 1 : vector<32x31xf32>, vector<32x1xf32> -> vector<32x32xf32>
    %1010 = vector.broadcast %956 : vector<1x32xf32> to vector<32x32xf32>
    %1011 = arith.mulf %1009, %1010 : vector<32x32xf32>
    %cst_349 = arith.constant 0.000000e+00 : f32
    %1012 = vector.broadcast %cst_349 : f32 to vector<32x2xf32>
    %1013 = vector.extract_strided_slice %994 {offsets = [0, 2], sizes = [32, 30], strides = [1, 1]} : vector<32x32xf32> to vector<32x30xf32>
    %1014 = tpu.concatenate %1013, %1012 in 1 : vector<32x30xf32>, vector<32x2xf32> -> vector<32x32xf32>
    %1015 = vector.broadcast %967 : vector<1x32xf32> to vector<32x32xf32>
    %1016 = arith.mulf %1014, %1015 : vector<32x32xf32>
    %1017 = tpu.concatenate %1001, %1006, %994, %1011, %1016 in 0 : vector<32x32xf32>, vector<32x32xf32>, vector<32x32xf32>, vector<32x32xf32>, vector<32x32xf32> -> vector<160x32xf32>
    %cst_350 = arith.constant dense<0.000000e+00> : vector<32x32xf32>
    %1018 = tpu.matmul %995, %1017, %cst_350 {dimension_numbers = #tpu.dot_dimension_numbers<[1], [0], [0], [1], [0, 0, 1, 1], [], []>} : vector<32x160xf32>, vector<160x32xf32>, vector<32x32xf32> -> vector<32x32xf32>
    %1019 = vector.broadcast %996 : vector<32x1xf32> to vector<32x32xf32>
    %1020 = arith.addf %1018, %1019 : vector<32x32xf32>
    %cst_351 = arith.constant 0.000000e+00 : f32
    %1021 = vector.broadcast %cst_351 : f32 to vector<32x32xf32>
    %1022 = arith.maximumf %1020, %1021 : vector<32x32xf32>
    %c0_352 = arith.constant 0 : index
    %c16 = arith.constant 16 : index
    %1023 = vector.load %arg5[%c0_352, %c16] : memref<32x25xf32, #tpu.memory_space<vmem>>, vector<32x1xf32>
    %c0_353 = arith.constant 0 : index
    %c16_354 = arith.constant 16 : index
    %1024 = vector.load %arg6[%c0_353, %c16_354] : memref<32x25xf32, #tpu.memory_space<vmem>>, vector<32x1xf32>
    %cst_355 = arith.constant dense<0.000000e+00> : vector<32xf32>
    %1025 = vector.multi_reduction <add>, %1022, %cst_355 [1] : vector<32x32xf32> to vector<32xf32>
    %1026 = vector.shape_cast %1025 : vector<32xf32> to vector<32x1xf32>
    %cst_356 = arith.constant 3.125000e-02 : f32
    %1027 = vector.broadcast %cst_356 : f32 to vector<32x1xf32>
    %1028 = arith.mulf %1026, %1027 : vector<32x1xf32>
    %1029 = vector.broadcast %1028 : vector<32x1xf32> to vector<32x32xf32>
    %1030 = arith.subf %1022, %1029 : vector<32x32xf32>
    %1031 = arith.mulf %1030, %1030 : vector<32x32xf32>
    %cst_357 = arith.constant dense<0.000000e+00> : vector<32xf32>
    %1032 = vector.multi_reduction <add>, %1031, %cst_357 [1] : vector<32x32xf32> to vector<32xf32>
    %1033 = vector.shape_cast %1032 : vector<32xf32> to vector<32x1xf32>
    %cst_358 = arith.constant 3.125000e-02 : f32
    %1034 = vector.broadcast %cst_358 : f32 to vector<32x1xf32>
    %1035 = arith.mulf %1033, %1034 : vector<32x1xf32>
    %cst_359 = arith.constant 9.99999974E-6 : f32
    %1036 = vector.broadcast %cst_359 : f32 to vector<32x1xf32>
    %1037 = arith.addf %1035, %1036 : vector<32x1xf32>
    %1038 = math.rsqrt %1037 : vector<32x1xf32>
    %1039 = vector.broadcast %1038 : vector<32x1xf32> to vector<32x32xf32>
    %1040 = arith.mulf %1030, %1039 : vector<32x32xf32>
    %1041 = vector.broadcast %1023 : vector<32x1xf32> to vector<32x32xf32>
    %1042 = arith.mulf %1041, %1040 : vector<32x32xf32>
    %1043 = vector.broadcast %1024 : vector<32x1xf32> to vector<32x32xf32>
    %1044 = arith.addf %1042, %1043 : vector<32x32xf32>
    %c0_360 = arith.constant 0 : index
    %c2080 = arith.constant 2080 : index
    %1045 = vector.load %arg3[%c0_360, %c2080] : memref<32x3200xf32, #tpu.memory_space<vmem>>, vector<32x160xf32>
    %c0_361 = arith.constant 0 : index
    %c13_362 = arith.constant 13 : index
    %1046 = vector.load %arg4[%c0_361, %c13_362] : memref<32x20xf32, #tpu.memory_space<vmem>>, vector<32x1xf32>
    %cst_363 = arith.constant 0.000000e+00 : f32
    %1047 = vector.broadcast %cst_363 : f32 to vector<32x2xf32>
    %1048 = vector.extract_strided_slice %1044 {offsets = [0, 0], sizes = [32, 30], strides = [1, 1]} : vector<32x32xf32> to vector<32x30xf32>
    %1049 = tpu.concatenate %1047, %1048 in 1 : vector<32x2xf32>, vector<32x30xf32> -> vector<32x32xf32>
    %1050 = vector.broadcast %934 : vector<1x32xf32> to vector<32x32xf32>
    %1051 = arith.mulf %1049, %1050 : vector<32x32xf32>
    %cst_364 = arith.constant 0.000000e+00 : f32
    %1052 = vector.broadcast %cst_364 : f32 to vector<32x1xf32>
    %1053 = vector.extract_strided_slice %1044 {offsets = [0, 0], sizes = [32, 31], strides = [1, 1]} : vector<32x32xf32> to vector<32x31xf32>
    %1054 = tpu.concatenate %1052, %1053 in 1 : vector<32x1xf32>, vector<32x31xf32> -> vector<32x32xf32>
    %1055 = vector.broadcast %945 : vector<1x32xf32> to vector<32x32xf32>
    %1056 = arith.mulf %1054, %1055 : vector<32x32xf32>
    %cst_365 = arith.constant 0.000000e+00 : f32
    %1057 = vector.broadcast %cst_365 : f32 to vector<32x1xf32>
    %1058 = vector.extract_strided_slice %1044 {offsets = [0, 1], sizes = [32, 31], strides = [1, 1]} : vector<32x32xf32> to vector<32x31xf32>
    %1059 = tpu.concatenate %1058, %1057 in 1 : vector<32x31xf32>, vector<32x1xf32> -> vector<32x32xf32>
    %1060 = vector.broadcast %956 : vector<1x32xf32> to vector<32x32xf32>
    %1061 = arith.mulf %1059, %1060 : vector<32x32xf32>
    %cst_366 = arith.constant 0.000000e+00 : f32
    %1062 = vector.broadcast %cst_366 : f32 to vector<32x2xf32>
    %1063 = vector.extract_strided_slice %1044 {offsets = [0, 2], sizes = [32, 30], strides = [1, 1]} : vector<32x32xf32> to vector<32x30xf32>
    %1064 = tpu.concatenate %1063, %1062 in 1 : vector<32x30xf32>, vector<32x2xf32> -> vector<32x32xf32>
    %1065 = vector.broadcast %967 : vector<1x32xf32> to vector<32x32xf32>
    %1066 = arith.mulf %1064, %1065 : vector<32x32xf32>
    %1067 = tpu.concatenate %1051, %1056, %1044, %1061, %1066 in 0 : vector<32x32xf32>, vector<32x32xf32>, vector<32x32xf32>, vector<32x32xf32>, vector<32x32xf32> -> vector<160x32xf32>
    %cst_367 = arith.constant dense<0.000000e+00> : vector<32x32xf32>
    %1068 = tpu.matmul %1045, %1067, %cst_367 {dimension_numbers = #tpu.dot_dimension_numbers<[1], [0], [0], [1], [0, 0, 1, 1], [], []>} : vector<32x160xf32>, vector<160x32xf32>, vector<32x32xf32> -> vector<32x32xf32>
    %1069 = vector.broadcast %1046 : vector<32x1xf32> to vector<32x32xf32>
    %1070 = arith.addf %1068, %1069 : vector<32x32xf32>
    %cst_368 = arith.constant 0.000000e+00 : f32
    %1071 = vector.broadcast %cst_368 : f32 to vector<32x32xf32>
    %1072 = arith.maximumf %1070, %1071 : vector<32x32xf32>
    %c0_369 = arith.constant 0 : index
    %c17 = arith.constant 17 : index
    %1073 = vector.load %arg5[%c0_369, %c17] : memref<32x25xf32, #tpu.memory_space<vmem>>, vector<32x1xf32>
    %c0_370 = arith.constant 0 : index
    %c17_371 = arith.constant 17 : index
    %1074 = vector.load %arg6[%c0_370, %c17_371] : memref<32x25xf32, #tpu.memory_space<vmem>>, vector<32x1xf32>
    %cst_372 = arith.constant dense<0.000000e+00> : vector<32xf32>
    %1075 = vector.multi_reduction <add>, %1072, %cst_372 [1] : vector<32x32xf32> to vector<32xf32>
    %1076 = vector.shape_cast %1075 : vector<32xf32> to vector<32x1xf32>
    %cst_373 = arith.constant 3.125000e-02 : f32
    %1077 = vector.broadcast %cst_373 : f32 to vector<32x1xf32>
    %1078 = arith.mulf %1076, %1077 : vector<32x1xf32>
    %1079 = vector.broadcast %1078 : vector<32x1xf32> to vector<32x32xf32>
    %1080 = arith.subf %1072, %1079 : vector<32x32xf32>
    %1081 = arith.mulf %1080, %1080 : vector<32x32xf32>
    %cst_374 = arith.constant dense<0.000000e+00> : vector<32xf32>
    %1082 = vector.multi_reduction <add>, %1081, %cst_374 [1] : vector<32x32xf32> to vector<32xf32>
    %1083 = vector.shape_cast %1082 : vector<32xf32> to vector<32x1xf32>
    %cst_375 = arith.constant 3.125000e-02 : f32
    %1084 = vector.broadcast %cst_375 : f32 to vector<32x1xf32>
    %1085 = arith.mulf %1083, %1084 : vector<32x1xf32>
    %cst_376 = arith.constant 9.99999974E-6 : f32
    %1086 = vector.broadcast %cst_376 : f32 to vector<32x1xf32>
    %1087 = arith.addf %1085, %1086 : vector<32x1xf32>
    %1088 = math.rsqrt %1087 : vector<32x1xf32>
    %1089 = vector.broadcast %1088 : vector<32x1xf32> to vector<32x32xf32>
    %1090 = arith.mulf %1080, %1089 : vector<32x32xf32>
    %1091 = vector.broadcast %1073 : vector<32x1xf32> to vector<32x32xf32>
    %1092 = arith.mulf %1091, %1090 : vector<32x32xf32>
    %1093 = vector.broadcast %1074 : vector<32x1xf32> to vector<32x32xf32>
    %1094 = arith.addf %1092, %1093 : vector<32x32xf32>
    %1095 = arith.addf %1094, %994 : vector<32x32xf32>
    %c0_377 = arith.constant 0 : index
    %c2240 = arith.constant 2240 : index
    %1096 = vector.load %arg3[%c0_377, %c2240] : memref<32x3200xf32, #tpu.memory_space<vmem>>, vector<32x160xf32>
    %c0_378 = arith.constant 0 : index
    %c14_379 = arith.constant 14 : index
    %1097 = vector.load %arg4[%c0_378, %c14_379] : memref<32x20xf32, #tpu.memory_space<vmem>>, vector<32x1xf32>
    %cst_380 = arith.constant 0.000000e+00 : f32
    %1098 = vector.broadcast %cst_380 : f32 to vector<32x2xf32>
    %1099 = vector.extract_strided_slice %1095 {offsets = [0, 0], sizes = [32, 30], strides = [1, 1]} : vector<32x32xf32> to vector<32x30xf32>
    %1100 = tpu.concatenate %1098, %1099 in 1 : vector<32x2xf32>, vector<32x30xf32> -> vector<32x32xf32>
    %1101 = vector.broadcast %934 : vector<1x32xf32> to vector<32x32xf32>
    %1102 = arith.mulf %1100, %1101 : vector<32x32xf32>
    %cst_381 = arith.constant 0.000000e+00 : f32
    %1103 = vector.broadcast %cst_381 : f32 to vector<32x1xf32>
    %1104 = vector.extract_strided_slice %1095 {offsets = [0, 0], sizes = [32, 31], strides = [1, 1]} : vector<32x32xf32> to vector<32x31xf32>
    %1105 = tpu.concatenate %1103, %1104 in 1 : vector<32x1xf32>, vector<32x31xf32> -> vector<32x32xf32>
    %1106 = vector.broadcast %945 : vector<1x32xf32> to vector<32x32xf32>
    %1107 = arith.mulf %1105, %1106 : vector<32x32xf32>
    %cst_382 = arith.constant 0.000000e+00 : f32
    %1108 = vector.broadcast %cst_382 : f32 to vector<32x1xf32>
    %1109 = vector.extract_strided_slice %1095 {offsets = [0, 1], sizes = [32, 31], strides = [1, 1]} : vector<32x32xf32> to vector<32x31xf32>
    %1110 = tpu.concatenate %1109, %1108 in 1 : vector<32x31xf32>, vector<32x1xf32> -> vector<32x32xf32>
    %1111 = vector.broadcast %956 : vector<1x32xf32> to vector<32x32xf32>
    %1112 = arith.mulf %1110, %1111 : vector<32x32xf32>
    %cst_383 = arith.constant 0.000000e+00 : f32
    %1113 = vector.broadcast %cst_383 : f32 to vector<32x2xf32>
    %1114 = vector.extract_strided_slice %1095 {offsets = [0, 2], sizes = [32, 30], strides = [1, 1]} : vector<32x32xf32> to vector<32x30xf32>
    %1115 = tpu.concatenate %1114, %1113 in 1 : vector<32x30xf32>, vector<32x2xf32> -> vector<32x32xf32>
    %1116 = vector.broadcast %967 : vector<1x32xf32> to vector<32x32xf32>
    %1117 = arith.mulf %1115, %1116 : vector<32x32xf32>
    %1118 = tpu.concatenate %1102, %1107, %1095, %1112, %1117 in 0 : vector<32x32xf32>, vector<32x32xf32>, vector<32x32xf32>, vector<32x32xf32>, vector<32x32xf32> -> vector<160x32xf32>
    %cst_384 = arith.constant dense<0.000000e+00> : vector<32x32xf32>
    %1119 = tpu.matmul %1096, %1118, %cst_384 {dimension_numbers = #tpu.dot_dimension_numbers<[1], [0], [0], [1], [0, 0, 1, 1], [], []>} : vector<32x160xf32>, vector<160x32xf32>, vector<32x32xf32> -> vector<32x32xf32>
    %1120 = vector.broadcast %1097 : vector<32x1xf32> to vector<32x32xf32>
    %1121 = arith.addf %1119, %1120 : vector<32x32xf32>
    %cst_385 = arith.constant 0.000000e+00 : f32
    %1122 = vector.broadcast %cst_385 : f32 to vector<32x32xf32>
    %1123 = arith.maximumf %1121, %1122 : vector<32x32xf32>
    %c0_386 = arith.constant 0 : index
    %c18 = arith.constant 18 : index
    %1124 = vector.load %arg5[%c0_386, %c18] : memref<32x25xf32, #tpu.memory_space<vmem>>, vector<32x1xf32>
    %c0_387 = arith.constant 0 : index
    %c18_388 = arith.constant 18 : index
    %1125 = vector.load %arg6[%c0_387, %c18_388] : memref<32x25xf32, #tpu.memory_space<vmem>>, vector<32x1xf32>
    %cst_389 = arith.constant dense<0.000000e+00> : vector<32xf32>
    %1126 = vector.multi_reduction <add>, %1123, %cst_389 [1] : vector<32x32xf32> to vector<32xf32>
    %1127 = vector.shape_cast %1126 : vector<32xf32> to vector<32x1xf32>
    %cst_390 = arith.constant 3.125000e-02 : f32
    %1128 = vector.broadcast %cst_390 : f32 to vector<32x1xf32>
    %1129 = arith.mulf %1127, %1128 : vector<32x1xf32>
    %1130 = vector.broadcast %1129 : vector<32x1xf32> to vector<32x32xf32>
    %1131 = arith.subf %1123, %1130 : vector<32x32xf32>
    %1132 = arith.mulf %1131, %1131 : vector<32x32xf32>
    %cst_391 = arith.constant dense<0.000000e+00> : vector<32xf32>
    %1133 = vector.multi_reduction <add>, %1132, %cst_391 [1] : vector<32x32xf32> to vector<32xf32>
    %1134 = vector.shape_cast %1133 : vector<32xf32> to vector<32x1xf32>
    %cst_392 = arith.constant 3.125000e-02 : f32
    %1135 = vector.broadcast %cst_392 : f32 to vector<32x1xf32>
    %1136 = arith.mulf %1134, %1135 : vector<32x1xf32>
    %cst_393 = arith.constant 9.99999974E-6 : f32
    %1137 = vector.broadcast %cst_393 : f32 to vector<32x1xf32>
    %1138 = arith.addf %1136, %1137 : vector<32x1xf32>
    %1139 = math.rsqrt %1138 : vector<32x1xf32>
    %1140 = vector.broadcast %1139 : vector<32x1xf32> to vector<32x32xf32>
    %1141 = arith.mulf %1131, %1140 : vector<32x32xf32>
    %1142 = vector.broadcast %1124 : vector<32x1xf32> to vector<32x32xf32>
    %1143 = arith.mulf %1142, %1141 : vector<32x32xf32>
    %1144 = vector.broadcast %1125 : vector<32x1xf32> to vector<32x32xf32>
    %1145 = arith.addf %1143, %1144 : vector<32x32xf32>
    %c0_394 = arith.constant 0 : index
    %c2400 = arith.constant 2400 : index
    %1146 = vector.load %arg3[%c0_394, %c2400] : memref<32x3200xf32, #tpu.memory_space<vmem>>, vector<32x160xf32>
    %c0_395 = arith.constant 0 : index
    %c15_396 = arith.constant 15 : index
    %1147 = vector.load %arg4[%c0_395, %c15_396] : memref<32x20xf32, #tpu.memory_space<vmem>>, vector<32x1xf32>
    %cst_397 = arith.constant 0.000000e+00 : f32
    %1148 = vector.broadcast %cst_397 : f32 to vector<32x2xf32>
    %1149 = vector.extract_strided_slice %1145 {offsets = [0, 0], sizes = [32, 30], strides = [1, 1]} : vector<32x32xf32> to vector<32x30xf32>
    %1150 = tpu.concatenate %1148, %1149 in 1 : vector<32x2xf32>, vector<32x30xf32> -> vector<32x32xf32>
    %1151 = vector.broadcast %934 : vector<1x32xf32> to vector<32x32xf32>
    %1152 = arith.mulf %1150, %1151 : vector<32x32xf32>
    %cst_398 = arith.constant 0.000000e+00 : f32
    %1153 = vector.broadcast %cst_398 : f32 to vector<32x1xf32>
    %1154 = vector.extract_strided_slice %1145 {offsets = [0, 0], sizes = [32, 31], strides = [1, 1]} : vector<32x32xf32> to vector<32x31xf32>
    %1155 = tpu.concatenate %1153, %1154 in 1 : vector<32x1xf32>, vector<32x31xf32> -> vector<32x32xf32>
    %1156 = vector.broadcast %945 : vector<1x32xf32> to vector<32x32xf32>
    %1157 = arith.mulf %1155, %1156 : vector<32x32xf32>
    %cst_399 = arith.constant 0.000000e+00 : f32
    %1158 = vector.broadcast %cst_399 : f32 to vector<32x1xf32>
    %1159 = vector.extract_strided_slice %1145 {offsets = [0, 1], sizes = [32, 31], strides = [1, 1]} : vector<32x32xf32> to vector<32x31xf32>
    %1160 = tpu.concatenate %1159, %1158 in 1 : vector<32x31xf32>, vector<32x1xf32> -> vector<32x32xf32>
    %1161 = vector.broadcast %956 : vector<1x32xf32> to vector<32x32xf32>
    %1162 = arith.mulf %1160, %1161 : vector<32x32xf32>
    %cst_400 = arith.constant 0.000000e+00 : f32
    %1163 = vector.broadcast %cst_400 : f32 to vector<32x2xf32>
    %1164 = vector.extract_strided_slice %1145 {offsets = [0, 2], sizes = [32, 30], strides = [1, 1]} : vector<32x32xf32> to vector<32x30xf32>
    %1165 = tpu.concatenate %1164, %1163 in 1 : vector<32x30xf32>, vector<32x2xf32> -> vector<32x32xf32>
    %1166 = vector.broadcast %967 : vector<1x32xf32> to vector<32x32xf32>
    %1167 = arith.mulf %1165, %1166 : vector<32x32xf32>
    %1168 = tpu.concatenate %1152, %1157, %1145, %1162, %1167 in 0 : vector<32x32xf32>, vector<32x32xf32>, vector<32x32xf32>, vector<32x32xf32>, vector<32x32xf32> -> vector<160x32xf32>
    %cst_401 = arith.constant dense<0.000000e+00> : vector<32x32xf32>
    %1169 = tpu.matmul %1146, %1168, %cst_401 {dimension_numbers = #tpu.dot_dimension_numbers<[1], [0], [0], [1], [0, 0, 1, 1], [], []>} : vector<32x160xf32>, vector<160x32xf32>, vector<32x32xf32> -> vector<32x32xf32>
    %1170 = vector.broadcast %1147 : vector<32x1xf32> to vector<32x32xf32>
    %1171 = arith.addf %1169, %1170 : vector<32x32xf32>
    %cst_402 = arith.constant 0.000000e+00 : f32
    %1172 = vector.broadcast %cst_402 : f32 to vector<32x32xf32>
    %1173 = arith.maximumf %1171, %1172 : vector<32x32xf32>
    %c0_403 = arith.constant 0 : index
    %c19 = arith.constant 19 : index
    %1174 = vector.load %arg5[%c0_403, %c19] : memref<32x25xf32, #tpu.memory_space<vmem>>, vector<32x1xf32>
    %c0_404 = arith.constant 0 : index
    %c19_405 = arith.constant 19 : index
    %1175 = vector.load %arg6[%c0_404, %c19_405] : memref<32x25xf32, #tpu.memory_space<vmem>>, vector<32x1xf32>
    %cst_406 = arith.constant dense<0.000000e+00> : vector<32xf32>
    %1176 = vector.multi_reduction <add>, %1173, %cst_406 [1] : vector<32x32xf32> to vector<32xf32>
    %1177 = vector.shape_cast %1176 : vector<32xf32> to vector<32x1xf32>
    %cst_407 = arith.constant 3.125000e-02 : f32
    %1178 = vector.broadcast %cst_407 : f32 to vector<32x1xf32>
    %1179 = arith.mulf %1177, %1178 : vector<32x1xf32>
    %1180 = vector.broadcast %1179 : vector<32x1xf32> to vector<32x32xf32>
    %1181 = arith.subf %1173, %1180 : vector<32x32xf32>
    %1182 = arith.mulf %1181, %1181 : vector<32x32xf32>
    %cst_408 = arith.constant dense<0.000000e+00> : vector<32xf32>
    %1183 = vector.multi_reduction <add>, %1182, %cst_408 [1] : vector<32x32xf32> to vector<32xf32>
    %1184 = vector.shape_cast %1183 : vector<32xf32> to vector<32x1xf32>
    %cst_409 = arith.constant 3.125000e-02 : f32
    %1185 = vector.broadcast %cst_409 : f32 to vector<32x1xf32>
    %1186 = arith.mulf %1184, %1185 : vector<32x1xf32>
    %cst_410 = arith.constant 9.99999974E-6 : f32
    %1187 = vector.broadcast %cst_410 : f32 to vector<32x1xf32>
    %1188 = arith.addf %1186, %1187 : vector<32x1xf32>
    %1189 = math.rsqrt %1188 : vector<32x1xf32>
    %1190 = vector.broadcast %1189 : vector<32x1xf32> to vector<32x32xf32>
    %1191 = arith.mulf %1181, %1190 : vector<32x32xf32>
    %1192 = vector.broadcast %1174 : vector<32x1xf32> to vector<32x32xf32>
    %1193 = arith.mulf %1192, %1191 : vector<32x32xf32>
    %1194 = vector.broadcast %1175 : vector<32x1xf32> to vector<32x32xf32>
    %1195 = arith.addf %1193, %1194 : vector<32x32xf32>
    %1196 = arith.addf %1195, %1095 : vector<32x32xf32>
    %cst_411 = arith.constant 0.000000e+00 : f32
    %1197 = vector.broadcast %cst_411 : f32 to vector<32x1xf32>
    %1198 = vector.extract_strided_slice %1196 {offsets = [0, 1], sizes = [32, 31], strides = [1, 1]} : vector<32x32xf32> to vector<32x31xf32>
    %1199 = tpu.concatenate %1198, %1197 in 1 : vector<32x31xf32>, vector<32x1xf32> -> vector<32x32xf32>
    %1200 = arith.maximumf %1196, %1199 : vector<32x32xf32>
    %1201 = tpu.iota {dimensions = array<i32: 0>} : vector<32x16xi32>
    %1202 = tpu.iota {dimensions = array<i32: 1>} : vector<32x16xi32>
    %c2_i32_412 = arith.constant 2 : i32
    %1203 = vector.broadcast %c2_i32_412 : i32 to vector<32x16xi32>
    %1204 = arith.muli %1203, %1202 : vector<32x16xi32>
    %1205 = arith.cmpi eq, %1201, %1204 : vector<32x16xi32>
    %1206 = arith.extui %1205 : vector<32x16xi1> to vector<32x16xi32>
    %1207 = arith.sitofp %1206 : vector<32x16xi32> to vector<32x16xf32>
    %cst_413 = arith.constant dense<0.000000e+00> : vector<32x16xf32>
    %1208 = tpu.matmul %1200, %1207, %cst_413 {dimension_numbers = #tpu.dot_dimension_numbers<[1], [0], [0], [1], [0, 0, 1, 1], [], []>} : vector<32x32xf32>, vector<32x16xf32>, vector<32x16xf32> -> vector<32x16xf32>
    %1209 = tpu.iota {dimensions = array<i32: 1>} : vector<1x16xi32>
    %c8_i32 = arith.constant 8 : i32
    %c0_i32_414 = arith.constant 0 : i32
    %1210 = arith.cmpi eq, %c8_i32, %c0_i32_414 : i32
    %c1_i32_415 = arith.constant 1 : i32
    %1211 = arith.select %1210, %c1_i32_415, %c8_i32 : i32
    %1212 = vector.broadcast %1211 : i32 to vector<1x16xi32>
    %1213 = arith.remsi %1209, %1212 : vector<1x16xi32>
    %c0_i32_416 = arith.constant 0 : i32
    %1214 = vector.broadcast %c0_i32_416 : i32 to vector<1x16xi32>
    %1215 = arith.cmpi ne, %1213, %1214 : vector<1x16xi32>
    %c0_i32_417 = arith.constant 0 : i32
    %1216 = vector.broadcast %c0_i32_417 : i32 to vector<1x16xi32>
    %1217 = arith.cmpi slt, %1213, %1216 : vector<1x16xi32>
    %c0_i32_418 = arith.constant 0 : i32
    %1218 = arith.cmpi slt, %1211, %c0_i32_418 : i32
    %1219 = vector.broadcast %1218 : i1 to vector<1x16xi1>
    %1220 = vector.broadcast %1219 : vector<1x16xi1> to vector<1x16xi1>
    %1221 = arith.xori %1217, %1220 : vector<1x16xi1>
    %1222 = arith.andi %1221, %1215 : vector<1x16xi1>
    %1223 = vector.broadcast %1211 : i32 to vector<1x16xi32>
    %1224 = arith.addi %1213, %1223 : vector<1x16xi32>
    %1225 = arith.select %1222, %1224, %1213 : vector<1x16xi1>, vector<1x16xi32>
    %c-2_i32_419 = arith.constant -2 : i32
    %1226 = vector.broadcast %c-2_i32_419 : i32 to vector<1x16xi32>
    %1227 = arith.addi %1225, %1226 : vector<1x16xi32>
    %c0_i32_420 = arith.constant 0 : i32
    %1228 = vector.broadcast %c0_i32_420 : i32 to vector<1x16xi32>
    %1229 = arith.cmpi sge, %1227, %1228 : vector<1x16xi32>
    %c-2_i32_421 = arith.constant -2 : i32
    %1230 = vector.broadcast %c-2_i32_421 : i32 to vector<1x16xi32>
    %1231 = arith.addi %1225, %1230 : vector<1x16xi32>
    %c8_i32_422 = arith.constant 8 : i32
    %1232 = vector.broadcast %c8_i32_422 : i32 to vector<1x16xi32>
    %1233 = arith.cmpi slt, %1231, %1232 : vector<1x16xi32>
    %1234 = arith.andi %1229, %1233 : vector<1x16xi1>
    %1235 = arith.extui %1234 : vector<1x16xi1> to vector<1x16xi32>
    %1236 = arith.sitofp %1235 : vector<1x16xi32> to vector<1x16xf32>
    %c-1_i32_423 = arith.constant -1 : i32
    %1237 = vector.broadcast %c-1_i32_423 : i32 to vector<1x16xi32>
    %1238 = arith.addi %1225, %1237 : vector<1x16xi32>
    %c0_i32_424 = arith.constant 0 : i32
    %1239 = vector.broadcast %c0_i32_424 : i32 to vector<1x16xi32>
    %1240 = arith.cmpi sge, %1238, %1239 : vector<1x16xi32>
    %c-1_i32_425 = arith.constant -1 : i32
    %1241 = vector.broadcast %c-1_i32_425 : i32 to vector<1x16xi32>
    %1242 = arith.addi %1225, %1241 : vector<1x16xi32>
    %c8_i32_426 = arith.constant 8 : i32
    %1243 = vector.broadcast %c8_i32_426 : i32 to vector<1x16xi32>
    %1244 = arith.cmpi slt, %1242, %1243 : vector<1x16xi32>
    %1245 = arith.andi %1240, %1244 : vector<1x16xi1>
    %1246 = arith.extui %1245 : vector<1x16xi1> to vector<1x16xi32>
    %1247 = arith.sitofp %1246 : vector<1x16xi32> to vector<1x16xf32>
    %c1_i32_427 = arith.constant 1 : i32
    %1248 = vector.broadcast %c1_i32_427 : i32 to vector<1x16xi32>
    %1249 = arith.addi %1225, %1248 : vector<1x16xi32>
    %c0_i32_428 = arith.constant 0 : i32
    %1250 = vector.broadcast %c0_i32_428 : i32 to vector<1x16xi32>
    %1251 = arith.cmpi sge, %1249, %1250 : vector<1x16xi32>
    %c1_i32_429 = arith.constant 1 : i32
    %1252 = vector.broadcast %c1_i32_429 : i32 to vector<1x16xi32>
    %1253 = arith.addi %1225, %1252 : vector<1x16xi32>
    %c8_i32_430 = arith.constant 8 : i32
    %1254 = vector.broadcast %c8_i32_430 : i32 to vector<1x16xi32>
    %1255 = arith.cmpi slt, %1253, %1254 : vector<1x16xi32>
    %1256 = arith.andi %1251, %1255 : vector<1x16xi1>
    %1257 = arith.extui %1256 : vector<1x16xi1> to vector<1x16xi32>
    %1258 = arith.sitofp %1257 : vector<1x16xi32> to vector<1x16xf32>
    %c2_i32_431 = arith.constant 2 : i32
    %1259 = vector.broadcast %c2_i32_431 : i32 to vector<1x16xi32>
    %1260 = arith.addi %1225, %1259 : vector<1x16xi32>
    %c0_i32_432 = arith.constant 0 : i32
    %1261 = vector.broadcast %c0_i32_432 : i32 to vector<1x16xi32>
    %1262 = arith.cmpi sge, %1260, %1261 : vector<1x16xi32>
    %c2_i32_433 = arith.constant 2 : i32
    %1263 = vector.broadcast %c2_i32_433 : i32 to vector<1x16xi32>
    %1264 = arith.addi %1225, %1263 : vector<1x16xi32>
    %c8_i32_434 = arith.constant 8 : i32
    %1265 = vector.broadcast %c8_i32_434 : i32 to vector<1x16xi32>
    %1266 = arith.cmpi slt, %1264, %1265 : vector<1x16xi32>
    %1267 = arith.andi %1262, %1266 : vector<1x16xi1>
    %1268 = arith.extui %1267 : vector<1x16xi1> to vector<1x16xi32>
    %1269 = arith.sitofp %1268 : vector<1x16xi32> to vector<1x16xf32>
    %c0_435 = arith.constant 0 : index
    %c128 = arith.constant 128 : index
    %1270 = vector.load %arg1[%c0_435, %c128] : memref<32x160xf32, #tpu.memory_space<vmem>>, vector<32x32xf32>
    %cst_436 = arith.constant dense<0.000000e+00> : vector<32x16xf32>
    %1271 = tpu.matmul %1270, %1208, %cst_436 {dimension_numbers = #tpu.dot_dimension_numbers<[1], [0], [0], [1], [0, 0, 1, 1], [], []>} : vector<32x32xf32>, vector<32x16xf32>, vector<32x16xf32> -> vector<32x16xf32>
    %c0_437 = arith.constant 0 : index
    %c4_438 = arith.constant 4 : index
    %1272 = vector.load %arg2[%c0_437, %c4_438] : memref<32x5xf32, #tpu.memory_space<vmem>>, vector<32x1xf32>
    %1273 = vector.broadcast %1272 : vector<32x1xf32> to vector<32x16xf32>
    %1274 = arith.addf %1271, %1273 : vector<32x16xf32>
    %c0_439 = arith.constant 0 : index
    %c20 = arith.constant 20 : index
    %1275 = vector.load %arg5[%c0_439, %c20] : memref<32x25xf32, #tpu.memory_space<vmem>>, vector<32x1xf32>
    %c0_440 = arith.constant 0 : index
    %c20_441 = arith.constant 20 : index
    %1276 = vector.load %arg6[%c0_440, %c20_441] : memref<32x25xf32, #tpu.memory_space<vmem>>, vector<32x1xf32>
    %cst_442 = arith.constant dense<0.000000e+00> : vector<32xf32>
    %1277 = vector.multi_reduction <add>, %1274, %cst_442 [1] : vector<32x16xf32> to vector<32xf32>
    %1278 = vector.shape_cast %1277 : vector<32xf32> to vector<32x1xf32>
    %cst_443 = arith.constant 6.250000e-02 : f32
    %1279 = vector.broadcast %cst_443 : f32 to vector<32x1xf32>
    %1280 = arith.mulf %1278, %1279 : vector<32x1xf32>
    %1281 = vector.broadcast %1280 : vector<32x1xf32> to vector<32x16xf32>
    %1282 = arith.subf %1274, %1281 : vector<32x16xf32>
    %1283 = arith.mulf %1282, %1282 : vector<32x16xf32>
    %cst_444 = arith.constant dense<0.000000e+00> : vector<32xf32>
    %1284 = vector.multi_reduction <add>, %1283, %cst_444 [1] : vector<32x16xf32> to vector<32xf32>
    %1285 = vector.shape_cast %1284 : vector<32xf32> to vector<32x1xf32>
    %cst_445 = arith.constant 6.250000e-02 : f32
    %1286 = vector.broadcast %cst_445 : f32 to vector<32x1xf32>
    %1287 = arith.mulf %1285, %1286 : vector<32x1xf32>
    %cst_446 = arith.constant 9.99999974E-6 : f32
    %1288 = vector.broadcast %cst_446 : f32 to vector<32x1xf32>
    %1289 = arith.addf %1287, %1288 : vector<32x1xf32>
    %1290 = math.rsqrt %1289 : vector<32x1xf32>
    %1291 = vector.broadcast %1290 : vector<32x1xf32> to vector<32x16xf32>
    %1292 = arith.mulf %1282, %1291 : vector<32x16xf32>
    %1293 = vector.broadcast %1275 : vector<32x1xf32> to vector<32x16xf32>
    %1294 = arith.mulf %1293, %1292 : vector<32x16xf32>
    %1295 = vector.broadcast %1276 : vector<32x1xf32> to vector<32x16xf32>
    %1296 = arith.addf %1294, %1295 : vector<32x16xf32>
    %c0_447 = arith.constant 0 : index
    %c2560 = arith.constant 2560 : index
    %1297 = vector.load %arg3[%c0_447, %c2560] : memref<32x3200xf32, #tpu.memory_space<vmem>>, vector<32x160xf32>
    %c0_448 = arith.constant 0 : index
    %c16_449 = arith.constant 16 : index
    %1298 = vector.load %arg4[%c0_448, %c16_449] : memref<32x20xf32, #tpu.memory_space<vmem>>, vector<32x1xf32>
    %cst_450 = arith.constant 0.000000e+00 : f32
    %1299 = vector.broadcast %cst_450 : f32 to vector<32x2xf32>
    %1300 = vector.extract_strided_slice %1296 {offsets = [0, 0], sizes = [32, 14], strides = [1, 1]} : vector<32x16xf32> to vector<32x14xf32>
    %1301 = tpu.concatenate %1299, %1300 in 1 : vector<32x2xf32>, vector<32x14xf32> -> vector<32x16xf32>
    %1302 = vector.broadcast %1236 : vector<1x16xf32> to vector<32x16xf32>
    %1303 = arith.mulf %1301, %1302 : vector<32x16xf32>
    %cst_451 = arith.constant 0.000000e+00 : f32
    %1304 = vector.broadcast %cst_451 : f32 to vector<32x1xf32>
    %1305 = vector.extract_strided_slice %1296 {offsets = [0, 0], sizes = [32, 15], strides = [1, 1]} : vector<32x16xf32> to vector<32x15xf32>
    %1306 = tpu.concatenate %1304, %1305 in 1 : vector<32x1xf32>, vector<32x15xf32> -> vector<32x16xf32>
    %1307 = vector.broadcast %1247 : vector<1x16xf32> to vector<32x16xf32>
    %1308 = arith.mulf %1306, %1307 : vector<32x16xf32>
    %cst_452 = arith.constant 0.000000e+00 : f32
    %1309 = vector.broadcast %cst_452 : f32 to vector<32x1xf32>
    %1310 = vector.extract_strided_slice %1296 {offsets = [0, 1], sizes = [32, 15], strides = [1, 1]} : vector<32x16xf32> to vector<32x15xf32>
    %1311 = tpu.concatenate %1310, %1309 in 1 : vector<32x15xf32>, vector<32x1xf32> -> vector<32x16xf32>
    %1312 = vector.broadcast %1258 : vector<1x16xf32> to vector<32x16xf32>
    %1313 = arith.mulf %1311, %1312 : vector<32x16xf32>
    %cst_453 = arith.constant 0.000000e+00 : f32
    %1314 = vector.broadcast %cst_453 : f32 to vector<32x2xf32>
    %1315 = vector.extract_strided_slice %1296 {offsets = [0, 2], sizes = [32, 14], strides = [1, 1]} : vector<32x16xf32> to vector<32x14xf32>
    %1316 = tpu.concatenate %1315, %1314 in 1 : vector<32x14xf32>, vector<32x2xf32> -> vector<32x16xf32>
    %1317 = vector.broadcast %1269 : vector<1x16xf32> to vector<32x16xf32>
    %1318 = arith.mulf %1316, %1317 : vector<32x16xf32>
    %1319 = tpu.concatenate %1303, %1308, %1296, %1313, %1318 in 0 : vector<32x16xf32>, vector<32x16xf32>, vector<32x16xf32>, vector<32x16xf32>, vector<32x16xf32> -> vector<160x16xf32>
    %cst_454 = arith.constant dense<0.000000e+00> : vector<32x16xf32>
    %1320 = tpu.matmul %1297, %1319, %cst_454 {dimension_numbers = #tpu.dot_dimension_numbers<[1], [0], [0], [1], [0, 0, 1, 1], [], []>} : vector<32x160xf32>, vector<160x16xf32>, vector<32x16xf32> -> vector<32x16xf32>
    %1321 = vector.broadcast %1298 : vector<32x1xf32> to vector<32x16xf32>
    %1322 = arith.addf %1320, %1321 : vector<32x16xf32>
    %cst_455 = arith.constant 0.000000e+00 : f32
    %1323 = vector.broadcast %cst_455 : f32 to vector<32x16xf32>
    %1324 = arith.maximumf %1322, %1323 : vector<32x16xf32>
    %c0_456 = arith.constant 0 : index
    %c21 = arith.constant 21 : index
    %1325 = vector.load %arg5[%c0_456, %c21] : memref<32x25xf32, #tpu.memory_space<vmem>>, vector<32x1xf32>
    %c0_457 = arith.constant 0 : index
    %c21_458 = arith.constant 21 : index
    %1326 = vector.load %arg6[%c0_457, %c21_458] : memref<32x25xf32, #tpu.memory_space<vmem>>, vector<32x1xf32>
    %cst_459 = arith.constant dense<0.000000e+00> : vector<32xf32>
    %1327 = vector.multi_reduction <add>, %1324, %cst_459 [1] : vector<32x16xf32> to vector<32xf32>
    %1328 = vector.shape_cast %1327 : vector<32xf32> to vector<32x1xf32>
    %cst_460 = arith.constant 6.250000e-02 : f32
    %1329 = vector.broadcast %cst_460 : f32 to vector<32x1xf32>
    %1330 = arith.mulf %1328, %1329 : vector<32x1xf32>
    %1331 = vector.broadcast %1330 : vector<32x1xf32> to vector<32x16xf32>
    %1332 = arith.subf %1324, %1331 : vector<32x16xf32>
    %1333 = arith.mulf %1332, %1332 : vector<32x16xf32>
    %cst_461 = arith.constant dense<0.000000e+00> : vector<32xf32>
    %1334 = vector.multi_reduction <add>, %1333, %cst_461 [1] : vector<32x16xf32> to vector<32xf32>
    %1335 = vector.shape_cast %1334 : vector<32xf32> to vector<32x1xf32>
    %cst_462 = arith.constant 6.250000e-02 : f32
    %1336 = vector.broadcast %cst_462 : f32 to vector<32x1xf32>
    %1337 = arith.mulf %1335, %1336 : vector<32x1xf32>
    %cst_463 = arith.constant 9.99999974E-6 : f32
    %1338 = vector.broadcast %cst_463 : f32 to vector<32x1xf32>
    %1339 = arith.addf %1337, %1338 : vector<32x1xf32>
    %1340 = math.rsqrt %1339 : vector<32x1xf32>
    %1341 = vector.broadcast %1340 : vector<32x1xf32> to vector<32x16xf32>
    %1342 = arith.mulf %1332, %1341 : vector<32x16xf32>
    %1343 = vector.broadcast %1325 : vector<32x1xf32> to vector<32x16xf32>
    %1344 = arith.mulf %1343, %1342 : vector<32x16xf32>
    %1345 = vector.broadcast %1326 : vector<32x1xf32> to vector<32x16xf32>
    %1346 = arith.addf %1344, %1345 : vector<32x16xf32>
    %c0_464 = arith.constant 0 : index
    %c2720 = arith.constant 2720 : index
    %1347 = vector.load %arg3[%c0_464, %c2720] : memref<32x3200xf32, #tpu.memory_space<vmem>>, vector<32x160xf32>
    %c0_465 = arith.constant 0 : index
    %c17_466 = arith.constant 17 : index
    %1348 = vector.load %arg4[%c0_465, %c17_466] : memref<32x20xf32, #tpu.memory_space<vmem>>, vector<32x1xf32>
    %cst_467 = arith.constant 0.000000e+00 : f32
    %1349 = vector.broadcast %cst_467 : f32 to vector<32x2xf32>
    %1350 = vector.extract_strided_slice %1346 {offsets = [0, 0], sizes = [32, 14], strides = [1, 1]} : vector<32x16xf32> to vector<32x14xf32>
    %1351 = tpu.concatenate %1349, %1350 in 1 : vector<32x2xf32>, vector<32x14xf32> -> vector<32x16xf32>
    %1352 = vector.broadcast %1236 : vector<1x16xf32> to vector<32x16xf32>
    %1353 = arith.mulf %1351, %1352 : vector<32x16xf32>
    %cst_468 = arith.constant 0.000000e+00 : f32
    %1354 = vector.broadcast %cst_468 : f32 to vector<32x1xf32>
    %1355 = vector.extract_strided_slice %1346 {offsets = [0, 0], sizes = [32, 15], strides = [1, 1]} : vector<32x16xf32> to vector<32x15xf32>
    %1356 = tpu.concatenate %1354, %1355 in 1 : vector<32x1xf32>, vector<32x15xf32> -> vector<32x16xf32>
    %1357 = vector.broadcast %1247 : vector<1x16xf32> to vector<32x16xf32>
    %1358 = arith.mulf %1356, %1357 : vector<32x16xf32>
    %cst_469 = arith.constant 0.000000e+00 : f32
    %1359 = vector.broadcast %cst_469 : f32 to vector<32x1xf32>
    %1360 = vector.extract_strided_slice %1346 {offsets = [0, 1], sizes = [32, 15], strides = [1, 1]} : vector<32x16xf32> to vector<32x15xf32>
    %1361 = tpu.concatenate %1360, %1359 in 1 : vector<32x15xf32>, vector<32x1xf32> -> vector<32x16xf32>
    %1362 = vector.broadcast %1258 : vector<1x16xf32> to vector<32x16xf32>
    %1363 = arith.mulf %1361, %1362 : vector<32x16xf32>
    %cst_470 = arith.constant 0.000000e+00 : f32
    %1364 = vector.broadcast %cst_470 : f32 to vector<32x2xf32>
    %1365 = vector.extract_strided_slice %1346 {offsets = [0, 2], sizes = [32, 14], strides = [1, 1]} : vector<32x16xf32> to vector<32x14xf32>
    %1366 = tpu.concatenate %1365, %1364 in 1 : vector<32x14xf32>, vector<32x2xf32> -> vector<32x16xf32>
    %1367 = vector.broadcast %1269 : vector<1x16xf32> to vector<32x16xf32>
    %1368 = arith.mulf %1366, %1367 : vector<32x16xf32>
    %1369 = tpu.concatenate %1353, %1358, %1346, %1363, %1368 in 0 : vector<32x16xf32>, vector<32x16xf32>, vector<32x16xf32>, vector<32x16xf32>, vector<32x16xf32> -> vector<160x16xf32>
    %cst_471 = arith.constant dense<0.000000e+00> : vector<32x16xf32>
    %1370 = tpu.matmul %1347, %1369, %cst_471 {dimension_numbers = #tpu.dot_dimension_numbers<[1], [0], [0], [1], [0, 0, 1, 1], [], []>} : vector<32x160xf32>, vector<160x16xf32>, vector<32x16xf32> -> vector<32x16xf32>
    %1371 = vector.broadcast %1348 : vector<32x1xf32> to vector<32x16xf32>
    %1372 = arith.addf %1370, %1371 : vector<32x16xf32>
    %cst_472 = arith.constant 0.000000e+00 : f32
    %1373 = vector.broadcast %cst_472 : f32 to vector<32x16xf32>
    %1374 = arith.maximumf %1372, %1373 : vector<32x16xf32>
    %c0_473 = arith.constant 0 : index
    %c22 = arith.constant 22 : index
    %1375 = vector.load %arg5[%c0_473, %c22] : memref<32x25xf32, #tpu.memory_space<vmem>>, vector<32x1xf32>
    %c0_474 = arith.constant 0 : index
    %c22_475 = arith.constant 22 : index
    %1376 = vector.load %arg6[%c0_474, %c22_475] : memref<32x25xf32, #tpu.memory_space<vmem>>, vector<32x1xf32>
    %cst_476 = arith.constant dense<0.000000e+00> : vector<32xf32>
    %1377 = vector.multi_reduction <add>, %1374, %cst_476 [1] : vector<32x16xf32> to vector<32xf32>
    %1378 = vector.shape_cast %1377 : vector<32xf32> to vector<32x1xf32>
    %cst_477 = arith.constant 6.250000e-02 : f32
    %1379 = vector.broadcast %cst_477 : f32 to vector<32x1xf32>
    %1380 = arith.mulf %1378, %1379 : vector<32x1xf32>
    %1381 = vector.broadcast %1380 : vector<32x1xf32> to vector<32x16xf32>
    %1382 = arith.subf %1374, %1381 : vector<32x16xf32>
    %1383 = arith.mulf %1382, %1382 : vector<32x16xf32>
    %cst_478 = arith.constant dense<0.000000e+00> : vector<32xf32>
    %1384 = vector.multi_reduction <add>, %1383, %cst_478 [1] : vector<32x16xf32> to vector<32xf32>
    %1385 = vector.shape_cast %1384 : vector<32xf32> to vector<32x1xf32>
    %cst_479 = arith.constant 6.250000e-02 : f32
    %1386 = vector.broadcast %cst_479 : f32 to vector<32x1xf32>
    %1387 = arith.mulf %1385, %1386 : vector<32x1xf32>
    %cst_480 = arith.constant 9.99999974E-6 : f32
    %1388 = vector.broadcast %cst_480 : f32 to vector<32x1xf32>
    %1389 = arith.addf %1387, %1388 : vector<32x1xf32>
    %1390 = math.rsqrt %1389 : vector<32x1xf32>
    %1391 = vector.broadcast %1390 : vector<32x1xf32> to vector<32x16xf32>
    %1392 = arith.mulf %1382, %1391 : vector<32x16xf32>
    %1393 = vector.broadcast %1375 : vector<32x1xf32> to vector<32x16xf32>
    %1394 = arith.mulf %1393, %1392 : vector<32x16xf32>
    %1395 = vector.broadcast %1376 : vector<32x1xf32> to vector<32x16xf32>
    %1396 = arith.addf %1394, %1395 : vector<32x16xf32>
    %1397 = arith.addf %1396, %1296 : vector<32x16xf32>
    %c0_481 = arith.constant 0 : index
    %c2880 = arith.constant 2880 : index
    %1398 = vector.load %arg3[%c0_481, %c2880] : memref<32x3200xf32, #tpu.memory_space<vmem>>, vector<32x160xf32>
    %c0_482 = arith.constant 0 : index
    %c18_483 = arith.constant 18 : index
    %1399 = vector.load %arg4[%c0_482, %c18_483] : memref<32x20xf32, #tpu.memory_space<vmem>>, vector<32x1xf32>
    %cst_484 = arith.constant 0.000000e+00 : f32
    %1400 = vector.broadcast %cst_484 : f32 to vector<32x2xf32>
    %1401 = vector.extract_strided_slice %1397 {offsets = [0, 0], sizes = [32, 14], strides = [1, 1]} : vector<32x16xf32> to vector<32x14xf32>
    %1402 = tpu.concatenate %1400, %1401 in 1 : vector<32x2xf32>, vector<32x14xf32> -> vector<32x16xf32>
    %1403 = vector.broadcast %1236 : vector<1x16xf32> to vector<32x16xf32>
    %1404 = arith.mulf %1402, %1403 : vector<32x16xf32>
    %cst_485 = arith.constant 0.000000e+00 : f32
    %1405 = vector.broadcast %cst_485 : f32 to vector<32x1xf32>
    %1406 = vector.extract_strided_slice %1397 {offsets = [0, 0], sizes = [32, 15], strides = [1, 1]} : vector<32x16xf32> to vector<32x15xf32>
    %1407 = tpu.concatenate %1405, %1406 in 1 : vector<32x1xf32>, vector<32x15xf32> -> vector<32x16xf32>
    %1408 = vector.broadcast %1247 : vector<1x16xf32> to vector<32x16xf32>
    %1409 = arith.mulf %1407, %1408 : vector<32x16xf32>
    %cst_486 = arith.constant 0.000000e+00 : f32
    %1410 = vector.broadcast %cst_486 : f32 to vector<32x1xf32>
    %1411 = vector.extract_strided_slice %1397 {offsets = [0, 1], sizes = [32, 15], strides = [1, 1]} : vector<32x16xf32> to vector<32x15xf32>
    %1412 = tpu.concatenate %1411, %1410 in 1 : vector<32x15xf32>, vector<32x1xf32> -> vector<32x16xf32>
    %1413 = vector.broadcast %1258 : vector<1x16xf32> to vector<32x16xf32>
    %1414 = arith.mulf %1412, %1413 : vector<32x16xf32>
    %cst_487 = arith.constant 0.000000e+00 : f32
    %1415 = vector.broadcast %cst_487 : f32 to vector<32x2xf32>
    %1416 = vector.extract_strided_slice %1397 {offsets = [0, 2], sizes = [32, 14], strides = [1, 1]} : vector<32x16xf32> to vector<32x14xf32>
    %1417 = tpu.concatenate %1416, %1415 in 1 : vector<32x14xf32>, vector<32x2xf32> -> vector<32x16xf32>
    %1418 = vector.broadcast %1269 : vector<1x16xf32> to vector<32x16xf32>
    %1419 = arith.mulf %1417, %1418 : vector<32x16xf32>
    %1420 = tpu.concatenate %1404, %1409, %1397, %1414, %1419 in 0 : vector<32x16xf32>, vector<32x16xf32>, vector<32x16xf32>, vector<32x16xf32>, vector<32x16xf32> -> vector<160x16xf32>
    %cst_488 = arith.constant dense<0.000000e+00> : vector<32x16xf32>
    %1421 = tpu.matmul %1398, %1420, %cst_488 {dimension_numbers = #tpu.dot_dimension_numbers<[1], [0], [0], [1], [0, 0, 1, 1], [], []>} : vector<32x160xf32>, vector<160x16xf32>, vector<32x16xf32> -> vector<32x16xf32>
    %1422 = vector.broadcast %1399 : vector<32x1xf32> to vector<32x16xf32>
    %1423 = arith.addf %1421, %1422 : vector<32x16xf32>
    %cst_489 = arith.constant 0.000000e+00 : f32
    %1424 = vector.broadcast %cst_489 : f32 to vector<32x16xf32>
    %1425 = arith.maximumf %1423, %1424 : vector<32x16xf32>
    %c0_490 = arith.constant 0 : index
    %c23 = arith.constant 23 : index
    %1426 = vector.load %arg5[%c0_490, %c23] : memref<32x25xf32, #tpu.memory_space<vmem>>, vector<32x1xf32>
    %c0_491 = arith.constant 0 : index
    %c23_492 = arith.constant 23 : index
    %1427 = vector.load %arg6[%c0_491, %c23_492] : memref<32x25xf32, #tpu.memory_space<vmem>>, vector<32x1xf32>
    %cst_493 = arith.constant dense<0.000000e+00> : vector<32xf32>
    %1428 = vector.multi_reduction <add>, %1425, %cst_493 [1] : vector<32x16xf32> to vector<32xf32>
    %1429 = vector.shape_cast %1428 : vector<32xf32> to vector<32x1xf32>
    %cst_494 = arith.constant 6.250000e-02 : f32
    %1430 = vector.broadcast %cst_494 : f32 to vector<32x1xf32>
    %1431 = arith.mulf %1429, %1430 : vector<32x1xf32>
    %1432 = vector.broadcast %1431 : vector<32x1xf32> to vector<32x16xf32>
    %1433 = arith.subf %1425, %1432 : vector<32x16xf32>
    %1434 = arith.mulf %1433, %1433 : vector<32x16xf32>
    %cst_495 = arith.constant dense<0.000000e+00> : vector<32xf32>
    %1435 = vector.multi_reduction <add>, %1434, %cst_495 [1] : vector<32x16xf32> to vector<32xf32>
    %1436 = vector.shape_cast %1435 : vector<32xf32> to vector<32x1xf32>
    %cst_496 = arith.constant 6.250000e-02 : f32
    %1437 = vector.broadcast %cst_496 : f32 to vector<32x1xf32>
    %1438 = arith.mulf %1436, %1437 : vector<32x1xf32>
    %cst_497 = arith.constant 9.99999974E-6 : f32
    %1439 = vector.broadcast %cst_497 : f32 to vector<32x1xf32>
    %1440 = arith.addf %1438, %1439 : vector<32x1xf32>
    %1441 = math.rsqrt %1440 : vector<32x1xf32>
    %1442 = vector.broadcast %1441 : vector<32x1xf32> to vector<32x16xf32>
    %1443 = arith.mulf %1433, %1442 : vector<32x16xf32>
    %1444 = vector.broadcast %1426 : vector<32x1xf32> to vector<32x16xf32>
    %1445 = arith.mulf %1444, %1443 : vector<32x16xf32>
    %1446 = vector.broadcast %1427 : vector<32x1xf32> to vector<32x16xf32>
    %1447 = arith.addf %1445, %1446 : vector<32x16xf32>
    %c0_498 = arith.constant 0 : index
    %c3040 = arith.constant 3040 : index
    %1448 = vector.load %arg3[%c0_498, %c3040] : memref<32x3200xf32, #tpu.memory_space<vmem>>, vector<32x160xf32>
    %c0_499 = arith.constant 0 : index
    %c19_500 = arith.constant 19 : index
    %1449 = vector.load %arg4[%c0_499, %c19_500] : memref<32x20xf32, #tpu.memory_space<vmem>>, vector<32x1xf32>
    %cst_501 = arith.constant 0.000000e+00 : f32
    %1450 = vector.broadcast %cst_501 : f32 to vector<32x2xf32>
    %1451 = vector.extract_strided_slice %1447 {offsets = [0, 0], sizes = [32, 14], strides = [1, 1]} : vector<32x16xf32> to vector<32x14xf32>
    %1452 = tpu.concatenate %1450, %1451 in 1 : vector<32x2xf32>, vector<32x14xf32> -> vector<32x16xf32>
    %1453 = vector.broadcast %1236 : vector<1x16xf32> to vector<32x16xf32>
    %1454 = arith.mulf %1452, %1453 : vector<32x16xf32>
    %cst_502 = arith.constant 0.000000e+00 : f32
    %1455 = vector.broadcast %cst_502 : f32 to vector<32x1xf32>
    %1456 = vector.extract_strided_slice %1447 {offsets = [0, 0], sizes = [32, 15], strides = [1, 1]} : vector<32x16xf32> to vector<32x15xf32>
    %1457 = tpu.concatenate %1455, %1456 in 1 : vector<32x1xf32>, vector<32x15xf32> -> vector<32x16xf32>
    %1458 = vector.broadcast %1247 : vector<1x16xf32> to vector<32x16xf32>
    %1459 = arith.mulf %1457, %1458 : vector<32x16xf32>
    %cst_503 = arith.constant 0.000000e+00 : f32
    %1460 = vector.broadcast %cst_503 : f32 to vector<32x1xf32>
    %1461 = vector.extract_strided_slice %1447 {offsets = [0, 1], sizes = [32, 15], strides = [1, 1]} : vector<32x16xf32> to vector<32x15xf32>
    %1462 = tpu.concatenate %1461, %1460 in 1 : vector<32x15xf32>, vector<32x1xf32> -> vector<32x16xf32>
    %1463 = vector.broadcast %1258 : vector<1x16xf32> to vector<32x16xf32>
    %1464 = arith.mulf %1462, %1463 : vector<32x16xf32>
    %cst_504 = arith.constant 0.000000e+00 : f32
    %1465 = vector.broadcast %cst_504 : f32 to vector<32x2xf32>
    %1466 = vector.extract_strided_slice %1447 {offsets = [0, 2], sizes = [32, 14], strides = [1, 1]} : vector<32x16xf32> to vector<32x14xf32>
    %1467 = tpu.concatenate %1466, %1465 in 1 : vector<32x14xf32>, vector<32x2xf32> -> vector<32x16xf32>
    %1468 = vector.broadcast %1269 : vector<1x16xf32> to vector<32x16xf32>
    %1469 = arith.mulf %1467, %1468 : vector<32x16xf32>
    %1470 = tpu.concatenate %1454, %1459, %1447, %1464, %1469 in 0 : vector<32x16xf32>, vector<32x16xf32>, vector<32x16xf32>, vector<32x16xf32>, vector<32x16xf32> -> vector<160x16xf32>
    %cst_505 = arith.constant dense<0.000000e+00> : vector<32x16xf32>
    %1471 = tpu.matmul %1448, %1470, %cst_505 {dimension_numbers = #tpu.dot_dimension_numbers<[1], [0], [0], [1], [0, 0, 1, 1], [], []>} : vector<32x160xf32>, vector<160x16xf32>, vector<32x16xf32> -> vector<32x16xf32>
    %1472 = vector.broadcast %1449 : vector<32x1xf32> to vector<32x16xf32>
    %1473 = arith.addf %1471, %1472 : vector<32x16xf32>
    %cst_506 = arith.constant 0.000000e+00 : f32
    %1474 = vector.broadcast %cst_506 : f32 to vector<32x16xf32>
    %1475 = arith.maximumf %1473, %1474 : vector<32x16xf32>
    %c0_507 = arith.constant 0 : index
    %c24 = arith.constant 24 : index
    %1476 = vector.load %arg5[%c0_507, %c24] : memref<32x25xf32, #tpu.memory_space<vmem>>, vector<32x1xf32>
    %c0_508 = arith.constant 0 : index
    %c24_509 = arith.constant 24 : index
    %1477 = vector.load %arg6[%c0_508, %c24_509] : memref<32x25xf32, #tpu.memory_space<vmem>>, vector<32x1xf32>
    %cst_510 = arith.constant dense<0.000000e+00> : vector<32xf32>
    %1478 = vector.multi_reduction <add>, %1475, %cst_510 [1] : vector<32x16xf32> to vector<32xf32>
    %1479 = vector.shape_cast %1478 : vector<32xf32> to vector<32x1xf32>
    %cst_511 = arith.constant 6.250000e-02 : f32
    %1480 = vector.broadcast %cst_511 : f32 to vector<32x1xf32>
    %1481 = arith.mulf %1479, %1480 : vector<32x1xf32>
    %1482 = vector.broadcast %1481 : vector<32x1xf32> to vector<32x16xf32>
    %1483 = arith.subf %1475, %1482 : vector<32x16xf32>
    %1484 = arith.mulf %1483, %1483 : vector<32x16xf32>
    %cst_512 = arith.constant dense<0.000000e+00> : vector<32xf32>
    %1485 = vector.multi_reduction <add>, %1484, %cst_512 [1] : vector<32x16xf32> to vector<32xf32>
    %1486 = vector.shape_cast %1485 : vector<32xf32> to vector<32x1xf32>
    %cst_513 = arith.constant 6.250000e-02 : f32
    %1487 = vector.broadcast %cst_513 : f32 to vector<32x1xf32>
    %1488 = arith.mulf %1486, %1487 : vector<32x1xf32>
    %cst_514 = arith.constant 9.99999974E-6 : f32
    %1489 = vector.broadcast %cst_514 : f32 to vector<32x1xf32>
    %1490 = arith.addf %1488, %1489 : vector<32x1xf32>
    %1491 = math.rsqrt %1490 : vector<32x1xf32>
    %1492 = vector.broadcast %1491 : vector<32x1xf32> to vector<32x16xf32>
    %1493 = arith.mulf %1483, %1492 : vector<32x16xf32>
    %1494 = vector.broadcast %1476 : vector<32x1xf32> to vector<32x16xf32>
    %1495 = arith.mulf %1494, %1493 : vector<32x16xf32>
    %1496 = vector.broadcast %1477 : vector<32x1xf32> to vector<32x16xf32>
    %1497 = arith.addf %1495, %1496 : vector<32x16xf32>
    %1498 = arith.addf %1497, %1397 : vector<32x16xf32>
    %cst_515 = arith.constant 0.000000e+00 : f32
    %1499 = vector.broadcast %cst_515 : f32 to vector<32x1xf32>
    %1500 = vector.extract_strided_slice %1498 {offsets = [0, 1], sizes = [32, 15], strides = [1, 1]} : vector<32x16xf32> to vector<32x15xf32>
    %1501 = tpu.concatenate %1500, %1499 in 1 : vector<32x15xf32>, vector<32x1xf32> -> vector<32x16xf32>
    %1502 = arith.maximumf %1498, %1501 : vector<32x16xf32>
    %1503 = tpu.iota {dimensions = array<i32: 0>} : vector<16x8xi32>
    %1504 = tpu.iota {dimensions = array<i32: 1>} : vector<16x8xi32>
    %c2_i32_516 = arith.constant 2 : i32
    %1505 = vector.broadcast %c2_i32_516 : i32 to vector<16x8xi32>
    %1506 = arith.muli %1505, %1504 : vector<16x8xi32>
    %1507 = arith.cmpi eq, %1503, %1506 : vector<16x8xi32>
    %1508 = arith.extui %1507 : vector<16x8xi1> to vector<16x8xi32>
    %1509 = arith.sitofp %1508 : vector<16x8xi32> to vector<16x8xf32>
    %cst_517 = arith.constant dense<0.000000e+00> : vector<32x8xf32>
    %1510 = tpu.matmul %1502, %1509, %cst_517 {dimension_numbers = #tpu.dot_dimension_numbers<[1], [0], [0], [1], [0, 0, 1, 1], [], []>} : vector<32x16xf32>, vector<16x8xf32>, vector<32x8xf32> -> vector<32x8xf32>
    %1511 = tpu.iota {dimensions = array<i32: 0>} : vector<8x2xi32>
    %1512 = tpu.iota {dimensions = array<i32: 1>} : vector<8x2xi32>
    %c4_i32 = arith.constant 4 : i32
    %1513 = vector.broadcast %c4_i32 : i32 to vector<8x2xi32>
    %1514 = arith.muli %1513, %1512 : vector<8x2xi32>
    %c0_i32_518 = arith.constant 0 : i32
    %1515 = vector.broadcast %c0_i32_518 : i32 to vector<8x2xi32>
    %1516 = arith.addi %1514, %1515 : vector<8x2xi32>
    %1517 = arith.cmpi eq, %1511, %1516 : vector<8x2xi32>
    %1518 = arith.extui %1517 : vector<8x2xi1> to vector<8x2xi32>
    %1519 = arith.sitofp %1518 : vector<8x2xi32> to vector<8x2xf32>
    %cst_519 = arith.constant dense<0.000000e+00> : vector<32x2xf32>
    %1520 = tpu.matmul %1510, %1519, %cst_519 {dimension_numbers = #tpu.dot_dimension_numbers<[1], [0], [0], [1], [0, 0, 1, 1], [], []>} : vector<32x8xf32>, vector<8x2xf32>, vector<32x2xf32> -> vector<32x2xf32>
    %c4_i32_520 = arith.constant 4 : i32
    %1521 = vector.broadcast %c4_i32_520 : i32 to vector<8x2xi32>
    %1522 = arith.muli %1521, %1512 : vector<8x2xi32>
    %c1_i32_521 = arith.constant 1 : i32
    %1523 = vector.broadcast %c1_i32_521 : i32 to vector<8x2xi32>
    %1524 = arith.addi %1522, %1523 : vector<8x2xi32>
    %1525 = arith.cmpi eq, %1511, %1524 : vector<8x2xi32>
    %1526 = arith.extui %1525 : vector<8x2xi1> to vector<8x2xi32>
    %1527 = arith.sitofp %1526 : vector<8x2xi32> to vector<8x2xf32>
    %cst_522 = arith.constant dense<0.000000e+00> : vector<32x2xf32>
    %1528 = tpu.matmul %1510, %1527, %cst_522 {dimension_numbers = #tpu.dot_dimension_numbers<[1], [0], [0], [1], [0, 0, 1, 1], [], []>} : vector<32x8xf32>, vector<8x2xf32>, vector<32x2xf32> -> vector<32x2xf32>
    %c4_i32_523 = arith.constant 4 : i32
    %1529 = vector.broadcast %c4_i32_523 : i32 to vector<8x2xi32>
    %1530 = arith.muli %1529, %1512 : vector<8x2xi32>
    %c2_i32_524 = arith.constant 2 : i32
    %1531 = vector.broadcast %c2_i32_524 : i32 to vector<8x2xi32>
    %1532 = arith.addi %1530, %1531 : vector<8x2xi32>
    %1533 = arith.cmpi eq, %1511, %1532 : vector<8x2xi32>
    %1534 = arith.extui %1533 : vector<8x2xi1> to vector<8x2xi32>
    %1535 = arith.sitofp %1534 : vector<8x2xi32> to vector<8x2xf32>
    %cst_525 = arith.constant dense<0.000000e+00> : vector<32x2xf32>
    %1536 = tpu.matmul %1510, %1535, %cst_525 {dimension_numbers = #tpu.dot_dimension_numbers<[1], [0], [0], [1], [0, 0, 1, 1], [], []>} : vector<32x8xf32>, vector<8x2xf32>, vector<32x2xf32> -> vector<32x2xf32>
    %c4_i32_526 = arith.constant 4 : i32
    %1537 = vector.broadcast %c4_i32_526 : i32 to vector<8x2xi32>
    %1538 = arith.muli %1537, %1512 : vector<8x2xi32>
    %c3_i32 = arith.constant 3 : i32
    %1539 = vector.broadcast %c3_i32 : i32 to vector<8x2xi32>
    %1540 = arith.addi %1538, %1539 : vector<8x2xi32>
    %1541 = arith.cmpi eq, %1511, %1540 : vector<8x2xi32>
    %1542 = arith.extui %1541 : vector<8x2xi1> to vector<8x2xi32>
    %1543 = arith.sitofp %1542 : vector<8x2xi32> to vector<8x2xf32>
    %cst_527 = arith.constant dense<0.000000e+00> : vector<32x2xf32>
    %1544 = tpu.matmul %1510, %1543, %cst_527 {dimension_numbers = #tpu.dot_dimension_numbers<[1], [0], [0], [1], [0, 0, 1, 1], [], []>} : vector<32x8xf32>, vector<8x2xf32>, vector<32x2xf32> -> vector<32x2xf32>
    %1545 = tpu.concatenate %1520, %1528, %1536, %1544 in 0 : vector<32x2xf32>, vector<32x2xf32>, vector<32x2xf32>, vector<32x2xf32> -> vector<128x2xf32>
    %c0_528 = arith.constant 0 : index
    %c0_529 = arith.constant 0 : index
    %1546 = vector.load %arg7[%c0_528, %c0_529] : memref<128x128xf32, #tpu.memory_space<vmem>>, vector<128x128xf32>
    %cst_530 = arith.constant dense<0.000000e+00> : vector<128x2xf32>
    %1547 = tpu.matmul %1546, %1545, %cst_530 {dimension_numbers = #tpu.dot_dimension_numbers<[1], [0], [0], [1], [0, 0, 1, 1], [], []>} : vector<128x128xf32>, vector<128x2xf32>, vector<128x2xf32> -> vector<128x2xf32>
    %c0_531 = arith.constant 0 : index
    %c0_532 = arith.constant 0 : index
    %1548 = vector.load %arg10[%c0_531, %c0_532] : memref<128x3xf32, #tpu.memory_space<vmem>>, vector<128x1xf32>
    %1549 = vector.broadcast %1548 : vector<128x1xf32> to vector<128x2xf32>
    %1550 = arith.addf %1547, %1549 : vector<128x2xf32>
    %cst_533 = arith.constant 0.000000e+00 : f32
    %1551 = vector.broadcast %cst_533 : f32 to vector<128x2xf32>
    %1552 = arith.maximumf %1550, %1551 : vector<128x2xf32>
    %c0_534 = arith.constant 0 : index
    %c0_535 = arith.constant 0 : index
    %1553 = vector.load %arg8[%c0_534, %c0_535] : memref<128x128xf32, #tpu.memory_space<vmem>>, vector<128x128xf32>
    %cst_536 = arith.constant dense<0.000000e+00> : vector<128x2xf32>
    %1554 = tpu.matmul %1553, %1552, %cst_536 {dimension_numbers = #tpu.dot_dimension_numbers<[1], [0], [0], [1], [0, 0, 1, 1], [], []>} : vector<128x128xf32>, vector<128x2xf32>, vector<128x2xf32> -> vector<128x2xf32>
    %c0_537 = arith.constant 0 : index
    %c1_538 = arith.constant 1 : index
    %1555 = vector.load %arg10[%c0_537, %c1_538] : memref<128x3xf32, #tpu.memory_space<vmem>>, vector<128x1xf32>
    %1556 = vector.broadcast %1555 : vector<128x1xf32> to vector<128x2xf32>
    %1557 = arith.addf %1554, %1556 : vector<128x2xf32>
    %cst_539 = arith.constant 0.000000e+00 : f32
    %1558 = vector.broadcast %cst_539 : f32 to vector<128x2xf32>
    %1559 = arith.maximumf %1557, %1558 : vector<128x2xf32>
    %c0_540 = arith.constant 0 : index
    %c0_541 = arith.constant 0 : index
    %1560 = vector.load %arg9[%c0_540, %c0_541] : memref<8x128xf32, #tpu.memory_space<vmem>>, vector<8x128xf32>
    %cst_542 = arith.constant dense<0.000000e+00> : vector<8x2xf32>
    %1561 = tpu.matmul %1560, %1559, %cst_542 {dimension_numbers = #tpu.dot_dimension_numbers<[1], [0], [0], [1], [0, 0, 1, 1], [], []>} : vector<8x128xf32>, vector<128x2xf32>, vector<8x2xf32> -> vector<8x2xf32>
    %c0_543 = arith.constant 0 : index
    %c2_544 = arith.constant 2 : index
    %1562 = vector.load %arg10[%c0_543, %c2_544] : memref<128x3xf32, #tpu.memory_space<vmem>>, vector<8x1xf32>
    %1563 = vector.broadcast %1562 : vector<8x1xf32> to vector<8x2xf32>
    %1564 = arith.addf %1561, %1563 : vector<8x2xf32>
    %c0_545 = arith.constant 0 : index
    %c0_546 = arith.constant 0 : index
    %1565 = vector.load %arg11[%c0_545, %c0_546] : memref<8x2xf32, #tpu.memory_space<vmem>>, vector<8x2xf32>
    tpu.vector_store %arg11[%c0_545, %c0_546], %1564 {strides = array<i32>} : memref<8x2xf32, #tpu.memory_space<vmem>>, vector<8x2xf32>,
    return
  }
}

</mosaic_0001>

<llo_original>
// kernel: resnet_forward.1
$region0: #{resnet_forward.1}
  #allocation0 [shape = 'u32[]', space=smem, size = 0x4, offset = 0x4, fixed_abs, tag = 'smem constant byte address 0x4 - core index']
  #allocation1 [shape = 'u32[72,128]{1,0:T(1,128)}', space=vmem, size = 0x9000, scoped, tag = 'internal scratch']
  %s0 = inlined_call_operand.vmem [shape: f32[32,256], index: 0, kind: input, shape index: {}]
  %s1 = inlined_call_operand.vmem [shape: f32[32,160], index: 1, kind: input, shape index: {}]
  %s2 = inlined_call_operand.vmem [shape: f32[32,5], index: 2, kind: input, shape index: {}]
  %s3 = inlined_call_operand.hbm [shape: f32[32,3200], index: 3, kind: input, shape index: {}]
  %s4 = inlined_call_operand.vmem [shape: f32[32,20], index: 4, kind: input, shape index: {}]
  %s5 = inlined_call_operand.vmem [shape: f32[32,25], index: 5, kind: input, shape index: {}]
  %s6 = inlined_call_operand.vmem [shape: f32[32,25], index: 6, kind: input, shape index: {}]
  %s7 = inlined_call_operand.vmem [shape: f32[128,128], index: 7, kind: input, shape index: {}]
  %s8 = inlined_call_operand.hbm [shape: f32[128,128], index: 8, kind: input, shape index: {}]
  %s9 = inlined_call_operand.vmem [shape: f32[8,128], index: 9, kind: input, shape index: {}]
  %s10 = inlined_call_operand.vmem [shape: f32[128,3], index: 10, kind: input, shape index: {}]
  %s11 = inlined_call_operand.vmem [shape: f32[8,2], index: 11, kind: output, shape index: {}]
  %s12 = sld [smem:[#allocation0]]
  $region62: #{resnet_forward.1} parent=0
    _
  %s14 = ssub.s32 1, %s12
  %s15 = scalar_select 0, %s14, %s12
  $region1: #{resnet_forward.1} parent=0
    #allocation2 [shape = 'u8[409600]{0}', space=vmem, size = 0x64000, scoped, tag = 'input window, operand 3, single buffered']
    #allocation3 [shape = 's32[1]{0}', space=sflag, size = 0x4, scoped, tag = 'scoped memory for resnet_forward.1']
    #allocation4 [shape = 'u8[65536]{0}', space=vmem, size = 0x10000, scoped, tag = 'input window, operand 8, single buffered']
    #allocation5 [shape = 's32[1]{0}', space=sflag, size = 0x4, scoped, tag = 'scoped memory for resnet_forward.1']
    %16 = vsyncpa [#allocation3], 0
    %17 = vsyncpa [#allocation5], 0
    // Predicated region
    $region2: #{resnet_forward.1} parent=1 // pred_check
      _
    $region3: #{resnet_forward.1} parent=1 // pred_check_branch
      %19 = sbr.rel (0) target = $region5
    $region4: #{resnet_forward.1} parent=1 // pred_region
      _
    $region5: #{resnet_forward.1} parent=1 // pred_fallthru
      _
    // Predicated region
    $region6: #{resnet_forward.1} parent=1 // pred_check
      _
    $region7: #{resnet_forward.1} parent=1 // pred_check_branch
      %21 = sbr.rel (0) target = $region9
    $region8: #{resnet_forward.1} parent=1 // pred_region
      _
    $region9: #{resnet_forward.1} parent=1 // pred_fallthru
      _
    // Predicated region
    $region10: #{resnet_forward.1} parent=1 // pred_check
      _
    $region11: #{resnet_forward.1} parent=1 // pred_check_branch
      %23 = sbr.rel (0) target = $region13
    $region12: #{resnet_forward.1} parent=1 // pred_region
      _
    $region13: #{resnet_forward.1} parent=1 // pred_fallthru
      _
    // Predicated region
    $region14: #{resnet_forward.1} parent=1 // pred_check
      _
    $region15: #{resnet_forward.1} parent=1 // pred_check_branch
      %25 = sbr.rel (0) target = $region17
    $region16: #{resnet_forward.1} parent=1 // pred_region
      %27 = vsyncadd [#allocation3], 0
      %s28 = sshll.u32 %s3, 4
      %s29 = int_to_ptr.hbm [resolvable:$true] %s28
      %s30 = sshll.u32 [#allocation2], 4
      %s31 = int_to_ptr.vmem [resolvable:$true] %s30
      %36 = dma.hbm_to_vmem [thread:$0]  %s29, 12800, %s31, [#allocation3], 3200, 3200, 200
    $region17: #{resnet_forward.1} parent=1 // pred_fallthru
      _
    // Predicated region
    $region18: #{resnet_forward.1} parent=1 // pred_check
      _
    $region19: #{resnet_forward.1} parent=1 // pred_check_branch
      %38 = sbr.rel (0) target = $region21
    $region20: #{resnet_forward.1} parent=1 // pred_region
      _
    $region21: #{resnet_forward.1} parent=1 // pred_fallthru
      _
    // Predicated region
    $region22: #{resnet_forward.1} parent=1 // pred_check
      _
    $region23: #{resnet_forward.1} parent=1 // pred_check_branch
      %40 = sbr.rel (0) target = $region25
    $region24: #{resnet_forward.1} parent=1 // pred_region
      _
    $region25: #{resnet_forward.1} parent=1 // pred_fallthru
      _
    // Predicated region
    $region26: #{resnet_forward.1} parent=1 // pred_check
      _
    $region27: #{resnet_forward.1} parent=1 // pred_check_branch
      %42 = sbr.rel (0) target = $region29
    $region28: #{resnet_forward.1} parent=1 // pred_region
      _
    $region29: #{resnet_forward.1} parent=1 // pred_fallthru
      _
    // Predicated region
    $region30: #{resnet_forward.1} parent=1 // pred_check
      _
    $region31: #{resnet_forward.1} parent=1 // pred_check_branch
      %44 = sbr.rel (0) target = $region33
    $region32: #{resnet_forward.1} parent=1 // pred_region
      _
    $region33: #{resnet_forward.1} parent=1 // pred_fallthru
      _
    // Predicated region
    $region34: #{resnet_forward.1} parent=1 // pred_check
      _
    $region35: #{resnet_forward.1} parent=1 // pred_check_branch
      %46 = sbr.rel (0) target = $region37
    $region36: #{resnet_forward.1} parent=1 // pred_region
      %48 = vsyncadd [#allocation5], 0
      %s49 = sshll.u32 %s8, 4
      %s50 = int_to_ptr.hbm [resolvable:$true] %s49
      %s51 = sshll.u32 [#allocation4], 4
      %s52 = int_to_ptr.vmem [resolvable:$true] %s51
      %57 = dma.hbm_to_vmem [thread:$0]  %s50, 2048, %s52, [#allocation5], 128, 128, 8
    $region37: #{resnet_forward.1} parent=1 // pred_fallthru
      _
    // Predicated region
    $region38: #{resnet_forward.1} parent=1 // pred_check
      _
    $region39: #{resnet_forward.1} parent=1 // pred_check_branch
      %59 = sbr.rel (0) target = $region41
    $region40: #{resnet_forward.1} parent=1 // pred_region
      _
    $region41: #{resnet_forward.1} parent=1 // pred_fallthru
      _
    // Predicated region
    $region42: #{resnet_forward.1} parent=1 // pred_check
      _
    $region43: #{resnet_forward.1} parent=1 // pred_check_branch
      %61 = sbr.rel (0) target = $region45
    $region44: #{resnet_forward.1} parent=1 // pred_region
      _
    $region45: #{resnet_forward.1} parent=1 // pred_fallthru
      _
    // Predicated region
    $region46: #{resnet_forward.1} parent=1 // pred_check
      _
    $region47: #{resnet_forward.1} parent=1 // pred_check_branch
      %63 = sbr.rel (0) target = $region49
    $region48: #{resnet_forward.1} parent=1 // pred_region
      %65 = dma.done [#allocation3], 12800
    $region49: #{resnet_forward.1} parent=1 // pred_fallthru
      _
    // Predicated region
    $region50: #{resnet_forward.1} parent=1 // pred_check
      _
    $region51: #{resnet_forward.1} parent=1 // pred_check_branch
      %67 = sbr.rel (0) target = $region53
    $region52: #{resnet_forward.1} parent=1 // pred_region
      %69 = dma.done [#allocation5], 2048
    $region53: #{resnet_forward.1} parent=1 // pred_fallthru
      _
    %v70 = vld [vmem:[%s0] sm:$0xff]
    %v71 = vld [vmem:[%s0 + $0x8] sm:$0xff]
    %v72 = vld [vmem:[%s0 + $0x10] sm:$0xff]
    %v73 = vld [vmem:[%s0 + $0x18] sm:$0xff]
    %v74 = vld [vmem:[%s0 + $0x20] sm:$0xff]
    %v75 = vld [vmem:[%s0 + $0x28] sm:$0xff]
    %v76 = vld [vmem:[%s0 + $0x30] sm:$0xff]
    %v77 = vld [vmem:[%s0 + $0x38] sm:$0xff]
    %v78 = vlaneseq
    %v79 = vand.u32 %v78, 127
    %v80 = vadd.s32 %v79, 128
    %vm81 = vcmp.lt.s32.totalorder %v79, 0
    %v82 = vsub.s32 0, %v79
    %v83 = vsel %vm81, %v82, %v79
    %v84 = vshrl.u32 %v83, 7
    %v85 = vand.u32 %v83, 127
    %v86 = vsub.s32 0, %v85
    %v87 = vsel %vm81, %v86, %v85
    %vm88 = vcmp.lt.s32.totalorder %v80, 0
    %v89 = vsub.s32 0, %v80
    %v90 = vsel %vm88, %v89, %v80
    %v91 = vshrl.u32 %v90, 7
    %v92 = vand.u32 %v90, 127
    %v93 = vsub.s32 0, %v92
    %v94 = vsel %vm88, %v93, %v92
    %vm95 = vcmp.ne.s32.totalorder %v87, 0
    %vm96 = vcmp.ne.s32.totalorder %v94, 0
    %vm97 = vcmp.lt.s32.totalorder %v87, 0
    %vm98 = vcmp.lt.s32.totalorder %v94, 0
    %vm99 = vmand %vm97, %vm95
    %vm100 = vmand %vm98, %vm96
    %v101 = vadd.s32 %v87, 128
    %v102 = vadd.s32 %v94, 128
    %v103 = vsel %vm99, %v101, %v87
    %v104 = vsel %vm100, %v102, %v94
    %v105 = vadd.s32 %v103, 4294967294
    %v106 = vadd.s32 %v104, 4294967294
    %vm107 = vcmp.ge.s32.totalorder %v105, 0
    %vm108 = vcmp.ge.s32.totalorder %v106, 0
    %vm109 = vcmp.lt.s32.totalorder %v105, 128
    %vm110 = vcmp.lt.s32.totalorder %v106, 128
    %vm111 = vmand %vm107, %vm109
    %vm112 = vmand %vm108, %vm110
    %v113 = vsel %vm111, 1, 0
    %v114 = vsel %vm112, 1, 0
    %v115 = vcvt.s32.f32 %v113
    %v116 = vcvt.s32.f32 %v114
    %v117 = vadd.s32 %v103, 4294967295
    %v118 = vadd.s32 %v104, 4294967295
    %vm119 = vcmp.ge.s32.totalorder %v117, 0
    %vm120 = vcmp.ge.s32.totalorder %v118, 0
    %vm121 = vcmp.lt.s32.totalorder %v117, 128
    %vm122 = vcmp.lt.s32.totalorder %v118, 128
    %vm123 = vmand %vm119, %vm121
    %vm124 = vmand %vm120, %vm122
    %v125 = vsel %vm123, 1, 0
    %v126 = vsel %vm124, 1, 0
    %v127 = vcvt.s32.f32 %v125
    %v128 = vcvt.s32.f32 %v126
    %v129 = vadd.s32 %v103, 1
    %v130 = vadd.s32 %v104, 1
    %vm131 = vcmp.ge.s32.totalorder %v129, 0
    %vm132 = vcmp.ge.s32.totalorder %v130, 0
    %vm133 = vcmp.lt.s32.totalorder %v129, 128
    %vm134 = vcmp.lt.s32.totalorder %v130, 128
    %vm135 = vmand %vm131, %vm133
    %vm136 = vmand %vm132, %vm134
    %v137 = vsel %vm135, 1, 0
    %v138 = vsel %vm136, 1, 0
    %v139 = vcvt.s32.f32 %v137
    %v140 = vcvt.s32.f32 %v138
    %v141 = vadd.s32 %v103, 2
    %v142 = vadd.s32 %v104, 2
    %vm143 = vcmp.ge.s32.totalorder %v141, 0
    %vm144 = vcmp.ge.s32.totalorder %v142, 0
    %vm145 = vcmp.lt.s32.totalorder %v141, 128
    %vm146 = vcmp.lt.s32.totalorder %v142, 128
    %vm147 = vmand %vm143, %vm145
    %vm148 = vmand %vm144, %vm146
    %v149 = vsel %vm147, 1, 0
    %v150 = vsel %vm148, 1, 0
    %v151 = vcvt.s32.f32 %v149
    %v152 = vcvt.s32.f32 %v150
    %v153 = vld [vmem:[%s1] sm:$0xff]
    %v154 = vld [vmem:[%s1 + $0x10] sm:$0xff]
    %v155 = vld [vmem:[%s1 + $0x20] sm:$0xff]
    %v156 = vld [vmem:[%s1 + $0x30] sm:$0xff]
    %v157 = vld [vmem:[%s2] sm:$0xff]
    %v158 = vld [vmem:[%s2 + $0x8] sm:$0xff]
    %v159 = vld [vmem:[%s2 + $0x10] sm:$0xff]
    %v160 = vld [vmem:[%s2 + $0x18] sm:$0xff]
    %162 = vset.pattern.permute.xlu0 0
    %163 = vperm.xlu0 %162, %v157
    %v164 = vpop.permute.xlu0 %163
    %167 = vset.pattern.permute.xlu0 0
    %168 = vperm.xlu0 %167, %v158
    %v169 = vpop.permute.xlu0 %168
    %172 = vset.pattern.permute.xlu0 0
    %173 = vperm.xlu0 %172, %v159
    %v174 = vpop.permute.xlu0 %173
    %177 = vset.pattern.permute.xlu0 0
    %178 = vperm.xlu0 %177, %v160
    %v179 = vpop.permute.xlu0 %178
    %vm181 = vcmask 261120
    %v183 = vsel %vm181, %v153, 0
    %v186 = vsel %vm181, %v154, 0
    %v189 = vsel %vm181, %v155, 0
    %v192 = vsel %vm181, %v156, 0
    %194 = vmatpush.msra.mxu0 0.0
    %195 = vmatpush.msra.mxu0 0.0
    %196 = vmatpush.msra.mxu0 0.0
    %197 = vmatpush.msra.mxu0 0.0
    %198 = vmatpush.msra.mxu0 0.0
    %199 = vmatpush.msra.mxu0 0.0
    %200 = vmatpush.msra.mxu0 0.0
    %201 = vmatpush.msra.mxu0 0.0
    %202 = vmatpush.msra.mxu0 0.0
    %203 = vmatpush.msra.mxu0 0.0
    %204 = vmatpush.msra.mxu0 0.0
    %205 = vmatpush.msra.mxu0 0.0
    %206 = vmatpush.msra.mxu0 %v76
    %207 = vmatpush.msra.mxu0 %v74
    %208 = vmatpush.msra.mxu0 %v72
    %209 = vmatpush.msra.mxu0 %v70
    %210 = vmatmul.f32.gmra.mxu0 %v183
    %v211 = vpop.f32.mrf.mxu0
    %v212 = vadd.f32 %v164, %v211
    %213 = vmatmul.f32.gmra.mxu0 %v186
    %v214 = vpop.f32.mrf.mxu0
    %v215 = vadd.f32 %v169, %v214
    %216 = vmatmul.f32.gmra.mxu0 %v189
    %v217 = vpop.f32.mrf.mxu0
    %v218 = vadd.f32 %v174, %v217
    %219 = vmatmul.f32.gmra.mxu0 %v192
    %v220 = vpop.f32.mrf.mxu0
    %v221 = vadd.f32 %v179, %v220
    %222 = vdwg.mxu0
    %223 = vmatpush.msra.mxu0 0.0
    %224 = vmatpush.msra.mxu0 0.0
    %225 = vmatpush.msra.mxu0 0.0
    %226 = vmatpush.msra.mxu0 0.0
    %227 = vmatpush.msra.mxu0 0.0
    %228 = vmatpush.msra.mxu0 0.0
    %229 = vmatpush.msra.mxu0 0.0
    %230 = vmatpush.msra.mxu0 0.0
    %231 = vmatpush.msra.mxu0 0.0
    %232 = vmatpush.msra.mxu0 0.0
    %233 = vmatpush.msra.mxu0 0.0
    %234 = vmatpush.msra.mxu0 0.0
    %235 = vmatpush.msra.mxu0 %v77
    %236 = vmatpush.msra.mxu0 %v75
    %237 = vmatpush.msra.mxu0 %v73
    %238 = vmatpush.msra.mxu0 %v71
    %239 = vmatmul.f32.gmra.mxu0 %v183
    %v240 = vpop.f32.mrf.mxu0
    %v241 = vadd.f32 %v164, %v240
    %242 = vmatmul.f32.gmra.mxu0 %v186
    %v243 = vpop.f32.mrf.mxu0
    %v244 = vadd.f32 %v169, %v243
    %245 = vmatmul.f32.gmra.mxu0 %v189
    %v246 = vpop.f32.mrf.mxu0
    %v247 = vadd.f32 %v174, %v246
    %248 = vmatmul.f32.gmra.mxu0 %v192
    %v249 = vpop.f32.mrf.mxu0
    %v250 = vadd.f32 %v179, %v249
    %251 = vdwg.mxu0
    %v252 = vld [vmem:[%s5] sm:$0xff]
    %v253 = vld [vmem:[%s5 + $0x8] sm:$0xff]
    %v254 = vld [vmem:[%s5 + $0x10] sm:$0xff]
    %v255 = vld [vmem:[%s5 + $0x18] sm:$0xff]
    %v256 = vld [vmem:[%s6] sm:$0xff]
    %v257 = vld [vmem:[%s6 + $0x8] sm:$0xff]
    %v258 = vld [vmem:[%s6 + $0x10] sm:$0xff]
    %v259 = vld [vmem:[%s6 + $0x18] sm:$0xff]
    %v260 = vadd.f32 %v212, %v241
    %261 = vadd.xlane.f32.xlu0 %v260
    %v262 = vpop.xlane.xlu0 %261
    %v263 = vadd.f32 %v215, %v244
    %264 = vadd.xlane.f32.xlu0 %v263
    %v265 = vpop.xlane.xlu0 %264
    %v266 = vadd.f32 %v218, %v247
    %267 = vadd.xlane.f32.xlu0 %v266
    %v268 = vpop.xlane.xlu0 %267
    %v269 = vadd.f32 %v221, %v250
    %270 = vadd.xlane.f32.xlu0 %v269
    %v271 = vpop.xlane.xlu0 %270
    %v272 = vmul.f32 %v262, 0.00390625
    %v273 = vmul.f32 %v265, 0.00390625
    %v274 = vmul.f32 %v268, 0.00390625
    %v275 = vmul.f32 %v271, 0.00390625
    %v276 = vsub.f32 %v212, %v272
    %v277 = vsub.f32 %v241, %v272
    %v278 = vsub.f32 %v215, %v273
    %v279 = vsub.f32 %v244, %v273
    %v280 = vsub.f32 %v218, %v274
    %v281 = vsub.f32 %v247, %v274
    %v282 = vsub.f32 %v221, %v275
    %v283 = vsub.f32 %v250, %v275
    %v284 = vmul.f32 %v276, %v276
    %v285 = vmul.f32 %v277, %v277
    %v286 = vmul.f32 %v278, %v278
    %v287 = vmul.f32 %v279, %v279
    %v288 = vmul.f32 %v280, %v280
    %v289 = vmul.f32 %v281, %v281
    %v290 = vmul.f32 %v282, %v282
    %v291 = vmul.f32 %v283, %v283
    %v292 = vadd.f32 %v284, %v285
    %293 = vadd.xlane.f32.xlu0 %v292
    %v294 = vpop.xlane.xlu0 %293
    %v295 = vadd.f32 %v286, %v287
    %296 = vadd.xlane.f32.xlu0 %v295
    %v297 = vpop.xlane.xlu0 %296
    %v298 = vadd.f32 %v288, %v289
    %299 = vadd.xlane.f32.xlu0 %v298
    %v300 = vpop.xlane.xlu0 %299
    %v301 = vadd.f32 %v290, %v291
    %302 = vadd.xlane.f32.xlu0 %v301
    %v303 = vpop.xlane.xlu0 %302
    %v304 = vmul.f32 %v294, 0.00390625
    %v305 = vmul.f32 %v297, 0.00390625
    %v306 = vmul.f32 %v300, 0.00390625
    %v307 = vmul.f32 %v303, 0.00390625
    %v308 = vadd.f32 %v304, 1e-05
    %v309 = vadd.f32 %v305, 1e-05
    %v310 = vadd.f32 %v306, 1e-05
    %v311 = vadd.f32 %v307, 1e-05
    %v312 = vrsqrt.pop %v308
    %v313 = vmul.f32 %v312, %v308
    %v314 = vmul.f32 %v313, %v312
    %v315 = vmul.f32 0.5, %v314
    %v316 = vsub.f32 1.5, %v315
    %v317 = vmul.f32 %v312, %v316
    %vm318 = vweird.f32 %v308
    %vm319 = vweird.f32 %v312
    %vm320 = vmor %vm318, %vm319
    %v321 = vsel %vm320, %v312, %v317
    %v322 = vrsqrt.pop %v309
    %v323 = vmul.f32 %v322, %v309
    %v324 = vmul.f32 %v323, %v322
    %v325 = vmul.f32 0.5, %v324
    %v326 = vsub.f32 1.5, %v325
    %v327 = vmul.f32 %v322, %v326
    %vm328 = vweird.f32 %v309
    %vm329 = vweird.f32 %v322
    %vm330 = vmor %vm328, %vm329
    %v331 = vsel %vm330, %v322, %v327
    %v332 = vrsqrt.pop %v310
    %v333 = vmul.f32 %v332, %v310
    %v334 = vmul.f32 %v333, %v332
    %v335 = vmul.f32 0.5, %v334
    %v336 = vsub.f32 1.5, %v335
    %v337 = vmul.f32 %v332, %v336
    %vm338 = vweird.f32 %v310
    %vm339 = vweird.f32 %v332
    %vm340 = vmor %vm338, %vm339
    %v341 = vsel %vm340, %v332, %v337
    %v342 = vrsqrt.pop %v311
    %v343 = vmul.f32 %v342, %v311
    %v344 = vmul.f32 %v343, %v342
    %v345 = vmul.f32 0.5, %v344
    %v346 = vsub.f32 1.5, %v345
    %v347 = vmul.f32 %v342, %v346
    %vm348 = vweird.f32 %v311
    %vm349 = vweird.f32 %v342
    %vm350 = vmor %vm348, %vm349
    %v351 = vsel %vm350, %v342, %v347
    %v352 = vmul.f32 %v276, %v321
    %v353 = vmul.f32 %v277, %v321
    %v354 = vmul.f32 %v278, %v331
    %v355 = vmul.f32 %v279, %v331
    %v356 = vmul.f32 %v280, %v341
    %v357 = vmul.f32 %v281, %v341
    %v358 = vmul.f32 %v282, %v351
    %v359 = vmul.f32 %v283, %v351
    %361 = vset.pattern.permute.xlu0 0
    %362 = vperm.xlu0 %361, %v252
    %v363 = vpop.permute.xlu0 %362
    %366 = vset.pattern.permute.xlu0 0
    %367 = vperm.xlu0 %366, %v253
    %v368 = vpop.permute.xlu0 %367
    %371 = vset.pattern.permute.xlu0 0
    %372 = vperm.xlu0 %371, %v254
    %v373 = vpop.permute.xlu0 %372
    %376 = vset.pattern.permute.xlu0 0
    %377 = vperm.xlu0 %376, %v255
    %v378 = vpop.permute.xlu0 %377
    %v380 = vmul.f32 %v363, %v352
    %v381 = vmul.f32 %v363, %v353
    %v382 = vmul.f32 %v368, %v354
    %v383 = vmul.f32 %v368, %v355
    %v384 = vmul.f32 %v373, %v356
    %v385 = vmul.f32 %v373, %v357
    %v386 = vmul.f32 %v378, %v358
    %v387 = vmul.f32 %v378, %v359
    %389 = vset.pattern.permute.xlu0 0
    %390 = vperm.xlu0 %389, %v256
    %v391 = vpop.permute.xlu0 %390
    %394 = vset.pattern.permute.xlu0 0
    %395 = vperm.xlu0 %394, %v257
    %v396 = vpop.permute.xlu0 %395
    %399 = vset.pattern.permute.xlu0 0
    %400 = vperm.xlu0 %399, %v258
    %v401 = vpop.permute.xlu0 %400
    %404 = vset.pattern.permute.xlu0 0
    %405 = vperm.xlu0 %404, %v259
    %v406 = vpop.permute.xlu0 %405
    %v408 = vadd.f32 %v380, %v391
    %v409 = vadd.f32 %v381, %v391
    %v410 = vadd.f32 %v382, %v396
    %v411 = vadd.f32 %v383, %v396
    %v412 = vadd.f32 %v384, %v401
    %v413 = vadd.f32 %v385, %v401
    %v414 = vadd.f32 %v386, %v406
    %v415 = vadd.f32 %v387, %v406
    %v416 = vld [vmem:[#allocation2] sm:$0xff]
    %v417 = vld [vmem:[#allocation2 + $0x8] sm:$0xff]
    %v418 = vld [vmem:[#allocation2 + $0xc8] sm:$0xff]
    %v419 = vld [vmem:[#allocation2 + $0xd0] sm:$0xff]
    %v420 = vld [vmem:[#allocation2 + $0x190] sm:$0xff]
    %v421 = vld [vmem:[#allocation2 + $0x198] sm:$0xff]
    %v422 = vld [vmem:[#allocation2 + $0x258] sm:$0xff]
    %v423 = vld [vmem:[#allocation2 + $0x260] sm:$0xff]
    %v424 = vld [vmem:[%s4] sm:$0xff]
    %v425 = vld [vmem:[%s4 + $0x8] sm:$0xff]
    %v426 = vld [vmem:[%s4 + $0x10] sm:$0xff]
    %v427 = vld [vmem:[%s4 + $0x18] sm:$0xff]
    %436 = vrot.lane.b32.xlu0 %v408, 2
    %v437 = vpop.permute.xlu0 %436
    %438 = vrot.lane.b32.xlu0 %v409, 2
    %v439 = vpop.permute.xlu0 %438
    %440 = vrot.lane.b32.xlu0 %v410, 2
    %v441 = vpop.permute.xlu0 %440
    %442 = vrot.lane.b32.xlu0 %v411, 2
    %v443 = vpop.permute.xlu0 %442
    %444 = vrot.lane.b32.xlu0 %v412, 2
    %v445 = vpop.permute.xlu0 %444
    %446 = vrot.lane.b32.xlu0 %v413, 2
    %v447 = vpop.permute.xlu0 %446
    %448 = vrot.lane.b32.xlu0 %v414, 2
    %v449 = vpop.permute.xlu0 %448
    %450 = vrot.lane.b32.xlu0 %v415, 2
    %v451 = vpop.permute.xlu0 %450
    %vm452 = vcmask 15360
    %v453 = vsel %vm452, %v437, %v439
    %v454 = vsel %vm452, %v441, %v443
    %v455 = vsel %vm452, %v445, %v447
    %v456 = vsel %vm452, %v449, %v451
    %v465 = vsel %vm452, 0.0, %v437
    %v466 = vsel %vm452, 0.0, %v441
    %v467 = vsel %vm452, 0.0, %v445
    %v468 = vsel %vm452, 0.0, %v449
    %v469 = vmul.f32 %v465, %v115
    %v470 = vmul.f32 %v453, %v116
    %v471 = vmul.f32 %v466, %v115
    %v472 = vmul.f32 %v454, %v116
    %v473 = vmul.f32 %v467, %v115
    %v474 = vmul.f32 %v455, %v116
    %v475 = vmul.f32 %v468, %v115
    %v476 = vmul.f32 %v456, %v116
    %477 = vrot.lane.b32.xlu0 %v408, 1
    %v478 = vpop.permute.xlu0 %477
    %479 = vrot.lane.b32.xlu0 %v409, 1
    %v480 = vpop.permute.xlu0 %479
    %481 = vrot.lane.b32.xlu0 %v410, 1
    %v482 = vpop.permute.xlu0 %481
    %483 = vrot.lane.b32.xlu0 %v411, 1
    %v484 = vpop.permute.xlu0 %483
    %485 = vrot.lane.b32.xlu0 %v412, 1
    %v486 = vpop.permute.xlu0 %485
    %487 = vrot.lane.b32.xlu0 %v413, 1
    %v488 = vpop.permute.xlu0 %487
    %489 = vrot.lane.b32.xlu0 %v414, 1
    %v490 = vpop.permute.xlu0 %489
    %491 = vrot.lane.b32.xlu0 %v415, 1
    %v492 = vpop.permute.xlu0 %491
    %vm493 = vcmask 7168
    %v494 = vsel %vm493, %v478, %v480
    %v495 = vsel %vm493, %v482, %v484
    %v496 = vsel %vm493, %v486, %v488
    %v497 = vsel %vm493, %v490, %v492
    %v506 = vsel %vm493, 0.0, %v478
    %v507 = vsel %vm493, 0.0, %v482
    %v508 = vsel %vm493, 0.0, %v486
    %v509 = vsel %vm493, 0.0, %v490
    %v510 = vmul.f32 %v506, %v127
    %v511 = vmul.f32 %v494, %v128
    %v512 = vmul.f32 %v507, %v127
    %v513 = vmul.f32 %v495, %v128
    %v514 = vmul.f32 %v508, %v127
    %v515 = vmul.f32 %v496, %v128
    %v516 = vmul.f32 %v509, %v127
    %v517 = vmul.f32 %v497, %v128
    %518 = vrot.lane.b32.xlu0 %v408, 127
    %v519 = vpop.permute.xlu0 %518
    %520 = vrot.lane.b32.xlu0 %v409, 127
    %v521 = vpop.permute.xlu0 %520
    %522 = vrot.lane.b32.xlu0 %v410, 127
    %v523 = vpop.permute.xlu0 %522
    %524 = vrot.lane.b32.xlu0 %v411, 127
    %v525 = vpop.permute.xlu0 %524
    %526 = vrot.lane.b32.xlu0 %v412, 127
    %v527 = vpop.permute.xlu0 %526
    %528 = vrot.lane.b32.xlu0 %v413, 127
    %v529 = vpop.permute.xlu0 %528
    %530 = vrot.lane.b32.xlu0 %v414, 127
    %v531 = vpop.permute.xlu0 %530
    %532 = vrot.lane.b32.xlu0 %v415, 127
    %v533 = vpop.permute.xlu0 %532
    %vm534 = vcmask 1039360
    %v535 = vsel %vm534, %v519, %v521
    %v536 = vsel %vm534, %v523, %v525
    %v537 = vsel %vm534, %v527, %v529
    %v538 = vsel %vm534, %v531, %v533
    %v547 = vsel %vm534, %v521, 0.0
    %v548 = vsel %vm534, %v525, 0.0
    %v549 = vsel %vm534, %v529, 0.0
    %v550 = vsel %vm534, %v533, 0.0
    %v551 = vmul.f32 %v535, %v139
    %v552 = vmul.f32 %v547, %v140
    %v553 = vmul.f32 %v536, %v139
    %v554 = vmul.f32 %v548, %v140
    %v555 = vmul.f32 %v537, %v139
    %v556 = vmul.f32 %v549, %v140
    %v557 = vmul.f32 %v538, %v139
    %v558 = vmul.f32 %v550, %v140
    %559 = vrot.lane.b32.xlu0 %v408, 126
    %v560 = vpop.permute.xlu0 %559
    %561 = vrot.lane.b32.xlu0 %v409, 126
    %v562 = vpop.permute.xlu0 %561
    %563 = vrot.lane.b32.xlu0 %v410, 126
    %v564 = vpop.permute.xlu0 %563
    %565 = vrot.lane.b32.xlu0 %v411, 126
    %v566 = vpop.permute.xlu0 %565
    %567 = vrot.lane.b32.xlu0 %v412, 126
    %v568 = vpop.permute.xlu0 %567
    %569 = vrot.lane.b32.xlu0 %v413, 126
    %v570 = vpop.permute.xlu0 %569
    %571 = vrot.lane.b32.xlu0 %v414, 126
    %v572 = vpop.permute.xlu0 %571
    %573 = vrot.lane.b32.xlu0 %v415, 126
    %v574 = vpop.permute.xlu0 %573
    %vm575 = vcmask 1031168
    %v576 = vsel %vm575, %v560, %v562
    %v577 = vsel %vm575, %v564, %v566
    %v578 = vsel %vm575, %v568, %v570
    %v579 = vsel %vm575, %v572, %v574
    %v588 = vsel %vm575, %v562, 0.0
    %v589 = vsel %vm575, %v566, 0.0
    %v590 = vsel %vm575, %v570, 0.0
    %v591 = vsel %vm575, %v574, 0.0
    %v592 = vmul.f32 %v576, %v151
    %v593 = vmul.f32 %v588, %v152
    %v594 = vmul.f32 %v577, %v151
    %v595 = vmul.f32 %v589, %v152
    %v596 = vmul.f32 %v578, %v151
    %v597 = vmul.f32 %v590, %v152
    %v598 = vmul.f32 %v579, %v151
    %v599 = vmul.f32 %v591, %v152
    %601 = vset.pattern.permute.xlu0 0
    %602 = vperm.xlu0 %601, %v424
    %v603 = vpop.permute.xlu0 %602
    %606 = vset.pattern.permute.xlu0 0
    %607 = vperm.xlu0 %606, %v425
    %v608 = vpop.permute.xlu0 %607
    %611 = vset.pattern.permute.xlu0 0
    %612 = vperm.xlu0 %611, %v426
    %v613 = vpop.permute.xlu0 %612
    %616 = vset.pattern.permute.xlu0 0
    %617 = vperm.xlu0 %616, %v427
    %v618 = vpop.permute.xlu0 %617
    %v621 = vsel %vm181, %v417, 0
    %v624 = vsel %vm181, %v419, 0
    %v627 = vsel %vm181, %v421, 0
    %v630 = vsel %vm181, %v423, 0
    %632 = vmatpush.msra.mxu0 %v557
    %633 = vmatpush.msra.mxu0 %v555
    %634 = vmatpush.msra.mxu0 %v553
    %635 = vmatpush.msra.mxu0 %v551
    %636 = vmatpush.msra.mxu0 %v414
    %637 = vmatpush.msra.mxu0 %v412
    %638 = vmatpush.msra.mxu0 %v410
    %639 = vmatpush.msra.mxu0 %v408
    %640 = vmatpush.msra.mxu0 %v516
    %641 = vmatpush.msra.mxu0 %v514
    %642 = vmatpush.msra.mxu0 %v512
    %643 = vmatpush.msra.mxu0 %v510
    %644 = vmatpush.msra.mxu0 %v475
    %645 = vmatpush.msra.mxu0 %v473
    %646 = vmatpush.msra.mxu0 %v471
    %647 = vmatpush.msra.mxu0 %v469
    %648 = vmatmul.f32.gmra.mxu0 %v416
    %v649 = vpop.f32.mrf.mxu0
    %v650 = vadd.f32 %v603, %v649
    %651 = vmatmul.f32.gmra.mxu0 %v418
    %v652 = vpop.f32.mrf.mxu0
    %v653 = vadd.f32 %v608, %v652
    %654 = vmatmul.f32.gmra.mxu0 %v420
    %v655 = vpop.f32.mrf.mxu0
    %v656 = vadd.f32 %v613, %v655
    %657 = vmatmul.f32.gmra.mxu0 %v422
    %v658 = vpop.f32.mrf.mxu0
    %v659 = vadd.f32 %v618, %v658
    %660 = vdwg.mxu0
    %661 = vmatpush.msra.mxu0 0.0
    %662 = vmatpush.msra.mxu0 0.0
    %663 = vmatpush.msra.mxu0 0.0
    %664 = vmatpush.msra.mxu0 0.0
    %665 = vmatpush.msra.mxu0 0.0
    %666 = vmatpush.msra.mxu0 0.0
    %667 = vmatpush.msra.mxu0 0.0
    %668 = vmatpush.msra.mxu0 0.0
    %669 = vmatpush.msra.mxu0 0.0
    %670 = vmatpush.msra.mxu0 0.0
    %671 = vmatpush.msra.mxu0 0.0
    %672 = vmatpush.msra.mxu0 0.0
    %673 = vmatpush.msra.mxu0 %v598
    %674 = vmatpush.msra.mxu0 %v596
    %675 = vmatpush.msra.mxu0 %v594
    %676 = vmatpush.msra.mxu0 %v592
    %677 = vmatmul.f32.gmra.mxu0 %v621
    %v678 = vpop.f32.mrf.mxu0
    %v679 = vadd.f32 %v650, %v678
    %680 = vmatmul.f32.gmra.mxu0 %v624
    %v681 = vpop.f32.mrf.mxu0
    %v682 = vadd.f32 %v653, %v681
    %683 = vmatmul.f32.gmra.mxu0 %v627
    %v684 = vpop.f32.mrf.mxu0
    %v685 = vadd.f32 %v656, %v684
    %686 = vmatmul.f32.gmra.mxu0 %v630
    %v687 = vpop.f32.mrf.mxu0
    %v688 = vadd.f32 %v659, %v687
    %689 = vdwg.mxu0
    %690 = vmatpush.msra.mxu0 %v558
    %691 = vmatpush.msra.mxu0 %v556
    %692 = vmatpush.msra.mxu0 %v554
    %693 = vmatpush.msra.mxu0 %v552
    %694 = vmatpush.msra.mxu0 %v415
    %695 = vmatpush.msra.mxu0 %v413
    %696 = vmatpush.msra.mxu0 %v411
    %697 = vmatpush.msra.mxu0 %v409
    %698 = vmatpush.msra.mxu0 %v517
    %699 = vmatpush.msra.mxu0 %v515
    %700 = vmatpush.msra.mxu0 %v513
    %701 = vmatpush.msra.mxu0 %v511
    %702 = vmatpush.msra.mxu0 %v476
    %703 = vmatpush.msra.mxu0 %v474
    %704 = vmatpush.msra.mxu0 %v472
    %705 = vmatpush.msra.mxu0 %v470
    %706 = vmatmul.f32.gmra.mxu0 %v416
    %v707 = vpop.f32.mrf.mxu0
    %v708 = vadd.f32 %v603, %v707
    %709 = vmatmul.f32.gmra.mxu0 %v418
    %v710 = vpop.f32.mrf.mxu0
    %v711 = vadd.f32 %v608, %v710
    %712 = vmatmul.f32.gmra.mxu0 %v420
    %v713 = vpop.f32.mrf.mxu0
    %v714 = vadd.f32 %v613, %v713
    %715 = vmatmul.f32.gmra.mxu0 %v422
    %v716 = vpop.f32.mrf.mxu0
    %v717 = vadd.f32 %v618, %v716
    %718 = vdwg.mxu0
    %719 = vmatpush.msra.mxu0 0.0
    %720 = vmatpush.msra.mxu0 0.0
    %721 = vmatpush.msra.mxu0 0.0
    %722 = vmatpush.msra.mxu0 0.0
    %723 = vmatpush.msra.mxu0 0.0
    %724 = vmatpush.msra.mxu0 0.0
    %725 = vmatpush.msra.mxu0 0.0
    %726 = vmatpush.msra.mxu0 0.0
    %727 = vmatpush.msra.mxu0 0.0
    %728 = vmatpush.msra.mxu0 0.0
    %729 = vmatpush.msra.mxu0 0.0
    %730 = vmatpush.msra.mxu0 0.0
    %731 = vmatpush.msra.mxu0 %v599
    %732 = vmatpush.msra.mxu0 %v597
    %733 = vmatpush.msra.mxu0 %v595
    %734 = vmatpush.msra.mxu0 %v593
    %735 = vmatmul.f32.gmra.mxu0 %v621
    %v736 = vpop.f32.mrf.mxu0
    %v737 = vadd.f32 %v708, %v736
    %738 = vmatmul.f32.gmra.mxu0 %v624
    %v739 = vpop.f32.mrf.mxu0
    %v740 = vadd.f32 %v711, %v739
    %741 = vmatmul.f32.gmra.mxu0 %v627
    %v742 = vpop.f32.mrf.mxu0
    %v743 = vadd.f32 %v714, %v742
    %744 = vmatmul.f32.gmra.mxu0 %v630
    %v745 = vpop.f32.mrf.mxu0
    %v746 = vadd.f32 %v717, %v745
    %747 = vdwg.mxu0
    %v748 = vmax.f32 %v679, 0.0
    %v749 = vmax.f32 %v737, 0.0
    %v750 = vmax.f32 %v682, 0.0
    %v751 = vmax.f32 %v740, 0.0
    %v752 = vmax.f32 %v685, 0.0
    %v753 = vmax.f32 %v743, 0.0
    %v754 = vmax.f32 %v688, 0.0
    %v755 = vmax.f32 %v746, 0.0
    %v756 = vadd.f32 %v748, %v749
    %757 = vadd.xlane.f32.xlu0 %v756
    %v758 = vpop.xlane.xlu0 %757
    %v759 = vadd.f32 %v750, %v751
    %760 = vadd.xlane.f32.xlu0 %v759
    %v761 = vpop.xlane.xlu0 %760
    %v762 = vadd.f32 %v752, %v753
    %763 = vadd.xlane.f32.xlu0 %v762
    %v764 = vpop.xlane.xlu0 %763
    %v765 = vadd.f32 %v754, %v755
    %766 = vadd.xlane.f32.xlu0 %v765
    %v767 = vpop.xlane.xlu0 %766
    %v768 = vmul.f32 %v758, 0.00390625
    %v769 = vmul.f32 %v761, 0.00390625
    %v770 = vmul.f32 %v764, 0.00390625
    %v771 = vmul.f32 %v767, 0.00390625
    %v772 = vsub.f32 %v748, %v768
    %v773 = vsub.f32 %v749, %v768
    %v774 = vsub.f32 %v750, %v769
    %v775 = vsub.f32 %v751, %v769
    %v776 = vsub.f32 %v752, %v770
    %v777 = vsub.f32 %v753, %v770
    %v778 = vsub.f32 %v754, %v771
    %v779 = vsub.f32 %v755, %v771
    %v780 = vmul.f32 %v772, %v772
    %v781 = vmul.f32 %v773, %v773
    %v782 = vmul.f32 %v774, %v774
    %v783 = vmul.f32 %v775, %v775
    %v784 = vmul.f32 %v776, %v776
    %v785 = vmul.f32 %v777, %v777
    %v786 = vmul.f32 %v778, %v778
    %v787 = vmul.f32 %v779, %v779
    %v788 = vadd.f32 %v780, %v781
    %789 = vadd.xlane.f32.xlu0 %v788
    %v790 = vpop.xlane.xlu0 %789
    %v791 = vadd.f32 %v782, %v783
    %792 = vadd.xlane.f32.xlu0 %v791
    %v793 = vpop.xlane.xlu0 %792
    %v794 = vadd.f32 %v784, %v785
    %795 = vadd.xlane.f32.xlu0 %v794
    %v796 = vpop.xlane.xlu0 %795
    %v797 = vadd.f32 %v786, %v787
    %798 = vadd.xlane.f32.xlu0 %v797
    %v799 = vpop.xlane.xlu0 %798
    %v800 = vmul.f32 %v790, 0.00390625
    %v801 = vmul.f32 %v793, 0.00390625
    %v802 = vmul.f32 %v796, 0.00390625
    %v803 = vmul.f32 %v799, 0.00390625
    %v804 = vadd.f32 %v800, 1e-05
    %v805 = vadd.f32 %v801, 1e-05
    %v806 = vadd.f32 %v802, 1e-05
    %v807 = vadd.f32 %v803, 1e-05
    %v808 = vrsqrt.pop %v804
    %v809 = vmul.f32 %v808, %v804
    %v810 = vmul.f32 %v809, %v808
    %v811 = vmul.f32 0.5, %v810
    %v812 = vsub.f32 1.5, %v811
    %v813 = vmul.f32 %v808, %v812
    %vm814 = vweird.f32 %v804
    %vm815 = vweird.f32 %v808
    %vm816 = vmor %vm814, %vm815
    %v817 = vsel %vm816, %v808, %v813
    %v818 = vrsqrt.pop %v805
    %v819 = vmul.f32 %v818, %v805
    %v820 = vmul.f32 %v819, %v818
    %v821 = vmul.f32 0.5, %v820
    %v822 = vsub.f32 1.5, %v821
    %v823 = vmul.f32 %v818, %v822
    %vm824 = vweird.f32 %v805
    %vm825 = vweird.f32 %v818
    %vm826 = vmor %vm824, %vm825
    %v827 = vsel %vm826, %v818, %v823
    %v828 = vrsqrt.pop %v806
    %v829 = vmul.f32 %v828, %v806
    %v830 = vmul.f32 %v829, %v828
    %v831 = vmul.f32 0.5, %v830
    %v832 = vsub.f32 1.5, %v831
    %v833 = vmul.f32 %v828, %v832
    %vm834 = vweird.f32 %v806
    %vm835 = vweird.f32 %v828
    %vm836 = vmor %vm834, %vm835
    %v837 = vsel %vm836, %v828, %v833
    %v838 = vrsqrt.pop %v807
    %v839 = vmul.f32 %v838, %v807
    %v840 = vmul.f32 %v839, %v838
    %v841 = vmul.f32 0.5, %v840
    %v842 = vsub.f32 1.5, %v841
    %v843 = vmul.f32 %v838, %v842
    %vm844 = vweird.f32 %v807
    %vm845 = vweird.f32 %v838
    %vm846 = vmor %vm844, %vm845
    %v847 = vsel %vm846, %v838, %v843
    %v848 = vmul.f32 %v772, %v817
    %v849 = vmul.f32 %v773, %v817
    %v850 = vmul.f32 %v774, %v827
    %v851 = vmul.f32 %v775, %v827
    %v852 = vmul.f32 %v776, %v837
    %v853 = vmul.f32 %v777, %v837
    %v854 = vmul.f32 %v778, %v847
    %v855 = vmul.f32 %v779, %v847
    %856 = vset.pattern.permute.xlu0 1
    %857 = vperm.xlu0 %856, %v252
    %v858 = vpop.permute.xlu0 %857
    %860 = vset.pattern.permute.xlu0 1
    %861 = vperm.xlu0 %860, %v253
    %v862 = vpop.permute.xlu0 %861
    %864 = vset.pattern.permute.xlu0 1
    %865 = vperm.xlu0 %864, %v254
    %v866 = vpop.permute.xlu0 %865
    %868 = vset.pattern.permute.xlu0 1
    %869 = vperm.xlu0 %868, %v255
    %v870 = vpop.permute.xlu0 %869
    %v872 = vmul.f32 %v858, %v848
    %v873 = vmul.f32 %v858, %v849
    %v874 = vmul.f32 %v862, %v850
    %v875 = vmul.f32 %v862, %v851
    %v876 = vmul.f32 %v866, %v852
    %v877 = vmul.f32 %v866, %v853
    %v878 = vmul.f32 %v870, %v854
    %v879 = vmul.f32 %v870, %v855
    %880 = vset.pattern.permute.xlu0 1
    %881 = vperm.xlu0 %880, %v256
    %v882 = vpop.permute.xlu0 %881
    %884 = vset.pattern.permute.xlu0 1
    %885 = vperm.xlu0 %884, %v257
    %v886 = vpop.permute.xlu0 %885
    %888 = vset.pattern.permute.xlu0 1
    %889 = vperm.xlu0 %888, %v258
    %v890 = vpop.permute.xlu0 %889
    %892 = vset.pattern.permute.xlu0 1
    %893 = vperm.xlu0 %892, %v259
    %v894 = vpop.permute.xlu0 %893
    %v896 = vadd.f32 %v872, %v882
    %v897 = vadd.f32 %v873, %v882
    %v898 = vadd.f32 %v874, %v886
    %v899 = vadd.f32 %v875, %v886
    %v900 = vadd.f32 %v876, %v890
    %v901 = vadd.f32 %v877, %v890
    %v902 = vadd.f32 %v878, %v894
    %v903 = vadd.f32 %v879, %v894
    %v904 = vld [vmem:[#allocation2 + $0x8] sm:$0xff]
    %v905 = vld [vmem:[#allocation2 + $0x10] sm:$0xff]
    %v906 = vld [vmem:[#allocation2 + $0xd0] sm:$0xff]
    %v907 = vld [vmem:[#allocation2 + $0xd8] sm:$0xff]
    %v908 = vld [vmem:[#allocation2 + $0x198] sm:$0xff]
    %v909 = vld [vmem:[#allocation2 + $0x1a0] sm:$0xff]
    %v910 = vld [vmem:[#allocation2 + $0x260] sm:$0xff]
    %v911 = vld [vmem:[#allocation2 + $0x268] sm:$0xff]
    %920 = vrot.lane.b32.xlu0 %v896, 2
    %v921 = vpop.permute.xlu0 %920
    %922 = vrot.lane.b32.xlu0 %v897, 2
    %v923 = vpop.permute.xlu0 %922
    %924 = vrot.lane.b32.xlu0 %v898, 2
    %v925 = vpop.permute.xlu0 %924
    %926 = vrot.lane.b32.xlu0 %v899, 2
    %v927 = vpop.permute.xlu0 %926
    %928 = vrot.lane.b32.xlu0 %v900, 2
    %v929 = vpop.permute.xlu0 %928
    %930 = vrot.lane.b32.xlu0 %v901, 2
    %v931 = vpop.permute.xlu0 %930
    %932 = vrot.lane.b32.xlu0 %v902, 2
    %v933 = vpop.permute.xlu0 %932
    %934 = vrot.lane.b32.xlu0 %v903, 2
    %v935 = vpop.permute.xlu0 %934
    %v936 = vsel %vm452, %v921, %v923
    %v937 = vsel %vm452, %v925, %v927
    %v938 = vsel %vm452, %v929, %v931
    %v939 = vsel %vm452, %v933, %v935
    %v948 = vsel %vm452, 0.0, %v921
    %v949 = vsel %vm452, 0.0, %v925
    %v950 = vsel %vm452, 0.0, %v929
    %v951 = vsel %vm452, 0.0, %v933
    %v952 = vmul.f32 %v948, %v115
    %v953 = vmul.f32 %v936, %v116
    %v954 = vmul.f32 %v949, %v115
    %v955 = vmul.f32 %v937, %v116
    %v956 = vmul.f32 %v950, %v115
    %v957 = vmul.f32 %v938, %v116
    %v958 = vmul.f32 %v951, %v115
    %v959 = vmul.f32 %v939, %v116
    %960 = vrot.lane.b32.xlu0 %v896, 1
    %v961 = vpop.permute.xlu0 %960
    %962 = vrot.lane.b32.xlu0 %v897, 1
    %v963 = vpop.permute.xlu0 %962
    %964 = vrot.lane.b32.xlu0 %v898, 1
    %v965 = vpop.permute.xlu0 %964
    %966 = vrot.lane.b32.xlu0 %v899, 1
    %v967 = vpop.permute.xlu0 %966
    %968 = vrot.lane.b32.xlu0 %v900, 1
    %v969 = vpop.permute.xlu0 %968
    %970 = vrot.lane.b32.xlu0 %v901, 1
    %v971 = vpop.permute.xlu0 %970
    %972 = vrot.lane.b32.xlu0 %v902, 1
    %v973 = vpop.permute.xlu0 %972
    %974 = vrot.lane.b32.xlu0 %v903, 1
    %v975 = vpop.permute.xlu0 %974
    %v976 = vsel %vm493, %v961, %v963
    %v977 = vsel %vm493, %v965, %v967
    %v978 = vsel %vm493, %v969, %v971
    %v979 = vsel %vm493, %v973, %v975
    %v988 = vsel %vm493, 0.0, %v961
    %v989 = vsel %vm493, 0.0, %v965
    %v990 = vsel %vm493, 0.0, %v969
    %v991 = vsel %vm493, 0.0, %v973
    %v992 = vmul.f32 %v988, %v127
    %v993 = vmul.f32 %v976, %v128
    %v994 = vmul.f32 %v989, %v127
    %v995 = vmul.f32 %v977, %v128
    %v996 = vmul.f32 %v990, %v127
    %v997 = vmul.f32 %v978, %v128
    %v998 = vmul.f32 %v991, %v127
    %v999 = vmul.f32 %v979, %v128
    %1000 = vrot.lane.b32.xlu0 %v896, 127
    %v1001 = vpop.permute.xlu0 %1000
    %1002 = vrot.lane.b32.xlu0 %v897, 127
    %v1003 = vpop.permute.xlu0 %1002
    %1004 = vrot.lane.b32.xlu0 %v898, 127
    %v1005 = vpop.permute.xlu0 %1004
    %1006 = vrot.lane.b32.xlu0 %v899, 127
    %v1007 = vpop.permute.xlu0 %1006
    %1008 = vrot.lane.b32.xlu0 %v900, 127
    %v1009 = vpop.permute.xlu0 %1008
    %1010 = vrot.lane.b32.xlu0 %v901, 127
    %v1011 = vpop.permute.xlu0 %1010
    %1012 = vrot.lane.b32.xlu0 %v902, 127
    %v1013 = vpop.permute.xlu0 %1012
    %1014 = vrot.lane.b32.xlu0 %v903, 127
    %v1015 = vpop.permute.xlu0 %1014
    %v1016 = vsel %vm534, %v1001, %v1003
    %v1017 = vsel %vm534, %v1005, %v1007
    %v1018 = vsel %vm534, %v1009, %v1011
    %v1019 = vsel %vm534, %v1013, %v1015
    %v1028 = vsel %vm534, %v1003, 0.0
    %v1029 = vsel %vm534, %v1007, 0.0
    %v1030 = vsel %vm534, %v1011, 0.0
    %v1031 = vsel %vm534, %v1015, 0.0
    %v1032 = vmul.f32 %v1016, %v139
    %v1033 = vmul.f32 %v1028, %v140
    %v1034 = vmul.f32 %v1017, %v139
    %v1035 = vmul.f32 %v1029, %v140
    %v1036 = vmul.f32 %v1018, %v139
    %v1037 = vmul.f32 %v1030, %v140
    %v1038 = vmul.f32 %v1019, %v139
    %v1039 = vmul.f32 %v1031, %v140
    %1040 = vrot.lane.b32.xlu0 %v896, 126
    %v1041 = vpop.permute.xlu0 %1040
    %1042 = vrot.lane.b32.xlu0 %v897, 126
    %v1043 = vpop.permute.xlu0 %1042
    %1044 = vrot.lane.b32.xlu0 %v898, 126
    %v1045 = vpop.permute.xlu0 %1044
    %1046 = vrot.lane.b32.xlu0 %v899, 126
    %v1047 = vpop.permute.xlu0 %1046
    %1048 = vrot.lane.b32.xlu0 %v900, 126
    %v1049 = vpop.permute.xlu0 %1048
    %1050 = vrot.lane.b32.xlu0 %v901, 126
    %v1051 = vpop.permute.xlu0 %1050
    %1052 = vrot.lane.b32.xlu0 %v902, 126
    %v1053 = vpop.permute.xlu0 %1052
    %1054 = vrot.lane.b32.xlu0 %v903, 126
    %v1055 = vpop.permute.xlu0 %1054
    %v1056 = vsel %vm575, %v1041, %v1043
    %v1057 = vsel %vm575, %v1045, %v1047
    %v1058 = vsel %vm575, %v1049, %v1051
    %v1059 = vsel %vm575, %v1053, %v1055
    %v1068 = vsel %vm575, %v1043, 0.0
    %v1069 = vsel %vm575, %v1047, 0.0
    %v1070 = vsel %vm575, %v1051, 0.0
    %v1071 = vsel %vm575, %v1055, 0.0
    %v1072 = vmul.f32 %v1056, %v151
    %v1073 = vmul.f32 %v1068, %v152
    %v1074 = vmul.f32 %v1057, %v151
    %v1075 = vmul.f32 %v1069, %v152
    %v1076 = vmul.f32 %v1058, %v151
    %v1077 = vmul.f32 %v1070, %v152
    %v1078 = vmul.f32 %v1059, %v151
    %v1079 = vmul.f32 %v1071, %v152
    %1080 = vset.pattern.permute.xlu0 1
    %1081 = vperm.xlu0 %1080, %v424
    %v1082 = vpop.permute.xlu0 %1081
    %1084 = vset.pattern.permute.xlu0 1
    %1085 = vperm.xlu0 %1084, %v425
    %v1086 = vpop.permute.xlu0 %1085
    %1088 = vset.pattern.permute.xlu0 1
    %1089 = vperm.xlu0 %1088, %v426
    %v1090 = vpop.permute.xlu0 %1089
    %1092 = vset.pattern.permute.xlu0 1
    %1093 = vperm.xlu0 %1092, %v427
    %v1094 = vpop.permute.xlu0 %1093
    %1104 = vrot.lane.b32.xlu0 %v904, 96
    %v1105 = vpop.permute.xlu0 %1104
    %1106 = vrot.lane.b32.xlu0 %v905, 96
    %v1107 = vpop.permute.xlu0 %1106
    %1108 = vrot.lane.b32.xlu0 %v906, 96
    %v1109 = vpop.permute.xlu0 %1108
    %1110 = vrot.lane.b32.xlu0 %v907, 96
    %v1111 = vpop.permute.xlu0 %1110
    %1112 = vrot.lane.b32.xlu0 %v908, 96
    %v1113 = vpop.permute.xlu0 %1112
    %1114 = vrot.lane.b32.xlu0 %v909, 96
    %v1115 = vpop.permute.xlu0 %1114
    %1116 = vrot.lane.b32.xlu0 %v910, 96
    %v1117 = vpop.permute.xlu0 %1116
    %1118 = vrot.lane.b32.xlu0 %v911, 96
    %v1119 = vpop.permute.xlu0 %1118
    %vm1120 = vcmask 785408
    %v1121 = vsel %vm1120, %v1105, %v1107
    %v1122 = vsel %vm1120, %v1109, %v1111
    %v1123 = vsel %vm1120, %v1113, %v1115
    %v1124 = vsel %vm1120, %v1117, %v1119
    %v1129 = vsel %vm181, %v1107, 0
    %v1131 = vsel %vm181, %v1111, 0
    %v1133 = vsel %vm181, %v1115, 0
    %v1135 = vsel %vm181, %v1119, 0
    %1137 = vmatpush.msra.mxu0 %v1038
    %1138 = vmatpush.msra.mxu0 %v1036
    %1139 = vmatpush.msra.mxu0 %v1034
    %1140 = vmatpush.msra.mxu0 %v1032
    %1141 = vmatpush.msra.mxu0 %v902
    %1142 = vmatpush.msra.mxu0 %v900
    %1143 = vmatpush.msra.mxu0 %v898
    %1144 = vmatpush.msra.mxu0 %v896
    %1145 = vmatpush.msra.mxu0 %v998
    %1146 = vmatpush.msra.mxu0 %v996
    %1147 = vmatpush.msra.mxu0 %v994
    %1148 = vmatpush.msra.mxu0 %v992
    %1149 = vmatpush.msra.mxu0 %v958
    %1150 = vmatpush.msra.mxu0 %v956
    %1151 = vmatpush.msra.mxu0 %v954
    %1152 = vmatpush.msra.mxu0 %v952
    %1153 = vmatmul.f32.gmra.mxu0 %v1121
    %v1154 = vpop.f32.mrf.mxu0
    %v1155 = vadd.f32 %v1082, %v1154
    %1156 = vmatmul.f32.gmra.mxu0 %v1122
    %v1157 = vpop.f32.mrf.mxu0
    %v1158 = vadd.f32 %v1086, %v1157
    %1159 = vmatmul.f32.gmra.mxu0 %v1123
    %v1160 = vpop.f32.mrf.mxu0
    %v1161 = vadd.f32 %v1090, %v1160
    %1162 = vmatmul.f32.gmra.mxu0 %v1124
    %v1163 = vpop.f32.mrf.mxu0
    %v1164 = vadd.f32 %v1094, %v1163
    %1165 = vdwg.mxu0
    %1166 = vmatpush.msra.mxu0 0.0
    %1167 = vmatpush.msra.mxu0 0.0
    %1168 = vmatpush.msra.mxu0 0.0
    %1169 = vmatpush.msra.mxu0 0.0
    %1170 = vmatpush.msra.mxu0 0.0
    %1171 = vmatpush.msra.mxu0 0.0
    %1172 = vmatpush.msra.mxu0 0.0
    %1173 = vmatpush.msra.mxu0 0.0
    %1174 = vmatpush.msra.mxu0 0.0
    %1175 = vmatpush.msra.mxu0 0.0
    %1176 = vmatpush.msra.mxu0 0.0
    %1177 = vmatpush.msra.mxu0 0.0
    %1178 = vmatpush.msra.mxu0 %v1078
    %1179 = vmatpush.msra.mxu0 %v1076
    %1180 = vmatpush.msra.mxu0 %v1074
    %1181 = vmatpush.msra.mxu0 %v1072
    %1182 = vmatmul.f32.gmra.mxu0 %v1129
    %v1183 = vpop.f32.mrf.mxu0
    %v1184 = vadd.f32 %v1155, %v1183
    %1185 = vmatmul.f32.gmra.mxu0 %v1131
    %v1186 = vpop.f32.mrf.mxu0
    %v1187 = vadd.f32 %v1158, %v1186
    %1188 = vmatmul.f32.gmra.mxu0 %v1133
    %v1189 = vpop.f32.mrf.mxu0
    %v1190 = vadd.f32 %v1161, %v1189
    %1191 = vmatmul.f32.gmra.mxu0 %v1135
    %v1192 = vpop.f32.mrf.mxu0
    %v1193 = vadd.f32 %v1164, %v1192
    %1194 = vdwg.mxu0
    %1195 = vmatpush.msra.mxu0 %v1039
    %1196 = vmatpush.msra.mxu0 %v1037
    %1197 = vmatpush.msra.mxu0 %v1035
    %1198 = vmatpush.msra.mxu0 %v1033
    %1199 = vmatpush.msra.mxu0 %v903
    %1200 = vmatpush.msra.mxu0 %v901
    %1201 = vmatpush.msra.mxu0 %v899
    %1202 = vmatpush.msra.mxu0 %v897
    %1203 = vmatpush.msra.mxu0 %v999
    %1204 = vmatpush.msra.mxu0 %v997
    %1205 = vmatpush.msra.mxu0 %v995
    %1206 = vmatpush.msra.mxu0 %v993
    %1207 = vmatpush.msra.mxu0 %v959
    %1208 = vmatpush.msra.mxu0 %v957
    %1209 = vmatpush.msra.mxu0 %v955
    %1210 = vmatpush.msra.mxu0 %v953
    %1211 = vmatmul.f32.gmra.mxu0 %v1121
    %v1212 = vpop.f32.mrf.mxu0
    %v1213 = vadd.f32 %v1082, %v1212
    %1214 = vmatmul.f32.gmra.mxu0 %v1122
    %v1215 = vpop.f32.mrf.mxu0
    %v1216 = vadd.f32 %v1086, %v1215
    %1217 = vmatmul.f32.gmra.mxu0 %v1123
    %v1218 = vpop.f32.mrf.mxu0
    %v1219 = vadd.f32 %v1090, %v1218
    %1220 = vmatmul.f32.gmra.mxu0 %v1124
    %v1221 = vpop.f32.mrf.mxu0
    %v1222 = vadd.f32 %v1094, %v1221
    %1223 = vdwg.mxu0
    %1224 = vmatpush.msra.mxu0 0.0
    %1225 = vmatpush.msra.mxu0 0.0
    %1226 = vmatpush.msra.mxu0 0.0
    %1227 = vmatpush.msra.mxu0 0.0
    %1228 = vmatpush.msra.mxu0 0.0
    %1229 = vmatpush.msra.mxu0 0.0
    %1230 = vmatpush.msra.mxu0 0.0
    %1231 = vmatpush.msra.mxu0 0.0
    %1232 = vmatpush.msra.mxu0 0.0
    %1233 = vmatpush.msra.mxu0 0.0
    %1234 = vmatpush.msra.mxu0 0.0
    %1235 = vmatpush.msra.mxu0 0.0
    %1236 = vmatpush.msra.mxu0 %v1079
    %1237 = vmatpush.msra.mxu0 %v1077
    %1238 = vmatpush.msra.mxu0 %v1075
    %1239 = vmatpush.msra.mxu0 %v1073
    %1240 = vmatmul.f32.gmra.mxu0 %v1129
    %v1241 = vpop.f32.mrf.mxu0
    %v1242 = vadd.f32 %v1213, %v1241
    %1243 = vmatmul.f32.gmra.mxu0 %v1131
    %v1244 = vpop.f32.mrf.mxu0
    %v1245 = vadd.f32 %v1216, %v1244
    %1246 = vmatmul.f32.gmra.mxu0 %v1133
    %v1247 = vpop.f32.mrf.mxu0
    %v1248 = vadd.f32 %v1219, %v1247
    %1249 = vmatmul.f32.gmra.mxu0 %v1135
    %v1250 = vpop.f32.mrf.mxu0
    %v1251 = vadd.f32 %v1222, %v1250
    %1252 = vdwg.mxu0
    %v1253 = vmax.f32 %v1184, 0.0
    %v1254 = vmax.f32 %v1242, 0.0
    %v1255 = vmax.f32 %v1187, 0.0
    %v1256 = vmax.f32 %v1245, 0.0
    %v1257 = vmax.f32 %v1190, 0.0
    %v1258 = vmax.f32 %v1248, 0.0
    %v1259 = vmax.f32 %v1193, 0.0
    %v1260 = vmax.f32 %v1251, 0.0
    %v1261 = vadd.f32 %v1253, %v1254
    %1262 = vadd.xlane.f32.xlu0 %v1261
    %v1263 = vpop.xlane.xlu0 %1262
    %v1264 = vadd.f32 %v1255, %v1256
    %1265 = vadd.xlane.f32.xlu0 %v1264
    %v1266 = vpop.xlane.xlu0 %1265
    %v1267 = vadd.f32 %v1257, %v1258
    %1268 = vadd.xlane.f32.xlu0 %v1267
    %v1269 = vpop.xlane.xlu0 %1268
    %v1270 = vadd.f32 %v1259, %v1260
    %1271 = vadd.xlane.f32.xlu0 %v1270
    %v1272 = vpop.xlane.xlu0 %1271
    %v1273 = vmul.f32 %v1263, 0.00390625
    %v1274 = vmul.f32 %v1266, 0.00390625
    %v1275 = vmul.f32 %v1269, 0.00390625
    %v1276 = vmul.f32 %v1272, 0.00390625
    %v1277 = vsub.f32 %v1253, %v1273
    %v1278 = vsub.f32 %v1254, %v1273
    %v1279 = vsub.f32 %v1255, %v1274
    %v1280 = vsub.f32 %v1256, %v1274
    %v1281 = vsub.f32 %v1257, %v1275
    %v1282 = vsub.f32 %v1258, %v1275
    %v1283 = vsub.f32 %v1259, %v1276
    %v1284 = vsub.f32 %v1260, %v1276
    %v1285 = vmul.f32 %v1277, %v1277
    %v1286 = vmul.f32 %v1278, %v1278
    %v1287 = vmul.f32 %v1279, %v1279
    %v1288 = vmul.f32 %v1280, %v1280
    %v1289 = vmul.f32 %v1281, %v1281
    %v1290 = vmul.f32 %v1282, %v1282
    %v1291 = vmul.f32 %v1283, %v1283
    %v1292 = vmul.f32 %v1284, %v1284
    %v1293 = vadd.f32 %v1285, %v1286
    %1294 = vadd.xlane.f32.xlu0 %v1293
    %v1295 = vpop.xlane.xlu0 %1294
    %v1296 = vadd.f32 %v1287, %v1288
    %1297 = vadd.xlane.f32.xlu0 %v1296
    %v1298 = vpop.xlane.xlu0 %1297
    %v1299 = vadd.f32 %v1289, %v1290
    %1300 = vadd.xlane.f32.xlu0 %v1299
    %v1301 = vpop.xlane.xlu0 %1300
    %v1302 = vadd.f32 %v1291, %v1292
    %1303 = vadd.xlane.f32.xlu0 %v1302
    %v1304 = vpop.xlane.xlu0 %1303
    %v1305 = vmul.f32 %v1295, 0.00390625
    %v1306 = vmul.f32 %v1298, 0.00390625
    %v1307 = vmul.f32 %v1301, 0.00390625
    %v1308 = vmul.f32 %v1304, 0.00390625
    %v1309 = vadd.f32 %v1305, 1e-05
    %v1310 = vadd.f32 %v1306, 1e-05
    %v1311 = vadd.f32 %v1307, 1e-05
    %v1312 = vadd.f32 %v1308, 1e-05
    %v1313 = vrsqrt.pop %v1309
    %v1314 = vmul.f32 %v1313, %v1309
    %v1315 = vmul.f32 %v1314, %v1313
    %v1316 = vmul.f32 0.5, %v1315
    %v1317 = vsub.f32 1.5, %v1316
    %v1318 = vmul.f32 %v1313, %v1317
    %vm1319 = vweird.f32 %v1309
    %vm1320 = vweird.f32 %v1313
    %vm1321 = vmor %vm1319, %vm1320
    %v1322 = vsel %vm1321, %v1313, %v1318
    %v1323 = vrsqrt.pop %v1310
    %v1324 = vmul.f32 %v1323, %v1310
    %v1325 = vmul.f32 %v1324, %v1323
    %v1326 = vmul.f32 0.5, %v1325
    %v1327 = vsub.f32 1.5, %v1326
    %v1328 = vmul.f32 %v1323, %v1327
    %vm1329 = vweird.f32 %v1310
    %vm1330 = vweird.f32 %v1323
    %vm1331 = vmor %vm1329, %vm1330
    %v1332 = vsel %vm1331, %v1323, %v1328
    %v1333 = vrsqrt.pop %v1311
    %v1334 = vmul.f32 %v1333, %v1311
    %v1335 = vmul.f32 %v1334, %v1333
    %v1336 = vmul.f32 0.5, %v1335
    %v1337 = vsub.f32 1.5, %v1336
    %v1338 = vmul.f32 %v1333, %v1337
    %vm1339 = vweird.f32 %v1311
    %vm1340 = vweird.f32 %v1333
    %vm1341 = vmor %vm1339, %vm1340
    %v1342 = vsel %vm1341, %v1333, %v1338
    %v1343 = vrsqrt.pop %v1312
    %v1344 = vmul.f32 %v1343, %v1312
    %v1345 = vmul.f32 %v1344, %v1343
    %v1346 = vmul.f32 0.5, %v1345
    %v1347 = vsub.f32 1.5, %v1346
    %v1348 = vmul.f32 %v1343, %v1347
    %vm1349 = vweird.f32 %v1312
    %vm1350 = vweird.f32 %v1343
    %vm1351 = vmor %vm1349, %vm1350
    %v1352 = vsel %vm1351, %v1343, %v1348
    %v1353 = vmul.f32 %v1277, %v1322
    %v1354 = vmul.f32 %v1278, %v1322
    %v1355 = vmul.f32 %v1279, %v1332
    %v1356 = vmul.f32 %v1280, %v1332
    %v1357 = vmul.f32 %v1281, %v1342
    %v1358 = vmul.f32 %v1282, %v1342
    %v1359 = vmul.f32 %v1283, %v1352
    %v1360 = vmul.f32 %v1284, %v1352
    %1361 = vset.pattern.permute.xlu0 2
    %1362 = vperm.xlu0 %1361, %v252
    %v1363 = vpop.permute.xlu0 %1362
    %1365 = vset.pattern.permute.xlu0 2
    %1366 = vperm.xlu0 %1365, %v253
    %v1367 = vpop.permute.xlu0 %1366
    %1369 = vset.pattern.permute.xlu0 2
    %1370 = vperm.xlu0 %1369, %v254
    %v1371 = vpop.permute.xlu0 %1370
    %1373 = vset.pattern.permute.xlu0 2
    %1374 = vperm.xlu0 %1373, %v255
    %v1375 = vpop.permute.xlu0 %1374
    %v1377 = vmul.f32 %v1363, %v1353
    %v1378 = vmul.f32 %v1363, %v1354
    %v1379 = vmul.f32 %v1367, %v1355
    %v1380 = vmul.f32 %v1367, %v1356
    %v1381 = vmul.f32 %v1371, %v1357
    %v1382 = vmul.f32 %v1371, %v1358
    %v1383 = vmul.f32 %v1375, %v1359
    %v1384 = vmul.f32 %v1375, %v1360
    %1385 = vset.pattern.permute.xlu0 2
    %1386 = vperm.xlu0 %1385, %v256
    %v1387 = vpop.permute.xlu0 %1386
    %1389 = vset.pattern.permute.xlu0 2
    %1390 = vperm.xlu0 %1389, %v257
    %v1391 = vpop.permute.xlu0 %1390
    %1393 = vset.pattern.permute.xlu0 2
    %1394 = vperm.xlu0 %1393, %v258
    %v1395 = vpop.permute.xlu0 %1394
    %1397 = vset.pattern.permute.xlu0 2
    %1398 = vperm.xlu0 %1397, %v259
    %v1399 = vpop.permute.xlu0 %1398
    %v1401 = vadd.f32 %v1377, %v1387
    %v1402 = vadd.f32 %v1378, %v1387
    %v1403 = vadd.f32 %v1379, %v1391
    %v1404 = vadd.f32 %v1380, %v1391
    %v1405 = vadd.f32 %v1381, %v1395
    %v1406 = vadd.f32 %v1382, %v1395
    %v1407 = vadd.f32 %v1383, %v1399
    %v1408 = vadd.f32 %v1384, %v1399
    %v1409 = vadd.f32 %v1401, %v408
    %v1410 = vadd.f32 %v1402, %v409
    %v1411 = vadd.f32 %v1403, %v410
    %v1412 = vadd.f32 %v1404, %v411
    %v1413 = vadd.f32 %v1405, %v412
    %v1414 = vadd.f32 %v1406, %v413
    %v1415 = vadd.f32 %v1407, %v414
    %v1416 = vadd.f32 %v1408, %v415
    %v1417 = vld [vmem:[#allocation2 + $0x10] sm:$0xff]
    %v1418 = vld [vmem:[#allocation2 + $0x18] sm:$0xff]
    %v1419 = vld [vmem:[#allocation2 + $0xd8] sm:$0xff]
    %v1420 = vld [vmem:[#allocation2 + $0xe0] sm:$0xff]
    %v1421 = vld [vmem:[#allocation2 + $0x1a0] sm:$0xff]
    %v1422 = vld [vmem:[#allocation2 + $0x1a8] sm:$0xff]
    %v1423 = vld [vmem:[#allocation2 + $0x268] sm:$0xff]
    %v1424 = vld [vmem:[#allocation2 + $0x270] sm:$0xff]
    %1433 = vrot.lane.b32.xlu0 %v1409, 2
    %v1434 = vpop.permute.xlu0 %1433
    %1435 = vrot.lane.b32.xlu0 %v1410, 2
    %v1436 = vpop.permute.xlu0 %1435
    %1437 = vrot.lane.b32.xlu0 %v1411, 2
    %v1438 = vpop.permute.xlu0 %1437
    %1439 = vrot.lane.b32.xlu0 %v1412, 2
    %v1440 = vpop.permute.xlu0 %1439
    %1441 = vrot.lane.b32.xlu0 %v1413, 2
    %v1442 = vpop.permute.xlu0 %1441
    %1443 = vrot.lane.b32.xlu0 %v1414, 2
    %v1444 = vpop.permute.xlu0 %1443
    %1445 = vrot.lane.b32.xlu0 %v1415, 2
    %v1446 = vpop.permute.xlu0 %1445
    %1447 = vrot.lane.b32.xlu0 %v1416, 2
    %v1448 = vpop.permute.xlu0 %1447
    %v1449 = vsel %vm452, %v1434, %v1436
    %v1450 = vsel %vm452, %v1438, %v1440
    %v1451 = vsel %vm452, %v1442, %v1444
    %v1452 = vsel %vm452, %v1446, %v1448
    %v1461 = vsel %vm452, 0.0, %v1434
    %v1462 = vsel %vm452, 0.0, %v1438
    %v1463 = vsel %vm452, 0.0, %v1442
    %v1464 = vsel %vm452, 0.0, %v1446
    %v1465 = vmul.f32 %v1461, %v115
    %v1466 = vmul.f32 %v1449, %v116
    %v1467 = vmul.f32 %v1462, %v115
    %v1468 = vmul.f32 %v1450, %v116
    %v1469 = vmul.f32 %v1463, %v115
    %v1470 = vmul.f32 %v1451, %v116
    %v1471 = vmul.f32 %v1464, %v115
    %v1472 = vmul.f32 %v1452, %v116
    %1473 = vrot.lane.b32.xlu0 %v1409, 1
    %v1474 = vpop.permute.xlu0 %1473
    %1475 = vrot.lane.b32.xlu0 %v1410, 1
    %v1476 = vpop.permute.xlu0 %1475
    %1477 = vrot.lane.b32.xlu0 %v1411, 1
    %v1478 = vpop.permute.xlu0 %1477
    %1479 = vrot.lane.b32.xlu0 %v1412, 1
    %v1480 = vpop.permute.xlu0 %1479
    %1481 = vrot.lane.b32.xlu0 %v1413, 1
    %v1482 = vpop.permute.xlu0 %1481
    %1483 = vrot.lane.b32.xlu0 %v1414, 1
    %v1484 = vpop.permute.xlu0 %1483
    %1485 = vrot.lane.b32.xlu0 %v1415, 1
    %v1486 = vpop.permute.xlu0 %1485
    %1487 = vrot.lane.b32.xlu0 %v1416, 1
    %v1488 = vpop.permute.xlu0 %1487
    %v1489 = vsel %vm493, %v1474, %v1476
    %v1490 = vsel %vm493, %v1478, %v1480
    %v1491 = vsel %vm493, %v1482, %v1484
    %v1492 = vsel %vm493, %v1486, %v1488
    %v1501 = vsel %vm493, 0.0, %v1474
    %v1502 = vsel %vm493, 0.0, %v1478
    %v1503 = vsel %vm493, 0.0, %v1482
    %v1504 = vsel %vm493, 0.0, %v1486
    %v1505 = vmul.f32 %v1501, %v127
    %v1506 = vmul.f32 %v1489, %v128
    %v1507 = vmul.f32 %v1502, %v127
    %v1508 = vmul.f32 %v1490, %v128
    %v1509 = vmul.f32 %v1503, %v127
    %v1510 = vmul.f32 %v1491, %v128
    %v1511 = vmul.f32 %v1504, %v127
    %v1512 = vmul.f32 %v1492, %v128
    %1513 = vrot.lane.b32.xlu0 %v1409, 127
    %v1514 = vpop.permute.xlu0 %1513
    %1515 = vrot.lane.b32.xlu0 %v1410, 127
    %v1516 = vpop.permute.xlu0 %1515
    %1517 = vrot.lane.b32.xlu0 %v1411, 127
    %v1518 = vpop.permute.xlu0 %1517
    %1519 = vrot.lane.b32.xlu0 %v1412, 127
    %v1520 = vpop.permute.xlu0 %1519
    %1521 = vrot.lane.b32.xlu0 %v1413, 127
    %v1522 = vpop.permute.xlu0 %1521
    %1523 = vrot.lane.b32.xlu0 %v1414, 127
    %v1524 = vpop.permute.xlu0 %1523
    %1525 = vrot.lane.b32.xlu0 %v1415, 127
    %v1526 = vpop.permute.xlu0 %1525
    %1527 = vrot.lane.b32.xlu0 %v1416, 127
    %v1528 = vpop.permute.xlu0 %1527
    %v1529 = vsel %vm534, %v1514, %v1516
    %v1530 = vsel %vm534, %v1518, %v1520
    %v1531 = vsel %vm534, %v1522, %v1524
    %v1532 = vsel %vm534, %v1526, %v1528
    %v1541 = vsel %vm534, %v1516, 0.0
    %v1542 = vsel %vm534, %v1520, 0.0
    %v1543 = vsel %vm534, %v1524, 0.0
    %v1544 = vsel %vm534, %v1528, 0.0
    %v1545 = vmul.f32 %v1529, %v139
    %v1546 = vmul.f32 %v1541, %v140
    %v1547 = vmul.f32 %v1530, %v139
    %v1548 = vmul.f32 %v1542, %v140
    %v1549 = vmul.f32 %v1531, %v139
    %v1550 = vmul.f32 %v1543, %v140
    %v1551 = vmul.f32 %v1532, %v139
    %v1552 = vmul.f32 %v1544, %v140
    %1553 = vrot.lane.b32.xlu0 %v1409, 126
    %v1554 = vpop.permute.xlu0 %1553
    %1555 = vrot.lane.b32.xlu0 %v1410, 126
    %v1556 = vpop.permute.xlu0 %1555
    %1557 = vrot.lane.b32.xlu0 %v1411, 126
    %v1558 = vpop.permute.xlu0 %1557
    %1559 = vrot.lane.b32.xlu0 %v1412, 126
    %v1560 = vpop.permute.xlu0 %1559
    %1561 = vrot.lane.b32.xlu0 %v1413, 126
    %v1562 = vpop.permute.xlu0 %1561
    %1563 = vrot.lane.b32.xlu0 %v1414, 126
    %v1564 = vpop.permute.xlu0 %1563
    %1565 = vrot.lane.b32.xlu0 %v1415, 126
    %v1566 = vpop.permute.xlu0 %1565
    %1567 = vrot.lane.b32.xlu0 %v1416, 126
    %v1568 = vpop.permute.xlu0 %1567
    %v1569 = vsel %vm575, %v1554, %v1556
    %v1570 = vsel %vm575, %v1558, %v1560
    %v1571 = vsel %vm575, %v1562, %v1564
    %v1572 = vsel %vm575, %v1566, %v1568
    %v1581 = vsel %vm575, %v1556, 0.0
    %v1582 = vsel %vm575, %v1560, 0.0
    %v1583 = vsel %vm575, %v1564, 0.0
    %v1584 = vsel %vm575, %v1568, 0.0
    %v1585 = vmul.f32 %v1569, %v151
    %v1586 = vmul.f32 %v1581, %v152
    %v1587 = vmul.f32 %v1570, %v151
    %v1588 = vmul.f32 %v1582, %v152
    %v1589 = vmul.f32 %v1571, %v151
    %v1590 = vmul.f32 %v1583, %v152
    %v1591 = vmul.f32 %v1572, %v151
    %v1592 = vmul.f32 %v1584, %v152
    %1593 = vset.pattern.permute.xlu0 2
    %1594 = vperm.xlu0 %1593, %v424
    %v1595 = vpop.permute.xlu0 %1594
    %1597 = vset.pattern.permute.xlu0 2
    %1598 = vperm.xlu0 %1597, %v425
    %v1599 = vpop.permute.xlu0 %1598
    %1601 = vset.pattern.permute.xlu0 2
    %1602 = vperm.xlu0 %1601, %v426
    %v1603 = vpop.permute.xlu0 %1602
    %1605 = vset.pattern.permute.xlu0 2
    %1606 = vperm.xlu0 %1605, %v427
    %v1607 = vpop.permute.xlu0 %1606
    %1617 = vrot.lane.b32.xlu0 %v1417, 64
    %v1618 = vpop.permute.xlu0 %1617
    %1619 = vrot.lane.b32.xlu0 %v1418, 64
    %v1620 = vpop.permute.xlu0 %1619
    %1621 = vrot.lane.b32.xlu0 %v1419, 64
    %v1622 = vpop.permute.xlu0 %1621
    %1623 = vrot.lane.b32.xlu0 %v1420, 64
    %v1624 = vpop.permute.xlu0 %1623
    %1625 = vrot.lane.b32.xlu0 %v1421, 64
    %v1626 = vpop.permute.xlu0 %1625
    %1627 = vrot.lane.b32.xlu0 %v1422, 64
    %v1628 = vpop.permute.xlu0 %1627
    %1629 = vrot.lane.b32.xlu0 %v1423, 64
    %v1630 = vpop.permute.xlu0 %1629
    %1631 = vrot.lane.b32.xlu0 %v1424, 64
    %v1632 = vpop.permute.xlu0 %1631
    %vm1633 = vcmask 523264
    %v1634 = vsel %vm1633, %v1618, %v1620
    %v1635 = vsel %vm1633, %v1622, %v1624
    %v1636 = vsel %vm1633, %v1626, %v1628
    %v1637 = vsel %vm1633, %v1630, %v1632
    %v1642 = vsel %vm181, %v1620, 0
    %v1644 = vsel %vm181, %v1624, 0
    %v1646 = vsel %vm181, %v1628, 0
    %v1648 = vsel %vm181, %v1632, 0
    %1650 = vmatpush.msra.mxu0 %v1551
    %1651 = vmatpush.msra.mxu0 %v1549
    %1652 = vmatpush.msra.mxu0 %v1547
    %1653 = vmatpush.msra.mxu0 %v1545
    %1654 = vmatpush.msra.mxu0 %v1415
    %1655 = vmatpush.msra.mxu0 %v1413
    %1656 = vmatpush.msra.mxu0 %v1411
    %1657 = vmatpush.msra.mxu0 %v1409
    %1658 = vmatpush.msra.mxu0 %v1511
    %1659 = vmatpush.msra.mxu0 %v1509
    %1660 = vmatpush.msra.mxu0 %v1507
    %1661 = vmatpush.msra.mxu0 %v1505
    %1662 = vmatpush.msra.mxu0 %v1471
    %1663 = vmatpush.msra.mxu0 %v1469
    %1664 = vmatpush.msra.mxu0 %v1467
    %1665 = vmatpush.msra.mxu0 %v1465
    %1666 = vmatmul.f32.gmra.mxu0 %v1634
    %v1667 = vpop.f32.mrf.mxu0
    %v1668 = vadd.f32 %v1595, %v1667
    %1669 = vmatmul.f32.gmra.mxu0 %v1635
    %v1670 = vpop.f32.mrf.mxu0
    %v1671 = vadd.f32 %v1599, %v1670
    %1672 = vmatmul.f32.gmra.mxu0 %v1636
    %v1673 = vpop.f32.mrf.mxu0
    %v1674 = vadd.f32 %v1603, %v1673
    %1675 = vmatmul.f32.gmra.mxu0 %v1637
    %v1676 = vpop.f32.mrf.mxu0
    %v1677 = vadd.f32 %v1607, %v1676
    %1678 = vdwg.mxu0
    %1679 = vmatpush.msra.mxu0 0.0
    %1680 = vmatpush.msra.mxu0 0.0
    %1681 = vmatpush.msra.mxu0 0.0
    %1682 = vmatpush.msra.mxu0 0.0
    %1683 = vmatpush.msra.mxu0 0.0
    %1684 = vmatpush.msra.mxu0 0.0
    %1685 = vmatpush.msra.mxu0 0.0
    %1686 = vmatpush.msra.mxu0 0.0
    %1687 = vmatpush.msra.mxu0 0.0
    %1688 = vmatpush.msra.mxu0 0.0
    %1689 = vmatpush.msra.mxu0 0.0
    %1690 = vmatpush.msra.mxu0 0.0
    %1691 = vmatpush.msra.mxu0 %v1591
    %1692 = vmatpush.msra.mxu0 %v1589
    %1693 = vmatpush.msra.mxu0 %v1587
    %1694 = vmatpush.msra.mxu0 %v1585
    %1695 = vmatmul.f32.gmra.mxu0 %v1642
    %v1696 = vpop.f32.mrf.mxu0
    %v1697 = vadd.f32 %v1668, %v1696
    %1698 = vmatmul.f32.gmra.mxu0 %v1644
    %v1699 = vpop.f32.mrf.mxu0
    %v1700 = vadd.f32 %v1671, %v1699
    %1701 = vmatmul.f32.gmra.mxu0 %v1646
    %v1702 = vpop.f32.mrf.mxu0
    %v1703 = vadd.f32 %v1674, %v1702
    %1704 = vmatmul.f32.gmra.mxu0 %v1648
    %v1705 = vpop.f32.mrf.mxu0
    %v1706 = vadd.f32 %v1677, %v1705
    %1707 = vdwg.mxu0
    %1708 = vmatpush.msra.mxu0 %v1552
    %1709 = vmatpush.msra.mxu0 %v1550
    %1710 = vmatpush.msra.mxu0 %v1548
    %1711 = vmatpush.msra.mxu0 %v1546
    %1712 = vmatpush.msra.mxu0 %v1416
    %1713 = vmatpush.msra.mxu0 %v1414
    %1714 = vmatpush.msra.mxu0 %v1412
    %1715 = vmatpush.msra.mxu0 %v1410
    %1716 = vmatpush.msra.mxu0 %v1512
    %1717 = vmatpush.msra.mxu0 %v1510
    %1718 = vmatpush.msra.mxu0 %v1508
    %1719 = vmatpush.msra.mxu0 %v1506
    %1720 = vmatpush.msra.mxu0 %v1472
    %1721 = vmatpush.msra.mxu0 %v1470
    %1722 = vmatpush.msra.mxu0 %v1468
    %1723 = vmatpush.msra.mxu0 %v1466
    %1724 = vmatmul.f32.gmra.mxu0 %v1634
    %v1725 = vpop.f32.mrf.mxu0
    %v1726 = vadd.f32 %v1595, %v1725
    %1727 = vmatmul.f32.gmra.mxu0 %v1635
    %v1728 = vpop.f32.mrf.mxu0
    %v1729 = vadd.f32 %v1599, %v1728
    %1730 = vmatmul.f32.gmra.mxu0 %v1636
    %v1731 = vpop.f32.mrf.mxu0
    %v1732 = vadd.f32 %v1603, %v1731
    %1733 = vmatmul.f32.gmra.mxu0 %v1637
    %v1734 = vpop.f32.mrf.mxu0
    %v1735 = vadd.f32 %v1607, %v1734
    %1736 = vdwg.mxu0
    %1737 = vmatpush.msra.mxu0 0.0
    %1738 = vmatpush.msra.mxu0 0.0
    %1739 = vmatpush.msra.mxu0 0.0
    %1740 = vmatpush.msra.mxu0 0.0
    %1741 = vmatpush.msra.mxu0 0.0
    %1742 = vmatpush.msra.mxu0 0.0
    %1743 = vmatpush.msra.mxu0 0.0
    %1744 = vmatpush.msra.mxu0 0.0
    %1745 = vmatpush.msra.mxu0 0.0
    %1746 = vmatpush.msra.mxu0 0.0
    %1747 = vmatpush.msra.mxu0 0.0
    %1748 = vmatpush.msra.mxu0 0.0
    %1749 = vmatpush.msra.mxu0 %v1592
    %1750 = vmatpush.msra.mxu0 %v1590
    %1751 = vmatpush.msra.mxu0 %v1588
    %1752 = vmatpush.msra.mxu0 %v1586
    %1753 = vmatmul.f32.gmra.mxu0 %v1642
    %v1754 = vpop.f32.mrf.mxu0
    %v1755 = vadd.f32 %v1726, %v1754
    %1756 = vmatmul.f32.gmra.mxu0 %v1644
    %v1757 = vpop.f32.mrf.mxu0
    %v1758 = vadd.f32 %v1729, %v1757
    %1759 = vmatmul.f32.gmra.mxu0 %v1646
    %v1760 = vpop.f32.mrf.mxu0
    %v1761 = vadd.f32 %v1732, %v1760
    %1762 = vmatmul.f32.gmra.mxu0 %v1648
    %v1763 = vpop.f32.mrf.mxu0
    %v1764 = vadd.f32 %v1735, %v1763
    %1765 = vdwg.mxu0
    %v1766 = vmax.f32 %v1697, 0.0
    %v1767 = vmax.f32 %v1755, 0.0
    %v1768 = vmax.f32 %v1700, 0.0
    %v1769 = vmax.f32 %v1758, 0.0
    %v1770 = vmax.f32 %v1703, 0.0
    %v1771 = vmax.f32 %v1761, 0.0
    %v1772 = vmax.f32 %v1706, 0.0
    %v1773 = vmax.f32 %v1764, 0.0
    %v1774 = vadd.f32 %v1766, %v1767
    %1775 = vadd.xlane.f32.xlu0 %v1774
    %v1776 = vpop.xlane.xlu0 %1775
    %v1777 = vadd.f32 %v1768, %v1769
    %1778 = vadd.xlane.f32.xlu0 %v1777
    %v1779 = vpop.xlane.xlu0 %1778
    %v1780 = vadd.f32 %v1770, %v1771
    %1781 = vadd.xlane.f32.xlu0 %v1780
    %v1782 = vpop.xlane.xlu0 %1781
    %v1783 = vadd.f32 %v1772, %v1773
    %1784 = vadd.xlane.f32.xlu0 %v1783
    %v1785 = vpop.xlane.xlu0 %1784
    %v1786 = vmul.f32 %v1776, 0.00390625
    %v1787 = vmul.f32 %v1779, 0.00390625
    %v1788 = vmul.f32 %v1782, 0.00390625
    %v1789 = vmul.f32 %v1785, 0.00390625
    %v1790 = vsub.f32 %v1766, %v1786
    %v1791 = vsub.f32 %v1767, %v1786
    %v1792 = vsub.f32 %v1768, %v1787
    %v1793 = vsub.f32 %v1769, %v1787
    %v1794 = vsub.f32 %v1770, %v1788
    %v1795 = vsub.f32 %v1771, %v1788
    %v1796 = vsub.f32 %v1772, %v1789
    %v1797 = vsub.f32 %v1773, %v1789
    %v1798 = vmul.f32 %v1790, %v1790
    %v1799 = vmul.f32 %v1791, %v1791
    %v1800 = vmul.f32 %v1792, %v1792
    %v1801 = vmul.f32 %v1793, %v1793
    %v1802 = vmul.f32 %v1794, %v1794
    %v1803 = vmul.f32 %v1795, %v1795
    %v1804 = vmul.f32 %v1796, %v1796
    %v1805 = vmul.f32 %v1797, %v1797
    %v1806 = vadd.f32 %v1798, %v1799
    %1807 = vadd.xlane.f32.xlu0 %v1806
    %v1808 = vpop.xlane.xlu0 %1807
    %v1809 = vadd.f32 %v1800, %v1801
    %1810 = vadd.xlane.f32.xlu0 %v1809
    %v1811 = vpop.xlane.xlu0 %1810
    %v1812 = vadd.f32 %v1802, %v1803
    %1813 = vadd.xlane.f32.xlu0 %v1812
    %v1814 = vpop.xlane.xlu0 %1813
    %v1815 = vadd.f32 %v1804, %v1805
    %1816 = vadd.xlane.f32.xlu0 %v1815
    %v1817 = vpop.xlane.xlu0 %1816
    %v1818 = vmul.f32 %v1808, 0.00390625
    %v1819 = vmul.f32 %v1811, 0.00390625
    %v1820 = vmul.f32 %v1814, 0.00390625
    %v1821 = vmul.f32 %v1817, 0.00390625
    %v1822 = vadd.f32 %v1818, 1e-05
    %v1823 = vadd.f32 %v1819, 1e-05
    %v1824 = vadd.f32 %v1820, 1e-05
    %v1825 = vadd.f32 %v1821, 1e-05
    %v1826 = vrsqrt.pop %v1822
    %v1827 = vmul.f32 %v1826, %v1822
    %v1828 = vmul.f32 %v1827, %v1826
    %v1829 = vmul.f32 0.5, %v1828
    %v1830 = vsub.f32 1.5, %v1829
    %v1831 = vmul.f32 %v1826, %v1830
    %vm1832 = vweird.f32 %v1822
    %vm1833 = vweird.f32 %v1826
    %vm1834 = vmor %vm1832, %vm1833
    %v1835 = vsel %vm1834, %v1826, %v1831
    %v1836 = vrsqrt.pop %v1823
    %v1837 = vmul.f32 %v1836, %v1823
    %v1838 = vmul.f32 %v1837, %v1836
    %v1839 = vmul.f32 0.5, %v1838
    %v1840 = vsub.f32 1.5, %v1839
    %v1841 = vmul.f32 %v1836, %v1840
    %vm1842 = vweird.f32 %v1823
    %vm1843 = vweird.f32 %v1836
    %vm1844 = vmor %vm1842, %vm1843
    %v1845 = vsel %vm1844, %v1836, %v1841
    %v1846 = vrsqrt.pop %v1824
    %v1847 = vmul.f32 %v1846, %v1824
    %v1848 = vmul.f32 %v1847, %v1846
    %v1849 = vmul.f32 0.5, %v1848
    %v1850 = vsub.f32 1.5, %v1849
    %v1851 = vmul.f32 %v1846, %v1850
    %vm1852 = vweird.f32 %v1824
    %vm1853 = vweird.f32 %v1846
    %vm1854 = vmor %vm1852, %vm1853
    %v1855 = vsel %vm1854, %v1846, %v1851
    %v1856 = vrsqrt.pop %v1825
    %v1857 = vmul.f32 %v1856, %v1825
    %v1858 = vmul.f32 %v1857, %v1856
    %v1859 = vmul.f32 0.5, %v1858
    %v1860 = vsub.f32 1.5, %v1859
    %v1861 = vmul.f32 %v1856, %v1860
    %vm1862 = vweird.f32 %v1825
    %vm1863 = vweird.f32 %v1856
    %vm1864 = vmor %vm1862, %vm1863
    %v1865 = vsel %vm1864, %v1856, %v1861
    %v1866 = vmul.f32 %v1790, %v1835
    %v1867 = vmul.f32 %v1791, %v1835
    %v1868 = vmul.f32 %v1792, %v1845
    %v1869 = vmul.f32 %v1793, %v1845
    %v1870 = vmul.f32 %v1794, %v1855
    %v1871 = vmul.f32 %v1795, %v1855
    %v1872 = vmul.f32 %v1796, %v1865
    %v1873 = vmul.f32 %v1797, %v1865
    %1874 = vset.pattern.permute.xlu0 3
    %1875 = vperm.xlu0 %1874, %v252
    %v1876 = vpop.permute.xlu0 %1875
    %1878 = vset.pattern.permute.xlu0 3
    %1879 = vperm.xlu0 %1878, %v253
    %v1880 = vpop.permute.xlu0 %1879
    %1882 = vset.pattern.permute.xlu0 3
    %1883 = vperm.xlu0 %1882, %v254
    %v1884 = vpop.permute.xlu0 %1883
    %1886 = vset.pattern.permute.xlu0 3
    %1887 = vperm.xlu0 %1886, %v255
    %v1888 = vpop.permute.xlu0 %1887
    %v1890 = vmul.f32 %v1876, %v1866
    %v1891 = vmul.f32 %v1876, %v1867
    %v1892 = vmul.f32 %v1880, %v1868
    %v1893 = vmul.f32 %v1880, %v1869
    %v1894 = vmul.f32 %v1884, %v1870
    %v1895 = vmul.f32 %v1884, %v1871
    %v1896 = vmul.f32 %v1888, %v1872
    %v1897 = vmul.f32 %v1888, %v1873
    %1898 = vset.pattern.permute.xlu0 3
    %1899 = vperm.xlu0 %1898, %v256
    %v1900 = vpop.permute.xlu0 %1899
    %1902 = vset.pattern.permute.xlu0 3
    %1903 = vperm.xlu0 %1902, %v257
    %v1904 = vpop.permute.xlu0 %1903
    %1906 = vset.pattern.permute.xlu0 3
    %1907 = vperm.xlu0 %1906, %v258
    %v1908 = vpop.permute.xlu0 %1907
    %1910 = vset.pattern.permute.xlu0 3
    %1911 = vperm.xlu0 %1910, %v259
    %v1912 = vpop.permute.xlu0 %1911
    %v1914 = vadd.f32 %v1890, %v1900
    %v1915 = vadd.f32 %v1891, %v1900
    %v1916 = vadd.f32 %v1892, %v1904
    %v1917 = vadd.f32 %v1893, %v1904
    %v1918 = vadd.f32 %v1894, %v1908
    %v1919 = vadd.f32 %v1895, %v1908
    %v1920 = vadd.f32 %v1896, %v1912
    %v1921 = vadd.f32 %v1897, %v1912
    %v1922 = vld [vmem:[#allocation2 + $0x18] sm:$0xff]
    %v1923 = vld [vmem:[#allocation2 + $0x20] sm:$0xff]
    %v1924 = vld [vmem:[#allocation2 + $0xe0] sm:$0xff]
    %v1925 = vld [vmem:[#allocation2 + $0xe8] sm:$0xff]
    %v1926 = vld [vmem:[#allocation2 + $0x1a8] sm:$0xff]
    %v1927 = vld [vmem:[#allocation2 + $0x1b0] sm:$0xff]
    %v1928 = vld [vmem:[#allocation2 + $0x270] sm:$0xff]
    %v1929 = vld [vmem:[#allocation2 + $0x278] sm:$0xff]
    %1938 = vrot.lane.b32.xlu0 %v1914, 2
    %v1939 = vpop.permute.xlu0 %1938
    %1940 = vrot.lane.b32.xlu0 %v1915, 2
    %v1941 = vpop.permute.xlu0 %1940
    %1942 = vrot.lane.b32.xlu0 %v1916, 2
    %v1943 = vpop.permute.xlu0 %1942
    %1944 = vrot.lane.b32.xlu0 %v1917, 2
    %v1945 = vpop.permute.xlu0 %1944
    %1946 = vrot.lane.b32.xlu0 %v1918, 2
    %v1947 = vpop.permute.xlu0 %1946
    %1948 = vrot.lane.b32.xlu0 %v1919, 2
    %v1949 = vpop.permute.xlu0 %1948
    %1950 = vrot.lane.b32.xlu0 %v1920, 2
    %v1951 = vpop.permute.xlu0 %1950
    %1952 = vrot.lane.b32.xlu0 %v1921, 2
    %v1953 = vpop.permute.xlu0 %1952
    %v1954 = vsel %vm452, %v1939, %v1941
    %v1955 = vsel %vm452, %v1943, %v1945
    %v1956 = vsel %vm452, %v1947, %v1949
    %v1957 = vsel %vm452, %v1951, %v1953
    %v1966 = vsel %vm452, 0.0, %v1939
    %v1967 = vsel %vm452, 0.0, %v1943
    %v1968 = vsel %vm452, 0.0, %v1947
    %v1969 = vsel %vm452, 0.0, %v1951
    %v1970 = vmul.f32 %v1966, %v115
    %v1971 = vmul.f32 %v1954, %v116
    %v1972 = vmul.f32 %v1967, %v115
    %v1973 = vmul.f32 %v1955, %v116
    %v1974 = vmul.f32 %v1968, %v115
    %v1975 = vmul.f32 %v1956, %v116
    %v1976 = vmul.f32 %v1969, %v115
    %v1977 = vmul.f32 %v1957, %v116
    %1978 = vrot.lane.b32.xlu0 %v1914, 1
    %v1979 = vpop.permute.xlu0 %1978
    %1980 = vrot.lane.b32.xlu0 %v1915, 1
    %v1981 = vpop.permute.xlu0 %1980
    %1982 = vrot.lane.b32.xlu0 %v1916, 1
    %v1983 = vpop.permute.xlu0 %1982
    %1984 = vrot.lane.b32.xlu0 %v1917, 1
    %v1985 = vpop.permute.xlu0 %1984
    %1986 = vrot.lane.b32.xlu0 %v1918, 1
    %v1987 = vpop.permute.xlu0 %1986
    %1988 = vrot.lane.b32.xlu0 %v1919, 1
    %v1989 = vpop.permute.xlu0 %1988
    %1990 = vrot.lane.b32.xlu0 %v1920, 1
    %v1991 = vpop.permute.xlu0 %1990
    %1992 = vrot.lane.b32.xlu0 %v1921, 1
    %v1993 = vpop.permute.xlu0 %1992
    %v1994 = vsel %vm493, %v1979, %v1981
    %v1995 = vsel %vm493, %v1983, %v1985
    %v1996 = vsel %vm493, %v1987, %v1989
    %v1997 = vsel %vm493, %v1991, %v1993
    %v2006 = vsel %vm493, 0.0, %v1979
    %v2007 = vsel %vm493, 0.0, %v1983
    %v2008 = vsel %vm493, 0.0, %v1987
    %v2009 = vsel %vm493, 0.0, %v1991
    %v2010 = vmul.f32 %v2006, %v127
    %v2011 = vmul.f32 %v1994, %v128
    %v2012 = vmul.f32 %v2007, %v127
    %v2013 = vmul.f32 %v1995, %v128
    %v2014 = vmul.f32 %v2008, %v127
    %v2015 = vmul.f32 %v1996, %v128
    %v2016 = vmul.f32 %v2009, %v127
    %v2017 = vmul.f32 %v1997, %v128
    %2018 = vrot.lane.b32.xlu0 %v1914, 127
    %v2019 = vpop.permute.xlu0 %2018
    %2020 = vrot.lane.b32.xlu0 %v1915, 127
    %v2021 = vpop.permute.xlu0 %2020
    %2022 = vrot.lane.b32.xlu0 %v1916, 127
    %v2023 = vpop.permute.xlu0 %2022
    %2024 = vrot.lane.b32.xlu0 %v1917, 127
    %v2025 = vpop.permute.xlu0 %2024
    %2026 = vrot.lane.b32.xlu0 %v1918, 127
    %v2027 = vpop.permute.xlu0 %2026
    %2028 = vrot.lane.b32.xlu0 %v1919, 127
    %v2029 = vpop.permute.xlu0 %2028
    %2030 = vrot.lane.b32.xlu0 %v1920, 127
    %v2031 = vpop.permute.xlu0 %2030
    %2032 = vrot.lane.b32.xlu0 %v1921, 127
    %v2033 = vpop.permute.xlu0 %2032
    %v2034 = vsel %vm534, %v2019, %v2021
    %v2035 = vsel %vm534, %v2023, %v2025
    %v2036 = vsel %vm534, %v2027, %v2029
    %v2037 = vsel %vm534, %v2031, %v2033
    %v2046 = vsel %vm534, %v2021, 0.0
    %v2047 = vsel %vm534, %v2025, 0.0
    %v2048 = vsel %vm534, %v2029, 0.0
    %v2049 = vsel %vm534, %v2033, 0.0
    %v2050 = vmul.f32 %v2034, %v139
    %v2051 = vmul.f32 %v2046, %v140
    %v2052 = vmul.f32 %v2035, %v139
    %v2053 = vmul.f32 %v2047, %v140
    %v2054 = vmul.f32 %v2036, %v139
    %v2055 = vmul.f32 %v2048, %v140
    %v2056 = vmul.f32 %v2037, %v139
    %v2057 = vmul.f32 %v2049, %v140
    %2058 = vrot.lane.b32.xlu0 %v1914, 126
    %v2059 = vpop.permute.xlu0 %2058
    %2060 = vrot.lane.b32.xlu0 %v1915, 126
    %v2061 = vpop.permute.xlu0 %2060
    %2062 = vrot.lane.b32.xlu0 %v1916, 126
    %v2063 = vpop.permute.xlu0 %2062
    %2064 = vrot.lane.b32.xlu0 %v1917, 126
    %v2065 = vpop.permute.xlu0 %2064
    %2066 = vrot.lane.b32.xlu0 %v1918, 126
    %v2067 = vpop.permute.xlu0 %2066
    %2068 = vrot.lane.b32.xlu0 %v1919, 126
    %v2069 = vpop.permute.xlu0 %2068
    %2070 = vrot.lane.b32.xlu0 %v1920, 126
    %v2071 = vpop.permute.xlu0 %2070
    %2072 = vrot.lane.b32.xlu0 %v1921, 126
    %v2073 = vpop.permute.xlu0 %2072
    %v2074 = vsel %vm575, %v2059, %v2061
    %v2075 = vsel %vm575, %v2063, %v2065
    %v2076 = vsel %vm575, %v2067, %v2069
    %v2077 = vsel %vm575, %v2071, %v2073
    %v2086 = vsel %vm575, %v2061, 0.0
    %v2087 = vsel %vm575, %v2065, 0.0
    %v2088 = vsel %vm575, %v2069, 0.0
    %v2089 = vsel %vm575, %v2073, 0.0
    %v2090 = vmul.f32 %v2074, %v151
    %v2091 = vmul.f32 %v2086, %v152
    %v2092 = vmul.f32 %v2075, %v151
    %v2093 = vmul.f32 %v2087, %v152
    %v2094 = vmul.f32 %v2076, %v151
    %v2095 = vmul.f32 %v2088, %v152
    %v2096 = vmul.f32 %v2077, %v151
    %v2097 = vmul.f32 %v2089, %v152
    %2098 = vset.pattern.permute.xlu0 3
    %2099 = vperm.xlu0 %2098, %v424
    %v2100 = vpop.permute.xlu0 %2099
    %2102 = vset.pattern.permute.xlu0 3
    %2103 = vperm.xlu0 %2102, %v425
    %v2104 = vpop.permute.xlu0 %2103
    %2106 = vset.pattern.permute.xlu0 3
    %2107 = vperm.xlu0 %2106, %v426
    %v2108 = vpop.permute.xlu0 %2107
    %2110 = vset.pattern.permute.xlu0 3
    %2111 = vperm.xlu0 %2110, %v427
    %v2112 = vpop.permute.xlu0 %2111
    %2122 = vrot.lane.b32.xlu0 %v1922, 32
    %v2123 = vpop.permute.xlu0 %2122
    %2124 = vrot.lane.b32.xlu0 %v1923, 32
    %v2125 = vpop.permute.xlu0 %2124
    %2126 = vrot.lane.b32.xlu0 %v1924, 32
    %v2127 = vpop.permute.xlu0 %2126
    %2128 = vrot.lane.b32.xlu0 %v1925, 32
    %v2129 = vpop.permute.xlu0 %2128
    %2130 = vrot.lane.b32.xlu0 %v1926, 32
    %v2131 = vpop.permute.xlu0 %2130
    %2132 = vrot.lane.b32.xlu0 %v1927, 32
    %v2133 = vpop.permute.xlu0 %2132
    %2134 = vrot.lane.b32.xlu0 %v1928, 32
    %v2135 = vpop.permute.xlu0 %2134
    %2136 = vrot.lane.b32.xlu0 %v1929, 32
    %v2137 = vpop.permute.xlu0 %2136
    %v2138 = vsel %vm181, %v2123, %v2125
    %v2139 = vsel %vm181, %v2127, %v2129
    %v2140 = vsel %vm181, %v2131, %v2133
    %v2141 = vsel %vm181, %v2135, %v2137
    %v2146 = vsel %vm181, %v2125, 0
    %v2148 = vsel %vm181, %v2129, 0
    %v2150 = vsel %vm181, %v2133, 0
    %v2152 = vsel %vm181, %v2137, 0
    %2154 = vmatpush.msra.mxu0 %v2056
    %2155 = vmatpush.msra.mxu0 %v2054
    %2156 = vmatpush.msra.mxu0 %v2052
    %2157 = vmatpush.msra.mxu0 %v2050
    %2158 = vmatpush.msra.mxu0 %v1920
    %2159 = vmatpush.msra.mxu0 %v1918
    %2160 = vmatpush.msra.mxu0 %v1916
    %2161 = vmatpush.msra.mxu0 %v1914
    %2162 = vmatpush.msra.mxu0 %v2016
    %2163 = vmatpush.msra.mxu0 %v2014
    %2164 = vmatpush.msra.mxu0 %v2012
    %2165 = vmatpush.msra.mxu0 %v2010
    %2166 = vmatpush.msra.mxu0 %v1976
    %2167 = vmatpush.msra.mxu0 %v1974
    %2168 = vmatpush.msra.mxu0 %v1972
    %2169 = vmatpush.msra.mxu0 %v1970
    %2170 = vmatmul.f32.gmra.mxu0 %v2138
    %v2171 = vpop.f32.mrf.mxu0
    %v2172 = vadd.f32 %v2100, %v2171
    %2173 = vmatmul.f32.gmra.mxu0 %v2139
    %v2174 = vpop.f32.mrf.mxu0
    %v2175 = vadd.f32 %v2104, %v2174
    %2176 = vmatmul.f32.gmra.mxu0 %v2140
    %v2177 = vpop.f32.mrf.mxu0
    %v2178 = vadd.f32 %v2108, %v2177
    %2179 = vmatmul.f32.gmra.mxu0 %v2141
    %v2180 = vpop.f32.mrf.mxu0
    %v2181 = vadd.f32 %v2112, %v2180
    %2182 = vdwg.mxu0
    %2183 = vmatpush.msra.mxu0 0.0
    %2184 = vmatpush.msra.mxu0 0.0
    %2185 = vmatpush.msra.mxu0 0.0
    %2186 = vmatpush.msra.mxu0 0.0
    %2187 = vmatpush.msra.mxu0 0.0
    %2188 = vmatpush.msra.mxu0 0.0
    %2189 = vmatpush.msra.mxu0 0.0
    %2190 = vmatpush.msra.mxu0 0.0
    %2191 = vmatpush.msra.mxu0 0.0
    %2192 = vmatpush.msra.mxu0 0.0
    %2193 = vmatpush.msra.mxu0 0.0
    %2194 = vmatpush.msra.mxu0 0.0
    %2195 = vmatpush.msra.mxu0 %v2096
    %2196 = vmatpush.msra.mxu0 %v2094
    %2197 = vmatpush.msra.mxu0 %v2092
    %2198 = vmatpush.msra.mxu0 %v2090
    %2199 = vmatmul.f32.gmra.mxu0 %v2146
    %v2200 = vpop.f32.mrf.mxu0
    %v2201 = vadd.f32 %v2172, %v2200
    %2202 = vmatmul.f32.gmra.mxu0 %v2148
    %v2203 = vpop.f32.mrf.mxu0
    %v2204 = vadd.f32 %v2175, %v2203
    %2205 = vmatmul.f32.gmra.mxu0 %v2150
    %v2206 = vpop.f32.mrf.mxu0
    %v2207 = vadd.f32 %v2178, %v2206
    %2208 = vmatmul.f32.gmra.mxu0 %v2152
    %v2209 = vpop.f32.mrf.mxu0
    %v2210 = vadd.f32 %v2181, %v2209
    %2211 = vdwg.mxu0
    %2212 = vmatpush.msra.mxu0 %v2057
    %2213 = vmatpush.msra.mxu0 %v2055
    %2214 = vmatpush.msra.mxu0 %v2053
    %2215 = vmatpush.msra.mxu0 %v2051
    %2216 = vmatpush.msra.mxu0 %v1921
    %2217 = vmatpush.msra.mxu0 %v1919
    %2218 = vmatpush.msra.mxu0 %v1917
    %2219 = vmatpush.msra.mxu0 %v1915
    %2220 = vmatpush.msra.mxu0 %v2017
    %2221 = vmatpush.msra.mxu0 %v2015
    %2222 = vmatpush.msra.mxu0 %v2013
    %2223 = vmatpush.msra.mxu0 %v2011
    %2224 = vmatpush.msra.mxu0 %v1977
    %2225 = vmatpush.msra.mxu0 %v1975
    %2226 = vmatpush.msra.mxu0 %v1973
    %2227 = vmatpush.msra.mxu0 %v1971
    %2228 = vmatmul.f32.gmra.mxu0 %v2138
    %v2229 = vpop.f32.mrf.mxu0
    %v2230 = vadd.f32 %v2100, %v2229
    %2231 = vmatmul.f32.gmra.mxu0 %v2139
    %v2232 = vpop.f32.mrf.mxu0
    %v2233 = vadd.f32 %v2104, %v2232
    %2234 = vmatmul.f32.gmra.mxu0 %v2140
    %v2235 = vpop.f32.mrf.mxu0
    %v2236 = vadd.f32 %v2108, %v2235
    %2237 = vmatmul.f32.gmra.mxu0 %v2141
    %v2238 = vpop.f32.mrf.mxu0
    %v2239 = vadd.f32 %v2112, %v2238
    %2240 = vdwg.mxu0
    %2241 = vmatpush.msra.mxu0 0.0
    %2242 = vmatpush.msra.mxu0 0.0
    %2243 = vmatpush.msra.mxu0 0.0
    %2244 = vmatpush.msra.mxu0 0.0
    %2245 = vmatpush.msra.mxu0 0.0
    %2246 = vmatpush.msra.mxu0 0.0
    %2247 = vmatpush.msra.mxu0 0.0
    %2248 = vmatpush.msra.mxu0 0.0
    %2249 = vmatpush.msra.mxu0 0.0
    %2250 = vmatpush.msra.mxu0 0.0
    %2251 = vmatpush.msra.mxu0 0.0
    %2252 = vmatpush.msra.mxu0 0.0
    %2253 = vmatpush.msra.mxu0 %v2097
    %2254 = vmatpush.msra.mxu0 %v2095
    %2255 = vmatpush.msra.mxu0 %v2093
    %2256 = vmatpush.msra.mxu0 %v2091
    %2257 = vmatmul.f32.gmra.mxu0 %v2146
    %v2258 = vpop.f32.mrf.mxu0
    %v2259 = vadd.f32 %v2230, %v2258
    %2260 = vmatmul.f32.gmra.mxu0 %v2148
    %v2261 = vpop.f32.mrf.mxu0
    %v2262 = vadd.f32 %v2233, %v2261
    %2263 = vmatmul.f32.gmra.mxu0 %v2150
    %v2264 = vpop.f32.mrf.mxu0
    %v2265 = vadd.f32 %v2236, %v2264
    %2266 = vmatmul.f32.gmra.mxu0 %v2152
    %v2267 = vpop.f32.mrf.mxu0
    %v2268 = vadd.f32 %v2239, %v2267
    %2269 = vdwg.mxu0
    %v2270 = vmax.f32 %v2201, 0.0
    %v2271 = vmax.f32 %v2259, 0.0
    %v2272 = vmax.f32 %v2204, 0.0
    %v2273 = vmax.f32 %v2262, 0.0
    %v2274 = vmax.f32 %v2207, 0.0
    %v2275 = vmax.f32 %v2265, 0.0
    %v2276 = vmax.f32 %v2210, 0.0
    %v2277 = vmax.f32 %v2268, 0.0
    %v2278 = vadd.f32 %v2270, %v2271
    %2279 = vadd.xlane.f32.xlu0 %v2278
    %v2280 = vpop.xlane.xlu0 %2279
    %v2281 = vadd.f32 %v2272, %v2273
    %2282 = vadd.xlane.f32.xlu0 %v2281
    %v2283 = vpop.xlane.xlu0 %2282
    %v2284 = vadd.f32 %v2274, %v2275
    %2285 = vadd.xlane.f32.xlu0 %v2284
    %v2286 = vpop.xlane.xlu0 %2285
    %v2287 = vadd.f32 %v2276, %v2277
    %2288 = vadd.xlane.f32.xlu0 %v2287
    %v2289 = vpop.xlane.xlu0 %2288
    %v2290 = vmul.f32 %v2280, 0.00390625
    %v2291 = vmul.f32 %v2283, 0.00390625
    %v2292 = vmul.f32 %v2286, 0.00390625
    %v2293 = vmul.f32 %v2289, 0.00390625
    %v2294 = vsub.f32 %v2270, %v2290
    %v2295 = vsub.f32 %v2271, %v2290
    %v2296 = vsub.f32 %v2272, %v2291
    %v2297 = vsub.f32 %v2273, %v2291
    %v2298 = vsub.f32 %v2274, %v2292
    %v2299 = vsub.f32 %v2275, %v2292
    %v2300 = vsub.f32 %v2276, %v2293
    %v2301 = vsub.f32 %v2277, %v2293
    %v2302 = vmul.f32 %v2294, %v2294
    %v2303 = vmul.f32 %v2295, %v2295
    %v2304 = vmul.f32 %v2296, %v2296
    %v2305 = vmul.f32 %v2297, %v2297
    %v2306 = vmul.f32 %v2298, %v2298
    %v2307 = vmul.f32 %v2299, %v2299
    %v2308 = vmul.f32 %v2300, %v2300
    %v2309 = vmul.f32 %v2301, %v2301
    %v2310 = vadd.f32 %v2302, %v2303
    %2311 = vadd.xlane.f32.xlu0 %v2310
    %v2312 = vpop.xlane.xlu0 %2311
    %v2313 = vadd.f32 %v2304, %v2305
    %2314 = vadd.xlane.f32.xlu0 %v2313
    %v2315 = vpop.xlane.xlu0 %2314
    %v2316 = vadd.f32 %v2306, %v2307
    %2317 = vadd.xlane.f32.xlu0 %v2316
    %v2318 = vpop.xlane.xlu0 %2317
    %v2319 = vadd.f32 %v2308, %v2309
    %2320 = vadd.xlane.f32.xlu0 %v2319
    %v2321 = vpop.xlane.xlu0 %2320
    %v2322 = vmul.f32 %v2312, 0.00390625
    %v2323 = vmul.f32 %v2315, 0.00390625
    %v2324 = vmul.f32 %v2318, 0.00390625
    %v2325 = vmul.f32 %v2321, 0.00390625
    %v2326 = vadd.f32 %v2322, 1e-05
    %v2327 = vadd.f32 %v2323, 1e-05
    %v2328 = vadd.f32 %v2324, 1e-05
    %v2329 = vadd.f32 %v2325, 1e-05
    %v2330 = vrsqrt.pop %v2326
    %v2331 = vmul.f32 %v2330, %v2326
    %v2332 = vmul.f32 %v2331, %v2330
    %v2333 = vmul.f32 0.5, %v2332
    %v2334 = vsub.f32 1.5, %v2333
    %v2335 = vmul.f32 %v2330, %v2334
    %vm2336 = vweird.f32 %v2326
    %vm2337 = vweird.f32 %v2330
    %vm2338 = vmor %vm2336, %vm2337
    %v2339 = vsel %vm2338, %v2330, %v2335
    %v2340 = vrsqrt.pop %v2327
    %v2341 = vmul.f32 %v2340, %v2327
    %v2342 = vmul.f32 %v2341, %v2340
    %v2343 = vmul.f32 0.5, %v2342
    %v2344 = vsub.f32 1.5, %v2343
    %v2345 = vmul.f32 %v2340, %v2344
    %vm2346 = vweird.f32 %v2327
    %vm2347 = vweird.f32 %v2340
    %vm2348 = vmor %vm2346, %vm2347
    %v2349 = vsel %vm2348, %v2340, %v2345
    %v2350 = vrsqrt.pop %v2328
    %v2351 = vmul.f32 %v2350, %v2328
    %v2352 = vmul.f32 %v2351, %v2350
    %v2353 = vmul.f32 0.5, %v2352
    %v2354 = vsub.f32 1.5, %v2353
    %v2355 = vmul.f32 %v2350, %v2354
    %vm2356 = vweird.f32 %v2328
    %vm2357 = vweird.f32 %v2350
    %vm2358 = vmor %vm2356, %vm2357
    %v2359 = vsel %vm2358, %v2350, %v2355
    %v2360 = vrsqrt.pop %v2329
    %v2361 = vmul.f32 %v2360, %v2329
    %v2362 = vmul.f32 %v2361, %v2360
    %v2363 = vmul.f32 0.5, %v2362
    %v2364 = vsub.f32 1.5, %v2363
    %v2365 = vmul.f32 %v2360, %v2364
    %vm2366 = vweird.f32 %v2329
    %vm2367 = vweird.f32 %v2360
    %vm2368 = vmor %vm2366, %vm2367
    %v2369 = vsel %vm2368, %v2360, %v2365
    %v2370 = vmul.f32 %v2294, %v2339
    %v2371 = vmul.f32 %v2295, %v2339
    %v2372 = vmul.f32 %v2296, %v2349
    %v2373 = vmul.f32 %v2297, %v2349
    %v2374 = vmul.f32 %v2298, %v2359
    %v2375 = vmul.f32 %v2299, %v2359
    %v2376 = vmul.f32 %v2300, %v2369
    %v2377 = vmul.f32 %v2301, %v2369
    %2378 = vset.pattern.permute.xlu0 4
    %2379 = vperm.xlu0 %2378, %v252
    %v2380 = vpop.permute.xlu0 %2379
    %2382 = vset.pattern.permute.xlu0 4
    %2383 = vperm.xlu0 %2382, %v253
    %v2384 = vpop.permute.xlu0 %2383
    %2386 = vset.pattern.permute.xlu0 4
    %2387 = vperm.xlu0 %2386, %v254
    %v2388 = vpop.permute.xlu0 %2387
    %2390 = vset.pattern.permute.xlu0 4
    %2391 = vperm.xlu0 %2390, %v255
    %v2392 = vpop.permute.xlu0 %2391
    %v2394 = vmul.f32 %v2380, %v2370
    %v2395 = vmul.f32 %v2380, %v2371
    %v2396 = vmul.f32 %v2384, %v2372
    %v2397 = vmul.f32 %v2384, %v2373
    %v2398 = vmul.f32 %v2388, %v2374
    %v2399 = vmul.f32 %v2388, %v2375
    %v2400 = vmul.f32 %v2392, %v2376
    %v2401 = vmul.f32 %v2392, %v2377
    %2402 = vset.pattern.permute.xlu0 4
    %2403 = vperm.xlu0 %2402, %v256
    %v2404 = vpop.permute.xlu0 %2403
    %2406 = vset.pattern.permute.xlu0 4
    %2407 = vperm.xlu0 %2406, %v257
    %v2408 = vpop.permute.xlu0 %2407
    %2410 = vset.pattern.permute.xlu0 4
    %2411 = vperm.xlu0 %2410, %v258
    %v2412 = vpop.permute.xlu0 %2411
    %2414 = vset.pattern.permute.xlu0 4
    %2415 = vperm.xlu0 %2414, %v259
    %v2416 = vpop.permute.xlu0 %2415
    %v2418 = vadd.f32 %v2394, %v2404
    %v2419 = vadd.f32 %v2395, %v2404
    %v2420 = vadd.f32 %v2396, %v2408
    %v2421 = vadd.f32 %v2397, %v2408
    %v2422 = vadd.f32 %v2398, %v2412
    %v2423 = vadd.f32 %v2399, %v2412
    %v2424 = vadd.f32 %v2400, %v2416
    %v2425 = vadd.f32 %v2401, %v2416
    %v2426 = vadd.f32 %v2418, %v1409
    %v2427 = vadd.f32 %v2419, %v1410
    %v2428 = vadd.f32 %v2420, %v1411
    %v2429 = vadd.f32 %v2421, %v1412
    %v2430 = vadd.f32 %v2422, %v1413
    %v2431 = vadd.f32 %v2423, %v1414
    %v2432 = vadd.f32 %v2424, %v1415
    %v2433 = vadd.f32 %v2425, %v1416
    %2442 = vrot.lane.b32.xlu0 %v2426, 127
    %v2443 = vpop.permute.xlu0 %2442
    %2444 = vrot.lane.b32.xlu0 %v2427, 127
    %v2445 = vpop.permute.xlu0 %2444
    %2446 = vrot.lane.b32.xlu0 %v2428, 127
    %v2447 = vpop.permute.xlu0 %2446
    %2448 = vrot.lane.b32.xlu0 %v2429, 127
    %v2449 = vpop.permute.xlu0 %2448
    %2450 = vrot.lane.b32.xlu0 %v2430, 127
    %v2451 = vpop.permute.xlu0 %2450
    %2452 = vrot.lane.b32.xlu0 %v2431, 127
    %v2453 = vpop.permute.xlu0 %2452
    %2454 = vrot.lane.b32.xlu0 %v2432, 127
    %v2455 = vpop.permute.xlu0 %2454
    %2456 = vrot.lane.b32.xlu0 %v2433, 127
    %v2457 = vpop.permute.xlu0 %2456
    %v2458 = vsel %vm534, %v2443, %v2445
    %v2459 = vsel %vm534, %v2447, %v2449
    %v2460 = vsel %vm534, %v2451, %v2453
    %v2461 = vsel %vm534, %v2455, %v2457
    %v2470 = vsel %vm534, %v2445, 0.0
    %v2471 = vsel %vm534, %v2449, 0.0
    %v2472 = vsel %vm534, %v2453, 0.0
    %v2473 = vsel %vm534, %v2457, 0.0
    %v2474 = vmax.f32 %v2426, %v2458
    %v2475 = vmax.f32 %v2427, %v2470
    %v2476 = vmax.f32 %v2428, %v2459
    %v2477 = vmax.f32 %v2429, %v2471
    %v2478 = vmax.f32 %v2430, %v2460
    %v2479 = vmax.f32 %v2431, %v2472
    %v2480 = vmax.f32 %v2432, %v2461
    %v2481 = vmax.f32 %v2433, %v2473
    %v2482 = vlaneseq
    %v2483 = vshrl.u32 %v2482, 7
    %v2484 = vadd.s32 %v2483, 8
    %v2485 = vadd.s32 %v2483, 16
    %v2486 = vadd.s32 %v2483, 24
    %v2487 = vadd.s32 %v2483, 32
    %v2488 = vadd.s32 %v2483, 40
    %v2489 = vadd.s32 %v2483, 48
    %v2490 = vadd.s32 %v2483, 56
    %v2491 = vadd.s32 %v2483, 64
    %v2492 = vadd.s32 %v2483, 72
    %v2493 = vadd.s32 %v2483, 80
    %v2494 = vadd.s32 %v2483, 88
    %v2495 = vadd.s32 %v2483, 96
    %v2496 = vadd.s32 %v2483, 104
    %v2497 = vadd.s32 %v2483, 112
    %v2498 = vadd.s32 %v2483, 120
    %v2499 = vadd.s32 %v2483, 128
    %v2500 = vadd.s32 %v2483, 136
    %v2501 = vadd.s32 %v2483, 144
    %v2502 = vadd.s32 %v2483, 152
    %v2503 = vadd.s32 %v2483, 160
    %v2504 = vadd.s32 %v2483, 168
    %v2505 = vadd.s32 %v2483, 176
    %v2506 = vadd.s32 %v2483, 184
    %v2507 = vadd.s32 %v2483, 192
    %v2508 = vadd.s32 %v2483, 200
    %v2509 = vadd.s32 %v2483, 208
    %v2510 = vadd.s32 %v2483, 216
    %v2511 = vadd.s32 %v2483, 224
    %v2512 = vadd.s32 %v2483, 232
    %v2513 = vadd.s32 %v2483, 240
    %v2514 = vadd.s32 %v2483, 248
    %v2515 = vmul.u32 %v79, 2
    %vm2516 = vcmp.eq.s32.totalorder %v2483, %v2515
    %vm2517 = vcmp.eq.s32.totalorder %v2484, %v2515
    %vm2518 = vcmp.eq.s32.totalorder %v2485, %v2515
    %vm2519 = vcmp.eq.s32.totalorder %v2486, %v2515
    %vm2520 = vcmp.eq.s32.totalorder %v2487, %v2515
    %vm2521 = vcmp.eq.s32.totalorder %v2488, %v2515
    %vm2522 = vcmp.eq.s32.totalorder %v2489, %v2515
    %vm2523 = vcmp.eq.s32.totalorder %v2490, %v2515
    %vm2524 = vcmp.eq.s32.totalorder %v2491, %v2515
    %vm2525 = vcmp.eq.s32.totalorder %v2492, %v2515
    %vm2526 = vcmp.eq.s32.totalorder %v2493, %v2515
    %vm2527 = vcmp.eq.s32.totalorder %v2494, %v2515
    %vm2528 = vcmp.eq.s32.totalorder %v2495, %v2515
    %vm2529 = vcmp.eq.s32.totalorder %v2496, %v2515
    %vm2530 = vcmp.eq.s32.totalorder %v2497, %v2515
    %vm2531 = vcmp.eq.s32.totalorder %v2498, %v2515
    %vm2532 = vcmp.eq.s32.totalorder %v2499, %v2515
    %vm2533 = vcmp.eq.s32.totalorder %v2500, %v2515
    %vm2534 = vcmp.eq.s32.totalorder %v2501, %v2515
    %vm2535 = vcmp.eq.s32.totalorder %v2502, %v2515
    %vm2536 = vcmp.eq.s32.totalorder %v2503, %v2515
    %vm2537 = vcmp.eq.s32.totalorder %v2504, %v2515
    %vm2538 = vcmp.eq.s32.totalorder %v2505, %v2515
    %vm2539 = vcmp.eq.s32.totalorder %v2506, %v2515
    %vm2540 = vcmp.eq.s32.totalorder %v2507, %v2515
    %vm2541 = vcmp.eq.s32.totalorder %v2508, %v2515
    %vm2542 = vcmp.eq.s32.totalorder %v2509, %v2515
    %vm2543 = vcmp.eq.s32.totalorder %v2510, %v2515
    %vm2544 = vcmp.eq.s32.totalorder %v2511, %v2515
    %vm2545 = vcmp.eq.s32.totalorder %v2512, %v2515
    %vm2546 = vcmp.eq.s32.totalorder %v2513, %v2515
    %vm2547 = vcmp.eq.s32.totalorder %v2514, %v2515
    %v2548 = vsel %vm2516, 1, 0
    %v2549 = vsel %vm2517, 1, 0
    %v2550 = vsel %vm2518, 1, 0
    %v2551 = vsel %vm2519, 1, 0
    %v2552 = vsel %vm2520, 1, 0
    %v2553 = vsel %vm2521, 1, 0
    %v2554 = vsel %vm2522, 1, 0
    %v2555 = vsel %vm2523, 1, 0
    %v2556 = vsel %vm2524, 1, 0
    %v2557 = vsel %vm2525, 1, 0
    %v2558 = vsel %vm2526, 1, 0
    %v2559 = vsel %vm2527, 1, 0
    %v2560 = vsel %vm2528, 1, 0
    %v2561 = vsel %vm2529, 1, 0
    %v2562 = vsel %vm2530, 1, 0
    %v2563 = vsel %vm2531, 1, 0
    %v2564 = vsel %vm2532, 1, 0
    %v2565 = vsel %vm2533, 1, 0
    %v2566 = vsel %vm2534, 1, 0
    %v2567 = vsel %vm2535, 1, 0
    %v2568 = vsel %vm2536, 1, 0
    %v2569 = vsel %vm2537, 1, 0
    %v2570 = vsel %vm2538, 1, 0
    %v2571 = vsel %vm2539, 1, 0
    %v2572 = vsel %vm2540, 1, 0
    %v2573 = vsel %vm2541, 1, 0
    %v2574 = vsel %vm2542, 1, 0
    %v2575 = vsel %vm2543, 1, 0
    %v2576 = vsel %vm2544, 1, 0
    %v2577 = vsel %vm2545, 1, 0
    %v2578 = vsel %vm2546, 1, 0
    %v2579 = vsel %vm2547, 1, 0
    %v2580 = vcvt.s32.f32 %v2548
    %v2581 = vcvt.s32.f32 %v2549
    %v2582 = vcvt.s32.f32 %v2550
    %v2583 = vcvt.s32.f32 %v2551
    %v2584 = vcvt.s32.f32 %v2552
    %v2585 = vcvt.s32.f32 %v2553
    %v2586 = vcvt.s32.f32 %v2554
    %v2587 = vcvt.s32.f32 %v2555
    %v2588 = vcvt.s32.f32 %v2556
    %v2589 = vcvt.s32.f32 %v2557
    %v2590 = vcvt.s32.f32 %v2558
    %v2591 = vcvt.s32.f32 %v2559
    %v2592 = vcvt.s32.f32 %v2560
    %v2593 = vcvt.s32.f32 %v2561
    %v2594 = vcvt.s32.f32 %v2562
    %v2595 = vcvt.s32.f32 %v2563
    %v2596 = vcvt.s32.f32 %v2564
    %v2597 = vcvt.s32.f32 %v2565
    %v2598 = vcvt.s32.f32 %v2566
    %v2599 = vcvt.s32.f32 %v2567
    %v2600 = vcvt.s32.f32 %v2568
    %v2601 = vcvt.s32.f32 %v2569
    %v2602 = vcvt.s32.f32 %v2570
    %v2603 = vcvt.s32.f32 %v2571
    %v2604 = vcvt.s32.f32 %v2572
    %v2605 = vcvt.s32.f32 %v2573
    %v2606 = vcvt.s32.f32 %v2574
    %v2607 = vcvt.s32.f32 %v2575
    %v2608 = vcvt.s32.f32 %v2576
    %v2609 = vcvt.s32.f32 %v2577
    %v2610 = vcvt.s32.f32 %v2578
    %v2611 = vcvt.s32.f32 %v2579
    %2612 = vmatpush.msra.mxu0 %v2595
    %2613 = vmatpush.msra.mxu0 %v2594
    %2614 = vmatpush.msra.mxu0 %v2593
    %2615 = vmatpush.msra.mxu0 %v2592
    %2616 = vmatpush.msra.mxu0 %v2591
    %2617 = vmatpush.msra.mxu0 %v2590
    %2618 = vmatpush.msra.mxu0 %v2589
    %2619 = vmatpush.msra.mxu0 %v2588
    %2620 = vmatpush.msra.mxu0 %v2587
    %2621 = vmatpush.msra.mxu0 %v2586
    %2622 = vmatpush.msra.mxu0 %v2585
    %2623 = vmatpush.msra.mxu0 %v2584
    %2624 = vmatpush.msra.mxu0 %v2583
    %2625 = vmatpush.msra.mxu0 %v2582
    %2626 = vmatpush.msra.mxu0 %v2581
    %2627 = vmatpush.msra.mxu0 %v2580
    %2628 = vmatmul.f32.gmra.mxu0 %v2474
    %v2629 = vpop.f32.mrf.mxu0
    %v2630 = vadd.f32 0.0, %v2629
    %2631 = vmatmul.f32.gmra.mxu0 %v2476
    %v2632 = vpop.f32.mrf.mxu0
    %v2633 = vadd.f32 0.0, %v2632
    %2634 = vmatmul.f32.gmra.mxu0 %v2478
    %v2635 = vpop.f32.mrf.mxu0
    %v2636 = vadd.f32 0.0, %v2635
    %2637 = vmatmul.f32.gmra.mxu0 %v2480
    %v2638 = vpop.f32.mrf.mxu0
    %v2639 = vadd.f32 0.0, %v2638
    %2640 = vdwg.mxu0
    %2641 = vmatpush.msra.mxu0 %v2611
    %2642 = vmatpush.msra.mxu0 %v2610
    %2643 = vmatpush.msra.mxu0 %v2609
    %2644 = vmatpush.msra.mxu0 %v2608
    %2645 = vmatpush.msra.mxu0 %v2607
    %2646 = vmatpush.msra.mxu0 %v2606
    %2647 = vmatpush.msra.mxu0 %v2605
    %2648 = vmatpush.msra.mxu0 %v2604
    %2649 = vmatpush.msra.mxu0 %v2603
    %2650 = vmatpush.msra.mxu0 %v2602
    %2651 = vmatpush.msra.mxu0 %v2601
    %2652 = vmatpush.msra.mxu0 %v2600
    %2653 = vmatpush.msra.mxu0 %v2599
    %2654 = vmatpush.msra.mxu0 %v2598
    %2655 = vmatpush.msra.mxu0 %v2597
    %2656 = vmatpush.msra.mxu0 %v2596
    %2657 = vmatmul.f32.gmra.mxu0 %v2475
    %v2658 = vpop.f32.mrf.mxu0
    %v2659 = vadd.f32 %v2630, %v2658
    %2660 = vmatmul.f32.gmra.mxu0 %v2477
    %v2661 = vpop.f32.mrf.mxu0
    %v2662 = vadd.f32 %v2633, %v2661
    %2663 = vmatmul.f32.gmra.mxu0 %v2479
    %v2664 = vpop.f32.mrf.mxu0
    %v2665 = vadd.f32 %v2636, %v2664
    %2666 = vmatmul.f32.gmra.mxu0 %v2481
    %v2667 = vpop.f32.mrf.mxu0
    %v2668 = vadd.f32 %v2639, %v2667
    %2669 = vdwg.mxu0
    %vm2670 = vcmp.lt.s32.totalorder %v79, 0
    %v2671 = vsub.s32 0, %v79
    %v2672 = vsel %vm2670, %v2671, %v79
    %v2673 = vshrl.u32 %v2672, 6
    %v2674 = vand.u32 %v2672, 63
    %v2675 = vsub.s32 0, %v2674
    %v2676 = vsel %vm2670, %v2675, %v2674
    %vm2677 = vcmp.ne.s32.totalorder %v2676, 0
    %vm2678 = vcmp.lt.s32.totalorder %v2676, 0
    %vm2679 = vmand %vm2678, %vm2677
    %v2680 = vadd.s32 %v2676, 64
    %v2681 = vsel %vm2679, %v2680, %v2676
    %v2682 = vadd.s32 %v2681, 4294967294
    %vm2683 = vcmp.ge.s32.totalorder %v2682, 0
    %vm2684 = vcmp.lt.s32.totalorder %v2682, 64
    %vm2685 = vmand %vm2683, %vm2684
    %v2686 = vsel %vm2685, 1, 0
    %v2687 = vcvt.s32.f32 %v2686
    %v2688 = vadd.s32 %v2681, 4294967295
    %vm2689 = vcmp.ge.s32.totalorder %v2688, 0
    %vm2690 = vcmp.lt.s32.totalorder %v2688, 64
    %vm2691 = vmand %vm2689, %vm2690
    %v2692 = vsel %vm2691, 1, 0
    %v2693 = vcvt.s32.f32 %v2692
    %v2694 = vadd.s32 %v2681, 1
    %vm2695 = vcmp.ge.s32.totalorder %v2694, 0
    %vm2696 = vcmp.lt.s32.totalorder %v2694, 64
    %vm2697 = vmand %vm2695, %vm2696
    %v2698 = vsel %vm2697, 1, 0
    %v2699 = vcvt.s32.f32 %v2698
    %v2700 = vadd.s32 %v2681, 2
    %vm2701 = vcmp.ge.s32.totalorder %v2700, 0
    %vm2702 = vcmp.lt.s32.totalorder %v2700, 64
    %vm2703 = vmand %vm2701, %vm2702
    %v2704 = vsel %vm2703, 1, 0
    %v2705 = vcvt.s32.f32 %v2704
    %2706 = vset.pattern.permute.xlu0 1
    %2707 = vperm.xlu0 %2706, %v157
    %v2708 = vpop.permute.xlu0 %2707
    %2710 = vset.pattern.permute.xlu0 1
    %2711 = vperm.xlu0 %2710, %v158
    %v2712 = vpop.permute.xlu0 %2711
    %2714 = vset.pattern.permute.xlu0 1
    %2715 = vperm.xlu0 %2714, %v159
    %v2716 = vpop.permute.xlu0 %2715
    %2718 = vset.pattern.permute.xlu0 1
    %2719 = vperm.xlu0 %2718, %v160
    %v2720 = vpop.permute.xlu0 %2719
    %2722 = vrot.lane.b32.xlu0 %v153, 96
    %v2723 = vpop.permute.xlu0 %2722
    %2724 = vrot.lane.b32.xlu0 %v154, 96
    %v2725 = vpop.permute.xlu0 %2724
    %2726 = vrot.lane.b32.xlu0 %v155, 96
    %v2727 = vpop.permute.xlu0 %2726
    %2728 = vrot.lane.b32.xlu0 %v156, 96
    %v2729 = vpop.permute.xlu0 %2728
    %v2730 = vsel %vm181, %v2723, 0
    %v2732 = vsel %vm181, %v2725, 0
    %v2734 = vsel %vm181, %v2727, 0
    %v2736 = vsel %vm181, %v2729, 0
    %2738 = vmatpush.msra.mxu0 0.0
    %2739 = vmatpush.msra.mxu0 0.0
    %2740 = vmatpush.msra.mxu0 0.0
    %2741 = vmatpush.msra.mxu0 0.0
    %2742 = vmatpush.msra.mxu0 0.0
    %2743 = vmatpush.msra.mxu0 0.0
    %2744 = vmatpush.msra.mxu0 0.0
    %2745 = vmatpush.msra.mxu0 0.0
    %2746 = vmatpush.msra.mxu0 0.0
    %2747 = vmatpush.msra.mxu0 0.0
    %2748 = vmatpush.msra.mxu0 0.0
    %2749 = vmatpush.msra.mxu0 0.0
    %2750 = vmatpush.msra.mxu0 %v2668
    %2751 = vmatpush.msra.mxu0 %v2665
    %2752 = vmatpush.msra.mxu0 %v2662
    %2753 = vmatpush.msra.mxu0 %v2659
    %2754 = vmatmul.f32.gmra.mxu0 %v2730
    %v2755 = vpop.f32.mrf.mxu0
    %v2756 = vadd.f32 %v2708, %v2755
    %2757 = vmatmul.f32.gmra.mxu0 %v2732
    %v2758 = vpop.f32.mrf.mxu0
    %v2759 = vadd.f32 %v2712, %v2758
    %2760 = vmatmul.f32.gmra.mxu0 %v2734
    %v2761 = vpop.f32.mrf.mxu0
    %v2762 = vadd.f32 %v2716, %v2761
    %2763 = vmatmul.f32.gmra.mxu0 %v2736
    %v2764 = vpop.f32.mrf.mxu0
    %v2765 = vadd.f32 %v2720, %v2764
    %2766 = vdwg.mxu0
    %2767 = vadd.xlane.f32.xlu0 %v2756
    %v2768 = vpop.xlane.xlu0 %2767
    %2769 = vadd.xlane.f32.xlu0 %v2759
    %v2770 = vpop.xlane.xlu0 %2769
    %2771 = vadd.xlane.f32.xlu0 %v2762
    %v2772 = vpop.xlane.xlu0 %2771
    %2773 = vadd.xlane.f32.xlu0 %v2765
    %v2774 = vpop.xlane.xlu0 %2773
    %v2775 = vmul.f32 %v2768, 0.0078125
    %v2776 = vmul.f32 %v2770, 0.0078125
    %v2777 = vmul.f32 %v2772, 0.0078125
    %v2778 = vmul.f32 %v2774, 0.0078125
    %v2779 = vsub.f32 %v2756, %v2775
    %v2780 = vsub.f32 %v2759, %v2776
    %v2781 = vsub.f32 %v2762, %v2777
    %v2782 = vsub.f32 %v2765, %v2778
    %v2783 = vmul.f32 %v2779, %v2779
    %v2784 = vmul.f32 %v2780, %v2780
    %v2785 = vmul.f32 %v2781, %v2781
    %v2786 = vmul.f32 %v2782, %v2782
    %2787 = vadd.xlane.f32.xlu0 %v2783
    %v2788 = vpop.xlane.xlu0 %2787
    %2789 = vadd.xlane.f32.xlu0 %v2784
    %v2790 = vpop.xlane.xlu0 %2789
    %2791 = vadd.xlane.f32.xlu0 %v2785
    %v2792 = vpop.xlane.xlu0 %2791
    %2793 = vadd.xlane.f32.xlu0 %v2786
    %v2794 = vpop.xlane.xlu0 %2793
    %v2795 = vmul.f32 %v2788, 0.0078125
    %v2796 = vmul.f32 %v2790, 0.0078125
    %v2797 = vmul.f32 %v2792, 0.0078125
    %v2798 = vmul.f32 %v2794, 0.0078125
    %v2799 = vadd.f32 %v2795, 1e-05
    %v2800 = vadd.f32 %v2796, 1e-05
    %v2801 = vadd.f32 %v2797, 1e-05
    %v2802 = vadd.f32 %v2798, 1e-05
    %v2803 = vrsqrt.pop %v2799
    %v2804 = vmul.f32 %v2803, %v2799
    %v2805 = vmul.f32 %v2804, %v2803
    %v2806 = vmul.f32 0.5, %v2805
    %v2807 = vsub.f32 1.5, %v2806
    %v2808 = vmul.f32 %v2803, %v2807
    %vm2809 = vweird.f32 %v2799
    %vm2810 = vweird.f32 %v2803
    %vm2811 = vmor %vm2809, %vm2810
    %v2812 = vsel %vm2811, %v2803, %v2808
    %v2813 = vrsqrt.pop %v2800
    %v2814 = vmul.f32 %v2813, %v2800
    %v2815 = vmul.f32 %v2814, %v2813
    %v2816 = vmul.f32 0.5, %v2815
    %v2817 = vsub.f32 1.5, %v2816
    %v2818 = vmul.f32 %v2813, %v2817
    %vm2819 = vweird.f32 %v2800
    %vm2820 = vweird.f32 %v2813
    %vm2821 = vmor %vm2819, %vm2820
    %v2822 = vsel %vm2821, %v2813, %v2818
    %v2823 = vrsqrt.pop %v2801
    %v2824 = vmul.f32 %v2823, %v2801
    %v2825 = vmul.f32 %v2824, %v2823
    %v2826 = vmul.f32 0.5, %v2825
    %v2827 = vsub.f32 1.5, %v2826
    %v2828 = vmul.f32 %v2823, %v2827
    %vm2829 = vweird.f32 %v2801
    %vm2830 = vweird.f32 %v2823
    %vm2831 = vmor %vm2829, %vm2830
    %v2832 = vsel %vm2831, %v2823, %v2828
    %v2833 = vrsqrt.pop %v2802
    %v2834 = vmul.f32 %v2833, %v2802
    %v2835 = vmul.f32 %v2834, %v2833
    %v2836 = vmul.f32 0.5, %v2835
    %v2837 = vsub.f32 1.5, %v2836
    %v2838 = vmul.f32 %v2833, %v2837
    %vm2839 = vweird.f32 %v2802
    %vm2840 = vweird.f32 %v2833
    %vm2841 = vmor %vm2839, %vm2840
    %v2842 = vsel %vm2841, %v2833, %v2838
    %v2843 = vmul.f32 %v2779, %v2812
    %v2844 = vmul.f32 %v2780, %v2822
    %v2845 = vmul.f32 %v2781, %v2832
    %v2846 = vmul.f32 %v2782, %v2842
    %2847 = vset.pattern.permute.xlu0 5
    %2848 = vperm.xlu0 %2847, %v252
    %v2849 = vpop.permute.xlu0 %2848
    %2851 = vset.pattern.permute.xlu0 5
    %2852 = vperm.xlu0 %2851, %v253
    %v2853 = vpop.permute.xlu0 %2852
    %2855 = vset.pattern.permute.xlu0 5
    %2856 = vperm.xlu0 %2855, %v254
    %v2857 = vpop.permute.xlu0 %2856
    %2859 = vset.pattern.permute.xlu0 5
    %2860 = vperm.xlu0 %2859, %v255
    %v2861 = vpop.permute.xlu0 %2860
    %v2863 = vmul.f32 %v2849, %v2843
    %v2864 = vmul.f32 %v2853, %v2844
    %v2865 = vmul.f32 %v2857, %v2845
    %v2866 = vmul.f32 %v2861, %v2846
    %2867 = vset.pattern.permute.xlu0 5
    %2868 = vperm.xlu0 %2867, %v256
    %v2869 = vpop.permute.xlu0 %2868
    %2871 = vset.pattern.permute.xlu0 5
    %2872 = vperm.xlu0 %2871, %v257
    %v2873 = vpop.permute.xlu0 %2872
    %2875 = vset.pattern.permute.xlu0 5
    %2876 = vperm.xlu0 %2875, %v258
    %v2877 = vpop.permute.xlu0 %2876
    %2879 = vset.pattern.permute.xlu0 5
    %2880 = vperm.xlu0 %2879, %v259
    %v2881 = vpop.permute.xlu0 %2880
    %v2883 = vadd.f32 %v2863, %v2869
    %v2884 = vadd.f32 %v2864, %v2873
    %v2885 = vadd.f32 %v2865, %v2877
    %v2886 = vadd.f32 %v2866, %v2881
    %v2887 = vld [vmem:[#allocation2 + $0x28] sm:$0xff]
    %v2888 = vld [vmem:[#allocation2 + $0x30] sm:$0xff]
    %v2889 = vld [vmem:[#allocation2 + $0xf0] sm:$0xff]
    %v2890 = vld [vmem:[#allocation2 + $0xf8] sm:$0xff]
    %v2891 = vld [vmem:[#allocation2 + $0x1b8] sm:$0xff]
    %v2892 = vld [vmem:[#allocation2 + $0x1c0] sm:$0xff]
    %v2893 = vld [vmem:[#allocation2 + $0x280] sm:$0xff]
    %v2894 = vld [vmem:[#allocation2 + $0x288] sm:$0xff]
    %2899 = vrot.lane.b32.xlu0 %v2883, 2
    %v2900 = vpop.permute.xlu0 %2899
    %2901 = vrot.lane.b32.xlu0 %v2884, 2
    %v2902 = vpop.permute.xlu0 %2901
    %2903 = vrot.lane.b32.xlu0 %v2885, 2
    %v2904 = vpop.permute.xlu0 %2903
    %2905 = vrot.lane.b32.xlu0 %v2886, 2
    %v2906 = vpop.permute.xlu0 %2905
    %v2911 = vsel %vm452, 0.0, %v2900
    %v2912 = vsel %vm452, 0.0, %v2902
    %v2913 = vsel %vm452, 0.0, %v2904
    %v2914 = vsel %vm452, 0.0, %v2906
    %v2915 = vmul.f32 %v2911, %v2687
    %v2916 = vmul.f32 %v2912, %v2687
    %v2917 = vmul.f32 %v2913, %v2687
    %v2918 = vmul.f32 %v2914, %v2687
    %2919 = vrot.lane.b32.xlu0 %v2883, 1
    %v2920 = vpop.permute.xlu0 %2919
    %2921 = vrot.lane.b32.xlu0 %v2884, 1
    %v2922 = vpop.permute.xlu0 %2921
    %2923 = vrot.lane.b32.xlu0 %v2885, 1
    %v2924 = vpop.permute.xlu0 %2923
    %2925 = vrot.lane.b32.xlu0 %v2886, 1
    %v2926 = vpop.permute.xlu0 %2925
    %v2931 = vsel %vm493, 0.0, %v2920
    %v2932 = vsel %vm493, 0.0, %v2922
    %v2933 = vsel %vm493, 0.0, %v2924
    %v2934 = vsel %vm493, 0.0, %v2926
    %v2935 = vmul.f32 %v2931, %v2693
    %v2936 = vmul.f32 %v2932, %v2693
    %v2937 = vmul.f32 %v2933, %v2693
    %v2938 = vmul.f32 %v2934, %v2693
    %2939 = vrot.lane.b32.xlu0 %v2883, 127
    %v2940 = vpop.permute.xlu0 %2939
    %2941 = vrot.lane.b32.xlu0 %v2884, 127
    %v2942 = vpop.permute.xlu0 %2941
    %2943 = vrot.lane.b32.xlu0 %v2885, 127
    %v2944 = vpop.permute.xlu0 %2943
    %2945 = vrot.lane.b32.xlu0 %v2886, 127
    %v2946 = vpop.permute.xlu0 %2945
    %v2951 = vsel %vm534, %v2940, 0.0
    %v2952 = vsel %vm534, %v2942, 0.0
    %v2953 = vsel %vm534, %v2944, 0.0
    %v2954 = vsel %vm534, %v2946, 0.0
    %v2955 = vmul.f32 %v2951, %v2699
    %v2956 = vmul.f32 %v2952, %v2699
    %v2957 = vmul.f32 %v2953, %v2699
    %v2958 = vmul.f32 %v2954, %v2699
    %2959 = vrot.lane.b32.xlu0 %v2883, 126
    %v2960 = vpop.permute.xlu0 %2959
    %2961 = vrot.lane.b32.xlu0 %v2884, 126
    %v2962 = vpop.permute.xlu0 %2961
    %2963 = vrot.lane.b32.xlu0 %v2885, 126
    %v2964 = vpop.permute.xlu0 %2963
    %2965 = vrot.lane.b32.xlu0 %v2886, 126
    %v2966 = vpop.permute.xlu0 %2965
    %v2971 = vsel %vm575, %v2960, 0.0
    %v2972 = vsel %vm575, %v2962, 0.0
    %v2973 = vsel %vm575, %v2964, 0.0
    %v2974 = vsel %vm575, %v2966, 0.0
    %v2975 = vmul.f32 %v2971, %v2705
    %v2976 = vmul.f32 %v2972, %v2705
    %v2977 = vmul.f32 %v2973, %v2705
    %v2978 = vmul.f32 %v2974, %v2705
    %2979 = vset.pattern.permute.xlu0 4
    %2980 = vperm.xlu0 %2979, %v424
    %v2981 = vpop.permute.xlu0 %2980
    %2983 = vset.pattern.permute.xlu0 4
    %2984 = vperm.xlu0 %2983, %v425
    %v2985 = vpop.permute.xlu0 %2984
    %2987 = vset.pattern.permute.xlu0 4
    %2988 = vperm.xlu0 %2987, %v426
    %v2989 = vpop.permute.xlu0 %2988
    %2991 = vset.pattern.permute.xlu0 4
    %2992 = vperm.xlu0 %2991, %v427
    %v2993 = vpop.permute.xlu0 %2992
    %v2996 = vsel %vm181, %v2888, 0
    %v2999 = vsel %vm181, %v2890, 0
    %v3002 = vsel %vm181, %v2892, 0
    %v3005 = vsel %vm181, %v2894, 0
    %3007 = vmatpush.msra.mxu0 %v2958
    %3008 = vmatpush.msra.mxu0 %v2957
    %3009 = vmatpush.msra.mxu0 %v2956
    %3010 = vmatpush.msra.mxu0 %v2955
    %3011 = vmatpush.msra.mxu0 %v2886
    %3012 = vmatpush.msra.mxu0 %v2885
    %3013 = vmatpush.msra.mxu0 %v2884
    %3014 = vmatpush.msra.mxu0 %v2883
    %3015 = vmatpush.msra.mxu0 %v2938
    %3016 = vmatpush.msra.mxu0 %v2937
    %3017 = vmatpush.msra.mxu0 %v2936
    %3018 = vmatpush.msra.mxu0 %v2935
    %3019 = vmatpush.msra.mxu0 %v2918
    %3020 = vmatpush.msra.mxu0 %v2917
    %3021 = vmatpush.msra.mxu0 %v2916
    %3022 = vmatpush.msra.mxu0 %v2915
    %3023 = vmatmul.f32.gmra.mxu0 %v2887
    %v3024 = vpop.f32.mrf.mxu0
    %v3025 = vadd.f32 %v2981, %v3024
    %3026 = vmatmul.f32.gmra.mxu0 %v2889
    %v3027 = vpop.f32.mrf.mxu0
    %v3028 = vadd.f32 %v2985, %v3027
    %3029 = vmatmul.f32.gmra.mxu0 %v2891
    %v3030 = vpop.f32.mrf.mxu0
    %v3031 = vadd.f32 %v2989, %v3030
    %3032 = vmatmul.f32.gmra.mxu0 %v2893
    %v3033 = vpop.f32.mrf.mxu0
    %v3034 = vadd.f32 %v2993, %v3033
    %3035 = vdwg.mxu0
    %3036 = vmatpush.msra.mxu0 0.0
    %3037 = vmatpush.msra.mxu0 0.0
    %3038 = vmatpush.msra.mxu0 0.0
    %3039 = vmatpush.msra.mxu0 0.0
    %3040 = vmatpush.msra.mxu0 0.0
    %3041 = vmatpush.msra.mxu0 0.0
    %3042 = vmatpush.msra.mxu0 0.0
    %3043 = vmatpush.msra.mxu0 0.0
    %3044 = vmatpush.msra.mxu0 0.0
    %3045 = vmatpush.msra.mxu0 0.0
    %3046 = vmatpush.msra.mxu0 0.0
    %3047 = vmatpush.msra.mxu0 0.0
    %3048 = vmatpush.msra.mxu0 %v2978
    %3049 = vmatpush.msra.mxu0 %v2977
    %3050 = vmatpush.msra.mxu0 %v2976
    %3051 = vmatpush.msra.mxu0 %v2975
    %3052 = vmatmul.f32.gmra.mxu0 %v2996
    %v3053 = vpop.f32.mrf.mxu0
    %v3054 = vadd.f32 %v3025, %v3053
    %3055 = vmatmul.f32.gmra.mxu0 %v2999
    %v3056 = vpop.f32.mrf.mxu0
    %v3057 = vadd.f32 %v3028, %v3056
    %3058 = vmatmul.f32.gmra.mxu0 %v3002
    %v3059 = vpop.f32.mrf.mxu0
    %v3060 = vadd.f32 %v3031, %v3059
    %3061 = vmatmul.f32.gmra.mxu0 %v3005
    %v3062 = vpop.f32.mrf.mxu0
    %v3063 = vadd.f32 %v3034, %v3062
    %3064 = vdwg.mxu0
    %v3065 = vmax.f32 %v3054, 0.0
    %v3066 = vmax.f32 %v3057, 0.0
    %v3067 = vmax.f32 %v3060, 0.0
    %v3068 = vmax.f32 %v3063, 0.0
    %3069 = vadd.xlane.f32.xlu0 %v3065
    %v3070 = vpop.xlane.xlu0 %3069
    %3071 = vadd.xlane.f32.xlu0 %v3066
    %v3072 = vpop.xlane.xlu0 %3071
    %3073 = vadd.xlane.f32.xlu0 %v3067
    %v3074 = vpop.xlane.xlu0 %3073
    %3075 = vadd.xlane.f32.xlu0 %v3068
    %v3076 = vpop.xlane.xlu0 %3075
    %v3077 = vmul.f32 %v3070, 0.0078125
    %v3078 = vmul.f32 %v3072, 0.0078125
    %v3079 = vmul.f32 %v3074, 0.0078125
    %v3080 = vmul.f32 %v3076, 0.0078125
    %v3081 = vsub.f32 %v3065, %v3077
    %v3082 = vsub.f32 %v3066, %v3078
    %v3083 = vsub.f32 %v3067, %v3079
    %v3084 = vsub.f32 %v3068, %v3080
    %v3085 = vmul.f32 %v3081, %v3081
    %v3086 = vmul.f32 %v3082, %v3082
    %v3087 = vmul.f32 %v3083, %v3083
    %v3088 = vmul.f32 %v3084, %v3084
    %3089 = vadd.xlane.f32.xlu0 %v3085
    %v3090 = vpop.xlane.xlu0 %3089
    %3091 = vadd.xlane.f32.xlu0 %v3086
    %v3092 = vpop.xlane.xlu0 %3091
    %3093 = vadd.xlane.f32.xlu0 %v3087
    %v3094 = vpop.xlane.xlu0 %3093
    %3095 = vadd.xlane.f32.xlu0 %v3088
    %v3096 = vpop.xlane.xlu0 %3095
    %v3097 = vmul.f32 %v3090, 0.0078125
    %v3098 = vmul.f32 %v3092, 0.0078125
    %v3099 = vmul.f32 %v3094, 0.0078125
    %v3100 = vmul.f32 %v3096, 0.0078125
    %v3101 = vadd.f32 %v3097, 1e-05
    %v3102 = vadd.f32 %v3098, 1e-05
    %v3103 = vadd.f32 %v3099, 1e-05
    %v3104 = vadd.f32 %v3100, 1e-05
    %v3105 = vrsqrt.pop %v3101
    %v3106 = vmul.f32 %v3105, %v3101
    %v3107 = vmul.f32 %v3106, %v3105
    %v3108 = vmul.f32 0.5, %v3107
    %v3109 = vsub.f32 1.5, %v3108
    %v3110 = vmul.f32 %v3105, %v3109
    %vm3111 = vweird.f32 %v3101
    %vm3112 = vweird.f32 %v3105
    %vm3113 = vmor %vm3111, %vm3112
    %v3114 = vsel %vm3113, %v3105, %v3110
    %v3115 = vrsqrt.pop %v3102
    %v3116 = vmul.f32 %v3115, %v3102
    %v3117 = vmul.f32 %v3116, %v3115
    %v3118 = vmul.f32 0.5, %v3117
    %v3119 = vsub.f32 1.5, %v3118
    %v3120 = vmul.f32 %v3115, %v3119
    %vm3121 = vweird.f32 %v3102
    %vm3122 = vweird.f32 %v3115
    %vm3123 = vmor %vm3121, %vm3122
    %v3124 = vsel %vm3123, %v3115, %v3120
    %v3125 = vrsqrt.pop %v3103
    %v3126 = vmul.f32 %v3125, %v3103
    %v3127 = vmul.f32 %v3126, %v3125
    %v3128 = vmul.f32 0.5, %v3127
    %v3129 = vsub.f32 1.5, %v3128
    %v3130 = vmul.f32 %v3125, %v3129
    %vm3131 = vweird.f32 %v3103
    %vm3132 = vweird.f32 %v3125
    %vm3133 = vmor %vm3131, %vm3132
    %v3134 = vsel %vm3133, %v3125, %v3130
    %v3135 = vrsqrt.pop %v3104
    %v3136 = vmul.f32 %v3135, %v3104
    %v3137 = vmul.f32 %v3136, %v3135
    %v3138 = vmul.f32 0.5, %v3137
    %v3139 = vsub.f32 1.5, %v3138
    %v3140 = vmul.f32 %v3135, %v3139
    %vm3141 = vweird.f32 %v3104
    %vm3142 = vweird.f32 %v3135
    %vm3143 = vmor %vm3141, %vm3142
    %v3144 = vsel %vm3143, %v3135, %v3140
    %v3145 = vmul.f32 %v3081, %v3114
    %v3146 = vmul.f32 %v3082, %v3124
    %v3147 = vmul.f32 %v3083, %v3134
    %v3148 = vmul.f32 %v3084, %v3144
    %3149 = vset.pattern.permute.xlu0 6
    %3150 = vperm.xlu0 %3149, %v252
    %v3151 = vpop.permute.xlu0 %3150
    %3153 = vset.pattern.permute.xlu0 6
    %3154 = vperm.xlu0 %3153, %v253
    %v3155 = vpop.permute.xlu0 %3154
    %3157 = vset.pattern.permute.xlu0 6
    %3158 = vperm.xlu0 %3157, %v254
    %v3159 = vpop.permute.xlu0 %3158
    %3161 = vset.pattern.permute.xlu0 6
    %3162 = vperm.xlu0 %3161, %v255
    %v3163 = vpop.permute.xlu0 %3162
    %v3165 = vmul.f32 %v3151, %v3145
    %v3166 = vmul.f32 %v3155, %v3146
    %v3167 = vmul.f32 %v3159, %v3147
    %v3168 = vmul.f32 %v3163, %v3148
    %3169 = vset.pattern.permute.xlu0 6
    %3170 = vperm.xlu0 %3169, %v256
    %v3171 = vpop.permute.xlu0 %3170
    %3173 = vset.pattern.permute.xlu0 6
    %3174 = vperm.xlu0 %3173, %v257
    %v3175 = vpop.permute.xlu0 %3174
    %3177 = vset.pattern.permute.xlu0 6
    %3178 = vperm.xlu0 %3177, %v258
    %v3179 = vpop.permute.xlu0 %3178
    %3181 = vset.pattern.permute.xlu0 6
    %3182 = vperm.xlu0 %3181, %v259
    %v3183 = vpop.permute.xlu0 %3182
    %v3185 = vadd.f32 %v3165, %v3171
    %v3186 = vadd.f32 %v3166, %v3175
    %v3187 = vadd.f32 %v3167, %v3179
    %v3188 = vadd.f32 %v3168, %v3183
    %v3189 = vld [vmem:[#allocation2 + $0x30] sm:$0xff]
    %v3190 = vld [vmem:[#allocation2 + $0x38] sm:$0xff]
    %v3191 = vld [vmem:[#allocation2 + $0xf8] sm:$0xff]
    %v3192 = vld [vmem:[#allocation2 + $0x100] sm:$0xff]
    %v3193 = vld [vmem:[#allocation2 + $0x1c0] sm:$0xff]
    %v3194 = vld [vmem:[#allocation2 + $0x1c8] sm:$0xff]
    %v3195 = vld [vmem:[#allocation2 + $0x288] sm:$0xff]
    %v3196 = vld [vmem:[#allocation2 + $0x290] sm:$0xff]
    %3201 = vrot.lane.b32.xlu0 %v3185, 2
    %v3202 = vpop.permute.xlu0 %3201
    %3203 = vrot.lane.b32.xlu0 %v3186, 2
    %v3204 = vpop.permute.xlu0 %3203
    %3205 = vrot.lane.b32.xlu0 %v3187, 2
    %v3206 = vpop.permute.xlu0 %3205
    %3207 = vrot.lane.b32.xlu0 %v3188, 2
    %v3208 = vpop.permute.xlu0 %3207
    %v3213 = vsel %vm452, 0.0, %v3202
    %v3214 = vsel %vm452, 0.0, %v3204
    %v3215 = vsel %vm452, 0.0, %v3206
    %v3216 = vsel %vm452, 0.0, %v3208
    %v3217 = vmul.f32 %v3213, %v2687
    %v3218 = vmul.f32 %v3214, %v2687
    %v3219 = vmul.f32 %v3215, %v2687
    %v3220 = vmul.f32 %v3216, %v2687
    %3221 = vrot.lane.b32.xlu0 %v3185, 1
    %v3222 = vpop.permute.xlu0 %3221
    %3223 = vrot.lane.b32.xlu0 %v3186, 1
    %v3224 = vpop.permute.xlu0 %3223
    %3225 = vrot.lane.b32.xlu0 %v3187, 1
    %v3226 = vpop.permute.xlu0 %3225
    %3227 = vrot.lane.b32.xlu0 %v3188, 1
    %v3228 = vpop.permute.xlu0 %3227
    %v3233 = vsel %vm493, 0.0, %v3222
    %v3234 = vsel %vm493, 0.0, %v3224
    %v3235 = vsel %vm493, 0.0, %v3226
    %v3236 = vsel %vm493, 0.0, %v3228
    %v3237 = vmul.f32 %v3233, %v2693
    %v3238 = vmul.f32 %v3234, %v2693
    %v3239 = vmul.f32 %v3235, %v2693
    %v3240 = vmul.f32 %v3236, %v2693
    %3241 = vrot.lane.b32.xlu0 %v3185, 127
    %v3242 = vpop.permute.xlu0 %3241
    %3243 = vrot.lane.b32.xlu0 %v3186, 127
    %v3244 = vpop.permute.xlu0 %3243
    %3245 = vrot.lane.b32.xlu0 %v3187, 127
    %v3246 = vpop.permute.xlu0 %3245
    %3247 = vrot.lane.b32.xlu0 %v3188, 127
    %v3248 = vpop.permute.xlu0 %3247
    %v3253 = vsel %vm534, %v3242, 0.0
    %v3254 = vsel %vm534, %v3244, 0.0
    %v3255 = vsel %vm534, %v3246, 0.0
    %v3256 = vsel %vm534, %v3248, 0.0
    %v3257 = vmul.f32 %v3253, %v2699
    %v3258 = vmul.f32 %v3254, %v2699
    %v3259 = vmul.f32 %v3255, %v2699
    %v3260 = vmul.f32 %v3256, %v2699
    %3261 = vrot.lane.b32.xlu0 %v3185, 126
    %v3262 = vpop.permute.xlu0 %3261
    %3263 = vrot.lane.b32.xlu0 %v3186, 126
    %v3264 = vpop.permute.xlu0 %3263
    %3265 = vrot.lane.b32.xlu0 %v3187, 126
    %v3266 = vpop.permute.xlu0 %3265
    %3267 = vrot.lane.b32.xlu0 %v3188, 126
    %v3268 = vpop.permute.xlu0 %3267
    %v3273 = vsel %vm575, %v3262, 0.0
    %v3274 = vsel %vm575, %v3264, 0.0
    %v3275 = vsel %vm575, %v3266, 0.0
    %v3276 = vsel %vm575, %v3268, 0.0
    %v3277 = vmul.f32 %v3273, %v2705
    %v3278 = vmul.f32 %v3274, %v2705
    %v3279 = vmul.f32 %v3275, %v2705
    %v3280 = vmul.f32 %v3276, %v2705
    %3281 = vset.pattern.permute.xlu0 5
    %3282 = vperm.xlu0 %3281, %v424
    %v3283 = vpop.permute.xlu0 %3282
    %3285 = vset.pattern.permute.xlu0 5
    %3286 = vperm.xlu0 %3285, %v425
    %v3287 = vpop.permute.xlu0 %3286
    %3289 = vset.pattern.permute.xlu0 5
    %3290 = vperm.xlu0 %3289, %v426
    %v3291 = vpop.permute.xlu0 %3290
    %3293 = vset.pattern.permute.xlu0 5
    %3294 = vperm.xlu0 %3293, %v427
    %v3295 = vpop.permute.xlu0 %3294
    %3305 = vrot.lane.b32.xlu0 %v3189, 96
    %v3306 = vpop.permute.xlu0 %3305
    %3307 = vrot.lane.b32.xlu0 %v3190, 96
    %v3308 = vpop.permute.xlu0 %3307
    %3309 = vrot.lane.b32.xlu0 %v3191, 96
    %v3310 = vpop.permute.xlu0 %3309
    %3311 = vrot.lane.b32.xlu0 %v3192, 96
    %v3312 = vpop.permute.xlu0 %3311
    %3313 = vrot.lane.b32.xlu0 %v3193, 96
    %v3314 = vpop.permute.xlu0 %3313
    %3315 = vrot.lane.b32.xlu0 %v3194, 96
    %v3316 = vpop.permute.xlu0 %3315
    %3317 = vrot.lane.b32.xlu0 %v3195, 96
    %v3318 = vpop.permute.xlu0 %3317
    %3319 = vrot.lane.b32.xlu0 %v3196, 96
    %v3320 = vpop.permute.xlu0 %3319
    %v3321 = vsel %vm1120, %v3306, %v3308
    %v3322 = vsel %vm1120, %v3310, %v3312
    %v3323 = vsel %vm1120, %v3314, %v3316
    %v3324 = vsel %vm1120, %v3318, %v3320
    %v3329 = vsel %vm181, %v3308, 0
    %v3331 = vsel %vm181, %v3312, 0
    %v3333 = vsel %vm181, %v3316, 0
    %v3335 = vsel %vm181, %v3320, 0
    %3337 = vmatpush.msra.mxu0 %v3260
    %3338 = vmatpush.msra.mxu0 %v3259
    %3339 = vmatpush.msra.mxu0 %v3258
    %3340 = vmatpush.msra.mxu0 %v3257
    %3341 = vmatpush.msra.mxu0 %v3188
    %3342 = vmatpush.msra.mxu0 %v3187
    %3343 = vmatpush.msra.mxu0 %v3186
    %3344 = vmatpush.msra.mxu0 %v3185
    %3345 = vmatpush.msra.mxu0 %v3240
    %3346 = vmatpush.msra.mxu0 %v3239
    %3347 = vmatpush.msra.mxu0 %v3238
    %3348 = vmatpush.msra.mxu0 %v3237
    %3349 = vmatpush.msra.mxu0 %v3220
    %3350 = vmatpush.msra.mxu0 %v3219
    %3351 = vmatpush.msra.mxu0 %v3218
    %3352 = vmatpush.msra.mxu0 %v3217
    %3353 = vmatmul.f32.gmra.mxu0 %v3321
    %v3354 = vpop.f32.mrf.mxu0
    %v3355 = vadd.f32 %v3283, %v3354
    %3356 = vmatmul.f32.gmra.mxu0 %v3322
    %v3357 = vpop.f32.mrf.mxu0
    %v3358 = vadd.f32 %v3287, %v3357
    %3359 = vmatmul.f32.gmra.mxu0 %v3323
    %v3360 = vpop.f32.mrf.mxu0
    %v3361 = vadd.f32 %v3291, %v3360
    %3362 = vmatmul.f32.gmra.mxu0 %v3324
    %v3363 = vpop.f32.mrf.mxu0
    %v3364 = vadd.f32 %v3295, %v3363
    %3365 = vdwg.mxu0
    %3366 = vmatpush.msra.mxu0 0.0
    %3367 = vmatpush.msra.mxu0 0.0
    %3368 = vmatpush.msra.mxu0 0.0
    %3369 = vmatpush.msra.mxu0 0.0
    %3370 = vmatpush.msra.mxu0 0.0
    %3371 = vmatpush.msra.mxu0 0.0
    %3372 = vmatpush.msra.mxu0 0.0
    %3373 = vmatpush.msra.mxu0 0.0
    %3374 = vmatpush.msra.mxu0 0.0
    %3375 = vmatpush.msra.mxu0 0.0
    %3376 = vmatpush.msra.mxu0 0.0
    %3377 = vmatpush.msra.mxu0 0.0
    %3378 = vmatpush.msra.mxu0 %v3280
    %3379 = vmatpush.msra.mxu0 %v3279
    %3380 = vmatpush.msra.mxu0 %v3278
    %3381 = vmatpush.msra.mxu0 %v3277
    %3382 = vmatmul.f32.gmra.mxu0 %v3329
    %v3383 = vpop.f32.mrf.mxu0
    %v3384 = vadd.f32 %v3355, %v3383
    %3385 = vmatmul.f32.gmra.mxu0 %v3331
    %v3386 = vpop.f32.mrf.mxu0
    %v3387 = vadd.f32 %v3358, %v3386
    %3388 = vmatmul.f32.gmra.mxu0 %v3333
    %v3389 = vpop.f32.mrf.mxu0
    %v3390 = vadd.f32 %v3361, %v3389
    %3391 = vmatmul.f32.gmra.mxu0 %v3335
    %v3392 = vpop.f32.mrf.mxu0
    %v3393 = vadd.f32 %v3364, %v3392
    %3394 = vdwg.mxu0
    %v3395 = vmax.f32 %v3384, 0.0
    %v3396 = vmax.f32 %v3387, 0.0
    %v3397 = vmax.f32 %v3390, 0.0
    %v3398 = vmax.f32 %v3393, 0.0
    %3399 = vadd.xlane.f32.xlu0 %v3395
    %v3400 = vpop.xlane.xlu0 %3399
    %3401 = vadd.xlane.f32.xlu0 %v3396
    %v3402 = vpop.xlane.xlu0 %3401
    %3403 = vadd.xlane.f32.xlu0 %v3397
    %v3404 = vpop.xlane.xlu0 %3403
    %3405 = vadd.xlane.f32.xlu0 %v3398
    %v3406 = vpop.xlane.xlu0 %3405
    %v3407 = vmul.f32 %v3400, 0.0078125
    %v3408 = vmul.f32 %v3402, 0.0078125
    %v3409 = vmul.f32 %v3404, 0.0078125
    %v3410 = vmul.f32 %v3406, 0.0078125
    %v3411 = vsub.f32 %v3395, %v3407
    %v3412 = vsub.f32 %v3396, %v3408
    %v3413 = vsub.f32 %v3397, %v3409
    %v3414 = vsub.f32 %v3398, %v3410
    %v3415 = vmul.f32 %v3411, %v3411
    %v3416 = vmul.f32 %v3412, %v3412
    %v3417 = vmul.f32 %v3413, %v3413
    %v3418 = vmul.f32 %v3414, %v3414
    %3419 = vadd.xlane.f32.xlu0 %v3415
    %v3420 = vpop.xlane.xlu0 %3419
    %3421 = vadd.xlane.f32.xlu0 %v3416
    %v3422 = vpop.xlane.xlu0 %3421
    %3423 = vadd.xlane.f32.xlu0 %v3417
    %v3424 = vpop.xlane.xlu0 %3423
    %3425 = vadd.xlane.f32.xlu0 %v3418
    %v3426 = vpop.xlane.xlu0 %3425
    %v3427 = vmul.f32 %v3420, 0.0078125
    %v3428 = vmul.f32 %v3422, 0.0078125
    %v3429 = vmul.f32 %v3424, 0.0078125
    %v3430 = vmul.f32 %v3426, 0.0078125
    %v3431 = vadd.f32 %v3427, 1e-05
    %v3432 = vadd.f32 %v3428, 1e-05
    %v3433 = vadd.f32 %v3429, 1e-05
    %v3434 = vadd.f32 %v3430, 1e-05
    %v3435 = vrsqrt.pop %v3431
    %v3436 = vmul.f32 %v3435, %v3431
    %v3437 = vmul.f32 %v3436, %v3435
    %v3438 = vmul.f32 0.5, %v3437
    %v3439 = vsub.f32 1.5, %v3438
    %v3440 = vmul.f32 %v3435, %v3439
    %vm3441 = vweird.f32 %v3431
    %vm3442 = vweird.f32 %v3435
    %vm3443 = vmor %vm3441, %vm3442
    %v3444 = vsel %vm3443, %v3435, %v3440
    %v3445 = vrsqrt.pop %v3432
    %v3446 = vmul.f32 %v3445, %v3432
    %v3447 = vmul.f32 %v3446, %v3445
    %v3448 = vmul.f32 0.5, %v3447
    %v3449 = vsub.f32 1.5, %v3448
    %v3450 = vmul.f32 %v3445, %v3449
    %vm3451 = vweird.f32 %v3432
    %vm3452 = vweird.f32 %v3445
    %vm3453 = vmor %vm3451, %vm3452
    %v3454 = vsel %vm3453, %v3445, %v3450
    %v3455 = vrsqrt.pop %v3433
    %v3456 = vmul.f32 %v3455, %v3433
    %v3457 = vmul.f32 %v3456, %v3455
    %v3458 = vmul.f32 0.5, %v3457
    %v3459 = vsub.f32 1.5, %v3458
    %v3460 = vmul.f32 %v3455, %v3459
    %vm3461 = vweird.f32 %v3433
    %vm3462 = vweird.f32 %v3455
    %vm3463 = vmor %vm3461, %vm3462
    %v3464 = vsel %vm3463, %v3455, %v3460
    %v3465 = vrsqrt.pop %v3434
    %v3466 = vmul.f32 %v3465, %v3434
    %v3467 = vmul.f32 %v3466, %v3465
    %v3468 = vmul.f32 0.5, %v3467
    %v3469 = vsub.f32 1.5, %v3468
    %v3470 = vmul.f32 %v3465, %v3469
    %vm3471 = vweird.f32 %v3434
    %vm3472 = vweird.f32 %v3465
    %vm3473 = vmor %vm3471, %vm3472
    %v3474 = vsel %vm3473, %v3465, %v3470
    %v3475 = vmul.f32 %v3411, %v3444
    %v3476 = vmul.f32 %v3412, %v3454
    %v3477 = vmul.f32 %v3413, %v3464
    %v3478 = vmul.f32 %v3414, %v3474
    %3479 = vset.pattern.permute.xlu0 7
    %3480 = vperm.xlu0 %3479, %v252
    %v3481 = vpop.permute.xlu0 %3480
    %3483 = vset.pattern.permute.xlu0 7
    %3484 = vperm.xlu0 %3483, %v253
    %v3485 = vpop.permute.xlu0 %3484
    %3487 = vset.pattern.permute.xlu0 7
    %3488 = vperm.xlu0 %3487, %v254
    %v3489 = vpop.permute.xlu0 %3488
    %3491 = vset.pattern.permute.xlu0 7
    %3492 = vperm.xlu0 %3491, %v255
    %v3493 = vpop.permute.xlu0 %3492
    %v3495 = vmul.f32 %v3481, %v3475
    %v3496 = vmul.f32 %v3485, %v3476
    %v3497 = vmul.f32 %v3489, %v3477
    %v3498 = vmul.f32 %v3493, %v3478
    %3499 = vset.pattern.permute.xlu0 7
    %3500 = vperm.xlu0 %3499, %v256
    %v3501 = vpop.permute.xlu0 %3500
    %3503 = vset.pattern.permute.xlu0 7
    %3504 = vperm.xlu0 %3503, %v257
    %v3505 = vpop.permute.xlu0 %3504
    %3507 = vset.pattern.permute.xlu0 7
    %3508 = vperm.xlu0 %3507, %v258
    %v3509 = vpop.permute.xlu0 %3508
    %3511 = vset.pattern.permute.xlu0 7
    %3512 = vperm.xlu0 %3511, %v259
    %v3513 = vpop.permute.xlu0 %3512
    %v3515 = vadd.f32 %v3495, %v3501
    %v3516 = vadd.f32 %v3496, %v3505
    %v3517 = vadd.f32 %v3497, %v3509
    %v3518 = vadd.f32 %v3498, %v3513
    %v3519 = vadd.f32 %v3515, %v2883
    %v3520 = vadd.f32 %v3516, %v2884
    %v3521 = vadd.f32 %v3517, %v2885
    %v3522 = vadd.f32 %v3518, %v2886
    %v3523 = vld [vmem:[#allocation2 + $0x38] sm:$0xff]
    %v3524 = vld [vmem:[#allocation2 + $0x40] sm:$0xff]
    %v3525 = vld [vmem:[#allocation2 + $0x100] sm:$0xff]
    %v3526 = vld [vmem:[#allocation2 + $0x108] sm:$0xff]
    %v3527 = vld [vmem:[#allocation2 + $0x1c8] sm:$0xff]
    %v3528 = vld [vmem:[#allocation2 + $0x1d0] sm:$0xff]
    %v3529 = vld [vmem:[#allocation2 + $0x290] sm:$0xff]
    %v3530 = vld [vmem:[#allocation2 + $0x298] sm:$0xff]
    %3535 = vrot.lane.b32.xlu0 %v3519, 2
    %v3536 = vpop.permute.xlu0 %3535
    %3537 = vrot.lane.b32.xlu0 %v3520, 2
    %v3538 = vpop.permute.xlu0 %3537
    %3539 = vrot.lane.b32.xlu0 %v3521, 2
    %v3540 = vpop.permute.xlu0 %3539
    %3541 = vrot.lane.b32.xlu0 %v3522, 2
    %v3542 = vpop.permute.xlu0 %3541
    %v3547 = vsel %vm452, 0.0, %v3536
    %v3548 = vsel %vm452, 0.0, %v3538
    %v3549 = vsel %vm452, 0.0, %v3540
    %v3550 = vsel %vm452, 0.0, %v3542
    %v3551 = vmul.f32 %v3547, %v2687
    %v3552 = vmul.f32 %v3548, %v2687
    %v3553 = vmul.f32 %v3549, %v2687
    %v3554 = vmul.f32 %v3550, %v2687
    %3555 = vrot.lane.b32.xlu0 %v3519, 1
    %v3556 = vpop.permute.xlu0 %3555
    %3557 = vrot.lane.b32.xlu0 %v3520, 1
    %v3558 = vpop.permute.xlu0 %3557
    %3559 = vrot.lane.b32.xlu0 %v3521, 1
    %v3560 = vpop.permute.xlu0 %3559
    %3561 = vrot.lane.b32.xlu0 %v3522, 1
    %v3562 = vpop.permute.xlu0 %3561
    %v3567 = vsel %vm493, 0.0, %v3556
    %v3568 = vsel %vm493, 0.0, %v3558
    %v3569 = vsel %vm493, 0.0, %v3560
    %v3570 = vsel %vm493, 0.0, %v3562
    %v3571 = vmul.f32 %v3567, %v2693
    %v3572 = vmul.f32 %v3568, %v2693
    %v3573 = vmul.f32 %v3569, %v2693
    %v3574 = vmul.f32 %v3570, %v2693
    %3575 = vrot.lane.b32.xlu0 %v3519, 127
    %v3576 = vpop.permute.xlu0 %3575
    %3577 = vrot.lane.b32.xlu0 %v3520, 127
    %v3578 = vpop.permute.xlu0 %3577
    %3579 = vrot.lane.b32.xlu0 %v3521, 127
    %v3580 = vpop.permute.xlu0 %3579
    %3581 = vrot.lane.b32.xlu0 %v3522, 127
    %v3582 = vpop.permute.xlu0 %3581
    %v3587 = vsel %vm534, %v3576, 0.0
    %v3588 = vsel %vm534, %v3578, 0.0
    %v3589 = vsel %vm534, %v3580, 0.0
    %v3590 = vsel %vm534, %v3582, 0.0
    %v3591 = vmul.f32 %v3587, %v2699
    %v3592 = vmul.f32 %v3588, %v2699
    %v3593 = vmul.f32 %v3589, %v2699
    %v3594 = vmul.f32 %v3590, %v2699
    %3595 = vrot.lane.b32.xlu0 %v3519, 126
    %v3596 = vpop.permute.xlu0 %3595
    %3597 = vrot.lane.b32.xlu0 %v3520, 126
    %v3598 = vpop.permute.xlu0 %3597
    %3599 = vrot.lane.b32.xlu0 %v3521, 126
    %v3600 = vpop.permute.xlu0 %3599
    %3601 = vrot.lane.b32.xlu0 %v3522, 126
    %v3602 = vpop.permute.xlu0 %3601
    %v3607 = vsel %vm575, %v3596, 0.0
    %v3608 = vsel %vm575, %v3598, 0.0
    %v3609 = vsel %vm575, %v3600, 0.0
    %v3610 = vsel %vm575, %v3602, 0.0
    %v3611 = vmul.f32 %v3607, %v2705
    %v3612 = vmul.f32 %v3608, %v2705
    %v3613 = vmul.f32 %v3609, %v2705
    %v3614 = vmul.f32 %v3610, %v2705
    %3615 = vset.pattern.permute.xlu0 6
    %3616 = vperm.xlu0 %3615, %v424
    %v3617 = vpop.permute.xlu0 %3616
    %3619 = vset.pattern.permute.xlu0 6
    %3620 = vperm.xlu0 %3619, %v425
    %v3621 = vpop.permute.xlu0 %3620
    %3623 = vset.pattern.permute.xlu0 6
    %3624 = vperm.xlu0 %3623, %v426
    %v3625 = vpop.permute.xlu0 %3624
    %3627 = vset.pattern.permute.xlu0 6
    %3628 = vperm.xlu0 %3627, %v427
    %v3629 = vpop.permute.xlu0 %3628
    %3639 = vrot.lane.b32.xlu0 %v3523, 64
    %v3640 = vpop.permute.xlu0 %3639
    %3641 = vrot.lane.b32.xlu0 %v3524, 64
    %v3642 = vpop.permute.xlu0 %3641
    %3643 = vrot.lane.b32.xlu0 %v3525, 64
    %v3644 = vpop.permute.xlu0 %3643
    %3645 = vrot.lane.b32.xlu0 %v3526, 64
    %v3646 = vpop.permute.xlu0 %3645
    %3647 = vrot.lane.b32.xlu0 %v3527, 64
    %v3648 = vpop.permute.xlu0 %3647
    %3649 = vrot.lane.b32.xlu0 %v3528, 64
    %v3650 = vpop.permute.xlu0 %3649
    %3651 = vrot.lane.b32.xlu0 %v3529, 64
    %v3652 = vpop.permute.xlu0 %3651
    %3653 = vrot.lane.b32.xlu0 %v3530, 64
    %v3654 = vpop.permute.xlu0 %3653
    %v3655 = vsel %vm1633, %v3640, %v3642
    %v3656 = vsel %vm1633, %v3644, %v3646
    %v3657 = vsel %vm1633, %v3648, %v3650
    %v3658 = vsel %vm1633, %v3652, %v3654
    %v3663 = vsel %vm181, %v3642, 0
    %v3665 = vsel %vm181, %v3646, 0
    %v3667 = vsel %vm181, %v3650, 0
    %v3669 = vsel %vm181, %v3654, 0
    %3671 = vmatpush.msra.mxu0 %v3594
    %3672 = vmatpush.msra.mxu0 %v3593
    %3673 = vmatpush.msra.mxu0 %v3592
    %3674 = vmatpush.msra.mxu0 %v3591
    %3675 = vmatpush.msra.mxu0 %v3522
    %3676 = vmatpush.msra.mxu0 %v3521
    %3677 = vmatpush.msra.mxu0 %v3520
    %3678 = vmatpush.msra.mxu0 %v3519
    %3679 = vmatpush.msra.mxu0 %v3574
    %3680 = vmatpush.msra.mxu0 %v3573
    %3681 = vmatpush.msra.mxu0 %v3572
    %3682 = vmatpush.msra.mxu0 %v3571
    %3683 = vmatpush.msra.mxu0 %v3554
    %3684 = vmatpush.msra.mxu0 %v3553
    %3685 = vmatpush.msra.mxu0 %v3552
    %3686 = vmatpush.msra.mxu0 %v3551
    %3687 = vmatmul.f32.gmra.mxu0 %v3655
    %v3688 = vpop.f32.mrf.mxu0
    %v3689 = vadd.f32 %v3617, %v3688
    %3690 = vmatmul.f32.gmra.mxu0 %v3656
    %v3691 = vpop.f32.mrf.mxu0
    %v3692 = vadd.f32 %v3621, %v3691
    %3693 = vmatmul.f32.gmra.mxu0 %v3657
    %v3694 = vpop.f32.mrf.mxu0
    %v3695 = vadd.f32 %v3625, %v3694
    %3696 = vmatmul.f32.gmra.mxu0 %v3658
    %v3697 = vpop.f32.mrf.mxu0
    %v3698 = vadd.f32 %v3629, %v3697
    %3699 = vdwg.mxu0
    %3700 = vmatpush.msra.mxu0 0.0
    %3701 = vmatpush.msra.mxu0 0.0
    %3702 = vmatpush.msra.mxu0 0.0
    %3703 = vmatpush.msra.mxu0 0.0
    %3704 = vmatpush.msra.mxu0 0.0
    %3705 = vmatpush.msra.mxu0 0.0
    %3706 = vmatpush.msra.mxu0 0.0
    %3707 = vmatpush.msra.mxu0 0.0
    %3708 = vmatpush.msra.mxu0 0.0
    %3709 = vmatpush.msra.mxu0 0.0
    %3710 = vmatpush.msra.mxu0 0.0
    %3711 = vmatpush.msra.mxu0 0.0
    %3712 = vmatpush.msra.mxu0 %v3614
    %3713 = vmatpush.msra.mxu0 %v3613
    %3714 = vmatpush.msra.mxu0 %v3612
    %3715 = vmatpush.msra.mxu0 %v3611
    %3716 = vmatmul.f32.gmra.mxu0 %v3663
    %v3717 = vpop.f32.mrf.mxu0
    %v3718 = vadd.f32 %v3689, %v3717
    %3719 = vmatmul.f32.gmra.mxu0 %v3665
    %v3720 = vpop.f32.mrf.mxu0
    %v3721 = vadd.f32 %v3692, %v3720
    %3722 = vmatmul.f32.gmra.mxu0 %v3667
    %v3723 = vpop.f32.mrf.mxu0
    %v3724 = vadd.f32 %v3695, %v3723
    %3725 = vmatmul.f32.gmra.mxu0 %v3669
    %v3726 = vpop.f32.mrf.mxu0
    %v3727 = vadd.f32 %v3698, %v3726
    %3728 = vdwg.mxu0
    %v3729 = vmax.f32 %v3718, 0.0
    %v3730 = vmax.f32 %v3721, 0.0
    %v3731 = vmax.f32 %v3724, 0.0
    %v3732 = vmax.f32 %v3727, 0.0
    %3733 = vadd.xlane.f32.xlu0 %v3729
    %v3734 = vpop.xlane.xlu0 %3733
    %3735 = vadd.xlane.f32.xlu0 %v3730
    %v3736 = vpop.xlane.xlu0 %3735
    %3737 = vadd.xlane.f32.xlu0 %v3731
    %v3738 = vpop.xlane.xlu0 %3737
    %3739 = vadd.xlane.f32.xlu0 %v3732
    %v3740 = vpop.xlane.xlu0 %3739
    %v3741 = vmul.f32 %v3734, 0.0078125
    %v3742 = vmul.f32 %v3736, 0.0078125
    %v3743 = vmul.f32 %v3738, 0.0078125
    %v3744 = vmul.f32 %v3740, 0.0078125
    %v3745 = vsub.f32 %v3729, %v3741
    %v3746 = vsub.f32 %v3730, %v3742
    %v3747 = vsub.f32 %v3731, %v3743
    %v3748 = vsub.f32 %v3732, %v3744
    %v3749 = vmul.f32 %v3745, %v3745
    %v3750 = vmul.f32 %v3746, %v3746
    %v3751 = vmul.f32 %v3747, %v3747
    %v3752 = vmul.f32 %v3748, %v3748
    %3753 = vadd.xlane.f32.xlu0 %v3749
    %v3754 = vpop.xlane.xlu0 %3753
    %3755 = vadd.xlane.f32.xlu0 %v3750
    %v3756 = vpop.xlane.xlu0 %3755
    %3757 = vadd.xlane.f32.xlu0 %v3751
    %v3758 = vpop.xlane.xlu0 %3757
    %3759 = vadd.xlane.f32.xlu0 %v3752
    %v3760 = vpop.xlane.xlu0 %3759
    %v3761 = vmul.f32 %v3754, 0.0078125
    %v3762 = vmul.f32 %v3756, 0.0078125
    %v3763 = vmul.f32 %v3758, 0.0078125
    %v3764 = vmul.f32 %v3760, 0.0078125
    %v3765 = vadd.f32 %v3761, 1e-05
    %v3766 = vadd.f32 %v3762, 1e-05
    %v3767 = vadd.f32 %v3763, 1e-05
    %v3768 = vadd.f32 %v3764, 1e-05
    %v3769 = vrsqrt.pop %v3765
    %v3770 = vmul.f32 %v3769, %v3765
    %v3771 = vmul.f32 %v3770, %v3769
    %v3772 = vmul.f32 0.5, %v3771
    %v3773 = vsub.f32 1.5, %v3772
    %v3774 = vmul.f32 %v3769, %v3773
    %vm3775 = vweird.f32 %v3765
    %vm3776 = vweird.f32 %v3769
    %vm3777 = vmor %vm3775, %vm3776
    %v3778 = vsel %vm3777, %v3769, %v3774
    %v3779 = vrsqrt.pop %v3766
    %v3780 = vmul.f32 %v3779, %v3766
    %v3781 = vmul.f32 %v3780, %v3779
    %v3782 = vmul.f32 0.5, %v3781
    %v3783 = vsub.f32 1.5, %v3782
    %v3784 = vmul.f32 %v3779, %v3783
    %vm3785 = vweird.f32 %v3766
    %vm3786 = vweird.f32 %v3779
    %vm3787 = vmor %vm3785, %vm3786
    %v3788 = vsel %vm3787, %v3779, %v3784
    %v3789 = vrsqrt.pop %v3767
    %v3790 = vmul.f32 %v3789, %v3767
    %v3791 = vmul.f32 %v3790, %v3789
    %v3792 = vmul.f32 0.5, %v3791
    %v3793 = vsub.f32 1.5, %v3792
    %v3794 = vmul.f32 %v3789, %v3793
    %vm3795 = vweird.f32 %v3767
    %vm3796 = vweird.f32 %v3789
    %vm3797 = vmor %vm3795, %vm3796
    %v3798 = vsel %vm3797, %v3789, %v3794
    %v3799 = vrsqrt.pop %v3768
    %v3800 = vmul.f32 %v3799, %v3768
    %v3801 = vmul.f32 %v3800, %v3799
    %v3802 = vmul.f32 0.5, %v3801
    %v3803 = vsub.f32 1.5, %v3802
    %v3804 = vmul.f32 %v3799, %v3803
    %vm3805 = vweird.f32 %v3768
    %vm3806 = vweird.f32 %v3799
    %vm3807 = vmor %vm3805, %vm3806
    %v3808 = vsel %vm3807, %v3799, %v3804
    %v3809 = vmul.f32 %v3745, %v3778
    %v3810 = vmul.f32 %v3746, %v3788
    %v3811 = vmul.f32 %v3747, %v3798
    %v3812 = vmul.f32 %v3748, %v3808
    %3813 = vset.pattern.permute.xlu0 8
    %3814 = vperm.xlu0 %3813, %v252
    %v3815 = vpop.permute.xlu0 %3814
    %3817 = vset.pattern.permute.xlu0 8
    %3818 = vperm.xlu0 %3817, %v253
    %v3819 = vpop.permute.xlu0 %3818
    %3821 = vset.pattern.permute.xlu0 8
    %3822 = vperm.xlu0 %3821, %v254
    %v3823 = vpop.permute.xlu0 %3822
    %3825 = vset.pattern.permute.xlu0 8
    %3826 = vperm.xlu0 %3825, %v255
    %v3827 = vpop.permute.xlu0 %3826
    %v3829 = vmul.f32 %v3815, %v3809
    %v3830 = vmul.f32 %v3819, %v3810
    %v3831 = vmul.f32 %v3823, %v3811
    %v3832 = vmul.f32 %v3827, %v3812
    %3833 = vset.pattern.permute.xlu0 8
    %3834 = vperm.xlu0 %3833, %v256
    %v3835 = vpop.permute.xlu0 %3834
    %3837 = vset.pattern.permute.xlu0 8
    %3838 = vperm.xlu0 %3837, %v257
    %v3839 = vpop.permute.xlu0 %3838
    %3841 = vset.pattern.permute.xlu0 8
    %3842 = vperm.xlu0 %3841, %v258
    %v3843 = vpop.permute.xlu0 %3842
    %3845 = vset.pattern.permute.xlu0 8
    %3846 = vperm.xlu0 %3845, %v259
    %v3847 = vpop.permute.xlu0 %3846
    %v3849 = vadd.f32 %v3829, %v3835
    %v3850 = vadd.f32 %v3830, %v3839
    %v3851 = vadd.f32 %v3831, %v3843
    %v3852 = vadd.f32 %v3832, %v3847
    %v3853 = vld [vmem:[#allocation2 + $0x40] sm:$0xff]
    %v3854 = vld [vmem:[#allocation2 + $0x48] sm:$0xff]
    %v3855 = vld [vmem:[#allocation2 + $0x108] sm:$0xff]
    %v3856 = vld [vmem:[#allocation2 + $0x110] sm:$0xff]
    %v3857 = vld [vmem:[#allocation2 + $0x1d0] sm:$0xff]
    %v3858 = vld [vmem:[#allocation2 + $0x1d8] sm:$0xff]
    %v3859 = vld [vmem:[#allocation2 + $0x298] sm:$0xff]
    %v3860 = vld [vmem:[#allocation2 + $0x2a0] sm:$0xff]
    %3865 = vrot.lane.b32.xlu0 %v3849, 2
    %v3866 = vpop.permute.xlu0 %3865
    %3867 = vrot.lane.b32.xlu0 %v3850, 2
    %v3868 = vpop.permute.xlu0 %3867
    %3869 = vrot.lane.b32.xlu0 %v3851, 2
    %v3870 = vpop.permute.xlu0 %3869
    %3871 = vrot.lane.b32.xlu0 %v3852, 2
    %v3872 = vpop.permute.xlu0 %3871
    %v3877 = vsel %vm452, 0.0, %v3866
    %v3878 = vsel %vm452, 0.0, %v3868
    %v3879 = vsel %vm452, 0.0, %v3870
    %v3880 = vsel %vm452, 0.0, %v3872
    %v3881 = vmul.f32 %v3877, %v2687
    %v3882 = vmul.f32 %v3878, %v2687
    %v3883 = vmul.f32 %v3879, %v2687
    %v3884 = vmul.f32 %v3880, %v2687
    %3885 = vrot.lane.b32.xlu0 %v3849, 1
    %v3886 = vpop.permute.xlu0 %3885
    %3887 = vrot.lane.b32.xlu0 %v3850, 1
    %v3888 = vpop.permute.xlu0 %3887
    %3889 = vrot.lane.b32.xlu0 %v3851, 1
    %v3890 = vpop.permute.xlu0 %3889
    %3891 = vrot.lane.b32.xlu0 %v3852, 1
    %v3892 = vpop.permute.xlu0 %3891
    %v3897 = vsel %vm493, 0.0, %v3886
    %v3898 = vsel %vm493, 0.0, %v3888
    %v3899 = vsel %vm493, 0.0, %v3890
    %v3900 = vsel %vm493, 0.0, %v3892
    %v3901 = vmul.f32 %v3897, %v2693
    %v3902 = vmul.f32 %v3898, %v2693
    %v3903 = vmul.f32 %v3899, %v2693
    %v3904 = vmul.f32 %v3900, %v2693
    %3905 = vrot.lane.b32.xlu0 %v3849, 127
    %v3906 = vpop.permute.xlu0 %3905
    %3907 = vrot.lane.b32.xlu0 %v3850, 127
    %v3908 = vpop.permute.xlu0 %3907
    %3909 = vrot.lane.b32.xlu0 %v3851, 127
    %v3910 = vpop.permute.xlu0 %3909
    %3911 = vrot.lane.b32.xlu0 %v3852, 127
    %v3912 = vpop.permute.xlu0 %3911
    %v3917 = vsel %vm534, %v3906, 0.0
    %v3918 = vsel %vm534, %v3908, 0.0
    %v3919 = vsel %vm534, %v3910, 0.0
    %v3920 = vsel %vm534, %v3912, 0.0
    %v3921 = vmul.f32 %v3917, %v2699
    %v3922 = vmul.f32 %v3918, %v2699
    %v3923 = vmul.f32 %v3919, %v2699
    %v3924 = vmul.f32 %v3920, %v2699
    %3925 = vrot.lane.b32.xlu0 %v3849, 126
    %v3926 = vpop.permute.xlu0 %3925
    %3927 = vrot.lane.b32.xlu0 %v3850, 126
    %v3928 = vpop.permute.xlu0 %3927
    %3929 = vrot.lane.b32.xlu0 %v3851, 126
    %v3930 = vpop.permute.xlu0 %3929
    %3931 = vrot.lane.b32.xlu0 %v3852, 126
    %v3932 = vpop.permute.xlu0 %3931
    %v3937 = vsel %vm575, %v3926, 0.0
    %v3938 = vsel %vm575, %v3928, 0.0
    %v3939 = vsel %vm575, %v3930, 0.0
    %v3940 = vsel %vm575, %v3932, 0.0
    %v3941 = vmul.f32 %v3937, %v2705
    %v3942 = vmul.f32 %v3938, %v2705
    %v3943 = vmul.f32 %v3939, %v2705
    %v3944 = vmul.f32 %v3940, %v2705
    %3945 = vset.pattern.permute.xlu0 7
    %3946 = vperm.xlu0 %3945, %v424
    %v3947 = vpop.permute.xlu0 %3946
    %3949 = vset.pattern.permute.xlu0 7
    %3950 = vperm.xlu0 %3949, %v425
    %v3951 = vpop.permute.xlu0 %3950
    %3953 = vset.pattern.permute.xlu0 7
    %3954 = vperm.xlu0 %3953, %v426
    %v3955 = vpop.permute.xlu0 %3954
    %3957 = vset.pattern.permute.xlu0 7
    %3958 = vperm.xlu0 %3957, %v427
    %v3959 = vpop.permute.xlu0 %3958
    %3969 = vrot.lane.b32.xlu0 %v3853, 32
    %v3970 = vpop.permute.xlu0 %3969
    %3971 = vrot.lane.b32.xlu0 %v3854, 32
    %v3972 = vpop.permute.xlu0 %3971
    %3973 = vrot.lane.b32.xlu0 %v3855, 32
    %v3974 = vpop.permute.xlu0 %3973
    %3975 = vrot.lane.b32.xlu0 %v3856, 32
    %v3976 = vpop.permute.xlu0 %3975
    %3977 = vrot.lane.b32.xlu0 %v3857, 32
    %v3978 = vpop.permute.xlu0 %3977
    %3979 = vrot.lane.b32.xlu0 %v3858, 32
    %v3980 = vpop.permute.xlu0 %3979
    %3981 = vrot.lane.b32.xlu0 %v3859, 32
    %v3982 = vpop.permute.xlu0 %3981
    %3983 = vrot.lane.b32.xlu0 %v3860, 32
    %v3984 = vpop.permute.xlu0 %3983
    %v3985 = vsel %vm181, %v3970, %v3972
    %v3986 = vsel %vm181, %v3974, %v3976
    %v3987 = vsel %vm181, %v3978, %v3980
    %v3988 = vsel %vm181, %v3982, %v3984
    %v3993 = vsel %vm181, %v3972, 0
    %v3995 = vsel %vm181, %v3976, 0
    %v3997 = vsel %vm181, %v3980, 0
    %v3999 = vsel %vm181, %v3984, 0
    %4001 = vmatpush.msra.mxu0 %v3924
    %4002 = vmatpush.msra.mxu0 %v3923
    %4003 = vmatpush.msra.mxu0 %v3922
    %4004 = vmatpush.msra.mxu0 %v3921
    %4005 = vmatpush.msra.mxu0 %v3852
    %4006 = vmatpush.msra.mxu0 %v3851
    %4007 = vmatpush.msra.mxu0 %v3850
    %4008 = vmatpush.msra.mxu0 %v3849
    %4009 = vmatpush.msra.mxu0 %v3904
    %4010 = vmatpush.msra.mxu0 %v3903
    %4011 = vmatpush.msra.mxu0 %v3902
    %4012 = vmatpush.msra.mxu0 %v3901
    %4013 = vmatpush.msra.mxu0 %v3884
    %4014 = vmatpush.msra.mxu0 %v3883
    %4015 = vmatpush.msra.mxu0 %v3882
    %4016 = vmatpush.msra.mxu0 %v3881
    %4017 = vmatmul.f32.gmra.mxu0 %v3985
    %v4018 = vpop.f32.mrf.mxu0
    %v4019 = vadd.f32 %v3947, %v4018
    %4020 = vmatmul.f32.gmra.mxu0 %v3986
    %v4021 = vpop.f32.mrf.mxu0
    %v4022 = vadd.f32 %v3951, %v4021
    %4023 = vmatmul.f32.gmra.mxu0 %v3987
    %v4024 = vpop.f32.mrf.mxu0
    %v4025 = vadd.f32 %v3955, %v4024
    %4026 = vmatmul.f32.gmra.mxu0 %v3988
    %v4027 = vpop.f32.mrf.mxu0
    %v4028 = vadd.f32 %v3959, %v4027
    %4029 = vdwg.mxu0
    %4030 = vmatpush.msra.mxu0 0.0
    %4031 = vmatpush.msra.mxu0 0.0
    %4032 = vmatpush.msra.mxu0 0.0
    %4033 = vmatpush.msra.mxu0 0.0
    %4034 = vmatpush.msra.mxu0 0.0
    %4035 = vmatpush.msra.mxu0 0.0
    %4036 = vmatpush.msra.mxu0 0.0
    %4037 = vmatpush.msra.mxu0 0.0
    %4038 = vmatpush.msra.mxu0 0.0
    %4039 = vmatpush.msra.mxu0 0.0
    %4040 = vmatpush.msra.mxu0 0.0
    %4041 = vmatpush.msra.mxu0 0.0
    %4042 = vmatpush.msra.mxu0 %v3944
    %4043 = vmatpush.msra.mxu0 %v3943
    %4044 = vmatpush.msra.mxu0 %v3942
    %4045 = vmatpush.msra.mxu0 %v3941
    %4046 = vmatmul.f32.gmra.mxu0 %v3993
    %v4047 = vpop.f32.mrf.mxu0
    %v4048 = vadd.f32 %v4019, %v4047
    %4049 = vmatmul.f32.gmra.mxu0 %v3995
    %v4050 = vpop.f32.mrf.mxu0
    %v4051 = vadd.f32 %v4022, %v4050
    %4052 = vmatmul.f32.gmra.mxu0 %v3997
    %v4053 = vpop.f32.mrf.mxu0
    %v4054 = vadd.f32 %v4025, %v4053
    %4055 = vmatmul.f32.gmra.mxu0 %v3999
    %v4056 = vpop.f32.mrf.mxu0
    %v4057 = vadd.f32 %v4028, %v4056
    %4058 = vdwg.mxu0
    %v4059 = vmax.f32 %v4048, 0.0
    %v4060 = vmax.f32 %v4051, 0.0
    %v4061 = vmax.f32 %v4054, 0.0
    %v4062 = vmax.f32 %v4057, 0.0
    %4063 = vadd.xlane.f32.xlu0 %v4059
    %v4064 = vpop.xlane.xlu0 %4063
    %4065 = vadd.xlane.f32.xlu0 %v4060
    %v4066 = vpop.xlane.xlu0 %4065
    %4067 = vadd.xlane.f32.xlu0 %v4061
    %v4068 = vpop.xlane.xlu0 %4067
    %4069 = vadd.xlane.f32.xlu0 %v4062
    %v4070 = vpop.xlane.xlu0 %4069
    %v4071 = vmul.f32 %v4064, 0.0078125
    %v4072 = vmul.f32 %v4066, 0.0078125
    %v4073 = vmul.f32 %v4068, 0.0078125
    %v4074 = vmul.f32 %v4070, 0.0078125
    %v4075 = vsub.f32 %v4059, %v4071
    %v4076 = vsub.f32 %v4060, %v4072
    %v4077 = vsub.f32 %v4061, %v4073
    %v4078 = vsub.f32 %v4062, %v4074
    %v4079 = vmul.f32 %v4075, %v4075
    %v4080 = vmul.f32 %v4076, %v4076
    %v4081 = vmul.f32 %v4077, %v4077
    %v4082 = vmul.f32 %v4078, %v4078
    %4083 = vadd.xlane.f32.xlu0 %v4079
    %v4084 = vpop.xlane.xlu0 %4083
    %4085 = vadd.xlane.f32.xlu0 %v4080
    %v4086 = vpop.xlane.xlu0 %4085
    %4087 = vadd.xlane.f32.xlu0 %v4081
    %v4088 = vpop.xlane.xlu0 %4087
    %4089 = vadd.xlane.f32.xlu0 %v4082
    %v4090 = vpop.xlane.xlu0 %4089
    %v4091 = vmul.f32 %v4084, 0.0078125
    %v4092 = vmul.f32 %v4086, 0.0078125
    %v4093 = vmul.f32 %v4088, 0.0078125
    %v4094 = vmul.f32 %v4090, 0.0078125
    %v4095 = vadd.f32 %v4091, 1e-05
    %v4096 = vadd.f32 %v4092, 1e-05
    %v4097 = vadd.f32 %v4093, 1e-05
    %v4098 = vadd.f32 %v4094, 1e-05
    %v4099 = vrsqrt.pop %v4095
    %v4100 = vmul.f32 %v4099, %v4095
    %v4101 = vmul.f32 %v4100, %v4099
    %v4102 = vmul.f32 0.5, %v4101
    %v4103 = vsub.f32 1.5, %v4102
    %v4104 = vmul.f32 %v4099, %v4103
    %vm4105 = vweird.f32 %v4095
    %vm4106 = vweird.f32 %v4099
    %vm4107 = vmor %vm4105, %vm4106
    %v4108 = vsel %vm4107, %v4099, %v4104
    %v4109 = vrsqrt.pop %v4096
    %v4110 = vmul.f32 %v4109, %v4096
    %v4111 = vmul.f32 %v4110, %v4109
    %v4112 = vmul.f32 0.5, %v4111
    %v4113 = vsub.f32 1.5, %v4112
    %v4114 = vmul.f32 %v4109, %v4113
    %vm4115 = vweird.f32 %v4096
    %vm4116 = vweird.f32 %v4109
    %vm4117 = vmor %vm4115, %vm4116
    %v4118 = vsel %vm4117, %v4109, %v4114
    %v4119 = vrsqrt.pop %v4097
    %v4120 = vmul.f32 %v4119, %v4097
    %v4121 = vmul.f32 %v4120, %v4119
    %v4122 = vmul.f32 0.5, %v4121
    %v4123 = vsub.f32 1.5, %v4122
    %v4124 = vmul.f32 %v4119, %v4123
    %vm4125 = vweird.f32 %v4097
    %vm4126 = vweird.f32 %v4119
    %vm4127 = vmor %vm4125, %vm4126
    %v4128 = vsel %vm4127, %v4119, %v4124
    %v4129 = vrsqrt.pop %v4098
    %v4130 = vmul.f32 %v4129, %v4098
    %v4131 = vmul.f32 %v4130, %v4129
    %v4132 = vmul.f32 0.5, %v4131
    %v4133 = vsub.f32 1.5, %v4132
    %v4134 = vmul.f32 %v4129, %v4133
    %vm4135 = vweird.f32 %v4098
    %vm4136 = vweird.f32 %v4129
    %vm4137 = vmor %vm4135, %vm4136
    %v4138 = vsel %vm4137, %v4129, %v4134
    %v4139 = vmul.f32 %v4075, %v4108
    %v4140 = vmul.f32 %v4076, %v4118
    %v4141 = vmul.f32 %v4077, %v4128
    %v4142 = vmul.f32 %v4078, %v4138
    %4143 = vset.pattern.permute.xlu0 9
    %4144 = vperm.xlu0 %4143, %v252
    %v4145 = vpop.permute.xlu0 %4144
    %4147 = vset.pattern.permute.xlu0 9
    %4148 = vperm.xlu0 %4147, %v253
    %v4149 = vpop.permute.xlu0 %4148
    %4151 = vset.pattern.permute.xlu0 9
    %4152 = vperm.xlu0 %4151, %v254
    %v4153 = vpop.permute.xlu0 %4152
    %4155 = vset.pattern.permute.xlu0 9
    %4156 = vperm.xlu0 %4155, %v255
    %v4157 = vpop.permute.xlu0 %4156
    %v4159 = vmul.f32 %v4145, %v4139
    %v4160 = vmul.f32 %v4149, %v4140
    %v4161 = vmul.f32 %v4153, %v4141
    %v4162 = vmul.f32 %v4157, %v4142
    %4163 = vset.pattern.permute.xlu0 9
    %4164 = vperm.xlu0 %4163, %v256
    %v4165 = vpop.permute.xlu0 %4164
    %4167 = vset.pattern.permute.xlu0 9
    %4168 = vperm.xlu0 %4167, %v257
    %v4169 = vpop.permute.xlu0 %4168
    %4171 = vset.pattern.permute.xlu0 9
    %4172 = vperm.xlu0 %4171, %v258
    %v4173 = vpop.permute.xlu0 %4172
    %4175 = vset.pattern.permute.xlu0 9
    %4176 = vperm.xlu0 %4175, %v259
    %v4177 = vpop.permute.xlu0 %4176
    %v4179 = vadd.f32 %v4159, %v4165
    %v4180 = vadd.f32 %v4160, %v4169
    %v4181 = vadd.f32 %v4161, %v4173
    %v4182 = vadd.f32 %v4162, %v4177
    %v4183 = vadd.f32 %v4179, %v3519
    %v4184 = vadd.f32 %v4180, %v3520
    %v4185 = vadd.f32 %v4181, %v3521
    %v4186 = vadd.f32 %v4182, %v3522
    %4191 = vrot.lane.b32.xlu0 %v4183, 127
    %v4192 = vpop.permute.xlu0 %4191
    %4193 = vrot.lane.b32.xlu0 %v4184, 127
    %v4194 = vpop.permute.xlu0 %4193
    %4195 = vrot.lane.b32.xlu0 %v4185, 127
    %v4196 = vpop.permute.xlu0 %4195
    %4197 = vrot.lane.b32.xlu0 %v4186, 127
    %v4198 = vpop.permute.xlu0 %4197
    %v4203 = vsel %vm534, %v4192, 0.0
    %v4204 = vsel %vm534, %v4194, 0.0
    %v4205 = vsel %vm534, %v4196, 0.0
    %v4206 = vsel %vm534, %v4198, 0.0
    %v4207 = vmax.f32 %v4183, %v4203
    %v4208 = vmax.f32 %v4184, %v4204
    %v4209 = vmax.f32 %v4185, %v4205
    %v4210 = vmax.f32 %v4186, %v4206
    %4211 = vmatpush.msra.mxu0 %v2595
    %4212 = vmatpush.msra.mxu0 %v2594
    %4213 = vmatpush.msra.mxu0 %v2593
    %4214 = vmatpush.msra.mxu0 %v2592
    %4215 = vmatpush.msra.mxu0 %v2591
    %4216 = vmatpush.msra.mxu0 %v2590
    %4217 = vmatpush.msra.mxu0 %v2589
    %4218 = vmatpush.msra.mxu0 %v2588
    %4219 = vmatpush.msra.mxu0 %v2587
    %4220 = vmatpush.msra.mxu0 %v2586
    %4221 = vmatpush.msra.mxu0 %v2585
    %4222 = vmatpush.msra.mxu0 %v2584
    %4223 = vmatpush.msra.mxu0 %v2583
    %4224 = vmatpush.msra.mxu0 %v2582
    %4225 = vmatpush.msra.mxu0 %v2581
    %4226 = vmatpush.msra.mxu0 %v2580
    %4227 = vmatmul.f32.gmra.mxu0 %v4207
    %v4228 = vpop.f32.mrf.mxu0
    %v4229 = vadd.f32 0.0, %v4228
    %4230 = vmatmul.f32.gmra.mxu0 %v4208
    %v4231 = vpop.f32.mrf.mxu0
    %v4232 = vadd.f32 0.0, %v4231
    %4233 = vmatmul.f32.gmra.mxu0 %v4209
    %v4234 = vpop.f32.mrf.mxu0
    %v4235 = vadd.f32 0.0, %v4234
    %4236 = vmatmul.f32.gmra.mxu0 %v4210
    %v4237 = vpop.f32.mrf.mxu0
    %v4238 = vadd.f32 0.0, %v4237
    %4239 = vdwg.mxu0
    %vm4240 = vcmp.lt.s32.totalorder %v79, 0
    %v4241 = vsub.s32 0, %v79
    %v4242 = vsel %vm4240, %v4241, %v79
    %v4243 = vshrl.u32 %v4242, 5
    %v4244 = vand.u32 %v4242, 31
    %v4245 = vsub.s32 0, %v4244
    %v4246 = vsel %vm4240, %v4245, %v4244
    %vm4247 = vcmp.ne.s32.totalorder %v4246, 0
    %vm4248 = vcmp.lt.s32.totalorder %v4246, 0
    %vm4249 = vmand %vm4248, %vm4247
    %v4250 = vadd.s32 %v4246, 32
    %v4251 = vsel %vm4249, %v4250, %v4246
    %v4252 = vadd.s32 %v4251, 4294967294
    %vm4253 = vcmp.ge.s32.totalorder %v4252, 0
    %vm4254 = vcmp.lt.s32.totalorder %v4252, 32
    %vm4255 = vmand %vm4253, %vm4254
    %v4256 = vsel %vm4255, 1, 0
    %v4257 = vcvt.s32.f32 %v4256
    %v4258 = vadd.s32 %v4251, 4294967295
    %vm4259 = vcmp.ge.s32.totalorder %v4258, 0
    %vm4260 = vcmp.lt.s32.totalorder %v4258, 32
    %vm4261 = vmand %vm4259, %vm4260
    %v4262 = vsel %vm4261, 1, 0
    %v4263 = vcvt.s32.f32 %v4262
    %v4264 = vadd.s32 %v4251, 1
    %vm4265 = vcmp.ge.s32.totalorder %v4264, 0
    %vm4266 = vcmp.lt.s32.totalorder %v4264, 32
    %vm4267 = vmand %vm4265, %vm4266
    %v4268 = vsel %vm4267, 1, 0
    %v4269 = vcvt.s32.f32 %v4268
    %v4270 = vadd.s32 %v4251, 2
    %vm4271 = vcmp.ge.s32.totalorder %v4270, 0
    %vm4272 = vcmp.lt.s32.totalorder %v4270, 32
    %vm4273 = vmand %vm4271, %vm4272
    %v4274 = vsel %vm4273, 1, 0
    %v4275 = vcvt.s32.f32 %v4274
    %4276 = vset.pattern.permute.xlu0 2
    %4277 = vperm.xlu0 %4276, %v157
    %v4278 = vpop.permute.xlu0 %4277
    %4280 = vset.pattern.permute.xlu0 2
    %4281 = vperm.xlu0 %4280, %v158
    %v4282 = vpop.permute.xlu0 %4281
    %4284 = vset.pattern.permute.xlu0 2
    %4285 = vperm.xlu0 %4284, %v159
    %v4286 = vpop.permute.xlu0 %4285
    %4288 = vset.pattern.permute.xlu0 2
    %4289 = vperm.xlu0 %4288, %v160
    %v4290 = vpop.permute.xlu0 %4289
    %4292 = vrot.lane.b32.xlu0 %v153, 64
    %v4293 = vpop.permute.xlu0 %4292
    %4294 = vrot.lane.b32.xlu0 %v154, 64
    %v4295 = vpop.permute.xlu0 %4294
    %4296 = vrot.lane.b32.xlu0 %v155, 64
    %v4297 = vpop.permute.xlu0 %4296
    %4298 = vrot.lane.b32.xlu0 %v156, 64
    %v4299 = vpop.permute.xlu0 %4298
    %v4300 = vsel %vm181, %v4293, 0
    %v4302 = vsel %vm181, %v4295, 0
    %v4304 = vsel %vm181, %v4297, 0
    %v4306 = vsel %vm181, %v4299, 0
    %4308 = vmatpush.msra.mxu0 0.0
    %4309 = vmatpush.msra.mxu0 0.0
    %4310 = vmatpush.msra.mxu0 0.0
    %4311 = vmatpush.msra.mxu0 0.0
    %4312 = vmatpush.msra.mxu0 0.0
    %4313 = vmatpush.msra.mxu0 0.0
    %4314 = vmatpush.msra.mxu0 0.0
    %4315 = vmatpush.msra.mxu0 0.0
    %4316 = vmatpush.msra.mxu0 0.0
    %4317 = vmatpush.msra.mxu0 0.0
    %4318 = vmatpush.msra.mxu0 0.0
    %4319 = vmatpush.msra.mxu0 0.0
    %4320 = vmatpush.msra.mxu0 %v4238
    %4321 = vmatpush.msra.mxu0 %v4235
    %4322 = vmatpush.msra.mxu0 %v4232
    %4323 = vmatpush.msra.mxu0 %v4229
    %4324 = vmatmul.f32.gmra.mxu0 %v4300
    %v4325 = vpop.f32.mrf.mxu0
    %v4326 = vadd.f32 %v4278, %v4325
    %4327 = vmatmul.f32.gmra.mxu0 %v4302
    %v4328 = vpop.f32.mrf.mxu0
    %v4329 = vadd.f32 %v4282, %v4328
    %4330 = vmatmul.f32.gmra.mxu0 %v4304
    %v4331 = vpop.f32.mrf.mxu0
    %v4332 = vadd.f32 %v4286, %v4331
    %4333 = vmatmul.f32.gmra.mxu0 %v4306
    %v4334 = vpop.f32.mrf.mxu0
    %v4335 = vadd.f32 %v4290, %v4334
    %4336 = vdwg.mxu0
    %v4337 = vsel %vm1633, %v4326, 0.0
    %4338 = vadd.xlane.f32.xlu0 %v4337
    %v4339 = vpop.xlane.xlu0 %4338
    %v4340 = vsel %vm1633, %v4329, 0.0
    %4341 = vadd.xlane.f32.xlu0 %v4340
    %v4342 = vpop.xlane.xlu0 %4341
    %v4343 = vsel %vm1633, %v4332, 0.0
    %4344 = vadd.xlane.f32.xlu0 %v4343
    %v4345 = vpop.xlane.xlu0 %4344
    %v4346 = vsel %vm1633, %v4335, 0.0
    %4347 = vadd.xlane.f32.xlu0 %v4346
    %v4348 = vpop.xlane.xlu0 %4347
    %v4349 = vmul.f32 %v4339, 0.015625
    %v4350 = vmul.f32 %v4342, 0.015625
    %v4351 = vmul.f32 %v4345, 0.015625
    %v4352 = vmul.f32 %v4348, 0.015625
    %v4353 = vsub.f32 %v4326, %v4349
    %v4354 = vsub.f32 %v4329, %v4350
    %v4355 = vsub.f32 %v4332, %v4351
    %v4356 = vsub.f32 %v4335, %v4352
    %v4357 = vmul.f32 %v4353, %v4353
    %v4358 = vmul.f32 %v4354, %v4354
    %v4359 = vmul.f32 %v4355, %v4355
    %v4360 = vmul.f32 %v4356, %v4356
    %v4361 = vsel %vm1633, %v4357, 0.0
    %4362 = vadd.xlane.f32.xlu0 %v4361
    %v4363 = vpop.xlane.xlu0 %4362
    %v4364 = vsel %vm1633, %v4358, 0.0
    %4365 = vadd.xlane.f32.xlu0 %v4364
    %v4366 = vpop.xlane.xlu0 %4365
    %v4367 = vsel %vm1633, %v4359, 0.0
    %4368 = vadd.xlane.f32.xlu0 %v4367
    %v4369 = vpop.xlane.xlu0 %4368
    %v4370 = vsel %vm1633, %v4360, 0.0
    %4371 = vadd.xlane.f32.xlu0 %v4370
    %v4372 = vpop.xlane.xlu0 %4371
    %v4373 = vmul.f32 %v4363, 0.015625
    %v4374 = vmul.f32 %v4366, 0.015625
    %v4375 = vmul.f32 %v4369, 0.015625
    %v4376 = vmul.f32 %v4372, 0.015625
    %v4377 = vadd.f32 %v4373, 1e-05
    %v4378 = vadd.f32 %v4374, 1e-05
    %v4379 = vadd.f32 %v4375, 1e-05
    %v4380 = vadd.f32 %v4376, 1e-05
    %v4381 = vrsqrt.pop %v4377
    %v4382 = vmul.f32 %v4381, %v4377
    %v4383 = vmul.f32 %v4382, %v4381
    %v4384 = vmul.f32 0.5, %v4383
    %v4385 = vsub.f32 1.5, %v4384
    %v4386 = vmul.f32 %v4381, %v4385
    %vm4387 = vweird.f32 %v4377
    %vm4388 = vweird.f32 %v4381
    %vm4389 = vmor %vm4387, %vm4388
    %v4390 = vsel %vm4389, %v4381, %v4386
    %v4391 = vrsqrt.pop %v4378
    %v4392 = vmul.f32 %v4391, %v4378
    %v4393 = vmul.f32 %v4392, %v4391
    %v4394 = vmul.f32 0.5, %v4393
    %v4395 = vsub.f32 1.5, %v4394
    %v4396 = vmul.f32 %v4391, %v4395
    %vm4397 = vweird.f32 %v4378
    %vm4398 = vweird.f32 %v4391
    %vm4399 = vmor %vm4397, %vm4398
    %v4400 = vsel %vm4399, %v4391, %v4396
    %v4401 = vrsqrt.pop %v4379
    %v4402 = vmul.f32 %v4401, %v4379
    %v4403 = vmul.f32 %v4402, %v4401
    %v4404 = vmul.f32 0.5, %v4403
    %v4405 = vsub.f32 1.5, %v4404
    %v4406 = vmul.f32 %v4401, %v4405
    %vm4407 = vweird.f32 %v4379
    %vm4408 = vweird.f32 %v4401
    %vm4409 = vmor %vm4407, %vm4408
    %v4410 = vsel %vm4409, %v4401, %v4406
    %v4411 = vrsqrt.pop %v4380
    %v4412 = vmul.f32 %v4411, %v4380
    %v4413 = vmul.f32 %v4412, %v4411
    %v4414 = vmul.f32 0.5, %v4413
    %v4415 = vsub.f32 1.5, %v4414
    %v4416 = vmul.f32 %v4411, %v4415
    %vm4417 = vweird.f32 %v4380
    %vm4418 = vweird.f32 %v4411
    %vm4419 = vmor %vm4417, %vm4418
    %v4420 = vsel %vm4419, %v4411, %v4416
    %v4421 = vmul.f32 %v4353, %v4390
    %v4422 = vmul.f32 %v4354, %v4400
    %v4423 = vmul.f32 %v4355, %v4410
    %v4424 = vmul.f32 %v4356, %v4420
    %4425 = vset.pattern.permute.xlu0 10
    %4426 = vperm.xlu0 %4425, %v252
    %v4427 = vpop.permute.xlu0 %4426
    %4429 = vset.pattern.permute.xlu0 10
    %4430 = vperm.xlu0 %4429, %v253
    %v4431 = vpop.permute.xlu0 %4430
    %4433 = vset.pattern.permute.xlu0 10
    %4434 = vperm.xlu0 %4433, %v254
    %v4435 = vpop.permute.xlu0 %4434
    %4437 = vset.pattern.permute.xlu0 10
    %4438 = vperm.xlu0 %4437, %v255
    %v4439 = vpop.permute.xlu0 %4438
    %v4441 = vmul.f32 %v4427, %v4421
    %v4442 = vmul.f32 %v4431, %v4422
    %v4443 = vmul.f32 %v4435, %v4423
    %v4444 = vmul.f32 %v4439, %v4424
    %4445 = vset.pattern.permute.xlu0 10
    %4446 = vperm.xlu0 %4445, %v256
    %v4447 = vpop.permute.xlu0 %4446
    %4449 = vset.pattern.permute.xlu0 10
    %4450 = vperm.xlu0 %4449, %v257
    %v4451 = vpop.permute.xlu0 %4450
    %4453 = vset.pattern.permute.xlu0 10
    %4454 = vperm.xlu0 %4453, %v258
    %v4455 = vpop.permute.xlu0 %4454
    %4457 = vset.pattern.permute.xlu0 10
    %4458 = vperm.xlu0 %4457, %v259
    %v4459 = vpop.permute.xlu0 %4458
    %v4461 = vadd.f32 %v4441, %v4447
    %v4462 = vadd.f32 %v4442, %v4451
    %v4463 = vadd.f32 %v4443, %v4455
    %v4464 = vadd.f32 %v4444, %v4459
    %v4465 = vld [vmem:[#allocation2 + $0x50] sm:$0xff]
    %v4466 = vld [vmem:[#allocation2 + $0x58] sm:$0xff]
    %v4467 = vld [vmem:[#allocation2 + $0x118] sm:$0xff]
    %v4468 = vld [vmem:[#allocation2 + $0x120] sm:$0xff]
    %v4469 = vld [vmem:[#allocation2 + $0x1e0] sm:$0xff]
    %v4470 = vld [vmem:[#allocation2 + $0x1e8] sm:$0xff]
    %v4471 = vld [vmem:[#allocation2 + $0x2a8] sm:$0xff]
    %v4472 = vld [vmem:[#allocation2 + $0x2b0] sm:$0xff]
    %4477 = vrot.lane.b32.xlu0 %v4461, 2
    %v4478 = vpop.permute.xlu0 %4477
    %4479 = vrot.lane.b32.xlu0 %v4462, 2
    %v4480 = vpop.permute.xlu0 %4479
    %4481 = vrot.lane.b32.xlu0 %v4463, 2
    %v4482 = vpop.permute.xlu0 %4481
    %4483 = vrot.lane.b32.xlu0 %v4464, 2
    %v4484 = vpop.permute.xlu0 %4483
    %v4489 = vsel %vm452, 0.0, %v4478
    %v4490 = vsel %vm452, 0.0, %v4480
    %v4491 = vsel %vm452, 0.0, %v4482
    %v4492 = vsel %vm452, 0.0, %v4484
    %v4493 = vmul.f32 %v4489, %v4257
    %v4494 = vmul.f32 %v4490, %v4257
    %v4495 = vmul.f32 %v4491, %v4257
    %v4496 = vmul.f32 %v4492, %v4257
    %4497 = vrot.lane.b32.xlu0 %v4461, 1
    %v4498 = vpop.permute.xlu0 %4497
    %4499 = vrot.lane.b32.xlu0 %v4462, 1
    %v4500 = vpop.permute.xlu0 %4499
    %4501 = vrot.lane.b32.xlu0 %v4463, 1
    %v4502 = vpop.permute.xlu0 %4501
    %4503 = vrot.lane.b32.xlu0 %v4464, 1
    %v4504 = vpop.permute.xlu0 %4503
    %v4509 = vsel %vm493, 0.0, %v4498
    %v4510 = vsel %vm493, 0.0, %v4500
    %v4511 = vsel %vm493, 0.0, %v4502
    %v4512 = vsel %vm493, 0.0, %v4504
    %v4513 = vmul.f32 %v4509, %v4263
    %v4514 = vmul.f32 %v4510, %v4263
    %v4515 = vmul.f32 %v4511, %v4263
    %v4516 = vmul.f32 %v4512, %v4263
    %4517 = vrot.lane.b32.xlu0 %v4461, 127
    %v4518 = vpop.permute.xlu0 %4517
    %4519 = vrot.lane.b32.xlu0 %v4462, 127
    %v4520 = vpop.permute.xlu0 %4519
    %4521 = vrot.lane.b32.xlu0 %v4463, 127
    %v4522 = vpop.permute.xlu0 %4521
    %4523 = vrot.lane.b32.xlu0 %v4464, 127
    %v4524 = vpop.permute.xlu0 %4523
    %vm4529 = vcmask 515072
    %v4530 = vsel %vm4529, %v4518, 0.0
    %v4531 = vsel %vm4529, %v4520, 0.0
    %v4532 = vsel %vm4529, %v4522, 0.0
    %v4533 = vsel %vm4529, %v4524, 0.0
    %v4534 = vmul.f32 %v4530, %v4269
    %v4535 = vmul.f32 %v4531, %v4269
    %v4536 = vmul.f32 %v4532, %v4269
    %v4537 = vmul.f32 %v4533, %v4269
    %4538 = vrot.lane.b32.xlu0 %v4461, 126
    %v4539 = vpop.permute.xlu0 %4538
    %4540 = vrot.lane.b32.xlu0 %v4462, 126
    %v4541 = vpop.permute.xlu0 %4540
    %4542 = vrot.lane.b32.xlu0 %v4463, 126
    %v4543 = vpop.permute.xlu0 %4542
    %4544 = vrot.lane.b32.xlu0 %v4464, 126
    %v4545 = vpop.permute.xlu0 %4544
    %vm4550 = vcmask 506880
    %v4551 = vsel %vm4550, %v4539, 0.0
    %v4552 = vsel %vm4550, %v4541, 0.0
    %v4553 = vsel %vm4550, %v4543, 0.0
    %v4554 = vsel %vm4550, %v4545, 0.0
    %v4555 = vmul.f32 %v4551, %v4275
    %v4556 = vmul.f32 %v4552, %v4275
    %v4557 = vmul.f32 %v4553, %v4275
    %v4558 = vmul.f32 %v4554, %v4275
    %4559 = vset.pattern.permute.xlu0 8
    %4560 = vperm.xlu0 %4559, %v424
    %v4561 = vpop.permute.xlu0 %4560
    %4563 = vset.pattern.permute.xlu0 8
    %4564 = vperm.xlu0 %4563, %v425
    %v4565 = vpop.permute.xlu0 %4564
    %4567 = vset.pattern.permute.xlu0 8
    %4568 = vperm.xlu0 %4567, %v426
    %v4569 = vpop.permute.xlu0 %4568
    %4571 = vset.pattern.permute.xlu0 8
    %4572 = vperm.xlu0 %4571, %v427
    %v4573 = vpop.permute.xlu0 %4572
    %v4576 = vsel %vm181, %v4466, 0
    %v4579 = vsel %vm181, %v4468, 0
    %v4582 = vsel %vm181, %v4470, 0
    %v4585 = vsel %vm181, %v4472, 0
    %4587 = vmatpush.msra.mxu0 %v4537
    %4588 = vmatpush.msra.mxu0 %v4536
    %4589 = vmatpush.msra.mxu0 %v4535
    %4590 = vmatpush.msra.mxu0 %v4534
    %4591 = vmatpush.msra.mxu0 %v4464
    %4592 = vmatpush.msra.mxu0 %v4463
    %4593 = vmatpush.msra.mxu0 %v4462
    %4594 = vmatpush.msra.mxu0 %v4461
    %4595 = vmatpush.msra.mxu0 %v4516
    %4596 = vmatpush.msra.mxu0 %v4515
    %4597 = vmatpush.msra.mxu0 %v4514
    %4598 = vmatpush.msra.mxu0 %v4513
    %4599 = vmatpush.msra.mxu0 %v4496
    %4600 = vmatpush.msra.mxu0 %v4495
    %4601 = vmatpush.msra.mxu0 %v4494
    %4602 = vmatpush.msra.mxu0 %v4493
    %4603 = vmatmul.f32.gmra.mxu0 %v4465
    %v4604 = vpop.f32.mrf.mxu0
    %v4605 = vadd.f32 %v4561, %v4604
    %4606 = vmatmul.f32.gmra.mxu0 %v4467
    %v4607 = vpop.f32.mrf.mxu0
    %v4608 = vadd.f32 %v4565, %v4607
    %4609 = vmatmul.f32.gmra.mxu0 %v4469
    %v4610 = vpop.f32.mrf.mxu0
    %v4611 = vadd.f32 %v4569, %v4610
    %4612 = vmatmul.f32.gmra.mxu0 %v4471
    %v4613 = vpop.f32.mrf.mxu0
    %v4614 = vadd.f32 %v4573, %v4613
    %4615 = vdwg.mxu0
    %4616 = vmatpush.msra.mxu0 0.0
    %4617 = vmatpush.msra.mxu0 0.0
    %4618 = vmatpush.msra.mxu0 0.0
    %4619 = vmatpush.msra.mxu0 0.0
    %4620 = vmatpush.msra.mxu0 0.0
    %4621 = vmatpush.msra.mxu0 0.0
    %4622 = vmatpush.msra.mxu0 0.0
    %4623 = vmatpush.msra.mxu0 0.0
    %4624 = vmatpush.msra.mxu0 0.0
    %4625 = vmatpush.msra.mxu0 0.0
    %4626 = vmatpush.msra.mxu0 0.0
    %4627 = vmatpush.msra.mxu0 0.0
    %4628 = vmatpush.msra.mxu0 %v4558
    %4629 = vmatpush.msra.mxu0 %v4557
    %4630 = vmatpush.msra.mxu0 %v4556
    %4631 = vmatpush.msra.mxu0 %v4555
    %4632 = vmatmul.f32.gmra.mxu0 %v4576
    %v4633 = vpop.f32.mrf.mxu0
    %v4634 = vadd.f32 %v4605, %v4633
    %4635 = vmatmul.f32.gmra.mxu0 %v4579
    %v4636 = vpop.f32.mrf.mxu0
    %v4637 = vadd.f32 %v4608, %v4636
    %4638 = vmatmul.f32.gmra.mxu0 %v4582
    %v4639 = vpop.f32.mrf.mxu0
    %v4640 = vadd.f32 %v4611, %v4639
    %4641 = vmatmul.f32.gmra.mxu0 %v4585
    %v4642 = vpop.f32.mrf.mxu0
    %v4643 = vadd.f32 %v4614, %v4642
    %4644 = vdwg.mxu0
    %v4645 = vmax.f32 %v4634, 0.0
    %v4646 = vmax.f32 %v4637, 0.0
    %v4647 = vmax.f32 %v4640, 0.0
    %v4648 = vmax.f32 %v4643, 0.0
    %v4649 = vsel %vm1633, %v4645, 0.0
    %4650 = vadd.xlane.f32.xlu0 %v4649
    %v4651 = vpop.xlane.xlu0 %4650
    %v4652 = vsel %vm1633, %v4646, 0.0
    %4653 = vadd.xlane.f32.xlu0 %v4652
    %v4654 = vpop.xlane.xlu0 %4653
    %v4655 = vsel %vm1633, %v4647, 0.0
    %4656 = vadd.xlane.f32.xlu0 %v4655
    %v4657 = vpop.xlane.xlu0 %4656
    %v4658 = vsel %vm1633, %v4648, 0.0
    %4659 = vadd.xlane.f32.xlu0 %v4658
    %v4660 = vpop.xlane.xlu0 %4659
    %v4661 = vmul.f32 %v4651, 0.015625
    %v4662 = vmul.f32 %v4654, 0.015625
    %v4663 = vmul.f32 %v4657, 0.015625
    %v4664 = vmul.f32 %v4660, 0.015625
    %v4665 = vsub.f32 %v4645, %v4661
    %v4666 = vsub.f32 %v4646, %v4662
    %v4667 = vsub.f32 %v4647, %v4663
    %v4668 = vsub.f32 %v4648, %v4664
    %v4669 = vmul.f32 %v4665, %v4665
    %v4670 = vmul.f32 %v4666, %v4666
    %v4671 = vmul.f32 %v4667, %v4667
    %v4672 = vmul.f32 %v4668, %v4668
    %v4673 = vsel %vm1633, %v4669, 0.0
    %4674 = vadd.xlane.f32.xlu0 %v4673
    %v4675 = vpop.xlane.xlu0 %4674
    %v4676 = vsel %vm1633, %v4670, 0.0
    %4677 = vadd.xlane.f32.xlu0 %v4676
    %v4678 = vpop.xlane.xlu0 %4677
    %v4679 = vsel %vm1633, %v4671, 0.0
    %4680 = vadd.xlane.f32.xlu0 %v4679
    %v4681 = vpop.xlane.xlu0 %4680
    %v4682 = vsel %vm1633, %v4672, 0.0
    %4683 = vadd.xlane.f32.xlu0 %v4682
    %v4684 = vpop.xlane.xlu0 %4683
    %v4685 = vmul.f32 %v4675, 0.015625
    %v4686 = vmul.f32 %v4678, 0.015625
    %v4687 = vmul.f32 %v4681, 0.015625
    %v4688 = vmul.f32 %v4684, 0.015625
    %v4689 = vadd.f32 %v4685, 1e-05
    %v4690 = vadd.f32 %v4686, 1e-05
    %v4691 = vadd.f32 %v4687, 1e-05
    %v4692 = vadd.f32 %v4688, 1e-05
    %v4693 = vrsqrt.pop %v4689
    %v4694 = vmul.f32 %v4693, %v4689
    %v4695 = vmul.f32 %v4694, %v4693
    %v4696 = vmul.f32 0.5, %v4695
    %v4697 = vsub.f32 1.5, %v4696
    %v4698 = vmul.f32 %v4693, %v4697
    %vm4699 = vweird.f32 %v4689
    %vm4700 = vweird.f32 %v4693
    %vm4701 = vmor %vm4699, %vm4700
    %v4702 = vsel %vm4701, %v4693, %v4698
    %v4703 = vrsqrt.pop %v4690
    %v4704 = vmul.f32 %v4703, %v4690
    %v4705 = vmul.f32 %v4704, %v4703
    %v4706 = vmul.f32 0.5, %v4705
    %v4707 = vsub.f32 1.5, %v4706
    %v4708 = vmul.f32 %v4703, %v4707
    %vm4709 = vweird.f32 %v4690
    %vm4710 = vweird.f32 %v4703
    %vm4711 = vmor %vm4709, %vm4710
    %v4712 = vsel %vm4711, %v4703, %v4708
    %v4713 = vrsqrt.pop %v4691
    %v4714 = vmul.f32 %v4713, %v4691
    %v4715 = vmul.f32 %v4714, %v4713
    %v4716 = vmul.f32 0.5, %v4715
    %v4717 = vsub.f32 1.5, %v4716
    %v4718 = vmul.f32 %v4713, %v4717
    %vm4719 = vweird.f32 %v4691
    %vm4720 = vweird.f32 %v4713
    %vm4721 = vmor %vm4719, %vm4720
    %v4722 = vsel %vm4721, %v4713, %v4718
    %v4723 = vrsqrt.pop %v4692
    %v4724 = vmul.f32 %v4723, %v4692
    %v4725 = vmul.f32 %v4724, %v4723
    %v4726 = vmul.f32 0.5, %v4725
    %v4727 = vsub.f32 1.5, %v4726
    %v4728 = vmul.f32 %v4723, %v4727
    %vm4729 = vweird.f32 %v4692
    %vm4730 = vweird.f32 %v4723
    %vm4731 = vmor %vm4729, %vm4730
    %v4732 = vsel %vm4731, %v4723, %v4728
    %v4733 = vmul.f32 %v4665, %v4702
    %v4734 = vmul.f32 %v4666, %v4712
    %v4735 = vmul.f32 %v4667, %v4722
    %v4736 = vmul.f32 %v4668, %v4732
    %4737 = vset.pattern.permute.xlu0 11
    %4738 = vperm.xlu0 %4737, %v252
    %v4739 = vpop.permute.xlu0 %4738
    %4741 = vset.pattern.permute.xlu0 11
    %4742 = vperm.xlu0 %4741, %v253
    %v4743 = vpop.permute.xlu0 %4742
    %4745 = vset.pattern.permute.xlu0 11
    %4746 = vperm.xlu0 %4745, %v254
    %v4747 = vpop.permute.xlu0 %4746
    %4749 = vset.pattern.permute.xlu0 11
    %4750 = vperm.xlu0 %4749, %v255
    %v4751 = vpop.permute.xlu0 %4750
    %v4753 = vmul.f32 %v4739, %v4733
    %v4754 = vmul.f32 %v4743, %v4734
    %v4755 = vmul.f32 %v4747, %v4735
    %v4756 = vmul.f32 %v4751, %v4736
    %4757 = vset.pattern.permute.xlu0 11
    %4758 = vperm.xlu0 %4757, %v256
    %v4759 = vpop.permute.xlu0 %4758
    %4761 = vset.pattern.permute.xlu0 11
    %4762 = vperm.xlu0 %4761, %v257
    %v4763 = vpop.permute.xlu0 %4762
    %4765 = vset.pattern.permute.xlu0 11
    %4766 = vperm.xlu0 %4765, %v258
    %v4767 = vpop.permute.xlu0 %4766
    %4769 = vset.pattern.permute.xlu0 11
    %4770 = vperm.xlu0 %4769, %v259
    %v4771 = vpop.permute.xlu0 %4770
    %v4773 = vadd.f32 %v4753, %v4759
    %v4774 = vadd.f32 %v4754, %v4763
    %v4775 = vadd.f32 %v4755, %v4767
    %v4776 = vadd.f32 %v4756, %v4771
    %v4777 = vld [vmem:[#allocation2 + $0x58] sm:$0xff]
    %v4778 = vld [vmem:[#allocation2 + $0x60] sm:$0xff]
    %v4779 = vld [vmem:[#allocation2 + $0x120] sm:$0xff]
    %v4780 = vld [vmem:[#allocation2 + $0x128] sm:$0xff]
    %v4781 = vld [vmem:[#allocation2 + $0x1e8] sm:$0xff]
    %v4782 = vld [vmem:[#allocation2 + $0x1f0] sm:$0xff]
    %v4783 = vld [vmem:[#allocation2 + $0x2b0] sm:$0xff]
    %v4784 = vld [vmem:[#allocation2 + $0x2b8] sm:$0xff]
    %4789 = vrot.lane.b32.xlu0 %v4773, 2
    %v4790 = vpop.permute.xlu0 %4789
    %4791 = vrot.lane.b32.xlu0 %v4774, 2
    %v4792 = vpop.permute.xlu0 %4791
    %4793 = vrot.lane.b32.xlu0 %v4775, 2
    %v4794 = vpop.permute.xlu0 %4793
    %4795 = vrot.lane.b32.xlu0 %v4776, 2
    %v4796 = vpop.permute.xlu0 %4795
    %v4801 = vsel %vm452, 0.0, %v4790
    %v4802 = vsel %vm452, 0.0, %v4792
    %v4803 = vsel %vm452, 0.0, %v4794
    %v4804 = vsel %vm452, 0.0, %v4796
    %v4805 = vmul.f32 %v4801, %v4257
    %v4806 = vmul.f32 %v4802, %v4257
    %v4807 = vmul.f32 %v4803, %v4257
    %v4808 = vmul.f32 %v4804, %v4257
    %4809 = vrot.lane.b32.xlu0 %v4773, 1
    %v4810 = vpop.permute.xlu0 %4809
    %4811 = vrot.lane.b32.xlu0 %v4774, 1
    %v4812 = vpop.permute.xlu0 %4811
    %4813 = vrot.lane.b32.xlu0 %v4775, 1
    %v4814 = vpop.permute.xlu0 %4813
    %4815 = vrot.lane.b32.xlu0 %v4776, 1
    %v4816 = vpop.permute.xlu0 %4815
    %v4821 = vsel %vm493, 0.0, %v4810
    %v4822 = vsel %vm493, 0.0, %v4812
    %v4823 = vsel %vm493, 0.0, %v4814
    %v4824 = vsel %vm493, 0.0, %v4816
    %v4825 = vmul.f32 %v4821, %v4263
    %v4826 = vmul.f32 %v4822, %v4263
    %v4827 = vmul.f32 %v4823, %v4263
    %v4828 = vmul.f32 %v4824, %v4263
    %4829 = vrot.lane.b32.xlu0 %v4773, 127
    %v4830 = vpop.permute.xlu0 %4829
    %4831 = vrot.lane.b32.xlu0 %v4774, 127
    %v4832 = vpop.permute.xlu0 %4831
    %4833 = vrot.lane.b32.xlu0 %v4775, 127
    %v4834 = vpop.permute.xlu0 %4833
    %4835 = vrot.lane.b32.xlu0 %v4776, 127
    %v4836 = vpop.permute.xlu0 %4835
    %v4841 = vsel %vm4529, %v4830, 0.0
    %v4842 = vsel %vm4529, %v4832, 0.0
    %v4843 = vsel %vm4529, %v4834, 0.0
    %v4844 = vsel %vm4529, %v4836, 0.0
    %v4845 = vmul.f32 %v4841, %v4269
    %v4846 = vmul.f32 %v4842, %v4269
    %v4847 = vmul.f32 %v4843, %v4269
    %v4848 = vmul.f32 %v4844, %v4269
    %4849 = vrot.lane.b32.xlu0 %v4773, 126
    %v4850 = vpop.permute.xlu0 %4849
    %4851 = vrot.lane.b32.xlu0 %v4774, 126
    %v4852 = vpop.permute.xlu0 %4851
    %4853 = vrot.lane.b32.xlu0 %v4775, 126
    %v4854 = vpop.permute.xlu0 %4853
    %4855 = vrot.lane.b32.xlu0 %v4776, 126
    %v4856 = vpop.permute.xlu0 %4855
    %v4861 = vsel %vm4550, %v4850, 0.0
    %v4862 = vsel %vm4550, %v4852, 0.0
    %v4863 = vsel %vm4550, %v4854, 0.0
    %v4864 = vsel %vm4550, %v4856, 0.0
    %v4865 = vmul.f32 %v4861, %v4275
    %v4866 = vmul.f32 %v4862, %v4275
    %v4867 = vmul.f32 %v4863, %v4275
    %v4868 = vmul.f32 %v4864, %v4275
    %4869 = vset.pattern.permute.xlu0 9
    %4870 = vperm.xlu0 %4869, %v424
    %v4871 = vpop.permute.xlu0 %4870
    %4873 = vset.pattern.permute.xlu0 9
    %4874 = vperm.xlu0 %4873, %v425
    %v4875 = vpop.permute.xlu0 %4874
    %4877 = vset.pattern.permute.xlu0 9
    %4878 = vperm.xlu0 %4877, %v426
    %v4879 = vpop.permute.xlu0 %4878
    %4881 = vset.pattern.permute.xlu0 9
    %4882 = vperm.xlu0 %4881, %v427
    %v4883 = vpop.permute.xlu0 %4882
    %4893 = vrot.lane.b32.xlu0 %v4777, 96
    %v4894 = vpop.permute.xlu0 %4893
    %4895 = vrot.lane.b32.xlu0 %v4778, 96
    %v4896 = vpop.permute.xlu0 %4895
    %4897 = vrot.lane.b32.xlu0 %v4779, 96
    %v4898 = vpop.permute.xlu0 %4897
    %4899 = vrot.lane.b32.xlu0 %v4780, 96
    %v4900 = vpop.permute.xlu0 %4899
    %4901 = vrot.lane.b32.xlu0 %v4781, 96
    %v4902 = vpop.permute.xlu0 %4901
    %4903 = vrot.lane.b32.xlu0 %v4782, 96
    %v4904 = vpop.permute.xlu0 %4903
    %4905 = vrot.lane.b32.xlu0 %v4783, 96
    %v4906 = vpop.permute.xlu0 %4905
    %4907 = vrot.lane.b32.xlu0 %v4784, 96
    %v4908 = vpop.permute.xlu0 %4907
    %v4909 = vsel %vm1120, %v4894, %v4896
    %v4910 = vsel %vm1120, %v4898, %v4900
    %v4911 = vsel %vm1120, %v4902, %v4904
    %v4912 = vsel %vm1120, %v4906, %v4908
    %v4917 = vsel %vm181, %v4896, 0
    %v4919 = vsel %vm181, %v4900, 0
    %v4921 = vsel %vm181, %v4904, 0
    %v4923 = vsel %vm181, %v4908, 0
    %4925 = vmatpush.msra.mxu0 %v4848
    %4926 = vmatpush.msra.mxu0 %v4847
    %4927 = vmatpush.msra.mxu0 %v4846
    %4928 = vmatpush.msra.mxu0 %v4845
    %4929 = vmatpush.msra.mxu0 %v4776
    %4930 = vmatpush.msra.mxu0 %v4775
    %4931 = vmatpush.msra.mxu0 %v4774
    %4932 = vmatpush.msra.mxu0 %v4773
    %4933 = vmatpush.msra.mxu0 %v4828
    %4934 = vmatpush.msra.mxu0 %v4827
    %4935 = vmatpush.msra.mxu0 %v4826
    %4936 = vmatpush.msra.mxu0 %v4825
    %4937 = vmatpush.msra.mxu0 %v4808
    %4938 = vmatpush.msra.mxu0 %v4807
    %4939 = vmatpush.msra.mxu0 %v4806
    %4940 = vmatpush.msra.mxu0 %v4805
    %4941 = vmatmul.f32.gmra.mxu0 %v4909
    %v4942 = vpop.f32.mrf.mxu0
    %v4943 = vadd.f32 %v4871, %v4942
    %4944 = vmatmul.f32.gmra.mxu0 %v4910
    %v4945 = vpop.f32.mrf.mxu0
    %v4946 = vadd.f32 %v4875, %v4945
    %4947 = vmatmul.f32.gmra.mxu0 %v4911
    %v4948 = vpop.f32.mrf.mxu0
    %v4949 = vadd.f32 %v4879, %v4948
    %4950 = vmatmul.f32.gmra.mxu0 %v4912
    %v4951 = vpop.f32.mrf.mxu0
    %v4952 = vadd.f32 %v4883, %v4951
    %4953 = vdwg.mxu0
    %4954 = vmatpush.msra.mxu0 0.0
    %4955 = vmatpush.msra.mxu0 0.0
    %4956 = vmatpush.msra.mxu0 0.0
    %4957 = vmatpush.msra.mxu0 0.0
    %4958 = vmatpush.msra.mxu0 0.0
    %4959 = vmatpush.msra.mxu0 0.0
    %4960 = vmatpush.msra.mxu0 0.0
    %4961 = vmatpush.msra.mxu0 0.0
    %4962 = vmatpush.msra.mxu0 0.0
    %4963 = vmatpush.msra.mxu0 0.0
    %4964 = vmatpush.msra.mxu0 0.0
    %4965 = vmatpush.msra.mxu0 0.0
    %4966 = vmatpush.msra.mxu0 %v4868
    %4967 = vmatpush.msra.mxu0 %v4867
    %4968 = vmatpush.msra.mxu0 %v4866
    %4969 = vmatpush.msra.mxu0 %v4865
    %4970 = vmatmul.f32.gmra.mxu0 %v4917
    %v4971 = vpop.f32.mrf.mxu0
    %v4972 = vadd.f32 %v4943, %v4971
    %4973 = vmatmul.f32.gmra.mxu0 %v4919
    %v4974 = vpop.f32.mrf.mxu0
    %v4975 = vadd.f32 %v4946, %v4974
    %4976 = vmatmul.f32.gmra.mxu0 %v4921
    %v4977 = vpop.f32.mrf.mxu0
    %v4978 = vadd.f32 %v4949, %v4977
    %4979 = vmatmul.f32.gmra.mxu0 %v4923
    %v4980 = vpop.f32.mrf.mxu0
    %v4981 = vadd.f32 %v4952, %v4980
    %4982 = vdwg.mxu0
    %v4983 = vmax.f32 %v4972, 0.0
    %v4984 = vmax.f32 %v4975, 0.0
    %v4985 = vmax.f32 %v4978, 0.0
    %v4986 = vmax.f32 %v4981, 0.0
    %v4987 = vsel %vm1633, %v4983, 0.0
    %4988 = vadd.xlane.f32.xlu0 %v4987
    %v4989 = vpop.xlane.xlu0 %4988
    %v4990 = vsel %vm1633, %v4984, 0.0
    %4991 = vadd.xlane.f32.xlu0 %v4990
    %v4992 = vpop.xlane.xlu0 %4991
    %v4993 = vsel %vm1633, %v4985, 0.0
    %4994 = vadd.xlane.f32.xlu0 %v4993
    %v4995 = vpop.xlane.xlu0 %4994
    %v4996 = vsel %vm1633, %v4986, 0.0
    %4997 = vadd.xlane.f32.xlu0 %v4996
    %v4998 = vpop.xlane.xlu0 %4997
    %v4999 = vmul.f32 %v4989, 0.015625
    %v5000 = vmul.f32 %v4992, 0.015625
    %v5001 = vmul.f32 %v4995, 0.015625
    %v5002 = vmul.f32 %v4998, 0.015625
    %v5003 = vsub.f32 %v4983, %v4999
    %v5004 = vsub.f32 %v4984, %v5000
    %v5005 = vsub.f32 %v4985, %v5001
    %v5006 = vsub.f32 %v4986, %v5002
    %v5007 = vmul.f32 %v5003, %v5003
    %v5008 = vmul.f32 %v5004, %v5004
    %v5009 = vmul.f32 %v5005, %v5005
    %v5010 = vmul.f32 %v5006, %v5006
    %v5011 = vsel %vm1633, %v5007, 0.0
    %5012 = vadd.xlane.f32.xlu0 %v5011
    %v5013 = vpop.xlane.xlu0 %5012
    %v5014 = vsel %vm1633, %v5008, 0.0
    %5015 = vadd.xlane.f32.xlu0 %v5014
    %v5016 = vpop.xlane.xlu0 %5015
    %v5017 = vsel %vm1633, %v5009, 0.0
    %5018 = vadd.xlane.f32.xlu0 %v5017
    %v5019 = vpop.xlane.xlu0 %5018
    %v5020 = vsel %vm1633, %v5010, 0.0
    %5021 = vadd.xlane.f32.xlu0 %v5020
    %v5022 = vpop.xlane.xlu0 %5021
    %v5023 = vmul.f32 %v5013, 0.015625
    %v5024 = vmul.f32 %v5016, 0.015625
    %v5025 = vmul.f32 %v5019, 0.015625
    %v5026 = vmul.f32 %v5022, 0.015625
    %v5027 = vadd.f32 %v5023, 1e-05
    %v5028 = vadd.f32 %v5024, 1e-05
    %v5029 = vadd.f32 %v5025, 1e-05
    %v5030 = vadd.f32 %v5026, 1e-05
    %v5031 = vrsqrt.pop %v5027
    %v5032 = vmul.f32 %v5031, %v5027
    %v5033 = vmul.f32 %v5032, %v5031
    %v5034 = vmul.f32 0.5, %v5033
    %v5035 = vsub.f32 1.5, %v5034
    %v5036 = vmul.f32 %v5031, %v5035
    %vm5037 = vweird.f32 %v5027
    %vm5038 = vweird.f32 %v5031
    %vm5039 = vmor %vm5037, %vm5038
    %v5040 = vsel %vm5039, %v5031, %v5036
    %v5041 = vrsqrt.pop %v5028
    %v5042 = vmul.f32 %v5041, %v5028
    %v5043 = vmul.f32 %v5042, %v5041
    %v5044 = vmul.f32 0.5, %v5043
    %v5045 = vsub.f32 1.5, %v5044
    %v5046 = vmul.f32 %v5041, %v5045
    %vm5047 = vweird.f32 %v5028
    %vm5048 = vweird.f32 %v5041
    %vm5049 = vmor %vm5047, %vm5048
    %v5050 = vsel %vm5049, %v5041, %v5046
    %v5051 = vrsqrt.pop %v5029
    %v5052 = vmul.f32 %v5051, %v5029
    %v5053 = vmul.f32 %v5052, %v5051
    %v5054 = vmul.f32 0.5, %v5053
    %v5055 = vsub.f32 1.5, %v5054
    %v5056 = vmul.f32 %v5051, %v5055
    %vm5057 = vweird.f32 %v5029
    %vm5058 = vweird.f32 %v5051
    %vm5059 = vmor %vm5057, %vm5058
    %v5060 = vsel %vm5059, %v5051, %v5056
    %v5061 = vrsqrt.pop %v5030
    %v5062 = vmul.f32 %v5061, %v5030
    %v5063 = vmul.f32 %v5062, %v5061
    %v5064 = vmul.f32 0.5, %v5063
    %v5065 = vsub.f32 1.5, %v5064
    %v5066 = vmul.f32 %v5061, %v5065
    %vm5067 = vweird.f32 %v5030
    %vm5068 = vweird.f32 %v5061
    %vm5069 = vmor %vm5067, %vm5068
    %v5070 = vsel %vm5069, %v5061, %v5066
    %v5071 = vmul.f32 %v5003, %v5040
    %v5072 = vmul.f32 %v5004, %v5050
    %v5073 = vmul.f32 %v5005, %v5060
    %v5074 = vmul.f32 %v5006, %v5070
    %5075 = vset.pattern.permute.xlu0 12
    %5076 = vperm.xlu0 %5075, %v252
    %v5077 = vpop.permute.xlu0 %5076
    %5079 = vset.pattern.permute.xlu0 12
    %5080 = vperm.xlu0 %5079, %v253
    %v5081 = vpop.permute.xlu0 %5080
    %5083 = vset.pattern.permute.xlu0 12
    %5084 = vperm.xlu0 %5083, %v254
    %v5085 = vpop.permute.xlu0 %5084
    %5087 = vset.pattern.permute.xlu0 12
    %5088 = vperm.xlu0 %5087, %v255
    %v5089 = vpop.permute.xlu0 %5088
    %v5091 = vmul.f32 %v5077, %v5071
    %v5092 = vmul.f32 %v5081, %v5072
    %v5093 = vmul.f32 %v5085, %v5073
    %v5094 = vmul.f32 %v5089, %v5074
    %5095 = vset.pattern.permute.xlu0 12
    %5096 = vperm.xlu0 %5095, %v256
    %v5097 = vpop.permute.xlu0 %5096
    %5099 = vset.pattern.permute.xlu0 12
    %5100 = vperm.xlu0 %5099, %v257
    %v5101 = vpop.permute.xlu0 %5100
    %5103 = vset.pattern.permute.xlu0 12
    %5104 = vperm.xlu0 %5103, %v258
    %v5105 = vpop.permute.xlu0 %5104
    %5107 = vset.pattern.permute.xlu0 12
    %5108 = vperm.xlu0 %5107, %v259
    %v5109 = vpop.permute.xlu0 %5108
    %v5111 = vadd.f32 %v5091, %v5097
    %v5112 = vadd.f32 %v5092, %v5101
    %v5113 = vadd.f32 %v5093, %v5105
    %v5114 = vadd.f32 %v5094, %v5109
    %v5115 = vadd.f32 %v5111, %v4461
    %v5116 = vadd.f32 %v5112, %v4462
    %v5117 = vadd.f32 %v5113, %v4463
    %v5118 = vadd.f32 %v5114, %v4464
    %v5119 = vld [vmem:[#allocation2 + $0x60] sm:$0xff]
    %v5120 = vld [vmem:[#allocation2 + $0x68] sm:$0xff]
    %v5121 = vld [vmem:[#allocation2 + $0x128] sm:$0xff]
    %v5122 = vld [vmem:[#allocation2 + $0x130] sm:$0xff]
    %v5123 = vld [vmem:[#allocation2 + $0x1f0] sm:$0xff]
    %v5124 = vld [vmem:[#allocation2 + $0x1f8] sm:$0xff]
    %v5125 = vld [vmem:[#allocation2 + $0x2b8] sm:$0xff]
    %v5126 = vld [vmem:[#allocation2 + $0x2c0] sm:$0xff]
    %5131 = vrot.lane.b32.xlu0 %v5115, 2
    %v5132 = vpop.permute.xlu0 %5131
    %5133 = vrot.lane.b32.xlu0 %v5116, 2
    %v5134 = vpop.permute.xlu0 %5133
    %5135 = vrot.lane.b32.xlu0 %v5117, 2
    %v5136 = vpop.permute.xlu0 %5135
    %5137 = vrot.lane.b32.xlu0 %v5118, 2
    %v5138 = vpop.permute.xlu0 %5137
    %v5143 = vsel %vm452, 0.0, %v5132
    %v5144 = vsel %vm452, 0.0, %v5134
    %v5145 = vsel %vm452, 0.0, %v5136
    %v5146 = vsel %vm452, 0.0, %v5138
    %v5147 = vmul.f32 %v5143, %v4257
    %v5148 = vmul.f32 %v5144, %v4257
    %v5149 = vmul.f32 %v5145, %v4257
    %v5150 = vmul.f32 %v5146, %v4257
    %5151 = vrot.lane.b32.xlu0 %v5115, 1
    %v5152 = vpop.permute.xlu0 %5151
    %5153 = vrot.lane.b32.xlu0 %v5116, 1
    %v5154 = vpop.permute.xlu0 %5153
    %5155 = vrot.lane.b32.xlu0 %v5117, 1
    %v5156 = vpop.permute.xlu0 %5155
    %5157 = vrot.lane.b32.xlu0 %v5118, 1
    %v5158 = vpop.permute.xlu0 %5157
    %v5163 = vsel %vm493, 0.0, %v5152
    %v5164 = vsel %vm493, 0.0, %v5154
    %v5165 = vsel %vm493, 0.0, %v5156
    %v5166 = vsel %vm493, 0.0, %v5158
    %v5167 = vmul.f32 %v5163, %v4263
    %v5168 = vmul.f32 %v5164, %v4263
    %v5169 = vmul.f32 %v5165, %v4263
    %v5170 = vmul.f32 %v5166, %v4263
    %5171 = vrot.lane.b32.xlu0 %v5115, 127
    %v5172 = vpop.permute.xlu0 %5171
    %5173 = vrot.lane.b32.xlu0 %v5116, 127
    %v5174 = vpop.permute.xlu0 %5173
    %5175 = vrot.lane.b32.xlu0 %v5117, 127
    %v5176 = vpop.permute.xlu0 %5175
    %5177 = vrot.lane.b32.xlu0 %v5118, 127
    %v5178 = vpop.permute.xlu0 %5177
    %v5183 = vsel %vm4529, %v5172, 0.0
    %v5184 = vsel %vm4529, %v5174, 0.0
    %v5185 = vsel %vm4529, %v5176, 0.0
    %v5186 = vsel %vm4529, %v5178, 0.0
    %v5187 = vmul.f32 %v5183, %v4269
    %v5188 = vmul.f32 %v5184, %v4269
    %v5189 = vmul.f32 %v5185, %v4269
    %v5190 = vmul.f32 %v5186, %v4269
    %5191 = vrot.lane.b32.xlu0 %v5115, 126
    %v5192 = vpop.permute.xlu0 %5191
    %5193 = vrot.lane.b32.xlu0 %v5116, 126
    %v5194 = vpop.permute.xlu0 %5193
    %5195 = vrot.lane.b32.xlu0 %v5117, 126
    %v5196 = vpop.permute.xlu0 %5195
    %5197 = vrot.lane.b32.xlu0 %v5118, 126
    %v5198 = vpop.permute.xlu0 %5197
    %v5203 = vsel %vm4550, %v5192, 0.0
    %v5204 = vsel %vm4550, %v5194, 0.0
    %v5205 = vsel %vm4550, %v5196, 0.0
    %v5206 = vsel %vm4550, %v5198, 0.0
    %v5207 = vmul.f32 %v5203, %v4275
    %v5208 = vmul.f32 %v5204, %v4275
    %v5209 = vmul.f32 %v5205, %v4275
    %v5210 = vmul.f32 %v5206, %v4275
    %5211 = vset.pattern.permute.xlu0 10
    %5212 = vperm.xlu0 %5211, %v424
    %v5213 = vpop.permute.xlu0 %5212
    %5215 = vset.pattern.permute.xlu0 10
    %5216 = vperm.xlu0 %5215, %v425
    %v5217 = vpop.permute.xlu0 %5216
    %5219 = vset.pattern.permute.xlu0 10
    %5220 = vperm.xlu0 %5219, %v426
    %v5221 = vpop.permute.xlu0 %5220
    %5223 = vset.pattern.permute.xlu0 10
    %5224 = vperm.xlu0 %5223, %v427
    %v5225 = vpop.permute.xlu0 %5224
    %5235 = vrot.lane.b32.xlu0 %v5119, 64
    %v5236 = vpop.permute.xlu0 %5235
    %5237 = vrot.lane.b32.xlu0 %v5120, 64
    %v5238 = vpop.permute.xlu0 %5237
    %5239 = vrot.lane.b32.xlu0 %v5121, 64
    %v5240 = vpop.permute.xlu0 %5239
    %5241 = vrot.lane.b32.xlu0 %v5122, 64
    %v5242 = vpop.permute.xlu0 %5241
    %5243 = vrot.lane.b32.xlu0 %v5123, 64
    %v5244 = vpop.permute.xlu0 %5243
    %5245 = vrot.lane.b32.xlu0 %v5124, 64
    %v5246 = vpop.permute.xlu0 %5245
    %5247 = vrot.lane.b32.xlu0 %v5125, 64
    %v5248 = vpop.permute.xlu0 %5247
    %5249 = vrot.lane.b32.xlu0 %v5126, 64
    %v5250 = vpop.permute.xlu0 %5249
    %v5251 = vsel %vm1633, %v5236, %v5238
    %v5252 = vsel %vm1633, %v5240, %v5242
    %v5253 = vsel %vm1633, %v5244, %v5246
    %v5254 = vsel %vm1633, %v5248, %v5250
    %v5259 = vsel %vm181, %v5238, 0
    %v5261 = vsel %vm181, %v5242, 0
    %v5263 = vsel %vm181, %v5246, 0
    %v5265 = vsel %vm181, %v5250, 0
    %5267 = vmatpush.msra.mxu0 %v5190
    %5268 = vmatpush.msra.mxu0 %v5189
    %5269 = vmatpush.msra.mxu0 %v5188
    %5270 = vmatpush.msra.mxu0 %v5187
    %5271 = vmatpush.msra.mxu0 %v5118
    %5272 = vmatpush.msra.mxu0 %v5117
    %5273 = vmatpush.msra.mxu0 %v5116
    %5274 = vmatpush.msra.mxu0 %v5115
    %5275 = vmatpush.msra.mxu0 %v5170
    %5276 = vmatpush.msra.mxu0 %v5169
    %5277 = vmatpush.msra.mxu0 %v5168
    %5278 = vmatpush.msra.mxu0 %v5167
    %5279 = vmatpush.msra.mxu0 %v5150
    %5280 = vmatpush.msra.mxu0 %v5149
    %5281 = vmatpush.msra.mxu0 %v5148
    %5282 = vmatpush.msra.mxu0 %v5147
    %5283 = vmatmul.f32.gmra.mxu0 %v5251
    %v5284 = vpop.f32.mrf.mxu0
    %v5285 = vadd.f32 %v5213, %v5284
    %5286 = vmatmul.f32.gmra.mxu0 %v5252
    %v5287 = vpop.f32.mrf.mxu0
    %v5288 = vadd.f32 %v5217, %v5287
    %5289 = vmatmul.f32.gmra.mxu0 %v5253
    %v5290 = vpop.f32.mrf.mxu0
    %v5291 = vadd.f32 %v5221, %v5290
    %5292 = vmatmul.f32.gmra.mxu0 %v5254
    %v5293 = vpop.f32.mrf.mxu0
    %v5294 = vadd.f32 %v5225, %v5293
    %5295 = vdwg.mxu0
    %5296 = vmatpush.msra.mxu0 0.0
    %5297 = vmatpush.msra.mxu0 0.0
    %5298 = vmatpush.msra.mxu0 0.0
    %5299 = vmatpush.msra.mxu0 0.0
    %5300 = vmatpush.msra.mxu0 0.0
    %5301 = vmatpush.msra.mxu0 0.0
    %5302 = vmatpush.msra.mxu0 0.0
    %5303 = vmatpush.msra.mxu0 0.0
    %5304 = vmatpush.msra.mxu0 0.0
    %5305 = vmatpush.msra.mxu0 0.0
    %5306 = vmatpush.msra.mxu0 0.0
    %5307 = vmatpush.msra.mxu0 0.0
    %5308 = vmatpush.msra.mxu0 %v5210
    %5309 = vmatpush.msra.mxu0 %v5209
    %5310 = vmatpush.msra.mxu0 %v5208
    %5311 = vmatpush.msra.mxu0 %v5207
    %5312 = vmatmul.f32.gmra.mxu0 %v5259
    %v5313 = vpop.f32.mrf.mxu0
    %v5314 = vadd.f32 %v5285, %v5313
    %5315 = vmatmul.f32.gmra.mxu0 %v5261
    %v5316 = vpop.f32.mrf.mxu0
    %v5317 = vadd.f32 %v5288, %v5316
    %5318 = vmatmul.f32.gmra.mxu0 %v5263
    %v5319 = vpop.f32.mrf.mxu0
    %v5320 = vadd.f32 %v5291, %v5319
    %5321 = vmatmul.f32.gmra.mxu0 %v5265
    %v5322 = vpop.f32.mrf.mxu0
    %v5323 = vadd.f32 %v5294, %v5322
    %5324 = vdwg.mxu0
    %v5325 = vmax.f32 %v5314, 0.0
    %v5326 = vmax.f32 %v5317, 0.0
    %v5327 = vmax.f32 %v5320, 0.0
    %v5328 = vmax.f32 %v5323, 0.0
    %v5329 = vsel %vm1633, %v5325, 0.0
    %5330 = vadd.xlane.f32.xlu0 %v5329
    %v5331 = vpop.xlane.xlu0 %5330
    %v5332 = vsel %vm1633, %v5326, 0.0
    %5333 = vadd.xlane.f32.xlu0 %v5332
    %v5334 = vpop.xlane.xlu0 %5333
    %v5335 = vsel %vm1633, %v5327, 0.0
    %5336 = vadd.xlane.f32.xlu0 %v5335
    %v5337 = vpop.xlane.xlu0 %5336
    %v5338 = vsel %vm1633, %v5328, 0.0
    %5339 = vadd.xlane.f32.xlu0 %v5338
    %v5340 = vpop.xlane.xlu0 %5339
    %v5341 = vmul.f32 %v5331, 0.015625
    %v5342 = vmul.f32 %v5334, 0.015625
    %v5343 = vmul.f32 %v5337, 0.015625
    %v5344 = vmul.f32 %v5340, 0.015625
    %v5345 = vsub.f32 %v5325, %v5341
    %v5346 = vsub.f32 %v5326, %v5342
    %v5347 = vsub.f32 %v5327, %v5343
    %v5348 = vsub.f32 %v5328, %v5344
    %v5349 = vmul.f32 %v5345, %v5345
    %v5350 = vmul.f32 %v5346, %v5346
    %v5351 = vmul.f32 %v5347, %v5347
    %v5352 = vmul.f32 %v5348, %v5348
    %v5353 = vsel %vm1633, %v5349, 0.0
    %5354 = vadd.xlane.f32.xlu0 %v5353
    %v5355 = vpop.xlane.xlu0 %5354
    %v5356 = vsel %vm1633, %v5350, 0.0
    %5357 = vadd.xlane.f32.xlu0 %v5356
    %v5358 = vpop.xlane.xlu0 %5357
    %v5359 = vsel %vm1633, %v5351, 0.0
    %5360 = vadd.xlane.f32.xlu0 %v5359
    %v5361 = vpop.xlane.xlu0 %5360
    %v5362 = vsel %vm1633, %v5352, 0.0
    %5363 = vadd.xlane.f32.xlu0 %v5362
    %v5364 = vpop.xlane.xlu0 %5363
    %v5365 = vmul.f32 %v5355, 0.015625
    %v5366 = vmul.f32 %v5358, 0.015625
    %v5367 = vmul.f32 %v5361, 0.015625
    %v5368 = vmul.f32 %v5364, 0.015625
    %v5369 = vadd.f32 %v5365, 1e-05
    %v5370 = vadd.f32 %v5366, 1e-05
    %v5371 = vadd.f32 %v5367, 1e-05
    %v5372 = vadd.f32 %v5368, 1e-05
    %v5373 = vrsqrt.pop %v5369
    %v5374 = vmul.f32 %v5373, %v5369
    %v5375 = vmul.f32 %v5374, %v5373
    %v5376 = vmul.f32 0.5, %v5375
    %v5377 = vsub.f32 1.5, %v5376
    %v5378 = vmul.f32 %v5373, %v5377
    %vm5379 = vweird.f32 %v5369
    %vm5380 = vweird.f32 %v5373
    %vm5381 = vmor %vm5379, %vm5380
    %v5382 = vsel %vm5381, %v5373, %v5378
    %v5383 = vrsqrt.pop %v5370
    %v5384 = vmul.f32 %v5383, %v5370
    %v5385 = vmul.f32 %v5384, %v5383
    %v5386 = vmul.f32 0.5, %v5385
    %v5387 = vsub.f32 1.5, %v5386
    %v5388 = vmul.f32 %v5383, %v5387
    %vm5389 = vweird.f32 %v5370
    %vm5390 = vweird.f32 %v5383
    %vm5391 = vmor %vm5389, %vm5390
    %v5392 = vsel %vm5391, %v5383, %v5388
    %v5393 = vrsqrt.pop %v5371
    %v5394 = vmul.f32 %v5393, %v5371
    %v5395 = vmul.f32 %v5394, %v5393
    %v5396 = vmul.f32 0.5, %v5395
    %v5397 = vsub.f32 1.5, %v5396
    %v5398 = vmul.f32 %v5393, %v5397
    %vm5399 = vweird.f32 %v5371
    %vm5400 = vweird.f32 %v5393
    %vm5401 = vmor %vm5399, %vm5400
    %v5402 = vsel %vm5401, %v5393, %v5398
    %v5403 = vrsqrt.pop %v5372
    %v5404 = vmul.f32 %v5403, %v5372
    %v5405 = vmul.f32 %v5404, %v5403
    %v5406 = vmul.f32 0.5, %v5405
    %v5407 = vsub.f32 1.5, %v5406
    %v5408 = vmul.f32 %v5403, %v5407
    %vm5409 = vweird.f32 %v5372
    %vm5410 = vweird.f32 %v5403
    %vm5411 = vmor %vm5409, %vm5410
    %v5412 = vsel %vm5411, %v5403, %v5408
    %v5413 = vmul.f32 %v5345, %v5382
    %v5414 = vmul.f32 %v5346, %v5392
    %v5415 = vmul.f32 %v5347, %v5402
    %v5416 = vmul.f32 %v5348, %v5412
    %5417 = vset.pattern.permute.xlu0 13
    %5418 = vperm.xlu0 %5417, %v252
    %v5419 = vpop.permute.xlu0 %5418
    %5421 = vset.pattern.permute.xlu0 13
    %5422 = vperm.xlu0 %5421, %v253
    %v5423 = vpop.permute.xlu0 %5422
    %5425 = vset.pattern.permute.xlu0 13
    %5426 = vperm.xlu0 %5425, %v254
    %v5427 = vpop.permute.xlu0 %5426
    %5429 = vset.pattern.permute.xlu0 13
    %5430 = vperm.xlu0 %5429, %v255
    %v5431 = vpop.permute.xlu0 %5430
    %v5433 = vmul.f32 %v5419, %v5413
    %v5434 = vmul.f32 %v5423, %v5414
    %v5435 = vmul.f32 %v5427, %v5415
    %v5436 = vmul.f32 %v5431, %v5416
    %5437 = vset.pattern.permute.xlu0 13
    %5438 = vperm.xlu0 %5437, %v256
    %v5439 = vpop.permute.xlu0 %5438
    %5441 = vset.pattern.permute.xlu0 13
    %5442 = vperm.xlu0 %5441, %v257
    %v5443 = vpop.permute.xlu0 %5442
    %5445 = vset.pattern.permute.xlu0 13
    %5446 = vperm.xlu0 %5445, %v258
    %v5447 = vpop.permute.xlu0 %5446
    %5449 = vset.pattern.permute.xlu0 13
    %5450 = vperm.xlu0 %5449, %v259
    %v5451 = vpop.permute.xlu0 %5450
    %v5453 = vadd.f32 %v5433, %v5439
    %v5454 = vadd.f32 %v5434, %v5443
    %v5455 = vadd.f32 %v5435, %v5447
    %v5456 = vadd.f32 %v5436, %v5451
    %v5457 = vld [vmem:[#allocation2 + $0x68] sm:$0xff]
    %v5458 = vld [vmem:[#allocation2 + $0x70] sm:$0xff]
    %v5459 = vld [vmem:[#allocation2 + $0x130] sm:$0xff]
    %v5460 = vld [vmem:[#allocation2 + $0x138] sm:$0xff]
    %v5461 = vld [vmem:[#allocation2 + $0x1f8] sm:$0xff]
    %v5462 = vld [vmem:[#allocation2 + $0x200] sm:$0xff]
    %v5463 = vld [vmem:[#allocation2 + $0x2c0] sm:$0xff]
    %v5464 = vld [vmem:[#allocation2 + $0x2c8] sm:$0xff]
    %5469 = vrot.lane.b32.xlu0 %v5453, 2
    %v5470 = vpop.permute.xlu0 %5469
    %5471 = vrot.lane.b32.xlu0 %v5454, 2
    %v5472 = vpop.permute.xlu0 %5471
    %5473 = vrot.lane.b32.xlu0 %v5455, 2
    %v5474 = vpop.permute.xlu0 %5473
    %5475 = vrot.lane.b32.xlu0 %v5456, 2
    %v5476 = vpop.permute.xlu0 %5475
    %v5481 = vsel %vm452, 0.0, %v5470
    %v5482 = vsel %vm452, 0.0, %v5472
    %v5483 = vsel %vm452, 0.0, %v5474
    %v5484 = vsel %vm452, 0.0, %v5476
    %v5485 = vmul.f32 %v5481, %v4257
    %v5486 = vmul.f32 %v5482, %v4257
    %v5487 = vmul.f32 %v5483, %v4257
    %v5488 = vmul.f32 %v5484, %v4257
    %5489 = vrot.lane.b32.xlu0 %v5453, 1
    %v5490 = vpop.permute.xlu0 %5489
    %5491 = vrot.lane.b32.xlu0 %v5454, 1
    %v5492 = vpop.permute.xlu0 %5491
    %5493 = vrot.lane.b32.xlu0 %v5455, 1
    %v5494 = vpop.permute.xlu0 %5493
    %5495 = vrot.lane.b32.xlu0 %v5456, 1
    %v5496 = vpop.permute.xlu0 %5495
    %v5501 = vsel %vm493, 0.0, %v5490
    %v5502 = vsel %vm493, 0.0, %v5492
    %v5503 = vsel %vm493, 0.0, %v5494
    %v5504 = vsel %vm493, 0.0, %v5496
    %v5505 = vmul.f32 %v5501, %v4263
    %v5506 = vmul.f32 %v5502, %v4263
    %v5507 = vmul.f32 %v5503, %v4263
    %v5508 = vmul.f32 %v5504, %v4263
    %5509 = vrot.lane.b32.xlu0 %v5453, 127
    %v5510 = vpop.permute.xlu0 %5509
    %5511 = vrot.lane.b32.xlu0 %v5454, 127
    %v5512 = vpop.permute.xlu0 %5511
    %5513 = vrot.lane.b32.xlu0 %v5455, 127
    %v5514 = vpop.permute.xlu0 %5513
    %5515 = vrot.lane.b32.xlu0 %v5456, 127
    %v5516 = vpop.permute.xlu0 %5515
    %v5521 = vsel %vm4529, %v5510, 0.0
    %v5522 = vsel %vm4529, %v5512, 0.0
    %v5523 = vsel %vm4529, %v5514, 0.0
    %v5524 = vsel %vm4529, %v5516, 0.0
    %v5525 = vmul.f32 %v5521, %v4269
    %v5526 = vmul.f32 %v5522, %v4269
    %v5527 = vmul.f32 %v5523, %v4269
    %v5528 = vmul.f32 %v5524, %v4269
    %5529 = vrot.lane.b32.xlu0 %v5453, 126
    %v5530 = vpop.permute.xlu0 %5529
    %5531 = vrot.lane.b32.xlu0 %v5454, 126
    %v5532 = vpop.permute.xlu0 %5531
    %5533 = vrot.lane.b32.xlu0 %v5455, 126
    %v5534 = vpop.permute.xlu0 %5533
    %5535 = vrot.lane.b32.xlu0 %v5456, 126
    %v5536 = vpop.permute.xlu0 %5535
    %v5541 = vsel %vm4550, %v5530, 0.0
    %v5542 = vsel %vm4550, %v5532, 0.0
    %v5543 = vsel %vm4550, %v5534, 0.0
    %v5544 = vsel %vm4550, %v5536, 0.0
    %v5545 = vmul.f32 %v5541, %v4275
    %v5546 = vmul.f32 %v5542, %v4275
    %v5547 = vmul.f32 %v5543, %v4275
    %v5548 = vmul.f32 %v5544, %v4275
    %5549 = vset.pattern.permute.xlu0 11
    %5550 = vperm.xlu0 %5549, %v424
    %v5551 = vpop.permute.xlu0 %5550
    %5553 = vset.pattern.permute.xlu0 11
    %5554 = vperm.xlu0 %5553, %v425
    %v5555 = vpop.permute.xlu0 %5554
    %5557 = vset.pattern.permute.xlu0 11
    %5558 = vperm.xlu0 %5557, %v426
    %v5559 = vpop.permute.xlu0 %5558
    %5561 = vset.pattern.permute.xlu0 11
    %5562 = vperm.xlu0 %5561, %v427
    %v5563 = vpop.permute.xlu0 %5562
    %5573 = vrot.lane.b32.xlu0 %v5457, 32
    %v5574 = vpop.permute.xlu0 %5573
    %5575 = vrot.lane.b32.xlu0 %v5458, 32
    %v5576 = vpop.permute.xlu0 %5575
    %5577 = vrot.lane.b32.xlu0 %v5459, 32
    %v5578 = vpop.permute.xlu0 %5577
    %5579 = vrot.lane.b32.xlu0 %v5460, 32
    %v5580 = vpop.permute.xlu0 %5579
    %5581 = vrot.lane.b32.xlu0 %v5461, 32
    %v5582 = vpop.permute.xlu0 %5581
    %5583 = vrot.lane.b32.xlu0 %v5462, 32
    %v5584 = vpop.permute.xlu0 %5583
    %5585 = vrot.lane.b32.xlu0 %v5463, 32
    %v5586 = vpop.permute.xlu0 %5585
    %5587 = vrot.lane.b32.xlu0 %v5464, 32
    %v5588 = vpop.permute.xlu0 %5587
    %v5589 = vsel %vm181, %v5574, %v5576
    %v5590 = vsel %vm181, %v5578, %v5580
    %v5591 = vsel %vm181, %v5582, %v5584
    %v5592 = vsel %vm181, %v5586, %v5588
    %v5597 = vsel %vm181, %v5576, 0
    %v5599 = vsel %vm181, %v5580, 0
    %v5601 = vsel %vm181, %v5584, 0
    %v5603 = vsel %vm181, %v5588, 0
    %5605 = vmatpush.msra.mxu0 %v5528
    %5606 = vmatpush.msra.mxu0 %v5527
    %5607 = vmatpush.msra.mxu0 %v5526
    %5608 = vmatpush.msra.mxu0 %v5525
    %5609 = vmatpush.msra.mxu0 %v5456
    %5610 = vmatpush.msra.mxu0 %v5455
    %5611 = vmatpush.msra.mxu0 %v5454
    %5612 = vmatpush.msra.mxu0 %v5453
    %5613 = vmatpush.msra.mxu0 %v5508
    %5614 = vmatpush.msra.mxu0 %v5507
    %5615 = vmatpush.msra.mxu0 %v5506
    %5616 = vmatpush.msra.mxu0 %v5505
    %5617 = vmatpush.msra.mxu0 %v5488
    %5618 = vmatpush.msra.mxu0 %v5487
    %5619 = vmatpush.msra.mxu0 %v5486
    %5620 = vmatpush.msra.mxu0 %v5485
    %5621 = vmatmul.f32.gmra.mxu0 %v5589
    %v5622 = vpop.f32.mrf.mxu0
    %v5623 = vadd.f32 %v5551, %v5622
    %5624 = vmatmul.f32.gmra.mxu0 %v5590
    %v5625 = vpop.f32.mrf.mxu0
    %v5626 = vadd.f32 %v5555, %v5625
    %5627 = vmatmul.f32.gmra.mxu0 %v5591
    %v5628 = vpop.f32.mrf.mxu0
    %v5629 = vadd.f32 %v5559, %v5628
    %5630 = vmatmul.f32.gmra.mxu0 %v5592
    %v5631 = vpop.f32.mrf.mxu0
    %v5632 = vadd.f32 %v5563, %v5631
    %5633 = vdwg.mxu0
    %5634 = vmatpush.msra.mxu0 0.0
    %5635 = vmatpush.msra.mxu0 0.0
    %5636 = vmatpush.msra.mxu0 0.0
    %5637 = vmatpush.msra.mxu0 0.0
    %5638 = vmatpush.msra.mxu0 0.0
    %5639 = vmatpush.msra.mxu0 0.0
    %5640 = vmatpush.msra.mxu0 0.0
    %5641 = vmatpush.msra.mxu0 0.0
    %5642 = vmatpush.msra.mxu0 0.0
    %5643 = vmatpush.msra.mxu0 0.0
    %5644 = vmatpush.msra.mxu0 0.0
    %5645 = vmatpush.msra.mxu0 0.0
    %5646 = vmatpush.msra.mxu0 %v5548
    %5647 = vmatpush.msra.mxu0 %v5547
    %5648 = vmatpush.msra.mxu0 %v5546
    %5649 = vmatpush.msra.mxu0 %v5545
    %5650 = vmatmul.f32.gmra.mxu0 %v5597
    %v5651 = vpop.f32.mrf.mxu0
    %v5652 = vadd.f32 %v5623, %v5651
    %5653 = vmatmul.f32.gmra.mxu0 %v5599
    %v5654 = vpop.f32.mrf.mxu0
    %v5655 = vadd.f32 %v5626, %v5654
    %5656 = vmatmul.f32.gmra.mxu0 %v5601
    %v5657 = vpop.f32.mrf.mxu0
    %v5658 = vadd.f32 %v5629, %v5657
    %5659 = vmatmul.f32.gmra.mxu0 %v5603
    %v5660 = vpop.f32.mrf.mxu0
    %v5661 = vadd.f32 %v5632, %v5660
    %5662 = vdwg.mxu0
    %v5663 = vmax.f32 %v5652, 0.0
    %v5664 = vmax.f32 %v5655, 0.0
    %v5665 = vmax.f32 %v5658, 0.0
    %v5666 = vmax.f32 %v5661, 0.0
    %v5667 = vsel %vm1633, %v5663, 0.0
    %5668 = vadd.xlane.f32.xlu0 %v5667
    %v5669 = vpop.xlane.xlu0 %5668
    %v5670 = vsel %vm1633, %v5664, 0.0
    %5671 = vadd.xlane.f32.xlu0 %v5670
    %v5672 = vpop.xlane.xlu0 %5671
    %v5673 = vsel %vm1633, %v5665, 0.0
    %5674 = vadd.xlane.f32.xlu0 %v5673
    %v5675 = vpop.xlane.xlu0 %5674
    %v5676 = vsel %vm1633, %v5666, 0.0
    %5677 = vadd.xlane.f32.xlu0 %v5676
    %v5678 = vpop.xlane.xlu0 %5677
    %v5679 = vmul.f32 %v5669, 0.015625
    %v5680 = vmul.f32 %v5672, 0.015625
    %v5681 = vmul.f32 %v5675, 0.015625
    %v5682 = vmul.f32 %v5678, 0.015625
    %v5683 = vsub.f32 %v5663, %v5679
    %v5684 = vsub.f32 %v5664, %v5680
    %v5685 = vsub.f32 %v5665, %v5681
    %v5686 = vsub.f32 %v5666, %v5682
    %v5687 = vmul.f32 %v5683, %v5683
    %v5688 = vmul.f32 %v5684, %v5684
    %v5689 = vmul.f32 %v5685, %v5685
    %v5690 = vmul.f32 %v5686, %v5686
    %v5691 = vsel %vm1633, %v5687, 0.0
    %5692 = vadd.xlane.f32.xlu0 %v5691
    %v5693 = vpop.xlane.xlu0 %5692
    %v5694 = vsel %vm1633, %v5688, 0.0
    %5695 = vadd.xlane.f32.xlu0 %v5694
    %v5696 = vpop.xlane.xlu0 %5695
    %v5697 = vsel %vm1633, %v5689, 0.0
    %5698 = vadd.xlane.f32.xlu0 %v5697
    %v5699 = vpop.xlane.xlu0 %5698
    %v5700 = vsel %vm1633, %v5690, 0.0
    %5701 = vadd.xlane.f32.xlu0 %v5700
    %v5702 = vpop.xlane.xlu0 %5701
    %v5703 = vmul.f32 %v5693, 0.015625
    %v5704 = vmul.f32 %v5696, 0.015625
    %v5705 = vmul.f32 %v5699, 0.015625
    %v5706 = vmul.f32 %v5702, 0.015625
    %v5707 = vadd.f32 %v5703, 1e-05
    %v5708 = vadd.f32 %v5704, 1e-05
    %v5709 = vadd.f32 %v5705, 1e-05
    %v5710 = vadd.f32 %v5706, 1e-05
    %v5711 = vrsqrt.pop %v5707
    %v5712 = vmul.f32 %v5711, %v5707
    %v5713 = vmul.f32 %v5712, %v5711
    %v5714 = vmul.f32 0.5, %v5713
    %v5715 = vsub.f32 1.5, %v5714
    %v5716 = vmul.f32 %v5711, %v5715
    %vm5717 = vweird.f32 %v5707
    %vm5718 = vweird.f32 %v5711
    %vm5719 = vmor %vm5717, %vm5718
    %v5720 = vsel %vm5719, %v5711, %v5716
    %v5721 = vrsqrt.pop %v5708
    %v5722 = vmul.f32 %v5721, %v5708
    %v5723 = vmul.f32 %v5722, %v5721
    %v5724 = vmul.f32 0.5, %v5723
    %v5725 = vsub.f32 1.5, %v5724
    %v5726 = vmul.f32 %v5721, %v5725
    %vm5727 = vweird.f32 %v5708
    %vm5728 = vweird.f32 %v5721
    %vm5729 = vmor %vm5727, %vm5728
    %v5730 = vsel %vm5729, %v5721, %v5726
    %v5731 = vrsqrt.pop %v5709
    %v5732 = vmul.f32 %v5731, %v5709
    %v5733 = vmul.f32 %v5732, %v5731
    %v5734 = vmul.f32 0.5, %v5733
    %v5735 = vsub.f32 1.5, %v5734
    %v5736 = vmul.f32 %v5731, %v5735
    %vm5737 = vweird.f32 %v5709
    %vm5738 = vweird.f32 %v5731
    %vm5739 = vmor %vm5737, %vm5738
    %v5740 = vsel %vm5739, %v5731, %v5736
    %v5741 = vrsqrt.pop %v5710
    %v5742 = vmul.f32 %v5741, %v5710
    %v5743 = vmul.f32 %v5742, %v5741
    %v5744 = vmul.f32 0.5, %v5743
    %v5745 = vsub.f32 1.5, %v5744
    %v5746 = vmul.f32 %v5741, %v5745
    %vm5747 = vweird.f32 %v5710
    %vm5748 = vweird.f32 %v5741
    %vm5749 = vmor %vm5747, %vm5748
    %v5750 = vsel %vm5749, %v5741, %v5746
    %v5751 = vmul.f32 %v5683, %v5720
    %v5752 = vmul.f32 %v5684, %v5730
    %v5753 = vmul.f32 %v5685, %v5740
    %v5754 = vmul.f32 %v5686, %v5750
    %5755 = vset.pattern.permute.xlu0 14
    %5756 = vperm.xlu0 %5755, %v252
    %v5757 = vpop.permute.xlu0 %5756
    %5759 = vset.pattern.permute.xlu0 14
    %5760 = vperm.xlu0 %5759, %v253
    %v5761 = vpop.permute.xlu0 %5760
    %5763 = vset.pattern.permute.xlu0 14
    %5764 = vperm.xlu0 %5763, %v254
    %v5765 = vpop.permute.xlu0 %5764
    %5767 = vset.pattern.permute.xlu0 14
    %5768 = vperm.xlu0 %5767, %v255
    %v5769 = vpop.permute.xlu0 %5768
    %v5771 = vmul.f32 %v5757, %v5751
    %v5772 = vmul.f32 %v5761, %v5752
    %v5773 = vmul.f32 %v5765, %v5753
    %v5774 = vmul.f32 %v5769, %v5754
    %5775 = vset.pattern.permute.xlu0 14
    %5776 = vperm.xlu0 %5775, %v256
    %v5777 = vpop.permute.xlu0 %5776
    %5779 = vset.pattern.permute.xlu0 14
    %5780 = vperm.xlu0 %5779, %v257
    %v5781 = vpop.permute.xlu0 %5780
    %5783 = vset.pattern.permute.xlu0 14
    %5784 = vperm.xlu0 %5783, %v258
    %v5785 = vpop.permute.xlu0 %5784
    %5787 = vset.pattern.permute.xlu0 14
    %5788 = vperm.xlu0 %5787, %v259
    %v5789 = vpop.permute.xlu0 %5788
    %v5791 = vadd.f32 %v5771, %v5777
    %v5792 = vadd.f32 %v5772, %v5781
    %v5793 = vadd.f32 %v5773, %v5785
    %v5794 = vadd.f32 %v5774, %v5789
    %v5795 = vadd.f32 %v5791, %v5115
    %v5796 = vadd.f32 %v5792, %v5116
    %v5797 = vadd.f32 %v5793, %v5117
    %v5798 = vadd.f32 %v5794, %v5118
    %5803 = vrot.lane.b32.xlu0 %v5795, 127
    %v5804 = vpop.permute.xlu0 %5803
    %5805 = vrot.lane.b32.xlu0 %v5796, 127
    %v5806 = vpop.permute.xlu0 %5805
    %5807 = vrot.lane.b32.xlu0 %v5797, 127
    %v5808 = vpop.permute.xlu0 %5807
    %5809 = vrot.lane.b32.xlu0 %v5798, 127
    %v5810 = vpop.permute.xlu0 %5809
    %v5815 = vsel %vm4529, %v5804, 0.0
    %v5816 = vsel %vm4529, %v5806, 0.0
    %v5817 = vsel %vm4529, %v5808, 0.0
    %v5818 = vsel %vm4529, %v5810, 0.0
    %v5819 = vmax.f32 %v5795, %v5815
    %v5820 = vmax.f32 %v5796, %v5816
    %v5821 = vmax.f32 %v5797, %v5817
    %v5822 = vmax.f32 %v5798, %v5818
    %v5824 = vsel %vm1633, %v5819, 0
    %v5827 = vsel %vm1633, %v5820, 0
    %v5830 = vsel %vm1633, %v5821, 0
    %v5833 = vsel %vm1633, %v5822, 0
    %5835 = vmatpush.msra.mxu0 0.0
    %5836 = vmatpush.msra.mxu0 0.0
    %5837 = vmatpush.msra.mxu0 0.0
    %5838 = vmatpush.msra.mxu0 0.0
    %5839 = vmatpush.msra.mxu0 0.0
    %5840 = vmatpush.msra.mxu0 0.0
    %5841 = vmatpush.msra.mxu0 0.0
    %5842 = vmatpush.msra.mxu0 0.0
    %5843 = vmatpush.msra.mxu0 %v2587
    %5844 = vmatpush.msra.mxu0 %v2586
    %5845 = vmatpush.msra.mxu0 %v2585
    %5846 = vmatpush.msra.mxu0 %v2584
    %5847 = vmatpush.msra.mxu0 %v2583
    %5848 = vmatpush.msra.mxu0 %v2582
    %5849 = vmatpush.msra.mxu0 %v2581
    %5850 = vmatpush.msra.mxu0 %v2580
    %5851 = vmatmul.f32.gmra.mxu0 %v5824
    %v5852 = vpop.f32.mrf.mxu0
    %v5853 = vadd.f32 0.0, %v5852
    %5854 = vmatmul.f32.gmra.mxu0 %v5827
    %v5855 = vpop.f32.mrf.mxu0
    %v5856 = vadd.f32 0.0, %v5855
    %5857 = vmatmul.f32.gmra.mxu0 %v5830
    %v5858 = vpop.f32.mrf.mxu0
    %v5859 = vadd.f32 0.0, %v5858
    %5860 = vmatmul.f32.gmra.mxu0 %v5833
    %v5861 = vpop.f32.mrf.mxu0
    %v5862 = vadd.f32 0.0, %v5861
    %5863 = vdwg.mxu0
    %vm5864 = vcmp.lt.s32.totalorder %v79, 0
    %v5865 = vsub.s32 0, %v79
    %v5866 = vsel %vm5864, %v5865, %v79
    %v5867 = vshrl.u32 %v5866, 4
    %v5868 = vand.u32 %v5866, 15
    %v5869 = vsub.s32 0, %v5868
    %v5870 = vsel %vm5864, %v5869, %v5868
    %vm5871 = vcmp.ne.s32.totalorder %v5870, 0
    %vm5872 = vcmp.lt.s32.totalorder %v5870, 0
    %vm5873 = vmand %vm5872, %vm5871
    %v5874 = vadd.s32 %v5870, 16
    %v5875 = vsel %vm5873, %v5874, %v5870
    %v5876 = vadd.s32 %v5875, 4294967294
    %vm5877 = vcmp.ge.s32.totalorder %v5876, 0
    %vm5878 = vcmp.lt.s32.totalorder %v5876, 16
    %vm5879 = vmand %vm5877, %vm5878
    %v5880 = vsel %vm5879, 1, 0
    %v5881 = vcvt.s32.f32 %v5880
    %v5882 = vadd.s32 %v5875, 4294967295
    %vm5883 = vcmp.ge.s32.totalorder %v5882, 0
    %vm5884 = vcmp.lt.s32.totalorder %v5882, 16
    %vm5885 = vmand %vm5883, %vm5884
    %v5886 = vsel %vm5885, 1, 0
    %v5887 = vcvt.s32.f32 %v5886
    %v5888 = vadd.s32 %v5875, 1
    %vm5889 = vcmp.ge.s32.totalorder %v5888, 0
    %vm5890 = vcmp.lt.s32.totalorder %v5888, 16
    %vm5891 = vmand %vm5889, %vm5890
    %v5892 = vsel %vm5891, 1, 0
    %v5893 = vcvt.s32.f32 %v5892
    %v5894 = vadd.s32 %v5875, 2
    %vm5895 = vcmp.ge.s32.totalorder %v5894, 0
    %vm5896 = vcmp.lt.s32.totalorder %v5894, 16
    %vm5897 = vmand %vm5895, %vm5896
    %v5898 = vsel %vm5897, 1, 0
    %v5899 = vcvt.s32.f32 %v5898
    %5900 = vset.pattern.permute.xlu0 3
    %5901 = vperm.xlu0 %5900, %v157
    %v5902 = vpop.permute.xlu0 %5901
    %5904 = vset.pattern.permute.xlu0 3
    %5905 = vperm.xlu0 %5904, %v158
    %v5906 = vpop.permute.xlu0 %5905
    %5908 = vset.pattern.permute.xlu0 3
    %5909 = vperm.xlu0 %5908, %v159
    %v5910 = vpop.permute.xlu0 %5909
    %5912 = vset.pattern.permute.xlu0 3
    %5913 = vperm.xlu0 %5912, %v160
    %v5914 = vpop.permute.xlu0 %5913
    %5916 = vrot.lane.b32.xlu0 %v153, 32
    %v5917 = vpop.permute.xlu0 %5916
    %5918 = vrot.lane.b32.xlu0 %v154, 32
    %v5919 = vpop.permute.xlu0 %5918
    %5920 = vrot.lane.b32.xlu0 %v155, 32
    %v5921 = vpop.permute.xlu0 %5920
    %5922 = vrot.lane.b32.xlu0 %v156, 32
    %v5923 = vpop.permute.xlu0 %5922
    %v5924 = vsel %vm181, %v5917, 0
    %v5926 = vsel %vm181, %v5919, 0
    %v5928 = vsel %vm181, %v5921, 0
    %v5930 = vsel %vm181, %v5923, 0
    %5932 = vmatpush.msra.mxu0 0.0
    %5933 = vmatpush.msra.mxu0 0.0
    %5934 = vmatpush.msra.mxu0 0.0
    %5935 = vmatpush.msra.mxu0 0.0
    %5936 = vmatpush.msra.mxu0 0.0
    %5937 = vmatpush.msra.mxu0 0.0
    %5938 = vmatpush.msra.mxu0 0.0
    %5939 = vmatpush.msra.mxu0 0.0
    %5940 = vmatpush.msra.mxu0 0.0
    %5941 = vmatpush.msra.mxu0 0.0
    %5942 = vmatpush.msra.mxu0 0.0
    %5943 = vmatpush.msra.mxu0 0.0
    %5944 = vmatpush.msra.mxu0 %v5862
    %5945 = vmatpush.msra.mxu0 %v5859
    %5946 = vmatpush.msra.mxu0 %v5856
    %5947 = vmatpush.msra.mxu0 %v5853
    %5948 = vmatmul.f32.gmra.mxu0 %v5924
    %v5949 = vpop.f32.mrf.mxu0
    %v5950 = vadd.f32 %v5902, %v5949
    %5951 = vmatmul.f32.gmra.mxu0 %v5926
    %v5952 = vpop.f32.mrf.mxu0
    %v5953 = vadd.f32 %v5906, %v5952
    %5954 = vmatmul.f32.gmra.mxu0 %v5928
    %v5955 = vpop.f32.mrf.mxu0
    %v5956 = vadd.f32 %v5910, %v5955
    %5957 = vmatmul.f32.gmra.mxu0 %v5930
    %v5958 = vpop.f32.mrf.mxu0
    %v5959 = vadd.f32 %v5914, %v5958
    %5960 = vdwg.mxu0
    %v5961 = vsel %vm181, %v5950, 0.0
    %5962 = vadd.xlane.f32.xlu0 %v5961
    %v5963 = vpop.xlane.xlu0 %5962
    %v5964 = vsel %vm181, %v5953, 0.0
    %5965 = vadd.xlane.f32.xlu0 %v5964
    %v5966 = vpop.xlane.xlu0 %5965
    %v5967 = vsel %vm181, %v5956, 0.0
    %5968 = vadd.xlane.f32.xlu0 %v5967
    %v5969 = vpop.xlane.xlu0 %5968
    %v5970 = vsel %vm181, %v5959, 0.0
    %5971 = vadd.xlane.f32.xlu0 %v5970
    %v5972 = vpop.xlane.xlu0 %5971
    %v5973 = vmul.f32 %v5963, 0.03125
    %v5974 = vmul.f32 %v5966, 0.03125
    %v5975 = vmul.f32 %v5969, 0.03125
    %v5976 = vmul.f32 %v5972, 0.03125
    %v5977 = vsub.f32 %v5950, %v5973
    %v5978 = vsub.f32 %v5953, %v5974
    %v5979 = vsub.f32 %v5956, %v5975
    %v5980 = vsub.f32 %v5959, %v5976
    %v5981 = vmul.f32 %v5977, %v5977
    %v5982 = vmul.f32 %v5978, %v5978
    %v5983 = vmul.f32 %v5979, %v5979
    %v5984 = vmul.f32 %v5980, %v5980
    %v5985 = vsel %vm181, %v5981, 0.0
    %5986 = vadd.xlane.f32.xlu0 %v5985
    %v5987 = vpop.xlane.xlu0 %5986
    %v5988 = vsel %vm181, %v5982, 0.0
    %5989 = vadd.xlane.f32.xlu0 %v5988
    %v5990 = vpop.xlane.xlu0 %5989
    %v5991 = vsel %vm181, %v5983, 0.0
    %5992 = vadd.xlane.f32.xlu0 %v5991
    %v5993 = vpop.xlane.xlu0 %5992
    %v5994 = vsel %vm181, %v5984, 0.0
    %5995 = vadd.xlane.f32.xlu0 %v5994
    %v5996 = vpop.xlane.xlu0 %5995
    %v5997 = vmul.f32 %v5987, 0.03125
    %v5998 = vmul.f32 %v5990, 0.03125
    %v5999 = vmul.f32 %v5993, 0.03125
    %v6000 = vmul.f32 %v5996, 0.03125
    %v6001 = vadd.f32 %v5997, 1e-05
    %v6002 = vadd.f32 %v5998, 1e-05
    %v6003 = vadd.f32 %v5999, 1e-05
    %v6004 = vadd.f32 %v6000, 1e-05
    %v6005 = vrsqrt.pop %v6001
    %v6006 = vmul.f32 %v6005, %v6001
    %v6007 = vmul.f32 %v6006, %v6005
    %v6008 = vmul.f32 0.5, %v6007
    %v6009 = vsub.f32 1.5, %v6008
    %v6010 = vmul.f32 %v6005, %v6009
    %vm6011 = vweird.f32 %v6001
    %vm6012 = vweird.f32 %v6005
    %vm6013 = vmor %vm6011, %vm6012
    %v6014 = vsel %vm6013, %v6005, %v6010
    %v6015 = vrsqrt.pop %v6002
    %v6016 = vmul.f32 %v6015, %v6002
    %v6017 = vmul.f32 %v6016, %v6015
    %v6018 = vmul.f32 0.5, %v6017
    %v6019 = vsub.f32 1.5, %v6018
    %v6020 = vmul.f32 %v6015, %v6019
    %vm6021 = vweird.f32 %v6002
    %vm6022 = vweird.f32 %v6015
    %vm6023 = vmor %vm6021, %vm6022
    %v6024 = vsel %vm6023, %v6015, %v6020
    %v6025 = vrsqrt.pop %v6003
    %v6026 = vmul.f32 %v6025, %v6003
    %v6027 = vmul.f32 %v6026, %v6025
    %v6028 = vmul.f32 0.5, %v6027
    %v6029 = vsub.f32 1.5, %v6028
    %v6030 = vmul.f32 %v6025, %v6029
    %vm6031 = vweird.f32 %v6003
    %vm6032 = vweird.f32 %v6025
    %vm6033 = vmor %vm6031, %vm6032
    %v6034 = vsel %vm6033, %v6025, %v6030
    %v6035 = vrsqrt.pop %v6004
    %v6036 = vmul.f32 %v6035, %v6004
    %v6037 = vmul.f32 %v6036, %v6035
    %v6038 = vmul.f32 0.5, %v6037
    %v6039 = vsub.f32 1.5, %v6038
    %v6040 = vmul.f32 %v6035, %v6039
    %vm6041 = vweird.f32 %v6004
    %vm6042 = vweird.f32 %v6035
    %vm6043 = vmor %vm6041, %vm6042
    %v6044 = vsel %vm6043, %v6035, %v6040
    %v6045 = vmul.f32 %v5977, %v6014
    %v6046 = vmul.f32 %v5978, %v6024
    %v6047 = vmul.f32 %v5979, %v6034
    %v6048 = vmul.f32 %v5980, %v6044
    %6049 = vset.pattern.permute.xlu0 15
    %6050 = vperm.xlu0 %6049, %v252
    %v6051 = vpop.permute.xlu0 %6050
    %6053 = vset.pattern.permute.xlu0 15
    %6054 = vperm.xlu0 %6053, %v253
    %v6055 = vpop.permute.xlu0 %6054
    %6057 = vset.pattern.permute.xlu0 15
    %6058 = vperm.xlu0 %6057, %v254
    %v6059 = vpop.permute.xlu0 %6058
    %6061 = vset.pattern.permute.xlu0 15
    %6062 = vperm.xlu0 %6061, %v255
    %v6063 = vpop.permute.xlu0 %6062
    %v6065 = vmul.f32 %v6051, %v6045
    %v6066 = vmul.f32 %v6055, %v6046
    %v6067 = vmul.f32 %v6059, %v6047
    %v6068 = vmul.f32 %v6063, %v6048
    %6069 = vset.pattern.permute.xlu0 15
    %6070 = vperm.xlu0 %6069, %v256
    %v6071 = vpop.permute.xlu0 %6070
    %6073 = vset.pattern.permute.xlu0 15
    %6074 = vperm.xlu0 %6073, %v257
    %v6075 = vpop.permute.xlu0 %6074
    %6077 = vset.pattern.permute.xlu0 15
    %6078 = vperm.xlu0 %6077, %v258
    %v6079 = vpop.permute.xlu0 %6078
    %6081 = vset.pattern.permute.xlu0 15
    %6082 = vperm.xlu0 %6081, %v259
    %v6083 = vpop.permute.xlu0 %6082
    %v6085 = vadd.f32 %v6065, %v6071
    %v6086 = vadd.f32 %v6066, %v6075
    %v6087 = vadd.f32 %v6067, %v6079
    %v6088 = vadd.f32 %v6068, %v6083
    %v6089 = vld [vmem:[#allocation2 + $0x78] sm:$0xff]
    %v6090 = vld [vmem:[#allocation2 + $0x80] sm:$0xff]
    %v6091 = vld [vmem:[#allocation2 + $0x140] sm:$0xff]
    %v6092 = vld [vmem:[#allocation2 + $0x148] sm:$0xff]
    %v6093 = vld [vmem:[#allocation2 + $0x208] sm:$0xff]
    %v6094 = vld [vmem:[#allocation2 + $0x210] sm:$0xff]
    %v6095 = vld [vmem:[#allocation2 + $0x2d0] sm:$0xff]
    %v6096 = vld [vmem:[#allocation2 + $0x2d8] sm:$0xff]
    %6101 = vrot.lane.b32.xlu0 %v6085, 2
    %v6102 = vpop.permute.xlu0 %6101
    %6103 = vrot.lane.b32.xlu0 %v6086, 2
    %v6104 = vpop.permute.xlu0 %6103
    %6105 = vrot.lane.b32.xlu0 %v6087, 2
    %v6106 = vpop.permute.xlu0 %6105
    %6107 = vrot.lane.b32.xlu0 %v6088, 2
    %v6108 = vpop.permute.xlu0 %6107
    %v6113 = vsel %vm452, 0.0, %v6102
    %v6114 = vsel %vm452, 0.0, %v6104
    %v6115 = vsel %vm452, 0.0, %v6106
    %v6116 = vsel %vm452, 0.0, %v6108
    %v6117 = vmul.f32 %v6113, %v5881
    %v6118 = vmul.f32 %v6114, %v5881
    %v6119 = vmul.f32 %v6115, %v5881
    %v6120 = vmul.f32 %v6116, %v5881
    %6121 = vrot.lane.b32.xlu0 %v6085, 1
    %v6122 = vpop.permute.xlu0 %6121
    %6123 = vrot.lane.b32.xlu0 %v6086, 1
    %v6124 = vpop.permute.xlu0 %6123
    %6125 = vrot.lane.b32.xlu0 %v6087, 1
    %v6126 = vpop.permute.xlu0 %6125
    %6127 = vrot.lane.b32.xlu0 %v6088, 1
    %v6128 = vpop.permute.xlu0 %6127
    %v6133 = vsel %vm493, 0.0, %v6122
    %v6134 = vsel %vm493, 0.0, %v6124
    %v6135 = vsel %vm493, 0.0, %v6126
    %v6136 = vsel %vm493, 0.0, %v6128
    %v6137 = vmul.f32 %v6133, %v5887
    %v6138 = vmul.f32 %v6134, %v5887
    %v6139 = vmul.f32 %v6135, %v5887
    %v6140 = vmul.f32 %v6136, %v5887
    %6141 = vrot.lane.b32.xlu0 %v6085, 127
    %v6142 = vpop.permute.xlu0 %6141
    %6143 = vrot.lane.b32.xlu0 %v6086, 127
    %v6144 = vpop.permute.xlu0 %6143
    %6145 = vrot.lane.b32.xlu0 %v6087, 127
    %v6146 = vpop.permute.xlu0 %6145
    %6147 = vrot.lane.b32.xlu0 %v6088, 127
    %v6148 = vpop.permute.xlu0 %6147
    %vm6153 = vcmask 252928
    %v6154 = vsel %vm6153, %v6142, 0.0
    %v6155 = vsel %vm6153, %v6144, 0.0
    %v6156 = vsel %vm6153, %v6146, 0.0
    %v6157 = vsel %vm6153, %v6148, 0.0
    %v6158 = vmul.f32 %v6154, %v5893
    %v6159 = vmul.f32 %v6155, %v5893
    %v6160 = vmul.f32 %v6156, %v5893
    %v6161 = vmul.f32 %v6157, %v5893
    %6162 = vrot.lane.b32.xlu0 %v6085, 126
    %v6163 = vpop.permute.xlu0 %6162
    %6164 = vrot.lane.b32.xlu0 %v6086, 126
    %v6165 = vpop.permute.xlu0 %6164
    %6166 = vrot.lane.b32.xlu0 %v6087, 126
    %v6167 = vpop.permute.xlu0 %6166
    %6168 = vrot.lane.b32.xlu0 %v6088, 126
    %v6169 = vpop.permute.xlu0 %6168
    %vm6174 = vcmask 244736
    %v6175 = vsel %vm6174, %v6163, 0.0
    %v6176 = vsel %vm6174, %v6165, 0.0
    %v6177 = vsel %vm6174, %v6167, 0.0
    %v6178 = vsel %vm6174, %v6169, 0.0
    %v6179 = vmul.f32 %v6175, %v5899
    %v6180 = vmul.f32 %v6176, %v5899
    %v6181 = vmul.f32 %v6177, %v5899
    %v6182 = vmul.f32 %v6178, %v5899
    %6183 = vset.pattern.permute.xlu0 12
    %6184 = vperm.xlu0 %6183, %v424
    %v6185 = vpop.permute.xlu0 %6184
    %6187 = vset.pattern.permute.xlu0 12
    %6188 = vperm.xlu0 %6187, %v425
    %v6189 = vpop.permute.xlu0 %6188
    %6191 = vset.pattern.permute.xlu0 12
    %6192 = vperm.xlu0 %6191, %v426
    %v6193 = vpop.permute.xlu0 %6192
    %6195 = vset.pattern.permute.xlu0 12
    %6196 = vperm.xlu0 %6195, %v427
    %v6197 = vpop.permute.xlu0 %6196
    %v6200 = vsel %vm181, %v6090, 0
    %v6203 = vsel %vm181, %v6092, 0
    %v6206 = vsel %vm181, %v6094, 0
    %v6209 = vsel %vm181, %v6096, 0
    %6211 = vmatpush.msra.mxu0 %v6161
    %6212 = vmatpush.msra.mxu0 %v6160
    %6213 = vmatpush.msra.mxu0 %v6159
    %6214 = vmatpush.msra.mxu0 %v6158
    %6215 = vmatpush.msra.mxu0 %v6088
    %6216 = vmatpush.msra.mxu0 %v6087
    %6217 = vmatpush.msra.mxu0 %v6086
    %6218 = vmatpush.msra.mxu0 %v6085
    %6219 = vmatpush.msra.mxu0 %v6140
    %6220 = vmatpush.msra.mxu0 %v6139
    %6221 = vmatpush.msra.mxu0 %v6138
    %6222 = vmatpush.msra.mxu0 %v6137
    %6223 = vmatpush.msra.mxu0 %v6120
    %6224 = vmatpush.msra.mxu0 %v6119
    %6225 = vmatpush.msra.mxu0 %v6118
    %6226 = vmatpush.msra.mxu0 %v6117
    %6227 = vmatmul.f32.gmra.mxu0 %v6089
    %v6228 = vpop.f32.mrf.mxu0
    %v6229 = vadd.f32 %v6185, %v6228
    %6230 = vmatmul.f32.gmra.mxu0 %v6091
    %v6231 = vpop.f32.mrf.mxu0
    %v6232 = vadd.f32 %v6189, %v6231
    %6233 = vmatmul.f32.gmra.mxu0 %v6093
    %v6234 = vpop.f32.mrf.mxu0
    %v6235 = vadd.f32 %v6193, %v6234
    %6236 = vmatmul.f32.gmra.mxu0 %v6095
    %v6237 = vpop.f32.mrf.mxu0
    %v6238 = vadd.f32 %v6197, %v6237
    %6239 = vdwg.mxu0
    %6240 = vmatpush.msra.mxu0 0.0
    %6241 = vmatpush.msra.mxu0 0.0
    %6242 = vmatpush.msra.mxu0 0.0
    %6243 = vmatpush.msra.mxu0 0.0
    %6244 = vmatpush.msra.mxu0 0.0
    %6245 = vmatpush.msra.mxu0 0.0
    %6246 = vmatpush.msra.mxu0 0.0
    %6247 = vmatpush.msra.mxu0 0.0
    %6248 = vmatpush.msra.mxu0 0.0
    %6249 = vmatpush.msra.mxu0 0.0
    %6250 = vmatpush.msra.mxu0 0.0
    %6251 = vmatpush.msra.mxu0 0.0
    %6252 = vmatpush.msra.mxu0 %v6182
    %6253 = vmatpush.msra.mxu0 %v6181
    %6254 = vmatpush.msra.mxu0 %v6180
    %6255 = vmatpush.msra.mxu0 %v6179
    %6256 = vmatmul.f32.gmra.mxu0 %v6200
    %v6257 = vpop.f32.mrf.mxu0
    %v6258 = vadd.f32 %v6229, %v6257
    %6259 = vmatmul.f32.gmra.mxu0 %v6203
    %v6260 = vpop.f32.mrf.mxu0
    %v6261 = vadd.f32 %v6232, %v6260
    %6262 = vmatmul.f32.gmra.mxu0 %v6206
    %v6263 = vpop.f32.mrf.mxu0
    %v6264 = vadd.f32 %v6235, %v6263
    %6265 = vmatmul.f32.gmra.mxu0 %v6209
    %v6266 = vpop.f32.mrf.mxu0
    %v6267 = vadd.f32 %v6238, %v6266
    %6268 = vdwg.mxu0
    %v6269 = vmax.f32 %v6258, 0.0
    %v6270 = vmax.f32 %v6261, 0.0
    %v6271 = vmax.f32 %v6264, 0.0
    %v6272 = vmax.f32 %v6267, 0.0
    %v6273 = vsel %vm181, %v6269, 0.0
    %6274 = vadd.xlane.f32.xlu0 %v6273
    %v6275 = vpop.xlane.xlu0 %6274
    %v6276 = vsel %vm181, %v6270, 0.0
    %6277 = vadd.xlane.f32.xlu0 %v6276
    %v6278 = vpop.xlane.xlu0 %6277
    %v6279 = vsel %vm181, %v6271, 0.0
    %6280 = vadd.xlane.f32.xlu0 %v6279
    %v6281 = vpop.xlane.xlu0 %6280
    %v6282 = vsel %vm181, %v6272, 0.0
    %6283 = vadd.xlane.f32.xlu0 %v6282
    %v6284 = vpop.xlane.xlu0 %6283
    %v6285 = vmul.f32 %v6275, 0.03125
    %v6286 = vmul.f32 %v6278, 0.03125
    %v6287 = vmul.f32 %v6281, 0.03125
    %v6288 = vmul.f32 %v6284, 0.03125
    %v6289 = vsub.f32 %v6269, %v6285
    %v6290 = vsub.f32 %v6270, %v6286
    %v6291 = vsub.f32 %v6271, %v6287
    %v6292 = vsub.f32 %v6272, %v6288
    %v6293 = vmul.f32 %v6289, %v6289
    %v6294 = vmul.f32 %v6290, %v6290
    %v6295 = vmul.f32 %v6291, %v6291
    %v6296 = vmul.f32 %v6292, %v6292
    %v6297 = vsel %vm181, %v6293, 0.0
    %6298 = vadd.xlane.f32.xlu0 %v6297
    %v6299 = vpop.xlane.xlu0 %6298
    %v6300 = vsel %vm181, %v6294, 0.0
    %6301 = vadd.xlane.f32.xlu0 %v6300
    %v6302 = vpop.xlane.xlu0 %6301
    %v6303 = vsel %vm181, %v6295, 0.0
    %6304 = vadd.xlane.f32.xlu0 %v6303
    %v6305 = vpop.xlane.xlu0 %6304
    %v6306 = vsel %vm181, %v6296, 0.0
    %6307 = vadd.xlane.f32.xlu0 %v6306
    %v6308 = vpop.xlane.xlu0 %6307
    %v6309 = vmul.f32 %v6299, 0.03125
    %v6310 = vmul.f32 %v6302, 0.03125
    %v6311 = vmul.f32 %v6305, 0.03125
    %v6312 = vmul.f32 %v6308, 0.03125
    %v6313 = vadd.f32 %v6309, 1e-05
    %v6314 = vadd.f32 %v6310, 1e-05
    %v6315 = vadd.f32 %v6311, 1e-05
    %v6316 = vadd.f32 %v6312, 1e-05
    %v6317 = vrsqrt.pop %v6313
    %v6318 = vmul.f32 %v6317, %v6313
    %v6319 = vmul.f32 %v6318, %v6317
    %v6320 = vmul.f32 0.5, %v6319
    %v6321 = vsub.f32 1.5, %v6320
    %v6322 = vmul.f32 %v6317, %v6321
    %vm6323 = vweird.f32 %v6313
    %vm6324 = vweird.f32 %v6317
    %vm6325 = vmor %vm6323, %vm6324
    %v6326 = vsel %vm6325, %v6317, %v6322
    %v6327 = vrsqrt.pop %v6314
    %v6328 = vmul.f32 %v6327, %v6314
    %v6329 = vmul.f32 %v6328, %v6327
    %v6330 = vmul.f32 0.5, %v6329
    %v6331 = vsub.f32 1.5, %v6330
    %v6332 = vmul.f32 %v6327, %v6331
    %vm6333 = vweird.f32 %v6314
    %vm6334 = vweird.f32 %v6327
    %vm6335 = vmor %vm6333, %vm6334
    %v6336 = vsel %vm6335, %v6327, %v6332
    %v6337 = vrsqrt.pop %v6315
    %v6338 = vmul.f32 %v6337, %v6315
    %v6339 = vmul.f32 %v6338, %v6337
    %v6340 = vmul.f32 0.5, %v6339
    %v6341 = vsub.f32 1.5, %v6340
    %v6342 = vmul.f32 %v6337, %v6341
    %vm6343 = vweird.f32 %v6315
    %vm6344 = vweird.f32 %v6337
    %vm6345 = vmor %vm6343, %vm6344
    %v6346 = vsel %vm6345, %v6337, %v6342
    %v6347 = vrsqrt.pop %v6316
    %v6348 = vmul.f32 %v6347, %v6316
    %v6349 = vmul.f32 %v6348, %v6347
    %v6350 = vmul.f32 0.5, %v6349
    %v6351 = vsub.f32 1.5, %v6350
    %v6352 = vmul.f32 %v6347, %v6351
    %vm6353 = vweird.f32 %v6316
    %vm6354 = vweird.f32 %v6347
    %vm6355 = vmor %vm6353, %vm6354
    %v6356 = vsel %vm6355, %v6347, %v6352
    %v6357 = vmul.f32 %v6289, %v6326
    %v6358 = vmul.f32 %v6290, %v6336
    %v6359 = vmul.f32 %v6291, %v6346
    %v6360 = vmul.f32 %v6292, %v6356
    %6361 = vset.pattern.permute.xlu0 16
    %6362 = vperm.xlu0 %6361, %v252
    %v6363 = vpop.permute.xlu0 %6362
    %6365 = vset.pattern.permute.xlu0 16
    %6366 = vperm.xlu0 %6365, %v253
    %v6367 = vpop.permute.xlu0 %6366
    %6369 = vset.pattern.permute.xlu0 16
    %6370 = vperm.xlu0 %6369, %v254
    %v6371 = vpop.permute.xlu0 %6370
    %6373 = vset.pattern.permute.xlu0 16
    %6374 = vperm.xlu0 %6373, %v255
    %v6375 = vpop.permute.xlu0 %6374
    %v6377 = vmul.f32 %v6363, %v6357
    %v6378 = vmul.f32 %v6367, %v6358
    %v6379 = vmul.f32 %v6371, %v6359
    %v6380 = vmul.f32 %v6375, %v6360
    %6381 = vset.pattern.permute.xlu0 16
    %6382 = vperm.xlu0 %6381, %v256
    %v6383 = vpop.permute.xlu0 %6382
    %6385 = vset.pattern.permute.xlu0 16
    %6386 = vperm.xlu0 %6385, %v257
    %v6387 = vpop.permute.xlu0 %6386
    %6389 = vset.pattern.permute.xlu0 16
    %6390 = vperm.xlu0 %6389, %v258
    %v6391 = vpop.permute.xlu0 %6390
    %6393 = vset.pattern.permute.xlu0 16
    %6394 = vperm.xlu0 %6393, %v259
    %v6395 = vpop.permute.xlu0 %6394
    %v6397 = vadd.f32 %v6377, %v6383
    %v6398 = vadd.f32 %v6378, %v6387
    %v6399 = vadd.f32 %v6379, %v6391
    %v6400 = vadd.f32 %v6380, %v6395
    %v6401 = vld [vmem:[#allocation2 + $0x80] sm:$0xff]
    %v6402 = vld [vmem:[#allocation2 + $0x88] sm:$0xff]
    %v6403 = vld [vmem:[#allocation2 + $0x148] sm:$0xff]
    %v6404 = vld [vmem:[#allocation2 + $0x150] sm:$0xff]
    %v6405 = vld [vmem:[#allocation2 + $0x210] sm:$0xff]
    %v6406 = vld [vmem:[#allocation2 + $0x218] sm:$0xff]
    %v6407 = vld [vmem:[#allocation2 + $0x2d8] sm:$0xff]
    %v6408 = vld [vmem:[#allocation2 + $0x2e0] sm:$0xff]
    %6413 = vrot.lane.b32.xlu0 %v6397, 2
    %v6414 = vpop.permute.xlu0 %6413
    %6415 = vrot.lane.b32.xlu0 %v6398, 2
    %v6416 = vpop.permute.xlu0 %6415
    %6417 = vrot.lane.b32.xlu0 %v6399, 2
    %v6418 = vpop.permute.xlu0 %6417
    %6419 = vrot.lane.b32.xlu0 %v6400, 2
    %v6420 = vpop.permute.xlu0 %6419
    %v6425 = vsel %vm452, 0.0, %v6414
    %v6426 = vsel %vm452, 0.0, %v6416
    %v6427 = vsel %vm452, 0.0, %v6418
    %v6428 = vsel %vm452, 0.0, %v6420
    %v6429 = vmul.f32 %v6425, %v5881
    %v6430 = vmul.f32 %v6426, %v5881
    %v6431 = vmul.f32 %v6427, %v5881
    %v6432 = vmul.f32 %v6428, %v5881
    %6433 = vrot.lane.b32.xlu0 %v6397, 1
    %v6434 = vpop.permute.xlu0 %6433
    %6435 = vrot.lane.b32.xlu0 %v6398, 1
    %v6436 = vpop.permute.xlu0 %6435
    %6437 = vrot.lane.b32.xlu0 %v6399, 1
    %v6438 = vpop.permute.xlu0 %6437
    %6439 = vrot.lane.b32.xlu0 %v6400, 1
    %v6440 = vpop.permute.xlu0 %6439
    %v6445 = vsel %vm493, 0.0, %v6434
    %v6446 = vsel %vm493, 0.0, %v6436
    %v6447 = vsel %vm493, 0.0, %v6438
    %v6448 = vsel %vm493, 0.0, %v6440
    %v6449 = vmul.f32 %v6445, %v5887
    %v6450 = vmul.f32 %v6446, %v5887
    %v6451 = vmul.f32 %v6447, %v5887
    %v6452 = vmul.f32 %v6448, %v5887
    %6453 = vrot.lane.b32.xlu0 %v6397, 127
    %v6454 = vpop.permute.xlu0 %6453
    %6455 = vrot.lane.b32.xlu0 %v6398, 127
    %v6456 = vpop.permute.xlu0 %6455
    %6457 = vrot.lane.b32.xlu0 %v6399, 127
    %v6458 = vpop.permute.xlu0 %6457
    %6459 = vrot.lane.b32.xlu0 %v6400, 127
    %v6460 = vpop.permute.xlu0 %6459
    %v6465 = vsel %vm6153, %v6454, 0.0
    %v6466 = vsel %vm6153, %v6456, 0.0
    %v6467 = vsel %vm6153, %v6458, 0.0
    %v6468 = vsel %vm6153, %v6460, 0.0
    %v6469 = vmul.f32 %v6465, %v5893
    %v6470 = vmul.f32 %v6466, %v5893
    %v6471 = vmul.f32 %v6467, %v5893
    %v6472 = vmul.f32 %v6468, %v5893
    %6473 = vrot.lane.b32.xlu0 %v6397, 126
    %v6474 = vpop.permute.xlu0 %6473
    %6475 = vrot.lane.b32.xlu0 %v6398, 126
    %v6476 = vpop.permute.xlu0 %6475
    %6477 = vrot.lane.b32.xlu0 %v6399, 126
    %v6478 = vpop.permute.xlu0 %6477
    %6479 = vrot.lane.b32.xlu0 %v6400, 126
    %v6480 = vpop.permute.xlu0 %6479
    %v6485 = vsel %vm6174, %v6474, 0.0
    %v6486 = vsel %vm6174, %v6476, 0.0
    %v6487 = vsel %vm6174, %v6478, 0.0
    %v6488 = vsel %vm6174, %v6480, 0.0
    %v6489 = vmul.f32 %v6485, %v5899
    %v6490 = vmul.f32 %v6486, %v5899
    %v6491 = vmul.f32 %v6487, %v5899
    %v6492 = vmul.f32 %v6488, %v5899
    %6493 = vset.pattern.permute.xlu0 13
    %6494 = vperm.xlu0 %6493, %v424
    %v6495 = vpop.permute.xlu0 %6494
    %6497 = vset.pattern.permute.xlu0 13
    %6498 = vperm.xlu0 %6497, %v425
    %v6499 = vpop.permute.xlu0 %6498
    %6501 = vset.pattern.permute.xlu0 13
    %6502 = vperm.xlu0 %6501, %v426
    %v6503 = vpop.permute.xlu0 %6502
    %6505 = vset.pattern.permute.xlu0 13
    %6506 = vperm.xlu0 %6505, %v427
    %v6507 = vpop.permute.xlu0 %6506
    %6517 = vrot.lane.b32.xlu0 %v6401, 96
    %v6518 = vpop.permute.xlu0 %6517
    %6519 = vrot.lane.b32.xlu0 %v6402, 96
    %v6520 = vpop.permute.xlu0 %6519
    %6521 = vrot.lane.b32.xlu0 %v6403, 96
    %v6522 = vpop.permute.xlu0 %6521
    %6523 = vrot.lane.b32.xlu0 %v6404, 96
    %v6524 = vpop.permute.xlu0 %6523
    %6525 = vrot.lane.b32.xlu0 %v6405, 96
    %v6526 = vpop.permute.xlu0 %6525
    %6527 = vrot.lane.b32.xlu0 %v6406, 96
    %v6528 = vpop.permute.xlu0 %6527
    %6529 = vrot.lane.b32.xlu0 %v6407, 96
    %v6530 = vpop.permute.xlu0 %6529
    %6531 = vrot.lane.b32.xlu0 %v6408, 96
    %v6532 = vpop.permute.xlu0 %6531
    %v6533 = vsel %vm1120, %v6518, %v6520
    %v6534 = vsel %vm1120, %v6522, %v6524
    %v6535 = vsel %vm1120, %v6526, %v6528
    %v6536 = vsel %vm1120, %v6530, %v6532
    %v6541 = vsel %vm181, %v6520, 0
    %v6543 = vsel %vm181, %v6524, 0
    %v6545 = vsel %vm181, %v6528, 0
    %v6547 = vsel %vm181, %v6532, 0
    %6549 = vmatpush.msra.mxu0 %v6472
    %6550 = vmatpush.msra.mxu0 %v6471
    %6551 = vmatpush.msra.mxu0 %v6470
    %6552 = vmatpush.msra.mxu0 %v6469
    %6553 = vmatpush.msra.mxu0 %v6400
    %6554 = vmatpush.msra.mxu0 %v6399
    %6555 = vmatpush.msra.mxu0 %v6398
    %6556 = vmatpush.msra.mxu0 %v6397
    %6557 = vmatpush.msra.mxu0 %v6452
    %6558 = vmatpush.msra.mxu0 %v6451
    %6559 = vmatpush.msra.mxu0 %v6450
    %6560 = vmatpush.msra.mxu0 %v6449
    %6561 = vmatpush.msra.mxu0 %v6432
    %6562 = vmatpush.msra.mxu0 %v6431
    %6563 = vmatpush.msra.mxu0 %v6430
    %6564 = vmatpush.msra.mxu0 %v6429
    %6565 = vmatmul.f32.gmra.mxu0 %v6533
    %v6566 = vpop.f32.mrf.mxu0
    %v6567 = vadd.f32 %v6495, %v6566
    %6568 = vmatmul.f32.gmra.mxu0 %v6534
    %v6569 = vpop.f32.mrf.mxu0
    %v6570 = vadd.f32 %v6499, %v6569
    %6571 = vmatmul.f32.gmra.mxu0 %v6535
    %v6572 = vpop.f32.mrf.mxu0
    %v6573 = vadd.f32 %v6503, %v6572
    %6574 = vmatmul.f32.gmra.mxu0 %v6536
    %v6575 = vpop.f32.mrf.mxu0
    %v6576 = vadd.f32 %v6507, %v6575
    %6577 = vdwg.mxu0
    %6578 = vmatpush.msra.mxu0 0.0
    %6579 = vmatpush.msra.mxu0 0.0
    %6580 = vmatpush.msra.mxu0 0.0
    %6581 = vmatpush.msra.mxu0 0.0
    %6582 = vmatpush.msra.mxu0 0.0
    %6583 = vmatpush.msra.mxu0 0.0
    %6584 = vmatpush.msra.mxu0 0.0
    %6585 = vmatpush.msra.mxu0 0.0
    %6586 = vmatpush.msra.mxu0 0.0
    %6587 = vmatpush.msra.mxu0 0.0
    %6588 = vmatpush.msra.mxu0 0.0
    %6589 = vmatpush.msra.mxu0 0.0
    %6590 = vmatpush.msra.mxu0 %v6492
    %6591 = vmatpush.msra.mxu0 %v6491
    %6592 = vmatpush.msra.mxu0 %v6490
    %6593 = vmatpush.msra.mxu0 %v6489
    %6594 = vmatmul.f32.gmra.mxu0 %v6541
    %v6595 = vpop.f32.mrf.mxu0
    %v6596 = vadd.f32 %v6567, %v6595
    %6597 = vmatmul.f32.gmra.mxu0 %v6543
    %v6598 = vpop.f32.mrf.mxu0
    %v6599 = vadd.f32 %v6570, %v6598
    %6600 = vmatmul.f32.gmra.mxu0 %v6545
    %v6601 = vpop.f32.mrf.mxu0
    %v6602 = vadd.f32 %v6573, %v6601
    %6603 = vmatmul.f32.gmra.mxu0 %v6547
    %v6604 = vpop.f32.mrf.mxu0
    %v6605 = vadd.f32 %v6576, %v6604
    %6606 = vdwg.mxu0
    %v6607 = vmax.f32 %v6596, 0.0
    %v6608 = vmax.f32 %v6599, 0.0
    %v6609 = vmax.f32 %v6602, 0.0
    %v6610 = vmax.f32 %v6605, 0.0
    %v6611 = vsel %vm181, %v6607, 0.0
    %6612 = vadd.xlane.f32.xlu0 %v6611
    %v6613 = vpop.xlane.xlu0 %6612
    %v6614 = vsel %vm181, %v6608, 0.0
    %6615 = vadd.xlane.f32.xlu0 %v6614
    %v6616 = vpop.xlane.xlu0 %6615
    %v6617 = vsel %vm181, %v6609, 0.0
    %6618 = vadd.xlane.f32.xlu0 %v6617
    %v6619 = vpop.xlane.xlu0 %6618
    %v6620 = vsel %vm181, %v6610, 0.0
    %6621 = vadd.xlane.f32.xlu0 %v6620
    %v6622 = vpop.xlane.xlu0 %6621
    %v6623 = vmul.f32 %v6613, 0.03125
    %v6624 = vmul.f32 %v6616, 0.03125
    %v6625 = vmul.f32 %v6619, 0.03125
    %v6626 = vmul.f32 %v6622, 0.03125
    %v6627 = vsub.f32 %v6607, %v6623
    %v6628 = vsub.f32 %v6608, %v6624
    %v6629 = vsub.f32 %v6609, %v6625
    %v6630 = vsub.f32 %v6610, %v6626
    %v6631 = vmul.f32 %v6627, %v6627
    %v6632 = vmul.f32 %v6628, %v6628
    %v6633 = vmul.f32 %v6629, %v6629
    %v6634 = vmul.f32 %v6630, %v6630
    %v6635 = vsel %vm181, %v6631, 0.0
    %6636 = vadd.xlane.f32.xlu0 %v6635
    %v6637 = vpop.xlane.xlu0 %6636
    %v6638 = vsel %vm181, %v6632, 0.0
    %6639 = vadd.xlane.f32.xlu0 %v6638
    %v6640 = vpop.xlane.xlu0 %6639
    %v6641 = vsel %vm181, %v6633, 0.0
    %6642 = vadd.xlane.f32.xlu0 %v6641
    %v6643 = vpop.xlane.xlu0 %6642
    %v6644 = vsel %vm181, %v6634, 0.0
    %6645 = vadd.xlane.f32.xlu0 %v6644
    %v6646 = vpop.xlane.xlu0 %6645
    %v6647 = vmul.f32 %v6637, 0.03125
    %v6648 = vmul.f32 %v6640, 0.03125
    %v6649 = vmul.f32 %v6643, 0.03125
    %v6650 = vmul.f32 %v6646, 0.03125
    %v6651 = vadd.f32 %v6647, 1e-05
    %v6652 = vadd.f32 %v6648, 1e-05
    %v6653 = vadd.f32 %v6649, 1e-05
    %v6654 = vadd.f32 %v6650, 1e-05
    %v6655 = vrsqrt.pop %v6651
    %v6656 = vmul.f32 %v6655, %v6651
    %v6657 = vmul.f32 %v6656, %v6655
    %v6658 = vmul.f32 0.5, %v6657
    %v6659 = vsub.f32 1.5, %v6658
    %v6660 = vmul.f32 %v6655, %v6659
    %vm6661 = vweird.f32 %v6651
    %vm6662 = vweird.f32 %v6655
    %vm6663 = vmor %vm6661, %vm6662
    %v6664 = vsel %vm6663, %v6655, %v6660
    %v6665 = vrsqrt.pop %v6652
    %v6666 = vmul.f32 %v6665, %v6652
    %v6667 = vmul.f32 %v6666, %v6665
    %v6668 = vmul.f32 0.5, %v6667
    %v6669 = vsub.f32 1.5, %v6668
    %v6670 = vmul.f32 %v6665, %v6669
    %vm6671 = vweird.f32 %v6652
    %vm6672 = vweird.f32 %v6665
    %vm6673 = vmor %vm6671, %vm6672
    %v6674 = vsel %vm6673, %v6665, %v6670
    %v6675 = vrsqrt.pop %v6653
    %v6676 = vmul.f32 %v6675, %v6653
    %v6677 = vmul.f32 %v6676, %v6675
    %v6678 = vmul.f32 0.5, %v6677
    %v6679 = vsub.f32 1.5, %v6678
    %v6680 = vmul.f32 %v6675, %v6679
    %vm6681 = vweird.f32 %v6653
    %vm6682 = vweird.f32 %v6675
    %vm6683 = vmor %vm6681, %vm6682
    %v6684 = vsel %vm6683, %v6675, %v6680
    %v6685 = vrsqrt.pop %v6654
    %v6686 = vmul.f32 %v6685, %v6654
    %v6687 = vmul.f32 %v6686, %v6685
    %v6688 = vmul.f32 0.5, %v6687
    %v6689 = vsub.f32 1.5, %v6688
    %v6690 = vmul.f32 %v6685, %v6689
    %vm6691 = vweird.f32 %v6654
    %vm6692 = vweird.f32 %v6685
    %vm6693 = vmor %vm6691, %vm6692
    %v6694 = vsel %vm6693, %v6685, %v6690
    %v6695 = vmul.f32 %v6627, %v6664
    %v6696 = vmul.f32 %v6628, %v6674
    %v6697 = vmul.f32 %v6629, %v6684
    %v6698 = vmul.f32 %v6630, %v6694
    %6699 = vset.pattern.permute.xlu0 17
    %6700 = vperm.xlu0 %6699, %v252
    %v6701 = vpop.permute.xlu0 %6700
    %6703 = vset.pattern.permute.xlu0 17
    %6704 = vperm.xlu0 %6703, %v253
    %v6705 = vpop.permute.xlu0 %6704
    %6707 = vset.pattern.permute.xlu0 17
    %6708 = vperm.xlu0 %6707, %v254
    %v6709 = vpop.permute.xlu0 %6708
    %6711 = vset.pattern.permute.xlu0 17
    %6712 = vperm.xlu0 %6711, %v255
    %v6713 = vpop.permute.xlu0 %6712
    %v6715 = vmul.f32 %v6701, %v6695
    %v6716 = vmul.f32 %v6705, %v6696
    %v6717 = vmul.f32 %v6709, %v6697
    %v6718 = vmul.f32 %v6713, %v6698
    %6719 = vset.pattern.permute.xlu0 17
    %6720 = vperm.xlu0 %6719, %v256
    %v6721 = vpop.permute.xlu0 %6720
    %6723 = vset.pattern.permute.xlu0 17
    %6724 = vperm.xlu0 %6723, %v257
    %v6725 = vpop.permute.xlu0 %6724
    %6727 = vset.pattern.permute.xlu0 17
    %6728 = vperm.xlu0 %6727, %v258
    %v6729 = vpop.permute.xlu0 %6728
    %6731 = vset.pattern.permute.xlu0 17
    %6732 = vperm.xlu0 %6731, %v259
    %v6733 = vpop.permute.xlu0 %6732
    %v6735 = vadd.f32 %v6715, %v6721
    %v6736 = vadd.f32 %v6716, %v6725
    %v6737 = vadd.f32 %v6717, %v6729
    %v6738 = vadd.f32 %v6718, %v6733
    %v6739 = vadd.f32 %v6735, %v6085
    %v6740 = vadd.f32 %v6736, %v6086
    %v6741 = vadd.f32 %v6737, %v6087
    %v6742 = vadd.f32 %v6738, %v6088
    %v6743 = vld [vmem:[#allocation2 + $0x88] sm:$0xff]
    %v6744 = vld [vmem:[#allocation2 + $0x90] sm:$0xff]
    %v6745 = vld [vmem:[#allocation2 + $0x150] sm:$0xff]
    %v6746 = vld [vmem:[#allocation2 + $0x158] sm:$0xff]
    %v6747 = vld [vmem:[#allocation2 + $0x218] sm:$0xff]
    %v6748 = vld [vmem:[#allocation2 + $0x220] sm:$0xff]
    %v6749 = vld [vmem:[#allocation2 + $0x2e0] sm:$0xff]
    %v6750 = vld [vmem:[#allocation2 + $0x2e8] sm:$0xff]
    %6755 = vrot.lane.b32.xlu0 %v6739, 2
    %v6756 = vpop.permute.xlu0 %6755
    %6757 = vrot.lane.b32.xlu0 %v6740, 2
    %v6758 = vpop.permute.xlu0 %6757
    %6759 = vrot.lane.b32.xlu0 %v6741, 2
    %v6760 = vpop.permute.xlu0 %6759
    %6761 = vrot.lane.b32.xlu0 %v6742, 2
    %v6762 = vpop.permute.xlu0 %6761
    %v6767 = vsel %vm452, 0.0, %v6756
    %v6768 = vsel %vm452, 0.0, %v6758
    %v6769 = vsel %vm452, 0.0, %v6760
    %v6770 = vsel %vm452, 0.0, %v6762
    %v6771 = vmul.f32 %v6767, %v5881
    %v6772 = vmul.f32 %v6768, %v5881
    %v6773 = vmul.f32 %v6769, %v5881
    %v6774 = vmul.f32 %v6770, %v5881
    %6775 = vrot.lane.b32.xlu0 %v6739, 1
    %v6776 = vpop.permute.xlu0 %6775
    %6777 = vrot.lane.b32.xlu0 %v6740, 1
    %v6778 = vpop.permute.xlu0 %6777
    %6779 = vrot.lane.b32.xlu0 %v6741, 1
    %v6780 = vpop.permute.xlu0 %6779
    %6781 = vrot.lane.b32.xlu0 %v6742, 1
    %v6782 = vpop.permute.xlu0 %6781
    %v6787 = vsel %vm493, 0.0, %v6776
    %v6788 = vsel %vm493, 0.0, %v6778
    %v6789 = vsel %vm493, 0.0, %v6780
    %v6790 = vsel %vm493, 0.0, %v6782
    %v6791 = vmul.f32 %v6787, %v5887
    %v6792 = vmul.f32 %v6788, %v5887
    %v6793 = vmul.f32 %v6789, %v5887
    %v6794 = vmul.f32 %v6790, %v5887
    %6795 = vrot.lane.b32.xlu0 %v6739, 127
    %v6796 = vpop.permute.xlu0 %6795
    %6797 = vrot.lane.b32.xlu0 %v6740, 127
    %v6798 = vpop.permute.xlu0 %6797
    %6799 = vrot.lane.b32.xlu0 %v6741, 127
    %v6800 = vpop.permute.xlu0 %6799
    %6801 = vrot.lane.b32.xlu0 %v6742, 127
    %v6802 = vpop.permute.xlu0 %6801
    %v6807 = vsel %vm6153, %v6796, 0.0
    %v6808 = vsel %vm6153, %v6798, 0.0
    %v6809 = vsel %vm6153, %v6800, 0.0
    %v6810 = vsel %vm6153, %v6802, 0.0
    %v6811 = vmul.f32 %v6807, %v5893
    %v6812 = vmul.f32 %v6808, %v5893
    %v6813 = vmul.f32 %v6809, %v5893
    %v6814 = vmul.f32 %v6810, %v5893
    %6815 = vrot.lane.b32.xlu0 %v6739, 126
    %v6816 = vpop.permute.xlu0 %6815
    %6817 = vrot.lane.b32.xlu0 %v6740, 126
    %v6818 = vpop.permute.xlu0 %6817
    %6819 = vrot.lane.b32.xlu0 %v6741, 126
    %v6820 = vpop.permute.xlu0 %6819
    %6821 = vrot.lane.b32.xlu0 %v6742, 126
    %v6822 = vpop.permute.xlu0 %6821
    %v6827 = vsel %vm6174, %v6816, 0.0
    %v6828 = vsel %vm6174, %v6818, 0.0
    %v6829 = vsel %vm6174, %v6820, 0.0
    %v6830 = vsel %vm6174, %v6822, 0.0
    %v6831 = vmul.f32 %v6827, %v5899
    %v6832 = vmul.f32 %v6828, %v5899
    %v6833 = vmul.f32 %v6829, %v5899
    %v6834 = vmul.f32 %v6830, %v5899
    %6835 = vset.pattern.permute.xlu0 14
    %6836 = vperm.xlu0 %6835, %v424
    %v6837 = vpop.permute.xlu0 %6836
    %6839 = vset.pattern.permute.xlu0 14
    %6840 = vperm.xlu0 %6839, %v425
    %v6841 = vpop.permute.xlu0 %6840
    %6843 = vset.pattern.permute.xlu0 14
    %6844 = vperm.xlu0 %6843, %v426
    %v6845 = vpop.permute.xlu0 %6844
    %6847 = vset.pattern.permute.xlu0 14
    %6848 = vperm.xlu0 %6847, %v427
    %v6849 = vpop.permute.xlu0 %6848
    %6859 = vrot.lane.b32.xlu0 %v6743, 64
    %v6860 = vpop.permute.xlu0 %6859
    %6861 = vrot.lane.b32.xlu0 %v6744, 64
    %v6862 = vpop.permute.xlu0 %6861
    %6863 = vrot.lane.b32.xlu0 %v6745, 64
    %v6864 = vpop.permute.xlu0 %6863
    %6865 = vrot.lane.b32.xlu0 %v6746, 64
    %v6866 = vpop.permute.xlu0 %6865
    %6867 = vrot.lane.b32.xlu0 %v6747, 64
    %v6868 = vpop.permute.xlu0 %6867
    %6869 = vrot.lane.b32.xlu0 %v6748, 64
    %v6870 = vpop.permute.xlu0 %6869
    %6871 = vrot.lane.b32.xlu0 %v6749, 64
    %v6872 = vpop.permute.xlu0 %6871
    %6873 = vrot.lane.b32.xlu0 %v6750, 64
    %v6874 = vpop.permute.xlu0 %6873
    %v6875 = vsel %vm1633, %v6860, %v6862
    %v6876 = vsel %vm1633, %v6864, %v6866
    %v6877 = vsel %vm1633, %v6868, %v6870
    %v6878 = vsel %vm1633, %v6872, %v6874
    %v6883 = vsel %vm181, %v6862, 0
    %v6885 = vsel %vm181, %v6866, 0
    %v6887 = vsel %vm181, %v6870, 0
    %v6889 = vsel %vm181, %v6874, 0
    %6891 = vmatpush.msra.mxu0 %v6814
    %6892 = vmatpush.msra.mxu0 %v6813
    %6893 = vmatpush.msra.mxu0 %v6812
    %6894 = vmatpush.msra.mxu0 %v6811
    %6895 = vmatpush.msra.mxu0 %v6742
    %6896 = vmatpush.msra.mxu0 %v6741
    %6897 = vmatpush.msra.mxu0 %v6740
    %6898 = vmatpush.msra.mxu0 %v6739
    %6899 = vmatpush.msra.mxu0 %v6794
    %6900 = vmatpush.msra.mxu0 %v6793
    %6901 = vmatpush.msra.mxu0 %v6792
    %6902 = vmatpush.msra.mxu0 %v6791
    %6903 = vmatpush.msra.mxu0 %v6774
    %6904 = vmatpush.msra.mxu0 %v6773
    %6905 = vmatpush.msra.mxu0 %v6772
    %6906 = vmatpush.msra.mxu0 %v6771
    %6907 = vmatmul.f32.gmra.mxu0 %v6875
    %v6908 = vpop.f32.mrf.mxu0
    %v6909 = vadd.f32 %v6837, %v6908
    %6910 = vmatmul.f32.gmra.mxu0 %v6876
    %v6911 = vpop.f32.mrf.mxu0
    %v6912 = vadd.f32 %v6841, %v6911
    %6913 = vmatmul.f32.gmra.mxu0 %v6877
    %v6914 = vpop.f32.mrf.mxu0
    %v6915 = vadd.f32 %v6845, %v6914
    %6916 = vmatmul.f32.gmra.mxu0 %v6878
    %v6917 = vpop.f32.mrf.mxu0
    %v6918 = vadd.f32 %v6849, %v6917
    %6919 = vdwg.mxu0
    %6920 = vmatpush.msra.mxu0 0.0
    %6921 = vmatpush.msra.mxu0 0.0
    %6922 = vmatpush.msra.mxu0 0.0
    %6923 = vmatpush.msra.mxu0 0.0
    %6924 = vmatpush.msra.mxu0 0.0
    %6925 = vmatpush.msra.mxu0 0.0
    %6926 = vmatpush.msra.mxu0 0.0
    %6927 = vmatpush.msra.mxu0 0.0
    %6928 = vmatpush.msra.mxu0 0.0
    %6929 = vmatpush.msra.mxu0 0.0
    %6930 = vmatpush.msra.mxu0 0.0
    %6931 = vmatpush.msra.mxu0 0.0
    %6932 = vmatpush.msra.mxu0 %v6834
    %6933 = vmatpush.msra.mxu0 %v6833
    %6934 = vmatpush.msra.mxu0 %v6832
    %6935 = vmatpush.msra.mxu0 %v6831
    %6936 = vmatmul.f32.gmra.mxu0 %v6883
    %v6937 = vpop.f32.mrf.mxu0
    %v6938 = vadd.f32 %v6909, %v6937
    %6939 = vmatmul.f32.gmra.mxu0 %v6885
    %v6940 = vpop.f32.mrf.mxu0
    %v6941 = vadd.f32 %v6912, %v6940
    %6942 = vmatmul.f32.gmra.mxu0 %v6887
    %v6943 = vpop.f32.mrf.mxu0
    %v6944 = vadd.f32 %v6915, %v6943
    %6945 = vmatmul.f32.gmra.mxu0 %v6889
    %v6946 = vpop.f32.mrf.mxu0
    %v6947 = vadd.f32 %v6918, %v6946
    %6948 = vdwg.mxu0
    %v6949 = vmax.f32 %v6938, 0.0
    %v6950 = vmax.f32 %v6941, 0.0
    %v6951 = vmax.f32 %v6944, 0.0
    %v6952 = vmax.f32 %v6947, 0.0
    %v6953 = vsel %vm181, %v6949, 0.0
    %6954 = vadd.xlane.f32.xlu0 %v6953
    %v6955 = vpop.xlane.xlu0 %6954
    %v6956 = vsel %vm181, %v6950, 0.0
    %6957 = vadd.xlane.f32.xlu0 %v6956
    %v6958 = vpop.xlane.xlu0 %6957
    %v6959 = vsel %vm181, %v6951, 0.0
    %6960 = vadd.xlane.f32.xlu0 %v6959
    %v6961 = vpop.xlane.xlu0 %6960
    %v6962 = vsel %vm181, %v6952, 0.0
    %6963 = vadd.xlane.f32.xlu0 %v6962
    %v6964 = vpop.xlane.xlu0 %6963
    %v6965 = vmul.f32 %v6955, 0.03125
    %v6966 = vmul.f32 %v6958, 0.03125
    %v6967 = vmul.f32 %v6961, 0.03125
    %v6968 = vmul.f32 %v6964, 0.03125
    %v6969 = vsub.f32 %v6949, %v6965
    %v6970 = vsub.f32 %v6950, %v6966
    %v6971 = vsub.f32 %v6951, %v6967
    %v6972 = vsub.f32 %v6952, %v6968
    %v6973 = vmul.f32 %v6969, %v6969
    %v6974 = vmul.f32 %v6970, %v6970
    %v6975 = vmul.f32 %v6971, %v6971
    %v6976 = vmul.f32 %v6972, %v6972
    %v6977 = vsel %vm181, %v6973, 0.0
    %6978 = vadd.xlane.f32.xlu0 %v6977
    %v6979 = vpop.xlane.xlu0 %6978
    %v6980 = vsel %vm181, %v6974, 0.0
    %6981 = vadd.xlane.f32.xlu0 %v6980
    %v6982 = vpop.xlane.xlu0 %6981
    %v6983 = vsel %vm181, %v6975, 0.0
    %6984 = vadd.xlane.f32.xlu0 %v6983
    %v6985 = vpop.xlane.xlu0 %6984
    %v6986 = vsel %vm181, %v6976, 0.0
    %6987 = vadd.xlane.f32.xlu0 %v6986
    %v6988 = vpop.xlane.xlu0 %6987
    %v6989 = vmul.f32 %v6979, 0.03125
    %v6990 = vmul.f32 %v6982, 0.03125
    %v6991 = vmul.f32 %v6985, 0.03125
    %v6992 = vmul.f32 %v6988, 0.03125
    %v6993 = vadd.f32 %v6989, 1e-05
    %v6994 = vadd.f32 %v6990, 1e-05
    %v6995 = vadd.f32 %v6991, 1e-05
    %v6996 = vadd.f32 %v6992, 1e-05
    %v6997 = vrsqrt.pop %v6993
    %v6998 = vmul.f32 %v6997, %v6993
    %v6999 = vmul.f32 %v6998, %v6997
    %v7000 = vmul.f32 0.5, %v6999
    %v7001 = vsub.f32 1.5, %v7000
    %v7002 = vmul.f32 %v6997, %v7001
    %vm7003 = vweird.f32 %v6993
    %vm7004 = vweird.f32 %v6997
    %vm7005 = vmor %vm7003, %vm7004
    %v7006 = vsel %vm7005, %v6997, %v7002
    %v7007 = vrsqrt.pop %v6994
    %v7008 = vmul.f32 %v7007, %v6994
    %v7009 = vmul.f32 %v7008, %v7007
    %v7010 = vmul.f32 0.5, %v7009
    %v7011 = vsub.f32 1.5, %v7010
    %v7012 = vmul.f32 %v7007, %v7011
    %vm7013 = vweird.f32 %v6994
    %vm7014 = vweird.f32 %v7007
    %vm7015 = vmor %vm7013, %vm7014
    %v7016 = vsel %vm7015, %v7007, %v7012
    %v7017 = vrsqrt.pop %v6995
    %v7018 = vmul.f32 %v7017, %v6995
    %v7019 = vmul.f32 %v7018, %v7017
    %v7020 = vmul.f32 0.5, %v7019
    %v7021 = vsub.f32 1.5, %v7020
    %v7022 = vmul.f32 %v7017, %v7021
    %vm7023 = vweird.f32 %v6995
    %vm7024 = vweird.f32 %v7017
    %vm7025 = vmor %vm7023, %vm7024
    %v7026 = vsel %vm7025, %v7017, %v7022
    %v7027 = vrsqrt.pop %v6996
    %v7028 = vmul.f32 %v7027, %v6996
    %v7029 = vmul.f32 %v7028, %v7027
    %v7030 = vmul.f32 0.5, %v7029
    %v7031 = vsub.f32 1.5, %v7030
    %v7032 = vmul.f32 %v7027, %v7031
    %vm7033 = vweird.f32 %v6996
    %vm7034 = vweird.f32 %v7027
    %vm7035 = vmor %vm7033, %vm7034
    %v7036 = vsel %vm7035, %v7027, %v7032
    %v7037 = vmul.f32 %v6969, %v7006
    %v7038 = vmul.f32 %v6970, %v7016
    %v7039 = vmul.f32 %v6971, %v7026
    %v7040 = vmul.f32 %v6972, %v7036
    %7041 = vset.pattern.permute.xlu0 18
    %7042 = vperm.xlu0 %7041, %v252
    %v7043 = vpop.permute.xlu0 %7042
    %7045 = vset.pattern.permute.xlu0 18
    %7046 = vperm.xlu0 %7045, %v253
    %v7047 = vpop.permute.xlu0 %7046
    %7049 = vset.pattern.permute.xlu0 18
    %7050 = vperm.xlu0 %7049, %v254
    %v7051 = vpop.permute.xlu0 %7050
    %7053 = vset.pattern.permute.xlu0 18
    %7054 = vperm.xlu0 %7053, %v255
    %v7055 = vpop.permute.xlu0 %7054
    %v7057 = vmul.f32 %v7043, %v7037
    %v7058 = vmul.f32 %v7047, %v7038
    %v7059 = vmul.f32 %v7051, %v7039
    %v7060 = vmul.f32 %v7055, %v7040
    %7061 = vset.pattern.permute.xlu0 18
    %7062 = vperm.xlu0 %7061, %v256
    %v7063 = vpop.permute.xlu0 %7062
    %7065 = vset.pattern.permute.xlu0 18
    %7066 = vperm.xlu0 %7065, %v257
    %v7067 = vpop.permute.xlu0 %7066
    %7069 = vset.pattern.permute.xlu0 18
    %7070 = vperm.xlu0 %7069, %v258
    %v7071 = vpop.permute.xlu0 %7070
    %7073 = vset.pattern.permute.xlu0 18
    %7074 = vperm.xlu0 %7073, %v259
    %v7075 = vpop.permute.xlu0 %7074
    %v7077 = vadd.f32 %v7057, %v7063
    %v7078 = vadd.f32 %v7058, %v7067
    %v7079 = vadd.f32 %v7059, %v7071
    %v7080 = vadd.f32 %v7060, %v7075
    %v7081 = vld [vmem:[#allocation2 + $0x90] sm:$0xff]
    %v7082 = vld [vmem:[#allocation2 + $0x98] sm:$0xff]
    %v7083 = vld [vmem:[#allocation2 + $0x158] sm:$0xff]
    %v7084 = vld [vmem:[#allocation2 + $0x160] sm:$0xff]
    %v7085 = vld [vmem:[#allocation2 + $0x220] sm:$0xff]
    %v7086 = vld [vmem:[#allocation2 + $0x228] sm:$0xff]
    %v7087 = vld [vmem:[#allocation2 + $0x2e8] sm:$0xff]
    %v7088 = vld [vmem:[#allocation2 + $0x2f0] sm:$0xff]
    %7093 = vrot.lane.b32.xlu0 %v7077, 2
    %v7094 = vpop.permute.xlu0 %7093
    %7095 = vrot.lane.b32.xlu0 %v7078, 2
    %v7096 = vpop.permute.xlu0 %7095
    %7097 = vrot.lane.b32.xlu0 %v7079, 2
    %v7098 = vpop.permute.xlu0 %7097
    %7099 = vrot.lane.b32.xlu0 %v7080, 2
    %v7100 = vpop.permute.xlu0 %7099
    %v7105 = vsel %vm452, 0.0, %v7094
    %v7106 = vsel %vm452, 0.0, %v7096
    %v7107 = vsel %vm452, 0.0, %v7098
    %v7108 = vsel %vm452, 0.0, %v7100
    %v7109 = vmul.f32 %v7105, %v5881
    %v7110 = vmul.f32 %v7106, %v5881
    %v7111 = vmul.f32 %v7107, %v5881
    %v7112 = vmul.f32 %v7108, %v5881
    %7113 = vrot.lane.b32.xlu0 %v7077, 1
    %v7114 = vpop.permute.xlu0 %7113
    %7115 = vrot.lane.b32.xlu0 %v7078, 1
    %v7116 = vpop.permute.xlu0 %7115
    %7117 = vrot.lane.b32.xlu0 %v7079, 1
    %v7118 = vpop.permute.xlu0 %7117
    %7119 = vrot.lane.b32.xlu0 %v7080, 1
    %v7120 = vpop.permute.xlu0 %7119
    %v7125 = vsel %vm493, 0.0, %v7114
    %v7126 = vsel %vm493, 0.0, %v7116
    %v7127 = vsel %vm493, 0.0, %v7118
    %v7128 = vsel %vm493, 0.0, %v7120
    %v7129 = vmul.f32 %v7125, %v5887
    %v7130 = vmul.f32 %v7126, %v5887
    %v7131 = vmul.f32 %v7127, %v5887
    %v7132 = vmul.f32 %v7128, %v5887
    %7133 = vrot.lane.b32.xlu0 %v7077, 127
    %v7134 = vpop.permute.xlu0 %7133
    %7135 = vrot.lane.b32.xlu0 %v7078, 127
    %v7136 = vpop.permute.xlu0 %7135
    %7137 = vrot.lane.b32.xlu0 %v7079, 127
    %v7138 = vpop.permute.xlu0 %7137
    %7139 = vrot.lane.b32.xlu0 %v7080, 127
    %v7140 = vpop.permute.xlu0 %7139
    %v7145 = vsel %vm6153, %v7134, 0.0
    %v7146 = vsel %vm6153, %v7136, 0.0
    %v7147 = vsel %vm6153, %v7138, 0.0
    %v7148 = vsel %vm6153, %v7140, 0.0
    %v7149 = vmul.f32 %v7145, %v5893
    %v7150 = vmul.f32 %v7146, %v5893
    %v7151 = vmul.f32 %v7147, %v5893
    %v7152 = vmul.f32 %v7148, %v5893
    %7153 = vrot.lane.b32.xlu0 %v7077, 126
    %v7154 = vpop.permute.xlu0 %7153
    %7155 = vrot.lane.b32.xlu0 %v7078, 126
    %v7156 = vpop.permute.xlu0 %7155
    %7157 = vrot.lane.b32.xlu0 %v7079, 126
    %v7158 = vpop.permute.xlu0 %7157
    %7159 = vrot.lane.b32.xlu0 %v7080, 126
    %v7160 = vpop.permute.xlu0 %7159
    %v7165 = vsel %vm6174, %v7154, 0.0
    %v7166 = vsel %vm6174, %v7156, 0.0
    %v7167 = vsel %vm6174, %v7158, 0.0
    %v7168 = vsel %vm6174, %v7160, 0.0
    %v7169 = vmul.f32 %v7165, %v5899
    %v7170 = vmul.f32 %v7166, %v5899
    %v7171 = vmul.f32 %v7167, %v5899
    %v7172 = vmul.f32 %v7168, %v5899
    %7173 = vset.pattern.permute.xlu0 15
    %7174 = vperm.xlu0 %7173, %v424
    %v7175 = vpop.permute.xlu0 %7174
    %7177 = vset.pattern.permute.xlu0 15
    %7178 = vperm.xlu0 %7177, %v425
    %v7179 = vpop.permute.xlu0 %7178
    %7181 = vset.pattern.permute.xlu0 15
    %7182 = vperm.xlu0 %7181, %v426
    %v7183 = vpop.permute.xlu0 %7182
    %7185 = vset.pattern.permute.xlu0 15
    %7186 = vperm.xlu0 %7185, %v427
    %v7187 = vpop.permute.xlu0 %7186
    %7197 = vrot.lane.b32.xlu0 %v7081, 32
    %v7198 = vpop.permute.xlu0 %7197
    %7199 = vrot.lane.b32.xlu0 %v7082, 32
    %v7200 = vpop.permute.xlu0 %7199
    %7201 = vrot.lane.b32.xlu0 %v7083, 32
    %v7202 = vpop.permute.xlu0 %7201
    %7203 = vrot.lane.b32.xlu0 %v7084, 32
    %v7204 = vpop.permute.xlu0 %7203
    %7205 = vrot.lane.b32.xlu0 %v7085, 32
    %v7206 = vpop.permute.xlu0 %7205
    %7207 = vrot.lane.b32.xlu0 %v7086, 32
    %v7208 = vpop.permute.xlu0 %7207
    %7209 = vrot.lane.b32.xlu0 %v7087, 32
    %v7210 = vpop.permute.xlu0 %7209
    %7211 = vrot.lane.b32.xlu0 %v7088, 32
    %v7212 = vpop.permute.xlu0 %7211
    %v7213 = vsel %vm181, %v7198, %v7200
    %v7214 = vsel %vm181, %v7202, %v7204
    %v7215 = vsel %vm181, %v7206, %v7208
    %v7216 = vsel %vm181, %v7210, %v7212
    %v7221 = vsel %vm181, %v7200, 0
    %v7223 = vsel %vm181, %v7204, 0
    %v7225 = vsel %vm181, %v7208, 0
    %v7227 = vsel %vm181, %v7212, 0
    %7229 = vmatpush.msra.mxu0 %v7152
    %7230 = vmatpush.msra.mxu0 %v7151
    %7231 = vmatpush.msra.mxu0 %v7150
    %7232 = vmatpush.msra.mxu0 %v7149
    %7233 = vmatpush.msra.mxu0 %v7080
    %7234 = vmatpush.msra.mxu0 %v7079
    %7235 = vmatpush.msra.mxu0 %v7078
    %7236 = vmatpush.msra.mxu0 %v7077
    %7237 = vmatpush.msra.mxu0 %v7132
    %7238 = vmatpush.msra.mxu0 %v7131
    %7239 = vmatpush.msra.mxu0 %v7130
    %7240 = vmatpush.msra.mxu0 %v7129
    %7241 = vmatpush.msra.mxu0 %v7112
    %7242 = vmatpush.msra.mxu0 %v7111
    %7243 = vmatpush.msra.mxu0 %v7110
    %7244 = vmatpush.msra.mxu0 %v7109
    %7245 = vmatmul.f32.gmra.mxu0 %v7213
    %v7246 = vpop.f32.mrf.mxu0
    %v7247 = vadd.f32 %v7175, %v7246
    %7248 = vmatmul.f32.gmra.mxu0 %v7214
    %v7249 = vpop.f32.mrf.mxu0
    %v7250 = vadd.f32 %v7179, %v7249
    %7251 = vmatmul.f32.gmra.mxu0 %v7215
    %v7252 = vpop.f32.mrf.mxu0
    %v7253 = vadd.f32 %v7183, %v7252
    %7254 = vmatmul.f32.gmra.mxu0 %v7216
    %v7255 = vpop.f32.mrf.mxu0
    %v7256 = vadd.f32 %v7187, %v7255
    %7257 = vdwg.mxu0
    %7258 = vmatpush.msra.mxu0 0.0
    %7259 = vmatpush.msra.mxu0 0.0
    %7260 = vmatpush.msra.mxu0 0.0
    %7261 = vmatpush.msra.mxu0 0.0
    %7262 = vmatpush.msra.mxu0 0.0
    %7263 = vmatpush.msra.mxu0 0.0
    %7264 = vmatpush.msra.mxu0 0.0
    %7265 = vmatpush.msra.mxu0 0.0
    %7266 = vmatpush.msra.mxu0 0.0
    %7267 = vmatpush.msra.mxu0 0.0
    %7268 = vmatpush.msra.mxu0 0.0
    %7269 = vmatpush.msra.mxu0 0.0
    %7270 = vmatpush.msra.mxu0 %v7172
    %7271 = vmatpush.msra.mxu0 %v7171
    %7272 = vmatpush.msra.mxu0 %v7170
    %7273 = vmatpush.msra.mxu0 %v7169
    %7274 = vmatmul.f32.gmra.mxu0 %v7221
    %v7275 = vpop.f32.mrf.mxu0
    %v7276 = vadd.f32 %v7247, %v7275
    %7277 = vmatmul.f32.gmra.mxu0 %v7223
    %v7278 = vpop.f32.mrf.mxu0
    %v7279 = vadd.f32 %v7250, %v7278
    %7280 = vmatmul.f32.gmra.mxu0 %v7225
    %v7281 = vpop.f32.mrf.mxu0
    %v7282 = vadd.f32 %v7253, %v7281
    %7283 = vmatmul.f32.gmra.mxu0 %v7227
    %v7284 = vpop.f32.mrf.mxu0
    %v7285 = vadd.f32 %v7256, %v7284
    %7286 = vdwg.mxu0
    %v7287 = vmax.f32 %v7276, 0.0
    %v7288 = vmax.f32 %v7279, 0.0
    %v7289 = vmax.f32 %v7282, 0.0
    %v7290 = vmax.f32 %v7285, 0.0
    %v7291 = vsel %vm181, %v7287, 0.0
    %7292 = vadd.xlane.f32.xlu0 %v7291
    %v7293 = vpop.xlane.xlu0 %7292
    %v7294 = vsel %vm181, %v7288, 0.0
    %7295 = vadd.xlane.f32.xlu0 %v7294
    %v7296 = vpop.xlane.xlu0 %7295
    %v7297 = vsel %vm181, %v7289, 0.0
    %7298 = vadd.xlane.f32.xlu0 %v7297
    %v7299 = vpop.xlane.xlu0 %7298
    %v7300 = vsel %vm181, %v7290, 0.0
    %7301 = vadd.xlane.f32.xlu0 %v7300
    %v7302 = vpop.xlane.xlu0 %7301
    %v7303 = vmul.f32 %v7293, 0.03125
    %v7304 = vmul.f32 %v7296, 0.03125
    %v7305 = vmul.f32 %v7299, 0.03125
    %v7306 = vmul.f32 %v7302, 0.03125
    %v7307 = vsub.f32 %v7287, %v7303
    %v7308 = vsub.f32 %v7288, %v7304
    %v7309 = vsub.f32 %v7289, %v7305
    %v7310 = vsub.f32 %v7290, %v7306
    %v7311 = vmul.f32 %v7307, %v7307
    %v7312 = vmul.f32 %v7308, %v7308
    %v7313 = vmul.f32 %v7309, %v7309
    %v7314 = vmul.f32 %v7310, %v7310
    %v7315 = vsel %vm181, %v7311, 0.0
    %7316 = vadd.xlane.f32.xlu0 %v7315
    %v7317 = vpop.xlane.xlu0 %7316
    %v7318 = vsel %vm181, %v7312, 0.0
    %7319 = vadd.xlane.f32.xlu0 %v7318
    %v7320 = vpop.xlane.xlu0 %7319
    %v7321 = vsel %vm181, %v7313, 0.0
    %7322 = vadd.xlane.f32.xlu0 %v7321
    %v7323 = vpop.xlane.xlu0 %7322
    %v7324 = vsel %vm181, %v7314, 0.0
    %7325 = vadd.xlane.f32.xlu0 %v7324
    %v7326 = vpop.xlane.xlu0 %7325
    %v7327 = vmul.f32 %v7317, 0.03125
    %v7328 = vmul.f32 %v7320, 0.03125
    %v7329 = vmul.f32 %v7323, 0.03125
    %v7330 = vmul.f32 %v7326, 0.03125
    %v7331 = vadd.f32 %v7327, 1e-05
    %v7332 = vadd.f32 %v7328, 1e-05
    %v7333 = vadd.f32 %v7329, 1e-05
    %v7334 = vadd.f32 %v7330, 1e-05
    %v7335 = vrsqrt.pop %v7331
    %v7336 = vmul.f32 %v7335, %v7331
    %v7337 = vmul.f32 %v7336, %v7335
    %v7338 = vmul.f32 0.5, %v7337
    %v7339 = vsub.f32 1.5, %v7338
    %v7340 = vmul.f32 %v7335, %v7339
    %vm7341 = vweird.f32 %v7331
    %vm7342 = vweird.f32 %v7335
    %vm7343 = vmor %vm7341, %vm7342
    %v7344 = vsel %vm7343, %v7335, %v7340
    %v7345 = vrsqrt.pop %v7332
    %v7346 = vmul.f32 %v7345, %v7332
    %v7347 = vmul.f32 %v7346, %v7345
    %v7348 = vmul.f32 0.5, %v7347
    %v7349 = vsub.f32 1.5, %v7348
    %v7350 = vmul.f32 %v7345, %v7349
    %vm7351 = vweird.f32 %v7332
    %vm7352 = vweird.f32 %v7345
    %vm7353 = vmor %vm7351, %vm7352
    %v7354 = vsel %vm7353, %v7345, %v7350
    %v7355 = vrsqrt.pop %v7333
    %v7356 = vmul.f32 %v7355, %v7333
    %v7357 = vmul.f32 %v7356, %v7355
    %v7358 = vmul.f32 0.5, %v7357
    %v7359 = vsub.f32 1.5, %v7358
    %v7360 = vmul.f32 %v7355, %v7359
    %vm7361 = vweird.f32 %v7333
    %vm7362 = vweird.f32 %v7355
    %vm7363 = vmor %vm7361, %vm7362
    %v7364 = vsel %vm7363, %v7355, %v7360
    %v7365 = vrsqrt.pop %v7334
    %v7366 = vmul.f32 %v7365, %v7334
    %v7367 = vmul.f32 %v7366, %v7365
    %v7368 = vmul.f32 0.5, %v7367
    %v7369 = vsub.f32 1.5, %v7368
    %v7370 = vmul.f32 %v7365, %v7369
    %vm7371 = vweird.f32 %v7334
    %vm7372 = vweird.f32 %v7365
    %vm7373 = vmor %vm7371, %vm7372
    %v7374 = vsel %vm7373, %v7365, %v7370
    %v7375 = vmul.f32 %v7307, %v7344
    %v7376 = vmul.f32 %v7308, %v7354
    %v7377 = vmul.f32 %v7309, %v7364
    %v7378 = vmul.f32 %v7310, %v7374
    %7379 = vset.pattern.permute.xlu0 19
    %7380 = vperm.xlu0 %7379, %v252
    %v7381 = vpop.permute.xlu0 %7380
    %7383 = vset.pattern.permute.xlu0 19
    %7384 = vperm.xlu0 %7383, %v253
    %v7385 = vpop.permute.xlu0 %7384
    %7387 = vset.pattern.permute.xlu0 19
    %7388 = vperm.xlu0 %7387, %v254
    %v7389 = vpop.permute.xlu0 %7388
    %7391 = vset.pattern.permute.xlu0 19
    %7392 = vperm.xlu0 %7391, %v255
    %v7393 = vpop.permute.xlu0 %7392
    %v7395 = vmul.f32 %v7381, %v7375
    %v7396 = vmul.f32 %v7385, %v7376
    %v7397 = vmul.f32 %v7389, %v7377
    %v7398 = vmul.f32 %v7393, %v7378
    %7399 = vset.pattern.permute.xlu0 19
    %7400 = vperm.xlu0 %7399, %v256
    %v7401 = vpop.permute.xlu0 %7400
    %7403 = vset.pattern.permute.xlu0 19
    %7404 = vperm.xlu0 %7403, %v257
    %v7405 = vpop.permute.xlu0 %7404
    %7407 = vset.pattern.permute.xlu0 19
    %7408 = vperm.xlu0 %7407, %v258
    %v7409 = vpop.permute.xlu0 %7408
    %7411 = vset.pattern.permute.xlu0 19
    %7412 = vperm.xlu0 %7411, %v259
    %v7413 = vpop.permute.xlu0 %7412
    %v7415 = vadd.f32 %v7395, %v7401
    %v7416 = vadd.f32 %v7396, %v7405
    %v7417 = vadd.f32 %v7397, %v7409
    %v7418 = vadd.f32 %v7398, %v7413
    %v7419 = vadd.f32 %v7415, %v6739
    %v7420 = vadd.f32 %v7416, %v6740
    %v7421 = vadd.f32 %v7417, %v6741
    %v7422 = vadd.f32 %v7418, %v6742
    %7427 = vrot.lane.b32.xlu0 %v7419, 127
    %v7428 = vpop.permute.xlu0 %7427
    %7429 = vrot.lane.b32.xlu0 %v7420, 127
    %v7430 = vpop.permute.xlu0 %7429
    %7431 = vrot.lane.b32.xlu0 %v7421, 127
    %v7432 = vpop.permute.xlu0 %7431
    %7433 = vrot.lane.b32.xlu0 %v7422, 127
    %v7434 = vpop.permute.xlu0 %7433
    %v7439 = vsel %vm6153, %v7428, 0.0
    %v7440 = vsel %vm6153, %v7430, 0.0
    %v7441 = vsel %vm6153, %v7432, 0.0
    %v7442 = vsel %vm6153, %v7434, 0.0
    %v7443 = vmax.f32 %v7419, %v7439
    %v7444 = vmax.f32 %v7420, %v7440
    %v7445 = vmax.f32 %v7421, %v7441
    %v7446 = vmax.f32 %v7422, %v7442
    %v7448 = vsel %vm181, %v7443, 0
    %v7451 = vsel %vm181, %v7444, 0
    %v7454 = vsel %vm181, %v7445, 0
    %v7457 = vsel %vm181, %v7446, 0
    %7459 = vmatpush.msra.mxu0 0.0
    %7460 = vmatpush.msra.mxu0 0.0
    %7461 = vmatpush.msra.mxu0 0.0
    %7462 = vmatpush.msra.mxu0 0.0
    %7463 = vmatpush.msra.mxu0 0.0
    %7464 = vmatpush.msra.mxu0 0.0
    %7465 = vmatpush.msra.mxu0 0.0
    %7466 = vmatpush.msra.mxu0 0.0
    %7467 = vmatpush.msra.mxu0 0.0
    %7468 = vmatpush.msra.mxu0 0.0
    %7469 = vmatpush.msra.mxu0 0.0
    %7470 = vmatpush.msra.mxu0 0.0
    %7471 = vmatpush.msra.mxu0 %v2583
    %7472 = vmatpush.msra.mxu0 %v2582
    %7473 = vmatpush.msra.mxu0 %v2581
    %7474 = vmatpush.msra.mxu0 %v2580
    %7475 = vmatmul.f32.gmra.mxu0 %v7448
    %v7476 = vpop.f32.mrf.mxu0
    %v7477 = vadd.f32 0.0, %v7476
    %7478 = vmatmul.f32.gmra.mxu0 %v7451
    %v7479 = vpop.f32.mrf.mxu0
    %v7480 = vadd.f32 0.0, %v7479
    %7481 = vmatmul.f32.gmra.mxu0 %v7454
    %v7482 = vpop.f32.mrf.mxu0
    %v7483 = vadd.f32 0.0, %v7482
    %7484 = vmatmul.f32.gmra.mxu0 %v7457
    %v7485 = vpop.f32.mrf.mxu0
    %v7486 = vadd.f32 0.0, %v7485
    %7487 = vdwg.mxu0
    %vm7488 = vcmp.lt.s32.totalorder %v79, 0
    %v7489 = vsub.s32 0, %v79
    %v7490 = vsel %vm7488, %v7489, %v79
    %v7491 = vshrl.u32 %v7490, 3
    %v7492 = vand.u32 %v7490, 7
    %v7493 = vsub.s32 0, %v7492
    %v7494 = vsel %vm7488, %v7493, %v7492
    %vm7495 = vcmp.ne.s32.totalorder %v7494, 0
    %vm7496 = vcmp.lt.s32.totalorder %v7494, 0
    %vm7497 = vmand %vm7496, %vm7495
    %v7498 = vadd.s32 %v7494, 8
    %v7499 = vsel %vm7497, %v7498, %v7494
    %v7500 = vadd.s32 %v7499, 4294967294
    %vm7501 = vcmp.ge.s32.totalorder %v7500, 0
    %vm7502 = vcmp.lt.s32.totalorder %v7500, 8
    %vm7503 = vmand %vm7501, %vm7502
    %v7504 = vsel %vm7503, 1, 0
    %v7505 = vcvt.s32.f32 %v7504
    %v7506 = vadd.s32 %v7499, 4294967295
    %vm7507 = vcmp.ge.s32.totalorder %v7506, 0
    %vm7508 = vcmp.lt.s32.totalorder %v7506, 8
    %vm7509 = vmand %vm7507, %vm7508
    %v7510 = vsel %vm7509, 1, 0
    %v7511 = vcvt.s32.f32 %v7510
    %v7512 = vadd.s32 %v7499, 1
    %vm7513 = vcmp.ge.s32.totalorder %v7512, 0
    %vm7514 = vcmp.lt.s32.totalorder %v7512, 8
    %vm7515 = vmand %vm7513, %vm7514
    %v7516 = vsel %vm7515, 1, 0
    %v7517 = vcvt.s32.f32 %v7516
    %v7518 = vadd.s32 %v7499, 2
    %vm7519 = vcmp.ge.s32.totalorder %v7518, 0
    %vm7520 = vcmp.lt.s32.totalorder %v7518, 8
    %vm7521 = vmand %vm7519, %vm7520
    %v7522 = vsel %vm7521, 1, 0
    %v7523 = vcvt.s32.f32 %v7522
    %v7524 = vld [vmem:[%s1 + $0x8] sm:$0xff]
    %v7525 = vld [vmem:[%s1 + $0x18] sm:$0xff]
    %v7526 = vld [vmem:[%s1 + $0x28] sm:$0xff]
    %v7527 = vld [vmem:[%s1 + $0x38] sm:$0xff]
    %7528 = vset.pattern.permute.xlu0 4
    %7529 = vperm.xlu0 %7528, %v157
    %v7530 = vpop.permute.xlu0 %7529
    %7532 = vset.pattern.permute.xlu0 4
    %7533 = vperm.xlu0 %7532, %v158
    %v7534 = vpop.permute.xlu0 %7533
    %7536 = vset.pattern.permute.xlu0 4
    %7537 = vperm.xlu0 %7536, %v159
    %v7538 = vpop.permute.xlu0 %7537
    %7540 = vset.pattern.permute.xlu0 4
    %7541 = vperm.xlu0 %7540, %v160
    %v7542 = vpop.permute.xlu0 %7541
    %v7545 = vsel %vm181, %v7524, 0
    %v7548 = vsel %vm181, %v7525, 0
    %v7551 = vsel %vm181, %v7526, 0
    %v7554 = vsel %vm181, %v7527, 0
    %7556 = vmatpush.msra.mxu0 0.0
    %7557 = vmatpush.msra.mxu0 0.0
    %7558 = vmatpush.msra.mxu0 0.0
    %7559 = vmatpush.msra.mxu0 0.0
    %7560 = vmatpush.msra.mxu0 0.0
    %7561 = vmatpush.msra.mxu0 0.0
    %7562 = vmatpush.msra.mxu0 0.0
    %7563 = vmatpush.msra.mxu0 0.0
    %7564 = vmatpush.msra.mxu0 0.0
    %7565 = vmatpush.msra.mxu0 0.0
    %7566 = vmatpush.msra.mxu0 0.0
    %7567 = vmatpush.msra.mxu0 0.0
    %7568 = vmatpush.msra.mxu0 %v7486
    %7569 = vmatpush.msra.mxu0 %v7483
    %7570 = vmatpush.msra.mxu0 %v7480
    %7571 = vmatpush.msra.mxu0 %v7477
    %7572 = vmatmul.f32.gmra.mxu0 %v7545
    %v7573 = vpop.f32.mrf.mxu0
    %v7574 = vadd.f32 %v7530, %v7573
    %7575 = vmatmul.f32.gmra.mxu0 %v7548
    %v7576 = vpop.f32.mrf.mxu0
    %v7577 = vadd.f32 %v7534, %v7576
    %7578 = vmatmul.f32.gmra.mxu0 %v7551
    %v7579 = vpop.f32.mrf.mxu0
    %v7580 = vadd.f32 %v7538, %v7579
    %7581 = vmatmul.f32.gmra.mxu0 %v7554
    %v7582 = vpop.f32.mrf.mxu0
    %v7583 = vadd.f32 %v7542, %v7582
    %7584 = vdwg.mxu0
    %vm7585 = vcmask 130048
    %v7586 = vsel %vm7585, %v7574, 0.0
    %7587 = vadd.xlane.f32.xlu0 %v7586
    %v7588 = vpop.xlane.xlu0 %7587
    %v7589 = vsel %vm7585, %v7577, 0.0
    %7590 = vadd.xlane.f32.xlu0 %v7589
    %v7591 = vpop.xlane.xlu0 %7590
    %v7592 = vsel %vm7585, %v7580, 0.0
    %7593 = vadd.xlane.f32.xlu0 %v7592
    %v7594 = vpop.xlane.xlu0 %7593
    %v7595 = vsel %vm7585, %v7583, 0.0
    %7596 = vadd.xlane.f32.xlu0 %v7595
    %v7597 = vpop.xlane.xlu0 %7596
    %v7598 = vmul.f32 %v7588, 0.0625
    %v7599 = vmul.f32 %v7591, 0.0625
    %v7600 = vmul.f32 %v7594, 0.0625
    %v7601 = vmul.f32 %v7597, 0.0625
    %v7602 = vsub.f32 %v7574, %v7598
    %v7603 = vsub.f32 %v7577, %v7599
    %v7604 = vsub.f32 %v7580, %v7600
    %v7605 = vsub.f32 %v7583, %v7601
    %v7606 = vmul.f32 %v7602, %v7602
    %v7607 = vmul.f32 %v7603, %v7603
    %v7608 = vmul.f32 %v7604, %v7604
    %v7609 = vmul.f32 %v7605, %v7605
    %v7610 = vsel %vm7585, %v7606, 0.0
    %7611 = vadd.xlane.f32.xlu0 %v7610
    %v7612 = vpop.xlane.xlu0 %7611
    %v7613 = vsel %vm7585, %v7607, 0.0
    %7614 = vadd.xlane.f32.xlu0 %v7613
    %v7615 = vpop.xlane.xlu0 %7614
    %v7616 = vsel %vm7585, %v7608, 0.0
    %7617 = vadd.xlane.f32.xlu0 %v7616
    %v7618 = vpop.xlane.xlu0 %7617
    %v7619 = vsel %vm7585, %v7609, 0.0
    %7620 = vadd.xlane.f32.xlu0 %v7619
    %v7621 = vpop.xlane.xlu0 %7620
    %v7622 = vmul.f32 %v7612, 0.0625
    %v7623 = vmul.f32 %v7615, 0.0625
    %v7624 = vmul.f32 %v7618, 0.0625
    %v7625 = vmul.f32 %v7621, 0.0625
    %v7626 = vadd.f32 %v7622, 1e-05
    %v7627 = vadd.f32 %v7623, 1e-05
    %v7628 = vadd.f32 %v7624, 1e-05
    %v7629 = vadd.f32 %v7625, 1e-05
    %v7630 = vrsqrt.pop %v7626
    %v7631 = vmul.f32 %v7630, %v7626
    %v7632 = vmul.f32 %v7631, %v7630
    %v7633 = vmul.f32 0.5, %v7632
    %v7634 = vsub.f32 1.5, %v7633
    %v7635 = vmul.f32 %v7630, %v7634
    %vm7636 = vweird.f32 %v7626
    %vm7637 = vweird.f32 %v7630
    %vm7638 = vmor %vm7636, %vm7637
    %v7639 = vsel %vm7638, %v7630, %v7635
    %v7640 = vrsqrt.pop %v7627
    %v7641 = vmul.f32 %v7640, %v7627
    %v7642 = vmul.f32 %v7641, %v7640
    %v7643 = vmul.f32 0.5, %v7642
    %v7644 = vsub.f32 1.5, %v7643
    %v7645 = vmul.f32 %v7640, %v7644
    %vm7646 = vweird.f32 %v7627
    %vm7647 = vweird.f32 %v7640
    %vm7648 = vmor %vm7646, %vm7647
    %v7649 = vsel %vm7648, %v7640, %v7645
    %v7650 = vrsqrt.pop %v7628
    %v7651 = vmul.f32 %v7650, %v7628
    %v7652 = vmul.f32 %v7651, %v7650
    %v7653 = vmul.f32 0.5, %v7652
    %v7654 = vsub.f32 1.5, %v7653
    %v7655 = vmul.f32 %v7650, %v7654
    %vm7656 = vweird.f32 %v7628
    %vm7657 = vweird.f32 %v7650
    %vm7658 = vmor %vm7656, %vm7657
    %v7659 = vsel %vm7658, %v7650, %v7655
    %v7660 = vrsqrt.pop %v7629
    %v7661 = vmul.f32 %v7660, %v7629
    %v7662 = vmul.f32 %v7661, %v7660
    %v7663 = vmul.f32 0.5, %v7662
    %v7664 = vsub.f32 1.5, %v7663
    %v7665 = vmul.f32 %v7660, %v7664
    %vm7666 = vweird.f32 %v7629
    %vm7667 = vweird.f32 %v7660
    %vm7668 = vmor %vm7666, %vm7667
    %v7669 = vsel %vm7668, %v7660, %v7665
    %v7670 = vmul.f32 %v7602, %v7639
    %v7671 = vmul.f32 %v7603, %v7649
    %v7672 = vmul.f32 %v7604, %v7659
    %v7673 = vmul.f32 %v7605, %v7669
    %7674 = vset.pattern.permute.xlu0 20
    %7675 = vperm.xlu0 %7674, %v252
    %v7676 = vpop.permute.xlu0 %7675
    %7678 = vset.pattern.permute.xlu0 20
    %7679 = vperm.xlu0 %7678, %v253
    %v7680 = vpop.permute.xlu0 %7679
    %7682 = vset.pattern.permute.xlu0 20
    %7683 = vperm.xlu0 %7682, %v254
    %v7684 = vpop.permute.xlu0 %7683
    %7686 = vset.pattern.permute.xlu0 20
    %7687 = vperm.xlu0 %7686, %v255
    %v7688 = vpop.permute.xlu0 %7687
    %v7690 = vmul.f32 %v7676, %v7670
    %v7691 = vmul.f32 %v7680, %v7671
    %v7692 = vmul.f32 %v7684, %v7672
    %v7693 = vmul.f32 %v7688, %v7673
    %7694 = vset.pattern.permute.xlu0 20
    %7695 = vperm.xlu0 %7694, %v256
    %v7696 = vpop.permute.xlu0 %7695
    %7698 = vset.pattern.permute.xlu0 20
    %7699 = vperm.xlu0 %7698, %v257
    %v7700 = vpop.permute.xlu0 %7699
    %7702 = vset.pattern.permute.xlu0 20
    %7703 = vperm.xlu0 %7702, %v258
    %v7704 = vpop.permute.xlu0 %7703
    %7706 = vset.pattern.permute.xlu0 20
    %7707 = vperm.xlu0 %7706, %v259
    %v7708 = vpop.permute.xlu0 %7707
    %v7710 = vadd.f32 %v7690, %v7696
    %v7711 = vadd.f32 %v7691, %v7700
    %v7712 = vadd.f32 %v7692, %v7704
    %v7713 = vadd.f32 %v7693, %v7708
    %v7714 = vld [vmem:[#allocation2 + $0xa0] sm:$0xff]
    %v7715 = vld [vmem:[#allocation2 + $0xa8] sm:$0xff]
    %v7716 = vld [vmem:[#allocation2 + $0x168] sm:$0xff]
    %v7717 = vld [vmem:[#allocation2 + $0x170] sm:$0xff]
    %v7718 = vld [vmem:[#allocation2 + $0x230] sm:$0xff]
    %v7719 = vld [vmem:[#allocation2 + $0x238] sm:$0xff]
    %v7720 = vld [vmem:[#allocation2 + $0x2f8] sm:$0xff]
    %v7721 = vld [vmem:[#allocation2 + $0x300] sm:$0xff]
    %7726 = vrot.lane.b32.xlu0 %v7710, 2
    %v7727 = vpop.permute.xlu0 %7726
    %7728 = vrot.lane.b32.xlu0 %v7711, 2
    %v7729 = vpop.permute.xlu0 %7728
    %7730 = vrot.lane.b32.xlu0 %v7712, 2
    %v7731 = vpop.permute.xlu0 %7730
    %7732 = vrot.lane.b32.xlu0 %v7713, 2
    %v7733 = vpop.permute.xlu0 %7732
    %v7738 = vsel %vm452, 0.0, %v7727
    %v7739 = vsel %vm452, 0.0, %v7729
    %v7740 = vsel %vm452, 0.0, %v7731
    %v7741 = vsel %vm452, 0.0, %v7733
    %v7742 = vmul.f32 %v7738, %v7505
    %v7743 = vmul.f32 %v7739, %v7505
    %v7744 = vmul.f32 %v7740, %v7505
    %v7745 = vmul.f32 %v7741, %v7505
    %7746 = vrot.lane.b32.xlu0 %v7710, 1
    %v7747 = vpop.permute.xlu0 %7746
    %7748 = vrot.lane.b32.xlu0 %v7711, 1
    %v7749 = vpop.permute.xlu0 %7748
    %7750 = vrot.lane.b32.xlu0 %v7712, 1
    %v7751 = vpop.permute.xlu0 %7750
    %7752 = vrot.lane.b32.xlu0 %v7713, 1
    %v7753 = vpop.permute.xlu0 %7752
    %v7758 = vsel %vm493, 0.0, %v7747
    %v7759 = vsel %vm493, 0.0, %v7749
    %v7760 = vsel %vm493, 0.0, %v7751
    %v7761 = vsel %vm493, 0.0, %v7753
    %v7762 = vmul.f32 %v7758, %v7511
    %v7763 = vmul.f32 %v7759, %v7511
    %v7764 = vmul.f32 %v7760, %v7511
    %v7765 = vmul.f32 %v7761, %v7511
    %7766 = vrot.lane.b32.xlu0 %v7710, 127
    %v7767 = vpop.permute.xlu0 %7766
    %7768 = vrot.lane.b32.xlu0 %v7711, 127
    %v7769 = vpop.permute.xlu0 %7768
    %7770 = vrot.lane.b32.xlu0 %v7712, 127
    %v7771 = vpop.permute.xlu0 %7770
    %7772 = vrot.lane.b32.xlu0 %v7713, 127
    %v7773 = vpop.permute.xlu0 %7772
    %vm7778 = vcmask 121856
    %v7779 = vsel %vm7778, %v7767, 0.0
    %v7780 = vsel %vm7778, %v7769, 0.0
    %v7781 = vsel %vm7778, %v7771, 0.0
    %v7782 = vsel %vm7778, %v7773, 0.0
    %v7783 = vmul.f32 %v7779, %v7517
    %v7784 = vmul.f32 %v7780, %v7517
    %v7785 = vmul.f32 %v7781, %v7517
    %v7786 = vmul.f32 %v7782, %v7517
    %7787 = vrot.lane.b32.xlu0 %v7710, 126
    %v7788 = vpop.permute.xlu0 %7787
    %7789 = vrot.lane.b32.xlu0 %v7711, 126
    %v7790 = vpop.permute.xlu0 %7789
    %7791 = vrot.lane.b32.xlu0 %v7712, 126
    %v7792 = vpop.permute.xlu0 %7791
    %7793 = vrot.lane.b32.xlu0 %v7713, 126
    %v7794 = vpop.permute.xlu0 %7793
    %vm7799 = vcmask 113664
    %v7800 = vsel %vm7799, %v7788, 0.0
    %v7801 = vsel %vm7799, %v7790, 0.0
    %v7802 = vsel %vm7799, %v7792, 0.0
    %v7803 = vsel %vm7799, %v7794, 0.0
    %v7804 = vmul.f32 %v7800, %v7523
    %v7805 = vmul.f32 %v7801, %v7523
    %v7806 = vmul.f32 %v7802, %v7523
    %v7807 = vmul.f32 %v7803, %v7523
    %7808 = vset.pattern.permute.xlu0 16
    %7809 = vperm.xlu0 %7808, %v424
    %v7810 = vpop.permute.xlu0 %7809
    %7812 = vset.pattern.permute.xlu0 16
    %7813 = vperm.xlu0 %7812, %v425
    %v7814 = vpop.permute.xlu0 %7813
    %7816 = vset.pattern.permute.xlu0 16
    %7817 = vperm.xlu0 %7816, %v426
    %v7818 = vpop.permute.xlu0 %7817
    %7820 = vset.pattern.permute.xlu0 16
    %7821 = vperm.xlu0 %7820, %v427
    %v7822 = vpop.permute.xlu0 %7821
    %v7825 = vsel %vm181, %v7715, 0
    %v7828 = vsel %vm181, %v7717, 0
    %v7831 = vsel %vm181, %v7719, 0
    %v7834 = vsel %vm181, %v7721, 0
    %7836 = vmatpush.msra.mxu0 %v7786
    %7837 = vmatpush.msra.mxu0 %v7785
    %7838 = vmatpush.msra.mxu0 %v7784
    %7839 = vmatpush.msra.mxu0 %v7783
    %7840 = vmatpush.msra.mxu0 %v7713
    %7841 = vmatpush.msra.mxu0 %v7712
    %7842 = vmatpush.msra.mxu0 %v7711
    %7843 = vmatpush.msra.mxu0 %v7710
    %7844 = vmatpush.msra.mxu0 %v7765
    %7845 = vmatpush.msra.mxu0 %v7764
    %7846 = vmatpush.msra.mxu0 %v7763
    %7847 = vmatpush.msra.mxu0 %v7762
    %7848 = vmatpush.msra.mxu0 %v7745
    %7849 = vmatpush.msra.mxu0 %v7744
    %7850 = vmatpush.msra.mxu0 %v7743
    %7851 = vmatpush.msra.mxu0 %v7742
    %7852 = vmatmul.f32.gmra.mxu0 %v7714
    %v7853 = vpop.f32.mrf.mxu0
    %v7854 = vadd.f32 %v7810, %v7853
    %7855 = vmatmul.f32.gmra.mxu0 %v7716
    %v7856 = vpop.f32.mrf.mxu0
    %v7857 = vadd.f32 %v7814, %v7856
    %7858 = vmatmul.f32.gmra.mxu0 %v7718
    %v7859 = vpop.f32.mrf.mxu0
    %v7860 = vadd.f32 %v7818, %v7859
    %7861 = vmatmul.f32.gmra.mxu0 %v7720
    %v7862 = vpop.f32.mrf.mxu0
    %v7863 = vadd.f32 %v7822, %v7862
    %7864 = vdwg.mxu0
    %7865 = vmatpush.msra.mxu0 0.0
    %7866 = vmatpush.msra.mxu0 0.0
    %7867 = vmatpush.msra.mxu0 0.0
    %7868 = vmatpush.msra.mxu0 0.0
    %7869 = vmatpush.msra.mxu0 0.0
    %7870 = vmatpush.msra.mxu0 0.0
    %7871 = vmatpush.msra.mxu0 0.0
    %7872 = vmatpush.msra.mxu0 0.0
    %7873 = vmatpush.msra.mxu0 0.0
    %7874 = vmatpush.msra.mxu0 0.0
    %7875 = vmatpush.msra.mxu0 0.0
    %7876 = vmatpush.msra.mxu0 0.0
    %7877 = vmatpush.msra.mxu0 %v7807
    %7878 = vmatpush.msra.mxu0 %v7806
    %7879 = vmatpush.msra.mxu0 %v7805
    %7880 = vmatpush.msra.mxu0 %v7804
    %7881 = vmatmul.f32.gmra.mxu0 %v7825
    %v7882 = vpop.f32.mrf.mxu0
    %v7883 = vadd.f32 %v7854, %v7882
    %7884 = vmatmul.f32.gmra.mxu0 %v7828
    %v7885 = vpop.f32.mrf.mxu0
    %v7886 = vadd.f32 %v7857, %v7885
    %7887 = vmatmul.f32.gmra.mxu0 %v7831
    %v7888 = vpop.f32.mrf.mxu0
    %v7889 = vadd.f32 %v7860, %v7888
    %7890 = vmatmul.f32.gmra.mxu0 %v7834
    %v7891 = vpop.f32.mrf.mxu0
    %v7892 = vadd.f32 %v7863, %v7891
    %7893 = vdwg.mxu0
    %v7894 = vmax.f32 %v7883, 0.0
    %v7895 = vmax.f32 %v7886, 0.0
    %v7896 = vmax.f32 %v7889, 0.0
    %v7897 = vmax.f32 %v7892, 0.0
    %v7898 = vsel %vm7585, %v7894, 0.0
    %7899 = vadd.xlane.f32.xlu0 %v7898
    %v7900 = vpop.xlane.xlu0 %7899
    %v7901 = vsel %vm7585, %v7895, 0.0
    %7902 = vadd.xlane.f32.xlu0 %v7901
    %v7903 = vpop.xlane.xlu0 %7902
    %v7904 = vsel %vm7585, %v7896, 0.0
    %7905 = vadd.xlane.f32.xlu0 %v7904
    %v7906 = vpop.xlane.xlu0 %7905
    %v7907 = vsel %vm7585, %v7897, 0.0
    %7908 = vadd.xlane.f32.xlu0 %v7907
    %v7909 = vpop.xlane.xlu0 %7908
    %v7910 = vmul.f32 %v7900, 0.0625
    %v7911 = vmul.f32 %v7903, 0.0625
    %v7912 = vmul.f32 %v7906, 0.0625
    %v7913 = vmul.f32 %v7909, 0.0625
    %v7914 = vsub.f32 %v7894, %v7910
    %v7915 = vsub.f32 %v7895, %v7911
    %v7916 = vsub.f32 %v7896, %v7912
    %v7917 = vsub.f32 %v7897, %v7913
    %v7918 = vmul.f32 %v7914, %v7914
    %v7919 = vmul.f32 %v7915, %v7915
    %v7920 = vmul.f32 %v7916, %v7916
    %v7921 = vmul.f32 %v7917, %v7917
    %v7922 = vsel %vm7585, %v7918, 0.0
    %7923 = vadd.xlane.f32.xlu0 %v7922
    %v7924 = vpop.xlane.xlu0 %7923
    %v7925 = vsel %vm7585, %v7919, 0.0
    %7926 = vadd.xlane.f32.xlu0 %v7925
    %v7927 = vpop.xlane.xlu0 %7926
    %v7928 = vsel %vm7585, %v7920, 0.0
    %7929 = vadd.xlane.f32.xlu0 %v7928
    %v7930 = vpop.xlane.xlu0 %7929
    %v7931 = vsel %vm7585, %v7921, 0.0
    %7932 = vadd.xlane.f32.xlu0 %v7931
    %v7933 = vpop.xlane.xlu0 %7932
    %v7934 = vmul.f32 %v7924, 0.0625
    %v7935 = vmul.f32 %v7927, 0.0625
    %v7936 = vmul.f32 %v7930, 0.0625
    %v7937 = vmul.f32 %v7933, 0.0625
    %v7938 = vadd.f32 %v7934, 1e-05
    %v7939 = vadd.f32 %v7935, 1e-05
    %v7940 = vadd.f32 %v7936, 1e-05
    %v7941 = vadd.f32 %v7937, 1e-05
    %v7942 = vrsqrt.pop %v7938
    %v7943 = vmul.f32 %v7942, %v7938
    %v7944 = vmul.f32 %v7943, %v7942
    %v7945 = vmul.f32 0.5, %v7944
    %v7946 = vsub.f32 1.5, %v7945
    %v7947 = vmul.f32 %v7942, %v7946
    %vm7948 = vweird.f32 %v7938
    %vm7949 = vweird.f32 %v7942
    %vm7950 = vmor %vm7948, %vm7949
    %v7951 = vsel %vm7950, %v7942, %v7947
    %v7952 = vrsqrt.pop %v7939
    %v7953 = vmul.f32 %v7952, %v7939
    %v7954 = vmul.f32 %v7953, %v7952
    %v7955 = vmul.f32 0.5, %v7954
    %v7956 = vsub.f32 1.5, %v7955
    %v7957 = vmul.f32 %v7952, %v7956
    %vm7958 = vweird.f32 %v7939
    %vm7959 = vweird.f32 %v7952
    %vm7960 = vmor %vm7958, %vm7959
    %v7961 = vsel %vm7960, %v7952, %v7957
    %v7962 = vrsqrt.pop %v7940
    %v7963 = vmul.f32 %v7962, %v7940
    %v7964 = vmul.f32 %v7963, %v7962
    %v7965 = vmul.f32 0.5, %v7964
    %v7966 = vsub.f32 1.5, %v7965
    %v7967 = vmul.f32 %v7962, %v7966
    %vm7968 = vweird.f32 %v7940
    %vm7969 = vweird.f32 %v7962
    %vm7970 = vmor %vm7968, %vm7969
    %v7971 = vsel %vm7970, %v7962, %v7967
    %v7972 = vrsqrt.pop %v7941
    %v7973 = vmul.f32 %v7972, %v7941
    %v7974 = vmul.f32 %v7973, %v7972
    %v7975 = vmul.f32 0.5, %v7974
    %v7976 = vsub.f32 1.5, %v7975
    %v7977 = vmul.f32 %v7972, %v7976
    %vm7978 = vweird.f32 %v7941
    %vm7979 = vweird.f32 %v7972
    %vm7980 = vmor %vm7978, %vm7979
    %v7981 = vsel %vm7980, %v7972, %v7977
    %v7982 = vmul.f32 %v7914, %v7951
    %v7983 = vmul.f32 %v7915, %v7961
    %v7984 = vmul.f32 %v7916, %v7971
    %v7985 = vmul.f32 %v7917, %v7981
    %7986 = vset.pattern.permute.xlu0 21
    %7987 = vperm.xlu0 %7986, %v252
    %v7988 = vpop.permute.xlu0 %7987
    %7990 = vset.pattern.permute.xlu0 21
    %7991 = vperm.xlu0 %7990, %v253
    %v7992 = vpop.permute.xlu0 %7991
    %7994 = vset.pattern.permute.xlu0 21
    %7995 = vperm.xlu0 %7994, %v254
    %v7996 = vpop.permute.xlu0 %7995
    %7998 = vset.pattern.permute.xlu0 21
    %7999 = vperm.xlu0 %7998, %v255
    %v8000 = vpop.permute.xlu0 %7999
    %v8002 = vmul.f32 %v7988, %v7982
    %v8003 = vmul.f32 %v7992, %v7983
    %v8004 = vmul.f32 %v7996, %v7984
    %v8005 = vmul.f32 %v8000, %v7985
    %8006 = vset.pattern.permute.xlu0 21
    %8007 = vperm.xlu0 %8006, %v256
    %v8008 = vpop.permute.xlu0 %8007
    %8010 = vset.pattern.permute.xlu0 21
    %8011 = vperm.xlu0 %8010, %v257
    %v8012 = vpop.permute.xlu0 %8011
    %8014 = vset.pattern.permute.xlu0 21
    %8015 = vperm.xlu0 %8014, %v258
    %v8016 = vpop.permute.xlu0 %8015
    %8018 = vset.pattern.permute.xlu0 21
    %8019 = vperm.xlu0 %8018, %v259
    %v8020 = vpop.permute.xlu0 %8019
    %v8022 = vadd.f32 %v8002, %v8008
    %v8023 = vadd.f32 %v8003, %v8012
    %v8024 = vadd.f32 %v8004, %v8016
    %v8025 = vadd.f32 %v8005, %v8020
    %v8026 = vld [vmem:[#allocation2 + $0xa8] sm:$0xff]
    %v8027 = vld [vmem:[#allocation2 + $0xb0] sm:$0xff]
    %v8028 = vld [vmem:[#allocation2 + $0x170] sm:$0xff]
    %v8029 = vld [vmem:[#allocation2 + $0x178] sm:$0xff]
    %v8030 = vld [vmem:[#allocation2 + $0x238] sm:$0xff]
    %v8031 = vld [vmem:[#allocation2 + $0x240] sm:$0xff]
    %v8032 = vld [vmem:[#allocation2 + $0x300] sm:$0xff]
    %v8033 = vld [vmem:[#allocation2 + $0x308] sm:$0xff]
    %8038 = vrot.lane.b32.xlu0 %v8022, 2
    %v8039 = vpop.permute.xlu0 %8038
    %8040 = vrot.lane.b32.xlu0 %v8023, 2
    %v8041 = vpop.permute.xlu0 %8040
    %8042 = vrot.lane.b32.xlu0 %v8024, 2
    %v8043 = vpop.permute.xlu0 %8042
    %8044 = vrot.lane.b32.xlu0 %v8025, 2
    %v8045 = vpop.permute.xlu0 %8044
    %v8050 = vsel %vm452, 0.0, %v8039
    %v8051 = vsel %vm452, 0.0, %v8041
    %v8052 = vsel %vm452, 0.0, %v8043
    %v8053 = vsel %vm452, 0.0, %v8045
    %v8054 = vmul.f32 %v8050, %v7505
    %v8055 = vmul.f32 %v8051, %v7505
    %v8056 = vmul.f32 %v8052, %v7505
    %v8057 = vmul.f32 %v8053, %v7505
    %8058 = vrot.lane.b32.xlu0 %v8022, 1
    %v8059 = vpop.permute.xlu0 %8058
    %8060 = vrot.lane.b32.xlu0 %v8023, 1
    %v8061 = vpop.permute.xlu0 %8060
    %8062 = vrot.lane.b32.xlu0 %v8024, 1
    %v8063 = vpop.permute.xlu0 %8062
    %8064 = vrot.lane.b32.xlu0 %v8025, 1
    %v8065 = vpop.permute.xlu0 %8064
    %v8070 = vsel %vm493, 0.0, %v8059
    %v8071 = vsel %vm493, 0.0, %v8061
    %v8072 = vsel %vm493, 0.0, %v8063
    %v8073 = vsel %vm493, 0.0, %v8065
    %v8074 = vmul.f32 %v8070, %v7511
    %v8075 = vmul.f32 %v8071, %v7511
    %v8076 = vmul.f32 %v8072, %v7511
    %v8077 = vmul.f32 %v8073, %v7511
    %8078 = vrot.lane.b32.xlu0 %v8022, 127
    %v8079 = vpop.permute.xlu0 %8078
    %8080 = vrot.lane.b32.xlu0 %v8023, 127
    %v8081 = vpop.permute.xlu0 %8080
    %8082 = vrot.lane.b32.xlu0 %v8024, 127
    %v8083 = vpop.permute.xlu0 %8082
    %8084 = vrot.lane.b32.xlu0 %v8025, 127
    %v8085 = vpop.permute.xlu0 %8084
    %v8090 = vsel %vm7778, %v8079, 0.0
    %v8091 = vsel %vm7778, %v8081, 0.0
    %v8092 = vsel %vm7778, %v8083, 0.0
    %v8093 = vsel %vm7778, %v8085, 0.0
    %v8094 = vmul.f32 %v8090, %v7517
    %v8095 = vmul.f32 %v8091, %v7517
    %v8096 = vmul.f32 %v8092, %v7517
    %v8097 = vmul.f32 %v8093, %v7517
    %8098 = vrot.lane.b32.xlu0 %v8022, 126
    %v8099 = vpop.permute.xlu0 %8098
    %8100 = vrot.lane.b32.xlu0 %v8023, 126
    %v8101 = vpop.permute.xlu0 %8100
    %8102 = vrot.lane.b32.xlu0 %v8024, 126
    %v8103 = vpop.permute.xlu0 %8102
    %8104 = vrot.lane.b32.xlu0 %v8025, 126
    %v8105 = vpop.permute.xlu0 %8104
    %v8110 = vsel %vm7799, %v8099, 0.0
    %v8111 = vsel %vm7799, %v8101, 0.0
    %v8112 = vsel %vm7799, %v8103, 0.0
    %v8113 = vsel %vm7799, %v8105, 0.0
    %v8114 = vmul.f32 %v8110, %v7523
    %v8115 = vmul.f32 %v8111, %v7523
    %v8116 = vmul.f32 %v8112, %v7523
    %v8117 = vmul.f32 %v8113, %v7523
    %8118 = vset.pattern.permute.xlu0 17
    %8119 = vperm.xlu0 %8118, %v424
    %v8120 = vpop.permute.xlu0 %8119
    %8122 = vset.pattern.permute.xlu0 17
    %8123 = vperm.xlu0 %8122, %v425
    %v8124 = vpop.permute.xlu0 %8123
    %8126 = vset.pattern.permute.xlu0 17
    %8127 = vperm.xlu0 %8126, %v426
    %v8128 = vpop.permute.xlu0 %8127
    %8130 = vset.pattern.permute.xlu0 17
    %8131 = vperm.xlu0 %8130, %v427
    %v8132 = vpop.permute.xlu0 %8131
    %8142 = vrot.lane.b32.xlu0 %v8026, 96
    %v8143 = vpop.permute.xlu0 %8142
    %8144 = vrot.lane.b32.xlu0 %v8027, 96
    %v8145 = vpop.permute.xlu0 %8144
    %8146 = vrot.lane.b32.xlu0 %v8028, 96
    %v8147 = vpop.permute.xlu0 %8146
    %8148 = vrot.lane.b32.xlu0 %v8029, 96
    %v8149 = vpop.permute.xlu0 %8148
    %8150 = vrot.lane.b32.xlu0 %v8030, 96
    %v8151 = vpop.permute.xlu0 %8150
    %8152 = vrot.lane.b32.xlu0 %v8031, 96
    %v8153 = vpop.permute.xlu0 %8152
    %8154 = vrot.lane.b32.xlu0 %v8032, 96
    %v8155 = vpop.permute.xlu0 %8154
    %8156 = vrot.lane.b32.xlu0 %v8033, 96
    %v8157 = vpop.permute.xlu0 %8156
    %v8158 = vsel %vm1120, %v8143, %v8145
    %v8159 = vsel %vm1120, %v8147, %v8149
    %v8160 = vsel %vm1120, %v8151, %v8153
    %v8161 = vsel %vm1120, %v8155, %v8157
    %v8166 = vsel %vm181, %v8145, 0
    %v8168 = vsel %vm181, %v8149, 0
    %v8170 = vsel %vm181, %v8153, 0
    %v8172 = vsel %vm181, %v8157, 0
    %8174 = vmatpush.msra.mxu0 %v8097
    %8175 = vmatpush.msra.mxu0 %v8096
    %8176 = vmatpush.msra.mxu0 %v8095
    %8177 = vmatpush.msra.mxu0 %v8094
    %8178 = vmatpush.msra.mxu0 %v8025
    %8179 = vmatpush.msra.mxu0 %v8024
    %8180 = vmatpush.msra.mxu0 %v8023
    %8181 = vmatpush.msra.mxu0 %v8022
    %8182 = vmatpush.msra.mxu0 %v8077
    %8183 = vmatpush.msra.mxu0 %v8076
    %8184 = vmatpush.msra.mxu0 %v8075
    %8185 = vmatpush.msra.mxu0 %v8074
    %8186 = vmatpush.msra.mxu0 %v8057
    %8187 = vmatpush.msra.mxu0 %v8056
    %8188 = vmatpush.msra.mxu0 %v8055
    %8189 = vmatpush.msra.mxu0 %v8054
    %8190 = vmatmul.f32.gmra.mxu0 %v8158
    %v8191 = vpop.f32.mrf.mxu0
    %v8192 = vadd.f32 %v8120, %v8191
    %8193 = vmatmul.f32.gmra.mxu0 %v8159
    %v8194 = vpop.f32.mrf.mxu0
    %v8195 = vadd.f32 %v8124, %v8194
    %8196 = vmatmul.f32.gmra.mxu0 %v8160
    %v8197 = vpop.f32.mrf.mxu0
    %v8198 = vadd.f32 %v8128, %v8197
    %8199 = vmatmul.f32.gmra.mxu0 %v8161
    %v8200 = vpop.f32.mrf.mxu0
    %v8201 = vadd.f32 %v8132, %v8200
    %8202 = vdwg.mxu0
    %8203 = vmatpush.msra.mxu0 0.0
    %8204 = vmatpush.msra.mxu0 0.0
    %8205 = vmatpush.msra.mxu0 0.0
    %8206 = vmatpush.msra.mxu0 0.0
    %8207 = vmatpush.msra.mxu0 0.0
    %8208 = vmatpush.msra.mxu0 0.0
    %8209 = vmatpush.msra.mxu0 0.0
    %8210 = vmatpush.msra.mxu0 0.0
    %8211 = vmatpush.msra.mxu0 0.0
    %8212 = vmatpush.msra.mxu0 0.0
    %8213 = vmatpush.msra.mxu0 0.0
    %8214 = vmatpush.msra.mxu0 0.0
    %8215 = vmatpush.msra.mxu0 %v8117
    %8216 = vmatpush.msra.mxu0 %v8116
    %8217 = vmatpush.msra.mxu0 %v8115
    %8218 = vmatpush.msra.mxu0 %v8114
    %8219 = vmatmul.f32.gmra.mxu0 %v8166
    %v8220 = vpop.f32.mrf.mxu0
    %v8221 = vadd.f32 %v8192, %v8220
    %8222 = vmatmul.f32.gmra.mxu0 %v8168
    %v8223 = vpop.f32.mrf.mxu0
    %v8224 = vadd.f32 %v8195, %v8223
    %8225 = vmatmul.f32.gmra.mxu0 %v8170
    %v8226 = vpop.f32.mrf.mxu0
    %v8227 = vadd.f32 %v8198, %v8226
    %8228 = vmatmul.f32.gmra.mxu0 %v8172
    %v8229 = vpop.f32.mrf.mxu0
    %v8230 = vadd.f32 %v8201, %v8229
    %8231 = vdwg.mxu0
    %v8232 = vmax.f32 %v8221, 0.0
    %v8233 = vmax.f32 %v8224, 0.0
    %v8234 = vmax.f32 %v8227, 0.0
    %v8235 = vmax.f32 %v8230, 0.0
    %v8236 = vsel %vm7585, %v8232, 0.0
    %8237 = vadd.xlane.f32.xlu0 %v8236
    %v8238 = vpop.xlane.xlu0 %8237
    %v8239 = vsel %vm7585, %v8233, 0.0
    %8240 = vadd.xlane.f32.xlu0 %v8239
    %v8241 = vpop.xlane.xlu0 %8240
    %v8242 = vsel %vm7585, %v8234, 0.0
    %8243 = vadd.xlane.f32.xlu0 %v8242
    %v8244 = vpop.xlane.xlu0 %8243
    %v8245 = vsel %vm7585, %v8235, 0.0
    %8246 = vadd.xlane.f32.xlu0 %v8245
    %v8247 = vpop.xlane.xlu0 %8246
    %v8248 = vmul.f32 %v8238, 0.0625
    %v8249 = vmul.f32 %v8241, 0.0625
    %v8250 = vmul.f32 %v8244, 0.0625
    %v8251 = vmul.f32 %v8247, 0.0625
    %v8252 = vsub.f32 %v8232, %v8248
    %v8253 = vsub.f32 %v8233, %v8249
    %v8254 = vsub.f32 %v8234, %v8250
    %v8255 = vsub.f32 %v8235, %v8251
    %v8256 = vmul.f32 %v8252, %v8252
    %v8257 = vmul.f32 %v8253, %v8253
    %v8258 = vmul.f32 %v8254, %v8254
    %v8259 = vmul.f32 %v8255, %v8255
    %v8260 = vsel %vm7585, %v8256, 0.0
    %8261 = vadd.xlane.f32.xlu0 %v8260
    %v8262 = vpop.xlane.xlu0 %8261
    %v8263 = vsel %vm7585, %v8257, 0.0
    %8264 = vadd.xlane.f32.xlu0 %v8263
    %v8265 = vpop.xlane.xlu0 %8264
    %v8266 = vsel %vm7585, %v8258, 0.0
    %8267 = vadd.xlane.f32.xlu0 %v8266
    %v8268 = vpop.xlane.xlu0 %8267
    %v8269 = vsel %vm7585, %v8259, 0.0
    %8270 = vadd.xlane.f32.xlu0 %v8269
    %v8271 = vpop.xlane.xlu0 %8270
    %v8272 = vmul.f32 %v8262, 0.0625
    %v8273 = vmul.f32 %v8265, 0.0625
    %v8274 = vmul.f32 %v8268, 0.0625
    %v8275 = vmul.f32 %v8271, 0.0625
    %v8276 = vadd.f32 %v8272, 1e-05
    %v8277 = vadd.f32 %v8273, 1e-05
    %v8278 = vadd.f32 %v8274, 1e-05
    %v8279 = vadd.f32 %v8275, 1e-05
    %v8280 = vrsqrt.pop %v8276
    %v8281 = vmul.f32 %v8280, %v8276
    %v8282 = vmul.f32 %v8281, %v8280
    %v8283 = vmul.f32 0.5, %v8282
    %v8284 = vsub.f32 1.5, %v8283
    %v8285 = vmul.f32 %v8280, %v8284
    %vm8286 = vweird.f32 %v8276
    %vm8287 = vweird.f32 %v8280
    %vm8288 = vmor %vm8286, %vm8287
    %v8289 = vsel %vm8288, %v8280, %v8285
    %v8290 = vrsqrt.pop %v8277
    %v8291 = vmul.f32 %v8290, %v8277
    %v8292 = vmul.f32 %v8291, %v8290
    %v8293 = vmul.f32 0.5, %v8292
    %v8294 = vsub.f32 1.5, %v8293
    %v8295 = vmul.f32 %v8290, %v8294
    %vm8296 = vweird.f32 %v8277
    %vm8297 = vweird.f32 %v8290
    %vm8298 = vmor %vm8296, %vm8297
    %v8299 = vsel %vm8298, %v8290, %v8295
    %v8300 = vrsqrt.pop %v8278
    %v8301 = vmul.f32 %v8300, %v8278
    %v8302 = vmul.f32 %v8301, %v8300
    %v8303 = vmul.f32 0.5, %v8302
    %v8304 = vsub.f32 1.5, %v8303
    %v8305 = vmul.f32 %v8300, %v8304
    %vm8306 = vweird.f32 %v8278
    %vm8307 = vweird.f32 %v8300
    %vm8308 = vmor %vm8306, %vm8307
    %v8309 = vsel %vm8308, %v8300, %v8305
    %v8310 = vrsqrt.pop %v8279
    %v8311 = vmul.f32 %v8310, %v8279
    %v8312 = vmul.f32 %v8311, %v8310
    %v8313 = vmul.f32 0.5, %v8312
    %v8314 = vsub.f32 1.5, %v8313
    %v8315 = vmul.f32 %v8310, %v8314
    %vm8316 = vweird.f32 %v8279
    %vm8317 = vweird.f32 %v8310
    %vm8318 = vmor %vm8316, %vm8317
    %v8319 = vsel %vm8318, %v8310, %v8315
    %v8320 = vmul.f32 %v8252, %v8289
    %v8321 = vmul.f32 %v8253, %v8299
    %v8322 = vmul.f32 %v8254, %v8309
    %v8323 = vmul.f32 %v8255, %v8319
    %8324 = vset.pattern.permute.xlu0 22
    %8325 = vperm.xlu0 %8324, %v252
    %v8326 = vpop.permute.xlu0 %8325
    %8328 = vset.pattern.permute.xlu0 22
    %8329 = vperm.xlu0 %8328, %v253
    %v8330 = vpop.permute.xlu0 %8329
    %8332 = vset.pattern.permute.xlu0 22
    %8333 = vperm.xlu0 %8332, %v254
    %v8334 = vpop.permute.xlu0 %8333
    %8336 = vset.pattern.permute.xlu0 22
    %8337 = vperm.xlu0 %8336, %v255
    %v8338 = vpop.permute.xlu0 %8337
    %v8340 = vmul.f32 %v8326, %v8320
    %v8341 = vmul.f32 %v8330, %v8321
    %v8342 = vmul.f32 %v8334, %v8322
    %v8343 = vmul.f32 %v8338, %v8323
    %8344 = vset.pattern.permute.xlu0 22
    %8345 = vperm.xlu0 %8344, %v256
    %v8346 = vpop.permute.xlu0 %8345
    %8348 = vset.pattern.permute.xlu0 22
    %8349 = vperm.xlu0 %8348, %v257
    %v8350 = vpop.permute.xlu0 %8349
    %8352 = vset.pattern.permute.xlu0 22
    %8353 = vperm.xlu0 %8352, %v258
    %v8354 = vpop.permute.xlu0 %8353
    %8356 = vset.pattern.permute.xlu0 22
    %8357 = vperm.xlu0 %8356, %v259
    %v8358 = vpop.permute.xlu0 %8357
    %v8360 = vadd.f32 %v8340, %v8346
    %v8361 = vadd.f32 %v8341, %v8350
    %v8362 = vadd.f32 %v8342, %v8354
    %v8363 = vadd.f32 %v8343, %v8358
    %v8364 = vadd.f32 %v8360, %v7710
    %v8365 = vadd.f32 %v8361, %v7711
    %v8366 = vadd.f32 %v8362, %v7712
    %v8367 = vadd.f32 %v8363, %v7713
    %v8368 = vld [vmem:[#allocation2 + $0xb0] sm:$0xff]
    %v8369 = vld [vmem:[#allocation2 + $0xb8] sm:$0xff]
    %v8370 = vld [vmem:[#allocation2 + $0x178] sm:$0xff]
    %v8371 = vld [vmem:[#allocation2 + $0x180] sm:$0xff]
    %v8372 = vld [vmem:[#allocation2 + $0x240] sm:$0xff]
    %v8373 = vld [vmem:[#allocation2 + $0x248] sm:$0xff]
    %v8374 = vld [vmem:[#allocation2 + $0x308] sm:$0xff]
    %v8375 = vld [vmem:[#allocation2 + $0x310] sm:$0xff]
    %8380 = vrot.lane.b32.xlu0 %v8364, 2
    %v8381 = vpop.permute.xlu0 %8380
    %8382 = vrot.lane.b32.xlu0 %v8365, 2
    %v8383 = vpop.permute.xlu0 %8382
    %8384 = vrot.lane.b32.xlu0 %v8366, 2
    %v8385 = vpop.permute.xlu0 %8384
    %8386 = vrot.lane.b32.xlu0 %v8367, 2
    %v8387 = vpop.permute.xlu0 %8386
    %v8392 = vsel %vm452, 0.0, %v8381
    %v8393 = vsel %vm452, 0.0, %v8383
    %v8394 = vsel %vm452, 0.0, %v8385
    %v8395 = vsel %vm452, 0.0, %v8387
    %v8396 = vmul.f32 %v8392, %v7505
    %v8397 = vmul.f32 %v8393, %v7505
    %v8398 = vmul.f32 %v8394, %v7505
    %v8399 = vmul.f32 %v8395, %v7505
    %8400 = vrot.lane.b32.xlu0 %v8364, 1
    %v8401 = vpop.permute.xlu0 %8400
    %8402 = vrot.lane.b32.xlu0 %v8365, 1
    %v8403 = vpop.permute.xlu0 %8402
    %8404 = vrot.lane.b32.xlu0 %v8366, 1
    %v8405 = vpop.permute.xlu0 %8404
    %8406 = vrot.lane.b32.xlu0 %v8367, 1
    %v8407 = vpop.permute.xlu0 %8406
    %v8412 = vsel %vm493, 0.0, %v8401
    %v8413 = vsel %vm493, 0.0, %v8403
    %v8414 = vsel %vm493, 0.0, %v8405
    %v8415 = vsel %vm493, 0.0, %v8407
    %v8416 = vmul.f32 %v8412, %v7511
    %v8417 = vmul.f32 %v8413, %v7511
    %v8418 = vmul.f32 %v8414, %v7511
    %v8419 = vmul.f32 %v8415, %v7511
    %8420 = vrot.lane.b32.xlu0 %v8364, 127
    %v8421 = vpop.permute.xlu0 %8420
    %8422 = vrot.lane.b32.xlu0 %v8365, 127
    %v8423 = vpop.permute.xlu0 %8422
    %8424 = vrot.lane.b32.xlu0 %v8366, 127
    %v8425 = vpop.permute.xlu0 %8424
    %8426 = vrot.lane.b32.xlu0 %v8367, 127
    %v8427 = vpop.permute.xlu0 %8426
    %v8432 = vsel %vm7778, %v8421, 0.0
    %v8433 = vsel %vm7778, %v8423, 0.0
    %v8434 = vsel %vm7778, %v8425, 0.0
    %v8435 = vsel %vm7778, %v8427, 0.0
    %v8436 = vmul.f32 %v8432, %v7517
    %v8437 = vmul.f32 %v8433, %v7517
    %v8438 = vmul.f32 %v8434, %v7517
    %v8439 = vmul.f32 %v8435, %v7517
    %8440 = vrot.lane.b32.xlu0 %v8364, 126
    %v8441 = vpop.permute.xlu0 %8440
    %8442 = vrot.lane.b32.xlu0 %v8365, 126
    %v8443 = vpop.permute.xlu0 %8442
    %8444 = vrot.lane.b32.xlu0 %v8366, 126
    %v8445 = vpop.permute.xlu0 %8444
    %8446 = vrot.lane.b32.xlu0 %v8367, 126
    %v8447 = vpop.permute.xlu0 %8446
    %v8452 = vsel %vm7799, %v8441, 0.0
    %v8453 = vsel %vm7799, %v8443, 0.0
    %v8454 = vsel %vm7799, %v8445, 0.0
    %v8455 = vsel %vm7799, %v8447, 0.0
    %v8456 = vmul.f32 %v8452, %v7523
    %v8457 = vmul.f32 %v8453, %v7523
    %v8458 = vmul.f32 %v8454, %v7523
    %v8459 = vmul.f32 %v8455, %v7523
    %8460 = vset.pattern.permute.xlu0 18
    %8461 = vperm.xlu0 %8460, %v424
    %v8462 = vpop.permute.xlu0 %8461
    %8464 = vset.pattern.permute.xlu0 18
    %8465 = vperm.xlu0 %8464, %v425
    %v8466 = vpop.permute.xlu0 %8465
    %8468 = vset.pattern.permute.xlu0 18
    %8469 = vperm.xlu0 %8468, %v426
    %v8470 = vpop.permute.xlu0 %8469
    %8472 = vset.pattern.permute.xlu0 18
    %8473 = vperm.xlu0 %8472, %v427
    %v8474 = vpop.permute.xlu0 %8473
    %8484 = vrot.lane.b32.xlu0 %v8368, 64
    %v8485 = vpop.permute.xlu0 %8484
    %8486 = vrot.lane.b32.xlu0 %v8369, 64
    %v8487 = vpop.permute.xlu0 %8486
    %8488 = vrot.lane.b32.xlu0 %v8370, 64
    %v8489 = vpop.permute.xlu0 %8488
    %8490 = vrot.lane.b32.xlu0 %v8371, 64
    %v8491 = vpop.permute.xlu0 %8490
    %8492 = vrot.lane.b32.xlu0 %v8372, 64
    %v8493 = vpop.permute.xlu0 %8492
    %8494 = vrot.lane.b32.xlu0 %v8373, 64
    %v8495 = vpop.permute.xlu0 %8494
    %8496 = vrot.lane.b32.xlu0 %v8374, 64
    %v8497 = vpop.permute.xlu0 %8496
    %8498 = vrot.lane.b32.xlu0 %v8375, 64
    %v8499 = vpop.permute.xlu0 %8498
    %v8500 = vsel %vm1633, %v8485, %v8487
    %v8501 = vsel %vm1633, %v8489, %v8491
    %v8502 = vsel %vm1633, %v8493, %v8495
    %v8503 = vsel %vm1633, %v8497, %v8499
    %v8508 = vsel %vm181, %v8487, 0
    %v8510 = vsel %vm181, %v8491, 0
    %v8512 = vsel %vm181, %v8495, 0
    %v8514 = vsel %vm181, %v8499, 0
    %8516 = vmatpush.msra.mxu0 %v8439
    %8517 = vmatpush.msra.mxu0 %v8438
    %8518 = vmatpush.msra.mxu0 %v8437
    %8519 = vmatpush.msra.mxu0 %v8436
    %8520 = vmatpush.msra.mxu0 %v8367
    %8521 = vmatpush.msra.mxu0 %v8366
    %8522 = vmatpush.msra.mxu0 %v8365
    %8523 = vmatpush.msra.mxu0 %v8364
    %8524 = vmatpush.msra.mxu0 %v8419
    %8525 = vmatpush.msra.mxu0 %v8418
    %8526 = vmatpush.msra.mxu0 %v8417
    %8527 = vmatpush.msra.mxu0 %v8416
    %8528 = vmatpush.msra.mxu0 %v8399
    %8529 = vmatpush.msra.mxu0 %v8398
    %8530 = vmatpush.msra.mxu0 %v8397
    %8531 = vmatpush.msra.mxu0 %v8396
    %8532 = vmatmul.f32.gmra.mxu0 %v8500
    %v8533 = vpop.f32.mrf.mxu0
    %v8534 = vadd.f32 %v8462, %v8533
    %8535 = vmatmul.f32.gmra.mxu0 %v8501
    %v8536 = vpop.f32.mrf.mxu0
    %v8537 = vadd.f32 %v8466, %v8536
    %8538 = vmatmul.f32.gmra.mxu0 %v8502
    %v8539 = vpop.f32.mrf.mxu0
    %v8540 = vadd.f32 %v8470, %v8539
    %8541 = vmatmul.f32.gmra.mxu0 %v8503
    %v8542 = vpop.f32.mrf.mxu0
    %v8543 = vadd.f32 %v8474, %v8542
    %8544 = vdwg.mxu0
    %8545 = vmatpush.msra.mxu0 0.0
    %8546 = vmatpush.msra.mxu0 0.0
    %8547 = vmatpush.msra.mxu0 0.0
    %8548 = vmatpush.msra.mxu0 0.0
    %8549 = vmatpush.msra.mxu0 0.0
    %8550 = vmatpush.msra.mxu0 0.0
    %8551 = vmatpush.msra.mxu0 0.0
    %8552 = vmatpush.msra.mxu0 0.0
    %8553 = vmatpush.msra.mxu0 0.0
    %8554 = vmatpush.msra.mxu0 0.0
    %8555 = vmatpush.msra.mxu0 0.0
    %8556 = vmatpush.msra.mxu0 0.0
    %8557 = vmatpush.msra.mxu0 %v8459
    %8558 = vmatpush.msra.mxu0 %v8458
    %8559 = vmatpush.msra.mxu0 %v8457
    %8560 = vmatpush.msra.mxu0 %v8456
    %8561 = vmatmul.f32.gmra.mxu0 %v8508
    %v8562 = vpop.f32.mrf.mxu0
    %v8563 = vadd.f32 %v8534, %v8562
    %8564 = vmatmul.f32.gmra.mxu0 %v8510
    %v8565 = vpop.f32.mrf.mxu0
    %v8566 = vadd.f32 %v8537, %v8565
    %8567 = vmatmul.f32.gmra.mxu0 %v8512
    %v8568 = vpop.f32.mrf.mxu0
    %v8569 = vadd.f32 %v8540, %v8568
    %8570 = vmatmul.f32.gmra.mxu0 %v8514
    %v8571 = vpop.f32.mrf.mxu0
    %v8572 = vadd.f32 %v8543, %v8571
    %8573 = vdwg.mxu0
    %v8574 = vmax.f32 %v8563, 0.0
    %v8575 = vmax.f32 %v8566, 0.0
    %v8576 = vmax.f32 %v8569, 0.0
    %v8577 = vmax.f32 %v8572, 0.0
    %v8578 = vsel %vm7585, %v8574, 0.0
    %8579 = vadd.xlane.f32.xlu0 %v8578
    %v8580 = vpop.xlane.xlu0 %8579
    %v8581 = vsel %vm7585, %v8575, 0.0
    %8582 = vadd.xlane.f32.xlu0 %v8581
    %v8583 = vpop.xlane.xlu0 %8582
    %v8584 = vsel %vm7585, %v8576, 0.0
    %8585 = vadd.xlane.f32.xlu0 %v8584
    %v8586 = vpop.xlane.xlu0 %8585
    %v8587 = vsel %vm7585, %v8577, 0.0
    %8588 = vadd.xlane.f32.xlu0 %v8587
    %v8589 = vpop.xlane.xlu0 %8588
    %v8590 = vmul.f32 %v8580, 0.0625
    %v8591 = vmul.f32 %v8583, 0.0625
    %v8592 = vmul.f32 %v8586, 0.0625
    %v8593 = vmul.f32 %v8589, 0.0625
    %v8594 = vsub.f32 %v8574, %v8590
    %v8595 = vsub.f32 %v8575, %v8591
    %v8596 = vsub.f32 %v8576, %v8592
    %v8597 = vsub.f32 %v8577, %v8593
    %v8598 = vmul.f32 %v8594, %v8594
    %v8599 = vmul.f32 %v8595, %v8595
    %v8600 = vmul.f32 %v8596, %v8596
    %v8601 = vmul.f32 %v8597, %v8597
    %v8602 = vsel %vm7585, %v8598, 0.0
    %8603 = vadd.xlane.f32.xlu0 %v8602
    %v8604 = vpop.xlane.xlu0 %8603
    %v8605 = vsel %vm7585, %v8599, 0.0
    %8606 = vadd.xlane.f32.xlu0 %v8605
    %v8607 = vpop.xlane.xlu0 %8606
    %v8608 = vsel %vm7585, %v8600, 0.0
    %8609 = vadd.xlane.f32.xlu0 %v8608
    %v8610 = vpop.xlane.xlu0 %8609
    %v8611 = vsel %vm7585, %v8601, 0.0
    %8612 = vadd.xlane.f32.xlu0 %v8611
    %v8613 = vpop.xlane.xlu0 %8612
    %v8614 = vmul.f32 %v8604, 0.0625
    %v8615 = vmul.f32 %v8607, 0.0625
    %v8616 = vmul.f32 %v8610, 0.0625
    %v8617 = vmul.f32 %v8613, 0.0625
    %v8618 = vadd.f32 %v8614, 1e-05
    %v8619 = vadd.f32 %v8615, 1e-05
    %v8620 = vadd.f32 %v8616, 1e-05
    %v8621 = vadd.f32 %v8617, 1e-05
    %v8622 = vrsqrt.pop %v8618
    %v8623 = vmul.f32 %v8622, %v8618
    %v8624 = vmul.f32 %v8623, %v8622
    %v8625 = vmul.f32 0.5, %v8624
    %v8626 = vsub.f32 1.5, %v8625
    %v8627 = vmul.f32 %v8622, %v8626
    %vm8628 = vweird.f32 %v8618
    %vm8629 = vweird.f32 %v8622
    %vm8630 = vmor %vm8628, %vm8629
    %v8631 = vsel %vm8630, %v8622, %v8627
    %v8632 = vrsqrt.pop %v8619
    %v8633 = vmul.f32 %v8632, %v8619
    %v8634 = vmul.f32 %v8633, %v8632
    %v8635 = vmul.f32 0.5, %v8634
    %v8636 = vsub.f32 1.5, %v8635
    %v8637 = vmul.f32 %v8632, %v8636
    %vm8638 = vweird.f32 %v8619
    %vm8639 = vweird.f32 %v8632
    %vm8640 = vmor %vm8638, %vm8639
    %v8641 = vsel %vm8640, %v8632, %v8637
    %v8642 = vrsqrt.pop %v8620
    %v8643 = vmul.f32 %v8642, %v8620
    %v8644 = vmul.f32 %v8643, %v8642
    %v8645 = vmul.f32 0.5, %v8644
    %v8646 = vsub.f32 1.5, %v8645
    %v8647 = vmul.f32 %v8642, %v8646
    %vm8648 = vweird.f32 %v8620
    %vm8649 = vweird.f32 %v8642
    %vm8650 = vmor %vm8648, %vm8649
    %v8651 = vsel %vm8650, %v8642, %v8647
    %v8652 = vrsqrt.pop %v8621
    %v8653 = vmul.f32 %v8652, %v8621
    %v8654 = vmul.f32 %v8653, %v8652
    %v8655 = vmul.f32 0.5, %v8654
    %v8656 = vsub.f32 1.5, %v8655
    %v8657 = vmul.f32 %v8652, %v8656
    %vm8658 = vweird.f32 %v8621
    %vm8659 = vweird.f32 %v8652
    %vm8660 = vmor %vm8658, %vm8659
    %v8661 = vsel %vm8660, %v8652, %v8657
    %v8662 = vmul.f32 %v8594, %v8631
    %v8663 = vmul.f32 %v8595, %v8641
    %v8664 = vmul.f32 %v8596, %v8651
    %v8665 = vmul.f32 %v8597, %v8661
    %8666 = vset.pattern.permute.xlu0 23
    %8667 = vperm.xlu0 %8666, %v252
    %v8668 = vpop.permute.xlu0 %8667
    %8670 = vset.pattern.permute.xlu0 23
    %8671 = vperm.xlu0 %8670, %v253
    %v8672 = vpop.permute.xlu0 %8671
    %8674 = vset.pattern.permute.xlu0 23
    %8675 = vperm.xlu0 %8674, %v254
    %v8676 = vpop.permute.xlu0 %8675
    %8678 = vset.pattern.permute.xlu0 23
    %8679 = vperm.xlu0 %8678, %v255
    %v8680 = vpop.permute.xlu0 %8679
    %v8682 = vmul.f32 %v8668, %v8662
    %v8683 = vmul.f32 %v8672, %v8663
    %v8684 = vmul.f32 %v8676, %v8664
    %v8685 = vmul.f32 %v8680, %v8665
    %8686 = vset.pattern.permute.xlu0 23
    %8687 = vperm.xlu0 %8686, %v256
    %v8688 = vpop.permute.xlu0 %8687
    %8690 = vset.pattern.permute.xlu0 23
    %8691 = vperm.xlu0 %8690, %v257
    %v8692 = vpop.permute.xlu0 %8691
    %8694 = vset.pattern.permute.xlu0 23
    %8695 = vperm.xlu0 %8694, %v258
    %v8696 = vpop.permute.xlu0 %8695
    %8698 = vset.pattern.permute.xlu0 23
    %8699 = vperm.xlu0 %8698, %v259
    %v8700 = vpop.permute.xlu0 %8699
    %v8702 = vadd.f32 %v8682, %v8688
    %v8703 = vadd.f32 %v8683, %v8692
    %v8704 = vadd.f32 %v8684, %v8696
    %v8705 = vadd.f32 %v8685, %v8700
    %v8706 = vld [vmem:[#allocation2 + $0xb8] sm:$0xff]
    %v8707 = vld [vmem:[#allocation2 + $0xc0] sm:$0xff]
    %v8708 = vld [vmem:[#allocation2 + $0x180] sm:$0xff]
    %v8709 = vld [vmem:[#allocation2 + $0x188] sm:$0xff]
    %v8710 = vld [vmem:[#allocation2 + $0x248] sm:$0xff]
    %v8711 = vld [vmem:[#allocation2 + $0x250] sm:$0xff]
    %v8712 = vld [vmem:[#allocation2 + $0x310] sm:$0xff]
    %v8713 = vld [vmem:[#allocation2 + $0x318] sm:$0xff]
    %8718 = vrot.lane.b32.xlu0 %v8702, 2
    %v8719 = vpop.permute.xlu0 %8718
    %8720 = vrot.lane.b32.xlu0 %v8703, 2
    %v8721 = vpop.permute.xlu0 %8720
    %8722 = vrot.lane.b32.xlu0 %v8704, 2
    %v8723 = vpop.permute.xlu0 %8722
    %8724 = vrot.lane.b32.xlu0 %v8705, 2
    %v8725 = vpop.permute.xlu0 %8724
    %v8730 = vsel %vm452, 0.0, %v8719
    %v8731 = vsel %vm452, 0.0, %v8721
    %v8732 = vsel %vm452, 0.0, %v8723
    %v8733 = vsel %vm452, 0.0, %v8725
    %v8734 = vmul.f32 %v8730, %v7505
    %v8735 = vmul.f32 %v8731, %v7505
    %v8736 = vmul.f32 %v8732, %v7505
    %v8737 = vmul.f32 %v8733, %v7505
    %8738 = vrot.lane.b32.xlu0 %v8702, 1
    %v8739 = vpop.permute.xlu0 %8738
    %8740 = vrot.lane.b32.xlu0 %v8703, 1
    %v8741 = vpop.permute.xlu0 %8740
    %8742 = vrot.lane.b32.xlu0 %v8704, 1
    %v8743 = vpop.permute.xlu0 %8742
    %8744 = vrot.lane.b32.xlu0 %v8705, 1
    %v8745 = vpop.permute.xlu0 %8744
    %v8750 = vsel %vm493, 0.0, %v8739
    %v8751 = vsel %vm493, 0.0, %v8741
    %v8752 = vsel %vm493, 0.0, %v8743
    %v8753 = vsel %vm493, 0.0, %v8745
    %v8754 = vmul.f32 %v8750, %v7511
    %v8755 = vmul.f32 %v8751, %v7511
    %v8756 = vmul.f32 %v8752, %v7511
    %v8757 = vmul.f32 %v8753, %v7511
    %8758 = vrot.lane.b32.xlu0 %v8702, 127
    %v8759 = vpop.permute.xlu0 %8758
    %8760 = vrot.lane.b32.xlu0 %v8703, 127
    %v8761 = vpop.permute.xlu0 %8760
    %8762 = vrot.lane.b32.xlu0 %v8704, 127
    %v8763 = vpop.permute.xlu0 %8762
    %8764 = vrot.lane.b32.xlu0 %v8705, 127
    %v8765 = vpop.permute.xlu0 %8764
    %v8770 = vsel %vm7778, %v8759, 0.0
    %v8771 = vsel %vm7778, %v8761, 0.0
    %v8772 = vsel %vm7778, %v8763, 0.0
    %v8773 = vsel %vm7778, %v8765, 0.0
    %v8774 = vmul.f32 %v8770, %v7517
    %v8775 = vmul.f32 %v8771, %v7517
    %v8776 = vmul.f32 %v8772, %v7517
    %v8777 = vmul.f32 %v8773, %v7517
    %8778 = vrot.lane.b32.xlu0 %v8702, 126
    %v8779 = vpop.permute.xlu0 %8778
    %8780 = vrot.lane.b32.xlu0 %v8703, 126
    %v8781 = vpop.permute.xlu0 %8780
    %8782 = vrot.lane.b32.xlu0 %v8704, 126
    %v8783 = vpop.permute.xlu0 %8782
    %8784 = vrot.lane.b32.xlu0 %v8705, 126
    %v8785 = vpop.permute.xlu0 %8784
    %v8790 = vsel %vm7799, %v8779, 0.0
    %v8791 = vsel %vm7799, %v8781, 0.0
    %v8792 = vsel %vm7799, %v8783, 0.0
    %v8793 = vsel %vm7799, %v8785, 0.0
    %v8794 = vmul.f32 %v8790, %v7523
    %v8795 = vmul.f32 %v8791, %v7523
    %v8796 = vmul.f32 %v8792, %v7523
    %v8797 = vmul.f32 %v8793, %v7523
    %8798 = vset.pattern.permute.xlu0 19
    %8799 = vperm.xlu0 %8798, %v424
    %v8800 = vpop.permute.xlu0 %8799
    %8802 = vset.pattern.permute.xlu0 19
    %8803 = vperm.xlu0 %8802, %v425
    %v8804 = vpop.permute.xlu0 %8803
    %8806 = vset.pattern.permute.xlu0 19
    %8807 = vperm.xlu0 %8806, %v426
    %v8808 = vpop.permute.xlu0 %8807
    %8810 = vset.pattern.permute.xlu0 19
    %8811 = vperm.xlu0 %8810, %v427
    %v8812 = vpop.permute.xlu0 %8811
    %8822 = vrot.lane.b32.xlu0 %v8706, 32
    %v8823 = vpop.permute.xlu0 %8822
    %8824 = vrot.lane.b32.xlu0 %v8707, 32
    %v8825 = vpop.permute.xlu0 %8824
    %8826 = vrot.lane.b32.xlu0 %v8708, 32
    %v8827 = vpop.permute.xlu0 %8826
    %8828 = vrot.lane.b32.xlu0 %v8709, 32
    %v8829 = vpop.permute.xlu0 %8828
    %8830 = vrot.lane.b32.xlu0 %v8710, 32
    %v8831 = vpop.permute.xlu0 %8830
    %8832 = vrot.lane.b32.xlu0 %v8711, 32
    %v8833 = vpop.permute.xlu0 %8832
    %8834 = vrot.lane.b32.xlu0 %v8712, 32
    %v8835 = vpop.permute.xlu0 %8834
    %8836 = vrot.lane.b32.xlu0 %v8713, 32
    %v8837 = vpop.permute.xlu0 %8836
    %v8838 = vsel %vm181, %v8823, %v8825
    %v8839 = vsel %vm181, %v8827, %v8829
    %v8840 = vsel %vm181, %v8831, %v8833
    %v8841 = vsel %vm181, %v8835, %v8837
    %v8846 = vsel %vm181, %v8825, 0
    %v8848 = vsel %vm181, %v8829, 0
    %v8850 = vsel %vm181, %v8833, 0
    %v8852 = vsel %vm181, %v8837, 0
    %8854 = vmatpush.msra.mxu0 %v8777
    %8855 = vmatpush.msra.mxu0 %v8776
    %8856 = vmatpush.msra.mxu0 %v8775
    %8857 = vmatpush.msra.mxu0 %v8774
    %8858 = vmatpush.msra.mxu0 %v8705
    %8859 = vmatpush.msra.mxu0 %v8704
    %8860 = vmatpush.msra.mxu0 %v8703
    %8861 = vmatpush.msra.mxu0 %v8702
    %8862 = vmatpush.msra.mxu0 %v8757
    %8863 = vmatpush.msra.mxu0 %v8756
    %8864 = vmatpush.msra.mxu0 %v8755
    %8865 = vmatpush.msra.mxu0 %v8754
    %8866 = vmatpush.msra.mxu0 %v8737
    %8867 = vmatpush.msra.mxu0 %v8736
    %8868 = vmatpush.msra.mxu0 %v8735
    %8869 = vmatpush.msra.mxu0 %v8734
    %8870 = vmatmul.f32.gmra.mxu0 %v8838
    %v8871 = vpop.f32.mrf.mxu0
    %v8872 = vadd.f32 %v8800, %v8871
    %8873 = vmatmul.f32.gmra.mxu0 %v8839
    %v8874 = vpop.f32.mrf.mxu0
    %v8875 = vadd.f32 %v8804, %v8874
    %8876 = vmatmul.f32.gmra.mxu0 %v8840
    %v8877 = vpop.f32.mrf.mxu0
    %v8878 = vadd.f32 %v8808, %v8877
    %8879 = vmatmul.f32.gmra.mxu0 %v8841
    %v8880 = vpop.f32.mrf.mxu0
    %v8881 = vadd.f32 %v8812, %v8880
    %8882 = vdwg.mxu0
    %8883 = vmatpush.msra.mxu0 0.0
    %8884 = vmatpush.msra.mxu0 0.0
    %8885 = vmatpush.msra.mxu0 0.0
    %8886 = vmatpush.msra.mxu0 0.0
    %8887 = vmatpush.msra.mxu0 0.0
    %8888 = vmatpush.msra.mxu0 0.0
    %8889 = vmatpush.msra.mxu0 0.0
    %8890 = vmatpush.msra.mxu0 0.0
    %8891 = vmatpush.msra.mxu0 0.0
    %8892 = vmatpush.msra.mxu0 0.0
    %8893 = vmatpush.msra.mxu0 0.0
    %8894 = vmatpush.msra.mxu0 0.0
    %8895 = vmatpush.msra.mxu0 %v8797
    %8896 = vmatpush.msra.mxu0 %v8796
    %8897 = vmatpush.msra.mxu0 %v8795
    %8898 = vmatpush.msra.mxu0 %v8794
    %8899 = vmatmul.f32.gmra.mxu0 %v8846
    %v8900 = vpop.f32.mrf.mxu0
    %v8901 = vadd.f32 %v8872, %v8900
    %8902 = vmatmul.f32.gmra.mxu0 %v8848
    %v8903 = vpop.f32.mrf.mxu0
    %v8904 = vadd.f32 %v8875, %v8903
    %8905 = vmatmul.f32.gmra.mxu0 %v8850
    %v8906 = vpop.f32.mrf.mxu0
    %v8907 = vadd.f32 %v8878, %v8906
    %8908 = vmatmul.f32.gmra.mxu0 %v8852
    %v8909 = vpop.f32.mrf.mxu0
    %v8910 = vadd.f32 %v8881, %v8909
    %8911 = vdwg.mxu0
    %v8912 = vmax.f32 %v8901, 0.0
    %v8913 = vmax.f32 %v8904, 0.0
    %v8914 = vmax.f32 %v8907, 0.0
    %v8915 = vmax.f32 %v8910, 0.0
    %v8916 = vsel %vm7585, %v8912, 0.0
    %8917 = vadd.xlane.f32.xlu0 %v8916
    %v8918 = vpop.xlane.xlu0 %8917
    %v8919 = vsel %vm7585, %v8913, 0.0
    %8920 = vadd.xlane.f32.xlu0 %v8919
    %v8921 = vpop.xlane.xlu0 %8920
    %v8922 = vsel %vm7585, %v8914, 0.0
    %8923 = vadd.xlane.f32.xlu0 %v8922
    %v8924 = vpop.xlane.xlu0 %8923
    %v8925 = vsel %vm7585, %v8915, 0.0
    %8926 = vadd.xlane.f32.xlu0 %v8925
    %v8927 = vpop.xlane.xlu0 %8926
    %v8928 = vmul.f32 %v8918, 0.0625
    %v8929 = vmul.f32 %v8921, 0.0625
    %v8930 = vmul.f32 %v8924, 0.0625
    %v8931 = vmul.f32 %v8927, 0.0625
    %v8932 = vsub.f32 %v8912, %v8928
    %v8933 = vsub.f32 %v8913, %v8929
    %v8934 = vsub.f32 %v8914, %v8930
    %v8935 = vsub.f32 %v8915, %v8931
    %v8936 = vmul.f32 %v8932, %v8932
    %v8937 = vmul.f32 %v8933, %v8933
    %v8938 = vmul.f32 %v8934, %v8934
    %v8939 = vmul.f32 %v8935, %v8935
    %v8940 = vsel %vm7585, %v8936, 0.0
    %8941 = vadd.xlane.f32.xlu0 %v8940
    %v8942 = vpop.xlane.xlu0 %8941
    %v8943 = vsel %vm7585, %v8937, 0.0
    %8944 = vadd.xlane.f32.xlu0 %v8943
    %v8945 = vpop.xlane.xlu0 %8944
    %v8946 = vsel %vm7585, %v8938, 0.0
    %8947 = vadd.xlane.f32.xlu0 %v8946
    %v8948 = vpop.xlane.xlu0 %8947
    %v8949 = vsel %vm7585, %v8939, 0.0
    %8950 = vadd.xlane.f32.xlu0 %v8949
    %v8951 = vpop.xlane.xlu0 %8950
    %v8952 = vmul.f32 %v8942, 0.0625
    %v8953 = vmul.f32 %v8945, 0.0625
    %v8954 = vmul.f32 %v8948, 0.0625
    %v8955 = vmul.f32 %v8951, 0.0625
    %v8956 = vadd.f32 %v8952, 1e-05
    %v8957 = vadd.f32 %v8953, 1e-05
    %v8958 = vadd.f32 %v8954, 1e-05
    %v8959 = vadd.f32 %v8955, 1e-05
    %v8960 = vrsqrt.pop %v8956
    %v8961 = vmul.f32 %v8960, %v8956
    %v8962 = vmul.f32 %v8961, %v8960
    %v8963 = vmul.f32 0.5, %v8962
    %v8964 = vsub.f32 1.5, %v8963
    %v8965 = vmul.f32 %v8960, %v8964
    %vm8966 = vweird.f32 %v8956
    %vm8967 = vweird.f32 %v8960
    %vm8968 = vmor %vm8966, %vm8967
    %v8969 = vsel %vm8968, %v8960, %v8965
    %v8970 = vrsqrt.pop %v8957
    %v8971 = vmul.f32 %v8970, %v8957
    %v8972 = vmul.f32 %v8971, %v8970
    %v8973 = vmul.f32 0.5, %v8972
    %v8974 = vsub.f32 1.5, %v8973
    %v8975 = vmul.f32 %v8970, %v8974
    %vm8976 = vweird.f32 %v8957
    %vm8977 = vweird.f32 %v8970
    %vm8978 = vmor %vm8976, %vm8977
    %v8979 = vsel %vm8978, %v8970, %v8975
    %v8980 = vrsqrt.pop %v8958
    %v8981 = vmul.f32 %v8980, %v8958
    %v8982 = vmul.f32 %v8981, %v8980
    %v8983 = vmul.f32 0.5, %v8982
    %v8984 = vsub.f32 1.5, %v8983
    %v8985 = vmul.f32 %v8980, %v8984
    %vm8986 = vweird.f32 %v8958
    %vm8987 = vweird.f32 %v8980
    %vm8988 = vmor %vm8986, %vm8987
    %v8989 = vsel %vm8988, %v8980, %v8985
    %v8990 = vrsqrt.pop %v8959
    %v8991 = vmul.f32 %v8990, %v8959
    %v8992 = vmul.f32 %v8991, %v8990
    %v8993 = vmul.f32 0.5, %v8992
    %v8994 = vsub.f32 1.5, %v8993
    %v8995 = vmul.f32 %v8990, %v8994
    %vm8996 = vweird.f32 %v8959
    %vm8997 = vweird.f32 %v8990
    %vm8998 = vmor %vm8996, %vm8997
    %v8999 = vsel %vm8998, %v8990, %v8995
    %v9000 = vmul.f32 %v8932, %v8969
    %v9001 = vmul.f32 %v8933, %v8979
    %v9002 = vmul.f32 %v8934, %v8989
    %v9003 = vmul.f32 %v8935, %v8999
    %9004 = vset.pattern.permute.xlu0 24
    %9005 = vperm.xlu0 %9004, %v252
    %v9006 = vpop.permute.xlu0 %9005
    %9008 = vset.pattern.permute.xlu0 24
    %9009 = vperm.xlu0 %9008, %v253
    %v9010 = vpop.permute.xlu0 %9009
    %9012 = vset.pattern.permute.xlu0 24
    %9013 = vperm.xlu0 %9012, %v254
    %v9014 = vpop.permute.xlu0 %9013
    %9016 = vset.pattern.permute.xlu0 24
    %9017 = vperm.xlu0 %9016, %v255
    %v9018 = vpop.permute.xlu0 %9017
    %v9020 = vmul.f32 %v9006, %v9000
    %v9021 = vmul.f32 %v9010, %v9001
    %v9022 = vmul.f32 %v9014, %v9002
    %v9023 = vmul.f32 %v9018, %v9003
    %9024 = vset.pattern.permute.xlu0 24
    %9025 = vperm.xlu0 %9024, %v256
    %v9026 = vpop.permute.xlu0 %9025
    %9028 = vset.pattern.permute.xlu0 24
    %9029 = vperm.xlu0 %9028, %v257
    %v9030 = vpop.permute.xlu0 %9029
    %9032 = vset.pattern.permute.xlu0 24
    %9033 = vperm.xlu0 %9032, %v258
    %v9034 = vpop.permute.xlu0 %9033
    %9036 = vset.pattern.permute.xlu0 24
    %9037 = vperm.xlu0 %9036, %v259
    %v9038 = vpop.permute.xlu0 %9037
    %v9040 = vadd.f32 %v9020, %v9026
    %v9041 = vadd.f32 %v9021, %v9030
    %v9042 = vadd.f32 %v9022, %v9034
    %v9043 = vadd.f32 %v9023, %v9038
    %v9044 = vadd.f32 %v9040, %v8364
    %v9045 = vadd.f32 %v9041, %v8365
    %v9046 = vadd.f32 %v9042, %v8366
    %v9047 = vadd.f32 %v9043, %v8367
    %9052 = vrot.lane.b32.xlu0 %v9044, 127
    %v9053 = vpop.permute.xlu0 %9052
    %9054 = vrot.lane.b32.xlu0 %v9045, 127
    %v9055 = vpop.permute.xlu0 %9054
    %9056 = vrot.lane.b32.xlu0 %v9046, 127
    %v9057 = vpop.permute.xlu0 %9056
    %9058 = vrot.lane.b32.xlu0 %v9047, 127
    %v9059 = vpop.permute.xlu0 %9058
    %v9064 = vsel %vm7778, %v9053, 0.0
    %v9065 = vsel %vm7778, %v9055, 0.0
    %v9066 = vsel %vm7778, %v9057, 0.0
    %v9067 = vsel %vm7778, %v9059, 0.0
    %v9068 = vmax.f32 %v9044, %v9064
    %v9069 = vmax.f32 %v9045, %v9065
    %v9070 = vmax.f32 %v9046, %v9066
    %v9071 = vmax.f32 %v9047, %v9067
    %v9073 = vsel %vm7585, %v9068, 0
    %v9076 = vsel %vm7585, %v9069, 0
    %v9079 = vsel %vm7585, %v9070, 0
    %v9082 = vsel %vm7585, %v9071, 0
    %9084 = vmatpush.msra.mxu0 0.0
    %9085 = vmatpush.msra.mxu0 0.0
    %9086 = vmatpush.msra.mxu0 0.0
    %9087 = vmatpush.msra.mxu0 0.0
    %9088 = vmatpush.msra.mxu0 0.0
    %9089 = vmatpush.msra.mxu0 0.0
    %9090 = vmatpush.msra.mxu0 0.0
    %9091 = vmatpush.msra.mxu0 0.0
    %9092 = vmatpush.msra.mxu0 0.0
    %9093 = vmatpush.msra.mxu0 0.0
    %9094 = vmatpush.msra.mxu0 0.0
    %9095 = vmatpush.msra.mxu0 0.0
    %9096 = vmatpush.msra.mxu0 0.0
    %9097 = vmatpush.msra.mxu0 0.0
    %9098 = vmatpush.msra.mxu0 %v2581
    %9099 = vmatpush.msra.mxu0 %v2580
    %9100 = vmatmul.f32.gmra.mxu0 %v9073
    %v9101 = vpop.f32.mrf.mxu0
    %v9102 = vadd.f32 0.0, %v9101
    %9103 = vmatmul.f32.gmra.mxu0 %v9076
    %v9104 = vpop.f32.mrf.mxu0
    %v9105 = vadd.f32 0.0, %v9104
    %9106 = vmatmul.f32.gmra.mxu0 %v9079
    %v9107 = vpop.f32.mrf.mxu0
    %v9108 = vadd.f32 0.0, %v9107
    %9109 = vmatmul.f32.gmra.mxu0 %v9082
    %v9110 = vpop.f32.mrf.mxu0
    %v9111 = vadd.f32 0.0, %v9110
    %9112 = vdwg.mxu0
    %v9113 = vmul.u32 %v79, 4
    %vm9114 = vcmp.eq.s32.totalorder %v2483, %v9113
    %v9115 = vsel %vm9114, 1, 0
    %v9116 = vcvt.s32.f32 %v9115
    %vm9117 = vcmask 64512
    %v9119 = vsel %vm9117, %v9102, 0
    %v9122 = vsel %vm9117, %v9105, 0
    %v9125 = vsel %vm9117, %v9108, 0
    %v9128 = vsel %vm9117, %v9111, 0
    %9130 = vmatpush.msra.mxu0 0.0
    %9131 = vmatpush.msra.mxu0 0.0
    %9132 = vmatpush.msra.mxu0 0.0
    %9133 = vmatpush.msra.mxu0 0.0
    %9134 = vmatpush.msra.mxu0 0.0
    %9135 = vmatpush.msra.mxu0 0.0
    %9136 = vmatpush.msra.mxu0 0.0
    %9137 = vmatpush.msra.mxu0 0.0
    %9138 = vmatpush.msra.mxu0 0.0
    %9139 = vmatpush.msra.mxu0 0.0
    %9140 = vmatpush.msra.mxu0 0.0
    %9141 = vmatpush.msra.mxu0 0.0
    %9142 = vmatpush.msra.mxu0 0.0
    %9143 = vmatpush.msra.mxu0 0.0
    %9144 = vmatpush.msra.mxu0 0.0
    %9145 = vmatpush.msra.mxu0 %v9116
    %9146 = vmatmul.f32.gmra.mxu0 %v9119
    %v9147 = vpop.f32.mrf.mxu0
    %v9148 = vadd.f32 0.0, %v9147
    %9149 = vmatmul.f32.gmra.mxu0 %v9122
    %v9150 = vpop.f32.mrf.mxu0
    %v9151 = vadd.f32 0.0, %v9150
    %9152 = vmatmul.f32.gmra.mxu0 %v9125
    %v9153 = vpop.f32.mrf.mxu0
    %v9154 = vadd.f32 0.0, %v9153
    %9155 = vmatmul.f32.gmra.mxu0 %v9128
    %v9156 = vpop.f32.mrf.mxu0
    %v9157 = vadd.f32 0.0, %v9156
    %9158 = vdwg.mxu0
    %v9159 = vadd.s32 %v9113, 1
    %vm9160 = vcmp.eq.s32.totalorder %v2483, %v9159
    %v9161 = vsel %vm9160, 1, 0
    %v9162 = vcvt.s32.f32 %v9161
    %9163 = vmatpush.msra.mxu0 0.0
    %9164 = vmatpush.msra.mxu0 0.0
    %9165 = vmatpush.msra.mxu0 0.0
    %9166 = vmatpush.msra.mxu0 0.0
    %9167 = vmatpush.msra.mxu0 0.0
    %9168 = vmatpush.msra.mxu0 0.0
    %9169 = vmatpush.msra.mxu0 0.0
    %9170 = vmatpush.msra.mxu0 0.0
    %9171 = vmatpush.msra.mxu0 0.0
    %9172 = vmatpush.msra.mxu0 0.0
    %9173 = vmatpush.msra.mxu0 0.0
    %9174 = vmatpush.msra.mxu0 0.0
    %9175 = vmatpush.msra.mxu0 0.0
    %9176 = vmatpush.msra.mxu0 0.0
    %9177 = vmatpush.msra.mxu0 0.0
    %9178 = vmatpush.msra.mxu0 %v9162
    %9179 = vmatmul.f32.gmra.mxu0 %v9119
    %v9180 = vpop.f32.mrf.mxu0
    %v9181 = vadd.f32 0.0, %v9180
    %9182 = vmatmul.f32.gmra.mxu0 %v9122
    %v9183 = vpop.f32.mrf.mxu0
    %v9184 = vadd.f32 0.0, %v9183
    %9185 = vmatmul.f32.gmra.mxu0 %v9125
    %v9186 = vpop.f32.mrf.mxu0
    %v9187 = vadd.f32 0.0, %v9186
    %9188 = vmatmul.f32.gmra.mxu0 %v9128
    %v9189 = vpop.f32.mrf.mxu0
    %v9190 = vadd.f32 0.0, %v9189
    %9191 = vdwg.mxu0
    %v9192 = vadd.s32 %v9113, 2
    %vm9193 = vcmp.eq.s32.totalorder %v2483, %v9192
    %v9194 = vsel %vm9193, 1, 0
    %v9195 = vcvt.s32.f32 %v9194
    %9196 = vmatpush.msra.mxu0 0.0
    %9197 = vmatpush.msra.mxu0 0.0
    %9198 = vmatpush.msra.mxu0 0.0
    %9199 = vmatpush.msra.mxu0 0.0
    %9200 = vmatpush.msra.mxu0 0.0
    %9201 = vmatpush.msra.mxu0 0.0
    %9202 = vmatpush.msra.mxu0 0.0
    %9203 = vmatpush.msra.mxu0 0.0
    %9204 = vmatpush.msra.mxu0 0.0
    %9205 = vmatpush.msra.mxu0 0.0
    %9206 = vmatpush.msra.mxu0 0.0
    %9207 = vmatpush.msra.mxu0 0.0
    %9208 = vmatpush.msra.mxu0 0.0
    %9209 = vmatpush.msra.mxu0 0.0
    %9210 = vmatpush.msra.mxu0 0.0
    %9211 = vmatpush.msra.mxu0 %v9195
    %9212 = vmatmul.f32.gmra.mxu0 %v9119
    %v9213 = vpop.f32.mrf.mxu0
    %v9214 = vadd.f32 0.0, %v9213
    %9215 = vmatmul.f32.gmra.mxu0 %v9122
    %v9216 = vpop.f32.mrf.mxu0
    %v9217 = vadd.f32 0.0, %v9216
    %9218 = vmatmul.f32.gmra.mxu0 %v9125
    %v9219 = vpop.f32.mrf.mxu0
    %v9220 = vadd.f32 0.0, %v9219
    %9221 = vmatmul.f32.gmra.mxu0 %v9128
    %v9222 = vpop.f32.mrf.mxu0
    %v9223 = vadd.f32 0.0, %v9222
    %9224 = vdwg.mxu0
    %v9225 = vadd.s32 %v9113, 3
    %vm9226 = vcmp.eq.s32.totalorder %v2483, %v9225
    %v9227 = vsel %vm9226, 1, 0
    %v9228 = vcvt.s32.f32 %v9227
    %9229 = vmatpush.msra.mxu0 0.0
    %9230 = vmatpush.msra.mxu0 0.0
    %9231 = vmatpush.msra.mxu0 0.0
    %9232 = vmatpush.msra.mxu0 0.0
    %9233 = vmatpush.msra.mxu0 0.0
    %9234 = vmatpush.msra.mxu0 0.0
    %9235 = vmatpush.msra.mxu0 0.0
    %9236 = vmatpush.msra.mxu0 0.0
    %9237 = vmatpush.msra.mxu0 0.0
    %9238 = vmatpush.msra.mxu0 0.0
    %9239 = vmatpush.msra.mxu0 0.0
    %9240 = vmatpush.msra.mxu0 0.0
    %9241 = vmatpush.msra.mxu0 0.0
    %9242 = vmatpush.msra.mxu0 0.0
    %9243 = vmatpush.msra.mxu0 0.0
    %9244 = vmatpush.msra.mxu0 %v9228
    %9245 = vmatmul.f32.gmra.mxu0 %v9119
    %v9246 = vpop.f32.mrf.mxu0
    %v9247 = vadd.f32 0.0, %v9246
    %9248 = vmatmul.f32.gmra.mxu0 %v9122
    %v9249 = vpop.f32.mrf.mxu0
    %v9250 = vadd.f32 0.0, %v9249
    %9251 = vmatmul.f32.gmra.mxu0 %v9125
    %v9252 = vpop.f32.mrf.mxu0
    %v9253 = vadd.f32 0.0, %v9252
    %9254 = vmatmul.f32.gmra.mxu0 %v9128
    %v9255 = vpop.f32.mrf.mxu0
    %v9256 = vadd.f32 0.0, %v9255
    %9257 = vdwg.mxu0
    %v9258 = vld [vmem:[%s7] sm:$0xff]
    %v9259 = vld [vmem:[%s7 + $0x8] sm:$0xff]
    %v9260 = vld [vmem:[%s7 + $0x10] sm:$0xff]
    %v9261 = vld [vmem:[%s7 + $0x18] sm:$0xff]
    %v9262 = vld [vmem:[%s7 + $0x20] sm:$0xff]
    %v9263 = vld [vmem:[%s7 + $0x28] sm:$0xff]
    %v9264 = vld [vmem:[%s7 + $0x30] sm:$0xff]
    %v9265 = vld [vmem:[%s7 + $0x38] sm:$0xff]
    %v9266 = vld [vmem:[%s7 + $0x40] sm:$0xff]
    %v9267 = vld [vmem:[%s7 + $0x48] sm:$0xff]
    %v9268 = vld [vmem:[%s7 + $0x50] sm:$0xff]
    %v9269 = vld [vmem:[%s7 + $0x58] sm:$0xff]
    %v9270 = vld [vmem:[%s7 + $0x60] sm:$0xff]
    %v9271 = vld [vmem:[%s7 + $0x68] sm:$0xff]
    %v9272 = vld [vmem:[%s7 + $0x70] sm:$0xff]
    %v9273 = vld [vmem:[%s7 + $0x78] sm:$0xff]
    %v9274 = vld [vmem:[%s10] sm:$0xff]
    %v9275 = vld [vmem:[%s10 + $0x8] sm:$0xff]
    %v9276 = vld [vmem:[%s10 + $0x10] sm:$0xff]
    %v9277 = vld [vmem:[%s10 + $0x18] sm:$0xff]
    %v9278 = vld [vmem:[%s10 + $0x20] sm:$0xff]
    %v9279 = vld [vmem:[%s10 + $0x28] sm:$0xff]
    %v9280 = vld [vmem:[%s10 + $0x30] sm:$0xff]
    %v9281 = vld [vmem:[%s10 + $0x38] sm:$0xff]
    %v9282 = vld [vmem:[%s10 + $0x40] sm:$0xff]
    %v9283 = vld [vmem:[%s10 + $0x48] sm:$0xff]
    %v9284 = vld [vmem:[%s10 + $0x50] sm:$0xff]
    %v9285 = vld [vmem:[%s10 + $0x58] sm:$0xff]
    %v9286 = vld [vmem:[%s10 + $0x60] sm:$0xff]
    %v9287 = vld [vmem:[%s10 + $0x68] sm:$0xff]
    %v9288 = vld [vmem:[%s10 + $0x70] sm:$0xff]
    %v9289 = vld [vmem:[%s10 + $0x78] sm:$0xff]
    %9291 = vset.pattern.permute.xlu0 0
    %9292 = vperm.xlu0 %9291, %v9274
    %v9293 = vpop.permute.xlu0 %9292
    %9296 = vset.pattern.permute.xlu0 0
    %9297 = vperm.xlu0 %9296, %v9275
    %v9298 = vpop.permute.xlu0 %9297
    %9301 = vset.pattern.permute.xlu0 0
    %9302 = vperm.xlu0 %9301, %v9276
    %v9303 = vpop.permute.xlu0 %9302
    %9306 = vset.pattern.permute.xlu0 0
    %9307 = vperm.xlu0 %9306, %v9277
    %v9308 = vpop.permute.xlu0 %9307
    %9311 = vset.pattern.permute.xlu0 0
    %9312 = vperm.xlu0 %9311, %v9278
    %v9313 = vpop.permute.xlu0 %9312
    %9316 = vset.pattern.permute.xlu0 0
    %9317 = vperm.xlu0 %9316, %v9279
    %v9318 = vpop.permute.xlu0 %9317
    %9321 = vset.pattern.permute.xlu0 0
    %9322 = vperm.xlu0 %9321, %v9280
    %v9323 = vpop.permute.xlu0 %9322
    %9326 = vset.pattern.permute.xlu0 0
    %9327 = vperm.xlu0 %9326, %v9281
    %v9328 = vpop.permute.xlu0 %9327
    %9331 = vset.pattern.permute.xlu0 0
    %9332 = vperm.xlu0 %9331, %v9282
    %v9333 = vpop.permute.xlu0 %9332
    %9336 = vset.pattern.permute.xlu0 0
    %9337 = vperm.xlu0 %9336, %v9283
    %v9338 = vpop.permute.xlu0 %9337
    %9341 = vset.pattern.permute.xlu0 0
    %9342 = vperm.xlu0 %9341, %v9284
    %v9343 = vpop.permute.xlu0 %9342
    %9346 = vset.pattern.permute.xlu0 0
    %9347 = vperm.xlu0 %9346, %v9285
    %v9348 = vpop.permute.xlu0 %9347
    %9351 = vset.pattern.permute.xlu0 0
    %9352 = vperm.xlu0 %9351, %v9286
    %v9353 = vpop.permute.xlu0 %9352
    %9356 = vset.pattern.permute.xlu0 0
    %9357 = vperm.xlu0 %9356, %v9287
    %v9358 = vpop.permute.xlu0 %9357
    %9361 = vset.pattern.permute.xlu0 0
    %9362 = vperm.xlu0 %9361, %v9288
    %v9363 = vpop.permute.xlu0 %9362
    %9366 = vset.pattern.permute.xlu0 0
    %9367 = vperm.xlu0 %9366, %v9289
    %v9368 = vpop.permute.xlu0 %9367
    %9370 = vmatpush.msra.mxu0 %v9256
    %9371 = vmatpush.msra.mxu0 %v9253
    %9372 = vmatpush.msra.mxu0 %v9250
    %9373 = vmatpush.msra.mxu0 %v9247
    %9374 = vmatpush.msra.mxu0 %v9223
    %9375 = vmatpush.msra.mxu0 %v9220
    %9376 = vmatpush.msra.mxu0 %v9217
    %9377 = vmatpush.msra.mxu0 %v9214
    %9378 = vmatpush.msra.mxu0 %v9190
    %9379 = vmatpush.msra.mxu0 %v9187
    %9380 = vmatpush.msra.mxu0 %v9184
    %9381 = vmatpush.msra.mxu0 %v9181
    %9382 = vmatpush.msra.mxu0 %v9157
    %9383 = vmatpush.msra.mxu0 %v9154
    %9384 = vmatpush.msra.mxu0 %v9151
    %9385 = vmatpush.msra.mxu0 %v9148
    %9386 = vmatmul.f32.gmra.mxu0 %v9258
    %v9387 = vpop.f32.mrf.mxu0
    %v9388 = vadd.f32 %v9293, %v9387
    %9389 = vmatmul.f32.gmra.mxu0 %v9259
    %v9390 = vpop.f32.mrf.mxu0
    %v9391 = vadd.f32 %v9298, %v9390
    %9392 = vmatmul.f32.gmra.mxu0 %v9260
    %v9393 = vpop.f32.mrf.mxu0
    %v9394 = vadd.f32 %v9303, %v9393
    %9395 = vmatmul.f32.gmra.mxu0 %v9261
    %v9396 = vpop.f32.mrf.mxu0
    %v9397 = vadd.f32 %v9308, %v9396
    %9398 = vmatmul.f32.gmra.mxu0 %v9262
    %v9399 = vpop.f32.mrf.mxu0
    %v9400 = vadd.f32 %v9313, %v9399
    %9401 = vmatmul.f32.gmra.mxu0 %v9263
    %v9402 = vpop.f32.mrf.mxu0
    %v9403 = vadd.f32 %v9318, %v9402
    %9404 = vmatmul.f32.gmra.mxu0 %v9264
    %v9405 = vpop.f32.mrf.mxu0
    %v9406 = vadd.f32 %v9323, %v9405
    %9407 = vmatmul.f32.gmra.mxu0 %v9265
    %v9408 = vpop.f32.mrf.mxu0
    %v9409 = vadd.f32 %v9328, %v9408
    %9410 = vmatmul.f32.gmra.mxu0 %v9266
    %v9411 = vpop.f32.mrf.mxu0
    %v9412 = vadd.f32 %v9333, %v9411
    %9413 = vmatmul.f32.gmra.mxu0 %v9267
    %v9414 = vpop.f32.mrf.mxu0
    %v9415 = vadd.f32 %v9338, %v9414
    %9416 = vmatmul.f32.gmra.mxu0 %v9268
    %v9417 = vpop.f32.mrf.mxu0
    %v9418 = vadd.f32 %v9343, %v9417
    %9419 = vmatmul.f32.gmra.mxu0 %v9269
    %v9420 = vpop.f32.mrf.mxu0
    %v9421 = vadd.f32 %v9348, %v9420
    %9422 = vmatmul.f32.gmra.mxu0 %v9270
    %v9423 = vpop.f32.mrf.mxu0
    %v9424 = vadd.f32 %v9353, %v9423
    %9425 = vmatmul.f32.gmra.mxu0 %v9271
    %v9426 = vpop.f32.mrf.mxu0
    %v9427 = vadd.f32 %v9358, %v9426
    %9428 = vmatmul.f32.gmra.mxu0 %v9272
    %v9429 = vpop.f32.mrf.mxu0
    %v9430 = vadd.f32 %v9363, %v9429
    %9431 = vmatmul.f32.gmra.mxu0 %v9273
    %v9432 = vpop.f32.mrf.mxu0
    %v9433 = vadd.f32 %v9368, %v9432
    %9434 = vdwg.mxu0
    %v9435 = vmax.f32 %v9388, 0.0
    %v9436 = vmax.f32 %v9391, 0.0
    %v9437 = vmax.f32 %v9394, 0.0
    %v9438 = vmax.f32 %v9397, 0.0
    %v9439 = vmax.f32 %v9400, 0.0
    %v9440 = vmax.f32 %v9403, 0.0
    %v9441 = vmax.f32 %v9406, 0.0
    %v9442 = vmax.f32 %v9409, 0.0
    %v9443 = vmax.f32 %v9412, 0.0
    %v9444 = vmax.f32 %v9415, 0.0
    %v9445 = vmax.f32 %v9418, 0.0
    %v9446 = vmax.f32 %v9421, 0.0
    %v9447 = vmax.f32 %v9424, 0.0
    %v9448 = vmax.f32 %v9427, 0.0
    %v9449 = vmax.f32 %v9430, 0.0
    %v9450 = vmax.f32 %v9433, 0.0
    %v9451 = vld [vmem:[#allocation4] sm:$0xff]
    %v9452 = vld [vmem:[#allocation4 + $0x8] sm:$0xff]
    %v9453 = vld [vmem:[#allocation4 + $0x10] sm:$0xff]
    %v9454 = vld [vmem:[#allocation4 + $0x18] sm:$0xff]
    %v9455 = vld [vmem:[#allocation4 + $0x20] sm:$0xff]
    %v9456 = vld [vmem:[#allocation4 + $0x28] sm:$0xff]
    %v9457 = vld [vmem:[#allocation4 + $0x30] sm:$0xff]
    %v9458 = vld [vmem:[#allocation4 + $0x38] sm:$0xff]
    %v9459 = vld [vmem:[#allocation4 + $0x40] sm:$0xff]
    %v9460 = vld [vmem:[#allocation4 + $0x48] sm:$0xff]
    %v9461 = vld [vmem:[#allocation4 + $0x50] sm:$0xff]
    %v9462 = vld [vmem:[#allocation4 + $0x58] sm:$0xff]
    %v9463 = vld [vmem:[#allocation4 + $0x60] sm:$0xff]
    %v9464 = vld [vmem:[#allocation4 + $0x68] sm:$0xff]
    %v9465 = vld [vmem:[#allocation4 + $0x70] sm:$0xff]
    %v9466 = vld [vmem:[#allocation4 + $0x78] sm:$0xff]
    %9467 = vset.pattern.permute.xlu0 1
    %9468 = vperm.xlu0 %9467, %v9274
    %v9469 = vpop.permute.xlu0 %9468
    %9471 = vset.pattern.permute.xlu0 1
    %9472 = vperm.xlu0 %9471, %v9275
    %v9473 = vpop.permute.xlu0 %9472
    %9475 = vset.pattern.permute.xlu0 1
    %9476 = vperm.xlu0 %9475, %v9276
    %v9477 = vpop.permute.xlu0 %9476
    %9479 = vset.pattern.permute.xlu0 1
    %9480 = vperm.xlu0 %9479, %v9277
    %v9481 = vpop.permute.xlu0 %9480
    %9483 = vset.pattern.permute.xlu0 1
    %9484 = vperm.xlu0 %9483, %v9278
    %v9485 = vpop.permute.xlu0 %9484
    %9487 = vset.pattern.permute.xlu0 1
    %9488 = vperm.xlu0 %9487, %v9279
    %v9489 = vpop.permute.xlu0 %9488
    %9491 = vset.pattern.permute.xlu0 1
    %9492 = vperm.xlu0 %9491, %v9280
    %v9493 = vpop.permute.xlu0 %9492
    %9495 = vset.pattern.permute.xlu0 1
    %9496 = vperm.xlu0 %9495, %v9281
    %v9497 = vpop.permute.xlu0 %9496
    %9499 = vset.pattern.permute.xlu0 1
    %9500 = vperm.xlu0 %9499, %v9282
    %v9501 = vpop.permute.xlu0 %9500
    %9503 = vset.pattern.permute.xlu0 1
    %9504 = vperm.xlu0 %9503, %v9283
    %v9505 = vpop.permute.xlu0 %9504
    %9507 = vset.pattern.permute.xlu0 1
    %9508 = vperm.xlu0 %9507, %v9284
    %v9509 = vpop.permute.xlu0 %9508
    %9511 = vset.pattern.permute.xlu0 1
    %9512 = vperm.xlu0 %9511, %v9285
    %v9513 = vpop.permute.xlu0 %9512
    %9515 = vset.pattern.permute.xlu0 1
    %9516 = vperm.xlu0 %9515, %v9286
    %v9517 = vpop.permute.xlu0 %9516
    %9519 = vset.pattern.permute.xlu0 1
    %9520 = vperm.xlu0 %9519, %v9287
    %v9521 = vpop.permute.xlu0 %9520
    %9523 = vset.pattern.permute.xlu0 1
    %9524 = vperm.xlu0 %9523, %v9288
    %v9525 = vpop.permute.xlu0 %9524
    %9527 = vset.pattern.permute.xlu0 1
    %9528 = vperm.xlu0 %9527, %v9289
    %v9529 = vpop.permute.xlu0 %9528
    %9531 = vmatpush.msra.mxu0 %v9450
    %9532 = vmatpush.msra.mxu0 %v9449
    %9533 = vmatpush.msra.mxu0 %v9448
    %9534 = vmatpush.msra.mxu0 %v9447
    %9535 = vmatpush.msra.mxu0 %v9446
    %9536 = vmatpush.msra.mxu0 %v9445
    %9537 = vmatpush.msra.mxu0 %v9444
    %9538 = vmatpush.msra.mxu0 %v9443
    %9539 = vmatpush.msra.mxu0 %v9442
    %9540 = vmatpush.msra.mxu0 %v9441
    %9541 = vmatpush.msra.mxu0 %v9440
    %9542 = vmatpush.msra.mxu0 %v9439
    %9543 = vmatpush.msra.mxu0 %v9438
    %9544 = vmatpush.msra.mxu0 %v9437
    %9545 = vmatpush.msra.mxu0 %v9436
    %9546 = vmatpush.msra.mxu0 %v9435
    %9547 = vmatmul.f32.gmra.mxu0 %v9451
    %v9548 = vpop.f32.mrf.mxu0
    %v9549 = vadd.f32 %v9469, %v9548
    %9550 = vmatmul.f32.gmra.mxu0 %v9452
    %v9551 = vpop.f32.mrf.mxu0
    %v9552 = vadd.f32 %v9473, %v9551
    %9553 = vmatmul.f32.gmra.mxu0 %v9453
    %v9554 = vpop.f32.mrf.mxu0
    %v9555 = vadd.f32 %v9477, %v9554
    %9556 = vmatmul.f32.gmra.mxu0 %v9454
    %v9557 = vpop.f32.mrf.mxu0
    %v9558 = vadd.f32 %v9481, %v9557
    %9559 = vmatmul.f32.gmra.mxu0 %v9455
    %v9560 = vpop.f32.mrf.mxu0
    %v9561 = vadd.f32 %v9485, %v9560
    %9562 = vmatmul.f32.gmra.mxu0 %v9456
    %v9563 = vpop.f32.mrf.mxu0
    %v9564 = vadd.f32 %v9489, %v9563
    %9565 = vmatmul.f32.gmra.mxu0 %v9457
    %v9566 = vpop.f32.mrf.mxu0
    %v9567 = vadd.f32 %v9493, %v9566
    %9568 = vmatmul.f32.gmra.mxu0 %v9458
    %v9569 = vpop.f32.mrf.mxu0
    %v9570 = vadd.f32 %v9497, %v9569
    %9571 = vmatmul.f32.gmra.mxu0 %v9459
    %v9572 = vpop.f32.mrf.mxu0
    %v9573 = vadd.f32 %v9501, %v9572
    %9574 = vmatmul.f32.gmra.mxu0 %v9460
    %v9575 = vpop.f32.mrf.mxu0
    %v9576 = vadd.f32 %v9505, %v9575
    %9577 = vmatmul.f32.gmra.mxu0 %v9461
    %v9578 = vpop.f32.mrf.mxu0
    %v9579 = vadd.f32 %v9509, %v9578
    %9580 = vmatmul.f32.gmra.mxu0 %v9462
    %v9581 = vpop.f32.mrf.mxu0
    %v9582 = vadd.f32 %v9513, %v9581
    %9583 = vmatmul.f32.gmra.mxu0 %v9463
    %v9584 = vpop.f32.mrf.mxu0
    %v9585 = vadd.f32 %v9517, %v9584
    %9586 = vmatmul.f32.gmra.mxu0 %v9464
    %v9587 = vpop.f32.mrf.mxu0
    %v9588 = vadd.f32 %v9521, %v9587
    %9589 = vmatmul.f32.gmra.mxu0 %v9465
    %v9590 = vpop.f32.mrf.mxu0
    %v9591 = vadd.f32 %v9525, %v9590
    %9592 = vmatmul.f32.gmra.mxu0 %v9466
    %v9593 = vpop.f32.mrf.mxu0
    %v9594 = vadd.f32 %v9529, %v9593
    %9595 = vdwg.mxu0
    %v9596 = vmax.f32 %v9549, 0.0
    %v9597 = vmax.f32 %v9552, 0.0
    %v9598 = vmax.f32 %v9555, 0.0
    %v9599 = vmax.f32 %v9558, 0.0
    %v9600 = vmax.f32 %v9561, 0.0
    %v9601 = vmax.f32 %v9564, 0.0
    %v9602 = vmax.f32 %v9567, 0.0
    %v9603 = vmax.f32 %v9570, 0.0
    %v9604 = vmax.f32 %v9573, 0.0
    %v9605 = vmax.f32 %v9576, 0.0
    %v9606 = vmax.f32 %v9579, 0.0
    %v9607 = vmax.f32 %v9582, 0.0
    %v9608 = vmax.f32 %v9585, 0.0
    %v9609 = vmax.f32 %v9588, 0.0
    %v9610 = vmax.f32 %v9591, 0.0
    %v9611 = vmax.f32 %v9594, 0.0
    %v9612 = vld [vmem:[%s9] sm:$0xff]
    %v9613 = vld [vmem:[%s10] sm:$0xff]
    %9615 = vset.pattern.permute.xlu0 2
    %9616 = vperm.xlu0 %9615, %v9613
    %v9617 = vpop.permute.xlu0 %9616
    %9619 = vmatpush.msra.mxu0 %v9611
    %9620 = vmatpush.msra.mxu0 %v9610
    %9621 = vmatpush.msra.mxu0 %v9609
    %9622 = vmatpush.msra.mxu0 %v9608
    %9623 = vmatpush.msra.mxu0 %v9607
    %9624 = vmatpush.msra.mxu0 %v9606
    %9625 = vmatpush.msra.mxu0 %v9605
    %9626 = vmatpush.msra.mxu0 %v9604
    %9627 = vmatpush.msra.mxu0 %v9603
    %9628 = vmatpush.msra.mxu0 %v9602
    %9629 = vmatpush.msra.mxu0 %v9601
    %9630 = vmatpush.msra.mxu0 %v9600
    %9631 = vmatpush.msra.mxu0 %v9599
    %9632 = vmatpush.msra.mxu0 %v9598
    %9633 = vmatpush.msra.mxu0 %v9597
    %9634 = vmatpush.msra.mxu0 %v9596
    %9635 = vmatmul.f32.gmra.mxu0 %v9612
    %v9636 = vpop.f32.mrf.mxu0
    %v9637 = vadd.f32 %v9617, %v9636
    %9638 = vdwg.mxu0
    %9639 = vst.msk [vmem:[%s11] sm:$0xff] %vm452, %v9637
    // Predicated region
    $region54: #{resnet_forward.1} parent=1 // pred_check
      _
    $region55: #{resnet_forward.1} parent=1 // pred_check_branch
      %9641 = sbr.rel (0) target = $region57
    $region56: #{resnet_forward.1} parent=1 // pred_region
      _
    $region57: #{resnet_forward.1} parent=1 // pred_fallthru
      _
    // Predicated region
    $region58: #{resnet_forward.1} parent=1 // pred_check
      _
    $region59: #{resnet_forward.1} parent=1 // pred_check_branch
      %9643 = sbr.rel (0) target = $region61
    $region60: #{resnet_forward.1} parent=1 // pred_region
      _
    $region61: #{resnet_forward.1} parent=1 // pred_fallthru
      _
    %9644 = vsyncpa [#allocation3], 1
    %9645 = vsyncpa [#allocation5], 1

</llo_original>
